<compile_context>
chip_gen: v5e
topology: v5e:2x2
jax: 0.10.0
libtpu: 0.0.40
codegen_flags: <defaults>
</compile_context>

<pallas_src>
import jax
import jax.numpy as jnp
from jax import lax
from jax.experimental import pallas as pl
from jax.experimental.pallas import tpu as pltpu

EPS = 1e-5


def _vmem_limit_bytes():
    """Generation-aware VMEM budget (v5e/v6e: 128 MiB, v7x: 64 MiB per core)."""
    try:
        cap = pltpu.get_tpu_info().vmem_capacity_bytes
    except Exception:
        cap = 64 * 1024 * 1024
    return min((int(cap) * 3) // 4, 96 * 1024 * 1024)


_VMEM_LIMIT = _vmem_limit_bytes()


# ------------------------------ in-kernel helpers ------------------------------

def _zero_border(pad_ref, H, W):
    """Zero only the 1-pixel border of the (H+2, W+2, C) scratch (not the body)."""
    C = pad_ref.shape[-1]
    zrow = jnp.zeros((1, W + 2, C), pad_ref.dtype)
    zcol = jnp.zeros((H + 2, 1, C), pad_ref.dtype)
    pad_ref[0:1, :, :] = zrow
    pad_ref[H + 1:H + 2, :, :] = zrow
    pad_ref[:, 0:1, :] = zcol
    pad_ref[:, W + 1:W + 2, :] = zcol


def _conv3x3(pad_ref, w_ref, H, W):
    """'same' 3x3 conv from the zero-bordered bf16 scratch.

    Wide channels (Cin >= 128): 9 lane-aligned per-tap matmuls (K = Cin each)
    accumulating in f32 — no im2col concatenate, ~9x less LHS VMEM.
    Narrow channels: one fused-K matmul (K = 9*Cin) so the MXU contraction
    depth is still filled.
    """
    Cin = pad_ref.shape[-1]
    Cout = w_ref.shape[-1]
    taps = [(ky, kx) for ky in range(3) for kx in range(3)]
    if Cin >= 128:
        acc = jnp.zeros((H * W, Cout), jnp.float32)
        for t, (ky, kx) in enumerate(taps):
            lhs = pad_ref[ky:ky + H, kx:kx + W, :].reshape(H * W, Cin)
            acc = acc + jnp.dot(lhs, w_ref[t * Cin:(t + 1) * Cin, :],
                                preferred_element_type=jnp.float32)
        return acc.reshape(H, W, Cout)
    patches = [pad_ref[ky:ky + H, kx:kx + W, :] for ky, kx in taps]
    lhs = jnp.concatenate(patches, axis=-1).reshape(H * W, 9 * Cin)  # bf16
    return jnp.dot(lhs, w_ref[...],
                   preferred_element_type=jnp.float32).reshape(H, W, Cout)


# ---------------------------------- kernels -----------------------------------

def pass1_kernel(x_ref, sc0_ref, sh0_ref, w1_ref, wavg_ref,
                 y1_ref, id_ref, stats_ref, pad_ref):
    H, W, Cin = x_ref.shape
    Cout = wavg_ref.shape[-1]

    x = x_ref[...]                                               # (H, W, Cin) f32

    # identity branch: 1x1 conv (its BN is applied in pass 2 with global stats)
    ident = jnp.dot(x.reshape(H * W, Cin).astype(jnp.bfloat16), wavg_ref[...],
                    preferred_element_type=jnp.float32).reshape(H, W, Cout)

    # pre-activation 1: fused BN0 (wrapper-reduced batch stats) + ReLU,
    # written already cast so the conv LHS is built in bf16.
    t = jnp.maximum(x * sc0_ref[...] + sh0_ref[...], 0.0)

    _zero_border(pad_ref, H, W)
    pad_ref[1:H + 1, 1:W + 1, :] = t.astype(jnp.bfloat16)
    # conv1 bias is folded out: BN1 cancels any per-channel constant exactly.
    y1 = _conv3x3(pad_ref, w1_ref, H, W)

    # bf16 inter-pass intermediates: halves the HBM round-trip between passes.
    y1_ref[...] = y1.astype(jnp.bfloat16)
    id_ref[...] = ident.astype(jnp.bfloat16)

    # per-image partial sums for the BN1 / BN_avg batch statistics (f32)
    y1f = y1.reshape(H * W, Cout)
    idf = ident.reshape(H * W, Cout)
    stats_ref[...] = jnp.concatenate(
        [jnp.sum(y1f, axis=0, keepdims=True),
         jnp.sum(y1f * y1f, axis=0, keepdims=True),
         jnp.sum(idf, axis=0, keepdims=True),
         jnp.sum(idf * idf, axis=0, keepdims=True)], axis=0)     # (4, Cout)


def pass2_kernel(y1_ref, id_ref, sc1_ref, sh1_ref, w2_ref, b2_ref,
                 sca_ref, sha_ref, out_ref, pool_ref, pad_ref):
    H, W, Cout = y1_ref.shape

    # pre-activation 2: fused BN1 (global batch stats, conv1-bias folded) + ReLU
    u = jnp.maximum(
        y1_ref[...].astype(jnp.float32) * sc1_ref[...] + sh1_ref[...], 0.0)

    _zero_border(pad_ref, H, W)
    pad_ref[1:H + 1, 1:W + 1, :] = u.astype(jnp.bfloat16)
    y2 = _conv3x3(pad_ref, w2_ref, H, W) + b2_ref[...]

    # residual add with the BatchNorm'ed identity
    out = y2 + (id_ref[...].astype(jnp.float32) * sca_ref[...] + sha_ref[...])
    out_ref[...] = out.astype(out_ref.dtype)

    # MaxPool2d(2) from the in-register `out` value (no re-read of out_ref).
    # TODO(synk): assumes even H and W (as MaxPool2d(2) effectively needs here).
    pw = jnp.max(out.reshape(H, W // 2, 2, Cout), axis=2)        # (H, W//2, C)
    pool_ref[...] = jnp.max(pw.reshape(H // 2, 2, W // 2, Cout),
                            axis=1).astype(pool_ref.dtype)


# ---------------------------------- wrapper ------------------------------------

def _const_spec(shape):
    nd = len(shape)
    return pl.BlockSpec(shape, lambda i, _nd=nd: (0,) * _nd)


def _vec(v):
    return jnp.asarray(v).reshape(1, 1, -1).astype(jnp.float32)


@jax.jit
def preact_resblock(x_nchw, params):
    """Returns (MaxPool2d(2)(out), out) in NCHW, matching the PyTorch module."""
    N, Cin, H, W = x_nchw.shape
    Cout = params['w_avg'].shape[0]
    x = jnp.transpose(x_nchw, (0, 2, 3, 1)).astype(jnp.float32)      # NHWC

    # BN0 batch statistics on the raw input: cheap wrapper-side reduction,
    # handed to the kernel as a fused per-channel scale/shift.
    g0, be0 = params['bn0']
    mean0 = jnp.mean(x, axis=(0, 1, 2))
    var0 = jnp.var(x, axis=(0, 1, 2))                 # biased, as in PyTorch BN
    scale0 = g0 * lax.rsqrt(var0 + EPS)
    shift0 = be0 - mean0 * scale0

    # conv weights: OIHW -> HWIO, 3x3 taps flattened to (9*Cin, Cout); bf16
    # MXU operands (accumulation stays f32).
    wavg = params['w_avg'][:, :, 0, 0].T.astype(jnp.bfloat16)        # (Cin, Cout)
    w1 = jnp.transpose(params['w1'], (2, 3, 1, 0)).reshape(9 * Cin, Cout)
    w2 = jnp.transpose(params['w2'], (2, 3, 1, 0)).reshape(9 * Cout, Cout)
    w1 = w1.astype(jnp.bfloat16)
    w2 = w2.astype(jnp.bfloat16)

    img_spec = lambda c: pl.BlockSpec((None, H, W, c), lambda i: (i, 0, 0, 0))
    compiler_params = pltpu.CompilerParams(
        dimension_semantics=("parallel",), vmem_limit_bytes=_VMEM_LIMIT)

    # ---- pass 1: identity conv1x1, BN0+ReLU+conv3x3, partial BN stats -------
    y1, ident, stats = pl.pallas_call(
        pass1_kernel,
        out_shape=(jax.ShapeDtypeStruct((N, H, W, Cout), jnp.bfloat16),
                   jax.ShapeDtypeStruct((N, H, W, Cout), jnp.bfloat16),
                   jax.ShapeDtypeStruct((N, 4, Cout), jnp.float32)),
        grid=(N,),
        in_specs=[img_spec(Cin),
                  _const_spec((1, 1, Cin)), _const_spec((1, 1, Cin)),
                  _const_spec((9 * Cin, Cout)),
                  _const_spec((Cin, Cout))],
        out_specs=(img_spec(Cout), img_spec(Cout),
                   pl.BlockSpec((None, 4, Cout), lambda i: (i, 0, 0))),
        scratch_shapes=[pltpu.VMEM((H + 2, W + 2, Cin), jnp.bfloat16)],
        compiler_params=compiler_params,
    )(x, _vec(scale0), _vec(shift0), w1, wavg)

    # fuse BN1 / BN_avg batch statistics into per-channel scale/shift.
    # (conv1 bias b1 needs no special handling: with bias-free y1 statistics,
    #  scale1*y1_nb + (be1 - mean1_nb*scale1) == BN1(y1_nb + b1) exactly.)
    cnt = float(N * H * W)
    sums = jnp.sum(stats, axis=0)                                    # (4, Cout)
    mean1, meana = sums[0] / cnt, sums[2] / cnt
    var1 = jnp.maximum(sums[1] / cnt - mean1 * mean1, 0.0)
    vara = jnp.maximum(sums[3] / cnt - meana * meana, 0.0)
    g1, be1 = params['bn1']
    ga, ba = params['bn_avg']
    scale1 = g1 * lax.rsqrt(var1 + EPS)
    shift1 = be1 - mean1 * scale1
    scalea = ga * lax.rsqrt(vara + EPS)
    shifta = ba - meana * scalea

    # ---- pass 2: BN1+ReLU+conv3x3, BN_avg identity, residual, maxpool -------
    out, pooled = pl.pallas_call(
        pass2_kernel,
        out_shape=(jax.ShapeDtypeStruct((N, H, W, Cout), jnp.float32),
                   jax.ShapeDtypeStruct((N, H // 2, W // 2, Cout), jnp.float32)),
        grid=(N,),
        in_specs=[img_spec(Cout), img_spec(Cout),
                  _const_spec((1, 1, Cout)), _const_spec((1, 1, Cout)),
                  _const_spec((9 * Cout, Cout)), _const_spec((1, 1, Cout)),
                  _const_spec((1, 1, Cout)), _const_spec((1, 1, Cout))],
        out_specs=(img_spec(Cout),
                   pl.BlockSpec((None, H // 2, W // 2, Cout),
                                lambda i: (i, 0, 0, 0))),
        scratch_shapes=[pltpu.VMEM((H + 2, W + 2, Cout), jnp.bfloat16)],
        compiler_params=compiler_params,
    )(y1, ident, _vec(scale1), _vec(shift1), w2, _vec(params['b2']),
      _vec(scalea), _vec(shifta))

    return (jnp.transpose(pooled, (0, 3, 1, 2)),
            jnp.transpose(out, (0, 3, 1, 2)))


# --------------------------- parameters & reference ----------------------------

def init_params(key, cin, cout):
    ks = jax.random.split(key, 8)

    def bn_params(k, c):
        k1, k2 = jax.random.split(k)
        gamma = 1.0 + 0.1 * jax.random.normal(k1, (c,), jnp.float32)
        beta = 0.1 * jax.random.normal(k2, (c,), jnp.float32)
        return (gamma, beta)

    return {
        'w_avg': 0.3 * jax.random.normal(ks[0], (cout, cin, 1, 1), jnp.float32),
        'bn_avg': bn_params(ks[1], cout),
        'bn0': bn_params(ks[2], cin),
        'w1': 0.3 * jax.random.normal(ks[3], (cout, cin, 3, 3), jnp.float32),
        'b1': 0.1 * jax.random.normal(ks[4], (cout,), jnp.float32),
        'bn1': bn_params(ks[5], cout),
        'w2': 0.3 * jax.random.normal(ks[6], (cout, cout, 3, 3), jnp.float32),
        'b2': 0.1 * jax.random.normal(ks[7], (cout,), jnp.float32),
    }


def reference(x, params):
    """Pure-JAX NCHW reference mirroring the PyTorch forward (training-mode BN)."""
    def bn(y, p):
        g, b = p
        mean = jnp.mean(y, axis=(0, 2, 3), keepdims=True)
        var = jnp.mean(jnp.square(y - mean), axis=(0, 2, 3), keepdims=True)
        return (y - mean) * (g[None, :, None, None] *
                             lax.rsqrt(var + EPS)) + b[None, :, None, None]

    def conv(y, w, pad):
        return lax.conv_general_dilated(
            y, w, (1, 1), [(pad, pad), (pad, pad)],
            dimension_numbers=('NCHW', 'OIHW', 'NCHW'),
            precision=lax.Precision.HIGHEST)

    ident = bn(conv(x, params['w_avg'], 0), params['bn_avg'])
    t = jax.nn.relu(bn(x, params['bn0']))
    y1 = conv(t, params['w1'], 1) + params['b1'][None, :, None, None]
    u = jax.nn.relu(bn(y1, params['bn1']))
    y2 = conv(u, params['w2'], 1) + params['b2'][None, :, None, None]
    out = y2 + ident
    pooled = lax.reduce_window(out, -jnp.inf, lax.max,
                               (1, 1, 2, 2), (1, 1, 2, 2), 'VALID')
    return pooled, out


if __name__ == "__main__":
    key = jax.random.PRNGKey(0)
    kx, kp = jax.random.split(key)
    N, Cin, Cout, H, W = 2, 4, 8, 16, 16

    x = jax.random.normal(kx, (N, Cin, H, W), jnp.float32)
    params = init_params(kp, Cin, Cout)

    pooled, out = jax.block_until_ready(preact_resblock(x, params))
    pooled_r, out_r = reference(x, params)

    assert out.shape == (N, Cout, H, W) and pooled.shape == (N, Cout, H // 2, W // 2)
    # bf16 MXU operands and bf16 inter-pass intermediates (per TPU perf
    # guidance) with f32 accumulation: compare against the f32 HIGHEST-precision
    # reference with a bf16-appropriate bound.
    assert bool(jnp.allclose(out, out_r, atol=1e-1, rtol=5e-2))
    assert bool(jnp.allclose(pooled, pooled_r, atol=1e-1, rtol=5e-2))
    print("KERNEL_OK")
</pallas_src>

<mosaic_0001>
module attributes {stable_mosaic.version = 11 : i64} {
  func.func @pass1_kernel(%arg0: i32, %arg1: memref<1x16x16x4xf32, #tpu.memory_space<vmem>>, %arg2: memref<1x1x4xf32, #tpu.memory_space<vmem>>, %arg3: memref<1x1x4xf32, #tpu.memory_space<vmem>>, %arg4: memref<36x8xbf16, #tpu.memory_space<vmem>>, %arg5: memref<4x8xbf16, #tpu.memory_space<vmem>>, %arg6: memref<1x16x16x8xbf16, #tpu.memory_space<vmem>>, %arg7: memref<1x16x16x8xbf16, #tpu.memory_space<vmem>>, %arg8: memref<1x4x8xf32, #tpu.memory_space<vmem>>, %arg9: memref<18x18x4xbf16, #tpu.memory_space<vmem>>) attributes {dimension_semantics = [#tpu.dimension_semantics<parallel>], iteration_bounds = array<i64: 2>, scalar_prefetch = 0 : i64, scratch_operands = 1 : i64, tpu.core_type = #tpu.core_type<tc>, window_params = [{transform_indices = @transform_0, window_bounds = array<i64: 1, 16, 16, 4>}, {pipeline_mode = #tpu.pipeline_mode<synchronous>, transform_indices = @transform_1, window_bounds = array<i64: 1, 1, 4>}, {pipeline_mode = #tpu.pipeline_mode<synchronous>, transform_indices = @transform_2, window_bounds = array<i64: 1, 1, 4>}, {pipeline_mode = #tpu.pipeline_mode<synchronous>, transform_indices = @transform_3, window_bounds = array<i64: 36, 8>}, {pipeline_mode = #tpu.pipeline_mode<synchronous>, transform_indices = @transform_4, window_bounds = array<i64: 4, 8>}, {transform_indices = @transform_5, window_bounds = array<i64: 1, 16, 16, 8>}, {transform_indices = @transform_6, window_bounds = array<i64: 1, 16, 16, 8>}, {transform_indices = @transform_7, window_bounds = array<i64: 1, 4, 8>}]} {
    %c0 = arith.constant 0 : index
    %c0_0 = arith.constant 0 : index
    %c0_1 = arith.constant 0 : index
    %c0_2 = arith.constant 0 : index
    %0 = vector.load %arg1[%c0, %c0_0, %c0_1, %c0_2] : memref<1x16x16x4xf32, #tpu.memory_space<vmem>>, vector<1x16x16x4xf32>
    %1 = vector.shape_cast %0 : vector<1x16x16x4xf32> to vector<16x16x4xf32>
    %2 = vector.shape_cast %1 : vector<16x16x4xf32> to vector<256x4xf32>
    %3 = arith.truncf %2 : vector<256x4xf32> to vector<256x4xbf16>
    %c0_3 = arith.constant 0 : index
    %c0_4 = arith.constant 0 : index
    %4 = vector.load %arg5[%c0_3, %c0_4] : memref<4x8xbf16, #tpu.memory_space<vmem>>, vector<4x8xbf16>
    %cst = arith.constant dense<0.000000e+00> : vector<256x8xf32>
    %5 = tpu.matmul %3, %4, %cst {dimension_numbers = #tpu.dot_dimension_numbers<[1], [0], [0], [1], [0, 0, 1, 1], [], []>} : vector<256x4xbf16>, vector<4x8xbf16>, vector<256x8xf32> -> vector<256x8xf32>
    %6 = vector.shape_cast %5 : vector<256x8xf32> to vector<16x16x8xf32>
    %c0_5 = arith.constant 0 : index
    %c0_6 = arith.constant 0 : index
    %c0_7 = arith.constant 0 : index
    %7 = vector.load %arg2[%c0_5, %c0_6, %c0_7] : memref<1x1x4xf32, #tpu.memory_space<vmem>>, vector<1x1x4xf32>
    %8 = vector.broadcast %7 : vector<1x1x4xf32> to vector<16x16x4xf32>
    %9 = arith.mulf %1, %8 : vector<16x16x4xf32>
    %c0_8 = arith.constant 0 : index
    %c0_9 = arith.constant 0 : index
    %c0_10 = arith.constant 0 : index
    %10 = vector.load %arg3[%c0_8, %c0_9, %c0_10] : memref<1x1x4xf32, #tpu.memory_space<vmem>>, vector<1x1x4xf32>
    %11 = vector.broadcast %10 : vector<1x1x4xf32> to vector<16x16x4xf32>
    %12 = arith.addf %9, %11 : vector<16x16x4xf32>
    %cst_11 = arith.constant 0.000000e+00 : f32
    %13 = vector.broadcast %cst_11 : f32 to vector<16x16x4xf32>
    %14 = arith.maximumf %12, %13 : vector<16x16x4xf32>
    %cst_12 = arith.constant 0.000000e+00 : bf16
    %15 = vector.broadcast %cst_12 : bf16 to vector<1x18x4xbf16>
    %cst_13 = arith.constant 0.000000e+00 : bf16
    %16 = vector.broadcast %cst_13 : bf16 to vector<18x1x4xbf16>
    %c0_14 = arith.constant 0 : index
    %c0_15 = arith.constant 0 : index
    %c0_16 = arith.constant 0 : index
    %17 = vector.load %arg9[%c0_14, %c0_15, %c0_16] : memref<18x18x4xbf16, #tpu.memory_space<vmem>>, vector<1x18x4xbf16>
    tpu.vector_store %arg9[%c0_14, %c0_15, %c0_16], %15 {strides = array<i32>} : memref<18x18x4xbf16, #tpu.memory_space<vmem>>, vector<1x18x4xbf16>,
    %c17 = arith.constant 17 : index
    %c0_17 = arith.constant 0 : index
    %c0_18 = arith.constant 0 : index
    %18 = vector.load %arg9[%c17, %c0_17, %c0_18] : memref<18x18x4xbf16, #tpu.memory_space<vmem>>, vector<1x18x4xbf16>
    tpu.vector_store %arg9[%c17, %c0_17, %c0_18], %15 {strides = array<i32>} : memref<18x18x4xbf16, #tpu.memory_space<vmem>>, vector<1x18x4xbf16>,
    %c0_19 = arith.constant 0 : index
    %c0_20 = arith.constant 0 : index
    %c0_21 = arith.constant 0 : index
    %19 = vector.load %arg9[%c0_19, %c0_20, %c0_21] : memref<18x18x4xbf16, #tpu.memory_space<vmem>>, vector<18x1x4xbf16>
    tpu.vector_store %arg9[%c0_19, %c0_20, %c0_21], %16 {strides = array<i32>} : memref<18x18x4xbf16, #tpu.memory_space<vmem>>, vector<18x1x4xbf16>,
    %c0_22 = arith.constant 0 : index
    %c17_23 = arith.constant 17 : index
    %c0_24 = arith.constant 0 : index
    %20 = vector.load %arg9[%c0_22, %c17_23, %c0_24] : memref<18x18x4xbf16, #tpu.memory_space<vmem>>, vector<18x1x4xbf16>
    tpu.vector_store %arg9[%c0_22, %c17_23, %c0_24], %16 {strides = array<i32>} : memref<18x18x4xbf16, #tpu.memory_space<vmem>>, vector<18x1x4xbf16>,
    %21 = arith.truncf %14 : vector<16x16x4xf32> to vector<16x16x4xbf16>
    %c1 = arith.constant 1 : index
    %c1_25 = arith.constant 1 : index
    %c0_26 = arith.constant 0 : index
    %22 = vector.load %arg9[%c1, %c1_25, %c0_26] : memref<18x18x4xbf16, #tpu.memory_space<vmem>>, vector<16x16x4xbf16>
    tpu.vector_store %arg9[%c1, %c1_25, %c0_26], %21 {strides = array<i32>} : memref<18x18x4xbf16, #tpu.memory_space<vmem>>, vector<16x16x4xbf16>,
    %c0_27 = arith.constant 0 : index
    %c0_28 = arith.constant 0 : index
    %c0_29 = arith.constant 0 : index
    %23 = vector.load %arg9[%c0_27, %c0_28, %c0_29] : memref<18x18x4xbf16, #tpu.memory_space<vmem>>, vector<16x16x4xbf16>
    %c0_30 = arith.constant 0 : index
    %c1_31 = arith.constant 1 : index
    %c0_32 = arith.constant 0 : index
    %24 = vector.load %arg9[%c0_30, %c1_31, %c0_32] : memref<18x18x4xbf16, #tpu.memory_space<vmem>>, vector<16x16x4xbf16>
    %c0_33 = arith.constant 0 : index
    %c2 = arith.constant 2 : index
    %c0_34 = arith.constant 0 : index
    %25 = vector.load %arg9[%c0_33, %c2, %c0_34] : memref<18x18x4xbf16, #tpu.memory_space<vmem>>, vector<16x16x4xbf16>
    %c1_35 = arith.constant 1 : index
    %c0_36 = arith.constant 0 : index
    %c0_37 = arith.constant 0 : index
    %26 = vector.load %arg9[%c1_35, %c0_36, %c0_37] : memref<18x18x4xbf16, #tpu.memory_space<vmem>>, vector<16x16x4xbf16>
    %c1_38 = arith.constant 1 : index
    %c1_39 = arith.constant 1 : index
    %c0_40 = arith.constant 0 : index
    %27 = vector.load %arg9[%c1_38, %c1_39, %c0_40] : memref<18x18x4xbf16, #tpu.memory_space<vmem>>, vector<16x16x4xbf16>
    %c1_41 = arith.constant 1 : index
    %c2_42 = arith.constant 2 : index
    %c0_43 = arith.constant 0 : index
    %28 = vector.load %arg9[%c1_41, %c2_42, %c0_43] : memref<18x18x4xbf16, #tpu.memory_space<vmem>>, vector<16x16x4xbf16>
    %c2_44 = arith.constant 2 : index
    %c0_45 = arith.constant 0 : index
    %c0_46 = arith.constant 0 : index
    %29 = vector.load %arg9[%c2_44, %c0_45, %c0_46] : memref<18x18x4xbf16, #tpu.memory_space<vmem>>, vector<16x16x4xbf16>
    %c2_47 = arith.constant 2 : index
    %c1_48 = arith.constant 1 : index
    %c0_49 = arith.constant 0 : index
    %30 = vector.load %arg9[%c2_47, %c1_48, %c0_49] : memref<18x18x4xbf16, #tpu.memory_space<vmem>>, vector<16x16x4xbf16>
    %c2_50 = arith.constant 2 : index
    %c2_51 = arith.constant 2 : index
    %c0_52 = arith.constant 0 : index
    %31 = vector.load %arg9[%c2_50, %c2_51, %c0_52] : memref<18x18x4xbf16, #tpu.memory_space<vmem>>, vector<16x16x4xbf16>
    %32 = tpu.concatenate %23, %24, %25, %26, %27, %28, %29, %30, %31 in 2 : vector<16x16x4xbf16>, vector<16x16x4xbf16>, vector<16x16x4xbf16>, vector<16x16x4xbf16>, vector<16x16x4xbf16>, vector<16x16x4xbf16>, vector<16x16x4xbf16>, vector<16x16x4xbf16>, vector<16x16x4xbf16> -> vector<16x16x36xbf16>
    %33 = vector.shape_cast %32 : vector<16x16x36xbf16> to vector<256x36xbf16>
    %c0_53 = arith.constant 0 : index
    %c0_54 = arith.constant 0 : index
    %34 = vector.load %arg4[%c0_53, %c0_54] : memref<36x8xbf16, #tpu.memory_space<vmem>>, vector<36x8xbf16>
    %cst_55 = arith.constant dense<0.000000e+00> : vector<256x8xf32>
    %35 = tpu.matmul %33, %34, %cst_55 {dimension_numbers = #tpu.dot_dimension_numbers<[1], [0], [0], [1], [0, 0, 1, 1], [], []>} : vector<256x36xbf16>, vector<36x8xbf16>, vector<256x8xf32> -> vector<256x8xf32>
    %36 = vector.shape_cast %35 : vector<256x8xf32> to vector<16x16x8xf32>
    %37 = arith.truncf %36 : vector<16x16x8xf32> to vector<16x16x8xbf16>
    %c0_56 = arith.constant 0 : index
    %c0_57 = arith.constant 0 : index
    %c0_58 = arith.constant 0 : index
    %c0_59 = arith.constant 0 : index
    %38 = vector.load %arg6[%c0_56, %c0_57, %c0_58, %c0_59] : memref<1x16x16x8xbf16, #tpu.memory_space<vmem>>, vector<1x16x16x8xbf16>
    %39 = vector.shape_cast %38 : vector<1x16x16x8xbf16> to vector<16x16x8xbf16>
    %40 = vector.shape_cast %37 : vector<16x16x8xbf16> to vector<1x16x16x8xbf16>
    tpu.vector_store %arg6[%c0_56, %c0_57, %c0_58, %c0_59], %40 {strides = array<i32>} : memref<1x16x16x8xbf16, #tpu.memory_space<vmem>>, vector<1x16x16x8xbf16>,
    %41 = arith.truncf %6 : vector<16x16x8xf32> to vector<16x16x8xbf16>
    %c0_60 = arith.constant 0 : index
    %c0_61 = arith.constant 0 : index
    %c0_62 = arith.constant 0 : index
    %c0_63 = arith.constant 0 : index
    %42 = vector.load %arg7[%c0_60, %c0_61, %c0_62, %c0_63] : memref<1x16x16x8xbf16, #tpu.memory_space<vmem>>, vector<1x16x16x8xbf16>
    %43 = vector.shape_cast %42 : vector<1x16x16x8xbf16> to vector<16x16x8xbf16>
    %44 = vector.shape_cast %41 : vector<16x16x8xbf16> to vector<1x16x16x8xbf16>
    tpu.vector_store %arg7[%c0_60, %c0_61, %c0_62, %c0_63], %44 {strides = array<i32>} : memref<1x16x16x8xbf16, #tpu.memory_space<vmem>>, vector<1x16x16x8xbf16>,
    %45 = vector.shape_cast %36 : vector<16x16x8xf32> to vector<256x8xf32>
    %46 = vector.shape_cast %6 : vector<16x16x8xf32> to vector<256x8xf32>
    %cst_64 = arith.constant dense<0.000000e+00> : vector<8xf32>
    %47 = vector.multi_reduction <add>, %45, %cst_64 [0] : vector<256x8xf32> to vector<8xf32>
    %48 = vector.shape_cast %47 : vector<8xf32> to vector<1x8xf32>
    %49 = arith.mulf %45, %45 : vector<256x8xf32>
    %cst_65 = arith.constant dense<0.000000e+00> : vector<8xf32>
    %50 = vector.multi_reduction <add>, %49, %cst_65 [0] : vector<256x8xf32> to vector<8xf32>
    %51 = vector.shape_cast %50 : vector<8xf32> to vector<1x8xf32>
    %cst_66 = arith.constant dense<0.000000e+00> : vector<8xf32>
    %52 = vector.multi_reduction <add>, %46, %cst_66 [0] : vector<256x8xf32> to vector<8xf32>
    %53 = vector.shape_cast %52 : vector<8xf32> to vector<1x8xf32>
    %54 = arith.mulf %46, %46 : vector<256x8xf32>
    %cst_67 = arith.constant dense<0.000000e+00> : vector<8xf32>
    %55 = vector.multi_reduction <add>, %54, %cst_67 [0] : vector<256x8xf32> to vector<8xf32>
    %56 = vector.shape_cast %55 : vector<8xf32> to vector<1x8xf32>
    %57 = tpu.concatenate %48, %51, %53, %56 in 0 : vector<1x8xf32>, vector<1x8xf32>, vector<1x8xf32>, vector<1x8xf32> -> vector<4x8xf32>
    %c0_68 = arith.constant 0 : index
    %c0_69 = arith.constant 0 : index
    %c0_70 = arith.constant 0 : index
    %58 = vector.load %arg8[%c0_68, %c0_69, %c0_70] : memref<1x4x8xf32, #tpu.memory_space<vmem>>, vector<1x4x8xf32>
    %59 = vector.shape_cast %58 : vector<1x4x8xf32> to vector<4x8xf32>
    %60 = vector.shape_cast %57 : vector<4x8xf32> to vector<1x4x8xf32>
    tpu.vector_store %arg8[%c0_68, %c0_69, %c0_70], %60 {strides = array<i32>} : memref<1x4x8xf32, #tpu.memory_space<vmem>>, vector<1x4x8xf32>,
    return
  }
  func.func @transform_0(%arg0: i32) -> (i32, i32, i32, i32) {
    %c0_i32 = arith.constant 0 : i32
    %c0_i32_0 = arith.constant 0 : i32
    %c0_i32_1 = arith.constant 0 : i32
    %c0_i32_2 = arith.constant 0 : i32
    return %arg0, %c0_i32, %c0_i32_0, %c0_i32_1 : i32, i32, i32, i32
  }
  func.func @transform_1(%arg0: i32) -> (i32, i32, i32) {
    %c0_i32 = arith.constant 0 : i32
    %c0_i32_0 = arith.constant 0 : i32
    %c0_i32_1 = arith.constant 0 : i32
    %c0_i32_2 = arith.constant 0 : i32
    return %c0_i32, %c0_i32_0, %c0_i32_1 : i32, i32, i32
  }
  func.func @transform_2(%arg0: i32) -> (i32, i32, i32) {
    %c0_i32 = arith.constant 0 : i32
    %c0_i32_0 = arith.constant 0 : i32
    %c0_i32_1 = arith.constant 0 : i32
    %c0_i32_2 = arith.constant 0 : i32
    return %c0_i32, %c0_i32_0, %c0_i32_1 : i32, i32, i32
  }
  func.func @transform_3(%arg0: i32) -> (i32, i32) {
    %c0_i32 = arith.constant 0 : i32
    %c0_i32_0 = arith.constant 0 : i32
    %c0_i32_1 = arith.constant 0 : i32
    return %c0_i32, %c0_i32_0 : i32, i32
  }
  func.func @transform_4(%arg0: i32) -> (i32, i32) {
    %c0_i32 = arith.constant 0 : i32
    %c0_i32_0 = arith.constant 0 : i32
    %c0_i32_1 = arith.constant 0 : i32
    return %c0_i32, %c0_i32_0 : i32, i32
  }
  func.func @transform_5(%arg0: i32) -> (i32, i32, i32, i32) {
    %c0_i32 = arith.constant 0 : i32
    %c0_i32_0 = arith.constant 0 : i32
    %c0_i32_1 = arith.constant 0 : i32
    %c0_i32_2 = arith.constant 0 : i32
    return %arg0, %c0_i32, %c0_i32_0, %c0_i32_1 : i32, i32, i32, i32
  }
  func.func @transform_6(%arg0: i32) -> (i32, i32, i32, i32) {
    %c0_i32 = arith.constant 0 : i32
    %c0_i32_0 = arith.constant 0 : i32
    %c0_i32_1 = arith.constant 0 : i32
    %c0_i32_2 = arith.constant 0 : i32
    return %arg0, %c0_i32, %c0_i32_0, %c0_i32_1 : i32, i32, i32, i32
  }
  func.func @transform_7(%arg0: i32) -> (i32, i32, i32) {
    %c0_i32 = arith.constant 0 : i32
    %c0_i32_0 = arith.constant 0 : i32
    %c0_i32_1 = arith.constant 0 : i32
    return %arg0, %c0_i32, %c0_i32_0 : i32, i32, i32
  }
}

module attributes {stable_mosaic.version = 11 : i64} {
  func.func @pass2_kernel(%arg0: i32, %arg1: memref<1x16x16x8xbf16, #tpu.memory_space<vmem>>, %arg2: memref<1x16x16x8xbf16, #tpu.memory_space<vmem>>, %arg3: memref<1x1x8xf32, #tpu.memory_space<vmem>>, %arg4: memref<1x1x8xf32, #tpu.memory_space<vmem>>, %arg5: memref<72x8xbf16, #tpu.memory_space<vmem>>, %arg6: memref<1x1x8xf32, #tpu.memory_space<vmem>>, %arg7: memref<1x1x8xf32, #tpu.memory_space<vmem>>, %arg8: memref<1x1x8xf32, #tpu.memory_space<vmem>>, %arg9: memref<1x16x16x8xf32, #tpu.memory_space<vmem>>, %arg10: memref<1x8x8x8xf32, #tpu.memory_space<vmem>>, %arg11: memref<18x18x8xbf16, #tpu.memory_space<vmem>>) attributes {dimension_semantics = [#tpu.dimension_semantics<parallel>], iteration_bounds = array<i64: 2>, scalar_prefetch = 0 : i64, scratch_operands = 1 : i64, tpu.core_type = #tpu.core_type<tc>, window_params = [{transform_indices = @transform_0, window_bounds = array<i64: 1, 16, 16, 8>}, {transform_indices = @transform_1, window_bounds = array<i64: 1, 16, 16, 8>}, {pipeline_mode = #tpu.pipeline_mode<synchronous>, transform_indices = @transform_2, window_bounds = array<i64: 1, 1, 8>}, {pipeline_mode = #tpu.pipeline_mode<synchronous>, transform_indices = @transform_3, window_bounds = array<i64: 1, 1, 8>}, {pipeline_mode = #tpu.pipeline_mode<synchronous>, transform_indices = @transform_4, window_bounds = array<i64: 72, 8>}, {pipeline_mode = #tpu.pipeline_mode<synchronous>, transform_indices = @transform_5, window_bounds = array<i64: 1, 1, 8>}, {pipeline_mode = #tpu.pipeline_mode<synchronous>, transform_indices = @transform_6, window_bounds = array<i64: 1, 1, 8>}, {pipeline_mode = #tpu.pipeline_mode<synchronous>, transform_indices = @transform_7, window_bounds = array<i64: 1, 1, 8>}, {transform_indices = @transform_8, window_bounds = array<i64: 1, 16, 16, 8>}, {transform_indices = @transform_9, window_bounds = array<i64: 1, 8, 8, 8>}]} {
    %c0 = arith.constant 0 : index
    %c0_0 = arith.constant 0 : index
    %c0_1 = arith.constant 0 : index
    %c0_2 = arith.constant 0 : index
    %0 = vector.load %arg1[%c0, %c0_0, %c0_1, %c0_2] : memref<1x16x16x8xbf16, #tpu.memory_space<vmem>>, vector<1x16x16x8xbf16>
    %1 = vector.shape_cast %0 : vector<1x16x16x8xbf16> to vector<16x16x8xbf16>
    %2 = arith.extf %1 : vector<16x16x8xbf16> to vector<16x16x8xf32>
    %c0_3 = arith.constant 0 : index
    %c0_4 = arith.constant 0 : index
    %c0_5 = arith.constant 0 : index
    %3 = vector.load %arg3[%c0_3, %c0_4, %c0_5] : memref<1x1x8xf32, #tpu.memory_space<vmem>>, vector<1x1x8xf32>
    %4 = vector.broadcast %3 : vector<1x1x8xf32> to vector<16x16x8xf32>
    %5 = arith.mulf %2, %4 : vector<16x16x8xf32>
    %c0_6 = arith.constant 0 : index
    %c0_7 = arith.constant 0 : index
    %c0_8 = arith.constant 0 : index
    %6 = vector.load %arg4[%c0_6, %c0_7, %c0_8] : memref<1x1x8xf32, #tpu.memory_space<vmem>>, vector<1x1x8xf32>
    %7 = vector.broadcast %6 : vector<1x1x8xf32> to vector<16x16x8xf32>
    %8 = arith.addf %5, %7 : vector<16x16x8xf32>
    %cst = arith.constant 0.000000e+00 : f32
    %9 = vector.broadcast %cst : f32 to vector<16x16x8xf32>
    %10 = arith.maximumf %8, %9 : vector<16x16x8xf32>
    %cst_9 = arith.constant 0.000000e+00 : bf16
    %11 = vector.broadcast %cst_9 : bf16 to vector<1x18x8xbf16>
    %cst_10 = arith.constant 0.000000e+00 : bf16
    %12 = vector.broadcast %cst_10 : bf16 to vector<18x1x8xbf16>
    %c0_11 = arith.constant 0 : index
    %c0_12 = arith.constant 0 : index
    %c0_13 = arith.constant 0 : index
    %13 = vector.load %arg11[%c0_11, %c0_12, %c0_13] : memref<18x18x8xbf16, #tpu.memory_space<vmem>>, vector<1x18x8xbf16>
    tpu.vector_store %arg11[%c0_11, %c0_12, %c0_13], %11 {strides = array<i32>} : memref<18x18x8xbf16, #tpu.memory_space<vmem>>, vector<1x18x8xbf16>,
    %c17 = arith.constant 17 : index
    %c0_14 = arith.constant 0 : index
    %c0_15 = arith.constant 0 : index
    %14 = vector.load %arg11[%c17, %c0_14, %c0_15] : memref<18x18x8xbf16, #tpu.memory_space<vmem>>, vector<1x18x8xbf16>
    tpu.vector_store %arg11[%c17, %c0_14, %c0_15], %11 {strides = array<i32>} : memref<18x18x8xbf16, #tpu.memory_space<vmem>>, vector<1x18x8xbf16>,
    %c0_16 = arith.constant 0 : index
    %c0_17 = arith.constant 0 : index
    %c0_18 = arith.constant 0 : index
    %15 = vector.load %arg11[%c0_16, %c0_17, %c0_18] : memref<18x18x8xbf16, #tpu.memory_space<vmem>>, vector<18x1x8xbf16>
    tpu.vector_store %arg11[%c0_16, %c0_17, %c0_18], %12 {strides = array<i32>} : memref<18x18x8xbf16, #tpu.memory_space<vmem>>, vector<18x1x8xbf16>,
    %c0_19 = arith.constant 0 : index
    %c17_20 = arith.constant 17 : index
    %c0_21 = arith.constant 0 : index
    %16 = vector.load %arg11[%c0_19, %c17_20, %c0_21] : memref<18x18x8xbf16, #tpu.memory_space<vmem>>, vector<18x1x8xbf16>
    tpu.vector_store %arg11[%c0_19, %c17_20, %c0_21], %12 {strides = array<i32>} : memref<18x18x8xbf16, #tpu.memory_space<vmem>>, vector<18x1x8xbf16>,
    %17 = arith.truncf %10 : vector<16x16x8xf32> to vector<16x16x8xbf16>
    %c1 = arith.constant 1 : index
    %c1_22 = arith.constant 1 : index
    %c0_23 = arith.constant 0 : index
    %18 = vector.load %arg11[%c1, %c1_22, %c0_23] : memref<18x18x8xbf16, #tpu.memory_space<vmem>>, vector<16x16x8xbf16>
    tpu.vector_store %arg11[%c1, %c1_22, %c0_23], %17 {strides = array<i32>} : memref<18x18x8xbf16, #tpu.memory_space<vmem>>, vector<16x16x8xbf16>,
    %c0_24 = arith.constant 0 : index
    %c0_25 = arith.constant 0 : index
    %c0_26 = arith.constant 0 : index
    %19 = vector.load %arg11[%c0_24, %c0_25, %c0_26] : memref<18x18x8xbf16, #tpu.memory_space<vmem>>, vector<16x16x8xbf16>
    %c0_27 = arith.constant 0 : index
    %c1_28 = arith.constant 1 : index
    %c0_29 = arith.constant 0 : index
    %20 = vector.load %arg11[%c0_27, %c1_28, %c0_29] : memref<18x18x8xbf16, #tpu.memory_space<vmem>>, vector<16x16x8xbf16>
    %c0_30 = arith.constant 0 : index
    %c2 = arith.constant 2 : index
    %c0_31 = arith.constant 0 : index
    %21 = vector.load %arg11[%c0_30, %c2, %c0_31] : memref<18x18x8xbf16, #tpu.memory_space<vmem>>, vector<16x16x8xbf16>
    %c1_32 = arith.constant 1 : index
    %c0_33 = arith.constant 0 : index
    %c0_34 = arith.constant 0 : index
    %22 = vector.load %arg11[%c1_32, %c0_33, %c0_34] : memref<18x18x8xbf16, #tpu.memory_space<vmem>>, vector<16x16x8xbf16>
    %c1_35 = arith.constant 1 : index
    %c1_36 = arith.constant 1 : index
    %c0_37 = arith.constant 0 : index
    %23 = vector.load %arg11[%c1_35, %c1_36, %c0_37] : memref<18x18x8xbf16, #tpu.memory_space<vmem>>, vector<16x16x8xbf16>
    %c1_38 = arith.constant 1 : index
    %c2_39 = arith.constant 2 : index
    %c0_40 = arith.constant 0 : index
    %24 = vector.load %arg11[%c1_38, %c2_39, %c0_40] : memref<18x18x8xbf16, #tpu.memory_space<vmem>>, vector<16x16x8xbf16>
    %c2_41 = arith.constant 2 : index
    %c0_42 = arith.constant 0 : index
    %c0_43 = arith.constant 0 : index
    %25 = vector.load %arg11[%c2_41, %c0_42, %c0_43] : memref<18x18x8xbf16, #tpu.memory_space<vmem>>, vector<16x16x8xbf16>
    %c2_44 = arith.constant 2 : index
    %c1_45 = arith.constant 1 : index
    %c0_46 = arith.constant 0 : index
    %26 = vector.load %arg11[%c2_44, %c1_45, %c0_46] : memref<18x18x8xbf16, #tpu.memory_space<vmem>>, vector<16x16x8xbf16>
    %c2_47 = arith.constant 2 : index
    %c2_48 = arith.constant 2 : index
    %c0_49 = arith.constant 0 : index
    %27 = vector.load %arg11[%c2_47, %c2_48, %c0_49] : memref<18x18x8xbf16, #tpu.memory_space<vmem>>, vector<16x16x8xbf16>
    %28 = tpu.concatenate %19, %20, %21, %22, %23, %24, %25, %26, %27 in 2 : vector<16x16x8xbf16>, vector<16x16x8xbf16>, vector<16x16x8xbf16>, vector<16x16x8xbf16>, vector<16x16x8xbf16>, vector<16x16x8xbf16>, vector<16x16x8xbf16>, vector<16x16x8xbf16>, vector<16x16x8xbf16> -> vector<16x16x72xbf16>
    %29 = vector.shape_cast %28 : vector<16x16x72xbf16> to vector<256x72xbf16>
    %c0_50 = arith.constant 0 : index
    %c0_51 = arith.constant 0 : index
    %30 = vector.load %arg5[%c0_50, %c0_51] : memref<72x8xbf16, #tpu.memory_space<vmem>>, vector<72x8xbf16>
    %cst_52 = arith.constant dense<0.000000e+00> : vector<256x8xf32>
    %31 = tpu.matmul %29, %30, %cst_52 {dimension_numbers = #tpu.dot_dimension_numbers<[1], [0], [0], [1], [0, 0, 1, 1], [], []>} : vector<256x72xbf16>, vector<72x8xbf16>, vector<256x8xf32> -> vector<256x8xf32>
    %32 = vector.shape_cast %31 : vector<256x8xf32> to vector<16x16x8xf32>
    %c0_53 = arith.constant 0 : index
    %c0_54 = arith.constant 0 : index
    %c0_55 = arith.constant 0 : index
    %33 = vector.load %arg6[%c0_53, %c0_54, %c0_55] : memref<1x1x8xf32, #tpu.memory_space<vmem>>, vector<1x1x8xf32>
    %34 = vector.broadcast %33 : vector<1x1x8xf32> to vector<16x16x8xf32>
    %35 = arith.addf %32, %34 : vector<16x16x8xf32>
    %c0_56 = arith.constant 0 : index
    %c0_57 = arith.constant 0 : index
    %c0_58 = arith.constant 0 : index
    %c0_59 = arith.constant 0 : index
    %36 = vector.load %arg2[%c0_56, %c0_57, %c0_58, %c0_59] : memref<1x16x16x8xbf16, #tpu.memory_space<vmem>>, vector<1x16x16x8xbf16>
    %37 = vector.shape_cast %36 : vector<1x16x16x8xbf16> to vector<16x16x8xbf16>
    %38 = arith.extf %37 : vector<16x16x8xbf16> to vector<16x16x8xf32>
    %c0_60 = arith.constant 0 : index
    %c0_61 = arith.constant 0 : index
    %c0_62 = arith.constant 0 : index
    %39 = vector.load %arg7[%c0_60, %c0_61, %c0_62] : memref<1x1x8xf32, #tpu.memory_space<vmem>>, vector<1x1x8xf32>
    %40 = vector.broadcast %39 : vector<1x1x8xf32> to vector<16x16x8xf32>
    %41 = arith.mulf %38, %40 : vector<16x16x8xf32>
    %c0_63 = arith.constant 0 : index
    %c0_64 = arith.constant 0 : index
    %c0_65 = arith.constant 0 : index
    %42 = vector.load %arg8[%c0_63, %c0_64, %c0_65] : memref<1x1x8xf32, #tpu.memory_space<vmem>>, vector<1x1x8xf32>
    %43 = vector.broadcast %42 : vector<1x1x8xf32> to vector<16x16x8xf32>
    %44 = arith.addf %41, %43 : vector<16x16x8xf32>
    %45 = arith.addf %35, %44 : vector<16x16x8xf32>
    %c0_66 = arith.constant 0 : index
    %c0_67 = arith.constant 0 : index
    %c0_68 = arith.constant 0 : index
    %c0_69 = arith.constant 0 : index
    %46 = vector.load %arg9[%c0_66, %c0_67, %c0_68, %c0_69] : memref<1x16x16x8xf32, #tpu.memory_space<vmem>>, vector<1x16x16x8xf32>
    %47 = vector.shape_cast %46 : vector<1x16x16x8xf32> to vector<16x16x8xf32>
    %48 = vector.shape_cast %45 : vector<16x16x8xf32> to vector<1x16x16x8xf32>
    tpu.vector_store %arg9[%c0_66, %c0_67, %c0_68, %c0_69], %48 {strides = array<i32>} : memref<1x16x16x8xf32, #tpu.memory_space<vmem>>, vector<1x16x16x8xf32>,
    %49 = vector.shape_cast %45 : vector<16x16x8xf32> to vector<16x8x2x8xf32>
    %cst_70 = arith.constant dense<0xFF800000> : vector<16x8x8xf32>
    %50 = vector.multi_reduction <maximumf>, %49, %cst_70 [2] : vector<16x8x2x8xf32> to vector<16x8x8xf32>
    %51 = vector.shape_cast %50 : vector<16x8x8xf32> to vector<8x2x8x8xf32>
    %cst_71 = arith.constant dense<0xFF800000> : vector<8x8x8xf32>
    %52 = vector.multi_reduction <maximumf>, %51, %cst_71 [1] : vector<8x2x8x8xf32> to vector<8x8x8xf32>
    %c0_72 = arith.constant 0 : index
    %c0_73 = arith.constant 0 : index
    %c0_74 = arith.constant 0 : index
    %c0_75 = arith.constant 0 : index
    %53 = vector.load %arg10[%c0_72, %c0_73, %c0_74, %c0_75] : memref<1x8x8x8xf32, #tpu.memory_space<vmem>>, vector<1x8x8x8xf32>
    %54 = vector.shape_cast %53 : vector<1x8x8x8xf32> to vector<8x8x8xf32>
    %55 = vector.shape_cast %52 : vector<8x8x8xf32> to vector<1x8x8x8xf32>
    tpu.vector_store %arg10[%c0_72, %c0_73, %c0_74, %c0_75], %55 {strides = array<i32>} : memref<1x8x8x8xf32, #tpu.memory_space<vmem>>, vector<1x8x8x8xf32>,
    return
  }
  func.func @transform_0(%arg0: i32) -> (i32, i32, i32, i32) {
    %c0_i32 = arith.constant 0 : i32
    %c0_i32_0 = arith.constant 0 : i32
    %c0_i32_1 = arith.constant 0 : i32
    %c0_i32_2 = arith.constant 0 : i32
    return %arg0, %c0_i32, %c0_i32_0, %c0_i32_1 : i32, i32, i32, i32
  }
  func.func @transform_1(%arg0: i32) -> (i32, i32, i32, i32) {
    %c0_i32 = arith.constant 0 : i32
    %c0_i32_0 = arith.constant 0 : i32
    %c0_i32_1 = arith.constant 0 : i32
    %c0_i32_2 = arith.constant 0 : i32
    return %arg0, %c0_i32, %c0_i32_0, %c0_i32_1 : i32, i32, i32, i32
  }
  func.func @transform_2(%arg0: i32) -> (i32, i32, i32) {
    %c0_i32 = arith.constant 0 : i32
    %c0_i32_0 = arith.constant 0 : i32
    %c0_i32_1 = arith.constant 0 : i32
    %c0_i32_2 = arith.constant 0 : i32
    return %c0_i32, %c0_i32_0, %c0_i32_1 : i32, i32, i32
  }
  func.func @transform_3(%arg0: i32) -> (i32, i32, i32) {
    %c0_i32 = arith.constant 0 : i32
    %c0_i32_0 = arith.constant 0 : i32
    %c0_i32_1 = arith.constant 0 : i32
    %c0_i32_2 = arith.constant 0 : i32
    return %c0_i32, %c0_i32_0, %c0_i32_1 : i32, i32, i32
  }
  func.func @transform_4(%arg0: i32) -> (i32, i32) {
    %c0_i32 = arith.constant 0 : i32
    %c0_i32_0 = arith.constant 0 : i32
    %c0_i32_1 = arith.constant 0 : i32
    return %c0_i32, %c0_i32_0 : i32, i32
  }
  func.func @transform_5(%arg0: i32) -> (i32, i32, i32) {
    %c0_i32 = arith.constant 0 : i32
    %c0_i32_0 = arith.constant 0 : i32
    %c0_i32_1 = arith.constant 0 : i32
    %c0_i32_2 = arith.constant 0 : i32
    return %c0_i32, %c0_i32_0, %c0_i32_1 : i32, i32, i32
  }
  func.func @transform_6(%arg0: i32) -> (i32, i32, i32) {
    %c0_i32 = arith.constant 0 : i32
    %c0_i32_0 = arith.constant 0 : i32
    %c0_i32_1 = arith.constant 0 : i32
    %c0_i32_2 = arith.constant 0 : i32
    return %c0_i32, %c0_i32_0, %c0_i32_1 : i32, i32, i32
  }
  func.func @transform_7(%arg0: i32) -> (i32, i32, i32) {
    %c0_i32 = arith.constant 0 : i32
    %c0_i32_0 = arith.constant 0 : i32
    %c0_i32_1 = arith.constant 0 : i32
    %c0_i32_2 = arith.constant 0 : i32
    return %c0_i32, %c0_i32_0, %c0_i32_1 : i32, i32, i32
  }
  func.func @transform_8(%arg0: i32) -> (i32, i32, i32, i32) {
    %c0_i32 = arith.constant 0 : i32
    %c0_i32_0 = arith.constant 0 : i32
    %c0_i32_1 = arith.constant 0 : i32
    %c0_i32_2 = arith.constant 0 : i32
    return %arg0, %c0_i32, %c0_i32_0, %c0_i32_1 : i32, i32, i32, i32
  }
  func.func @transform_9(%arg0: i32) -> (i32, i32, i32, i32) {
    %c0_i32 = arith.constant 0 : i32
    %c0_i32_0 = arith.constant 0 : i32
    %c0_i32_1 = arith.constant 0 : i32
    %c0_i32_2 = arith.constant 0 : i32
    return %arg0, %c0_i32, %c0_i32_0, %c0_i32_1 : i32, i32, i32, i32
  }
}

</mosaic_0001>

<llo_original>
// kernel: preact_resblock.2
$region0: #{preact_resblock.2}
  #allocation0 [shape = 'u32[]', space=smem, size = 0x4, offset = 0x4, fixed_abs, tag = 'smem constant byte address 0x4 - core index']
  #allocation1 [shape = 'u32[72,128]{1,0:T(1,128)}', space=vmem, size = 0x9000, scoped, tag = 'internal scratch']
  #allocation2 [shape = 'bf16[18,18,4]{2,1,0:T(8,128)(2,1)}', space=vmem, size = 0x1b000, scoped, tag = 'scratch operand']
  %s0 = inlined_call_operand.vmem [shape: f32[2,16,16,4], index: 0, kind: input, shape index: {}]
  %s1 = inlined_call_operand.vmem [shape: f32[1,1,4], index: 1, kind: input, shape index: {}]
  %s2 = inlined_call_operand.vmem [shape: f32[1,1,4], index: 2, kind: input, shape index: {}]
  %s3 = inlined_call_operand.vmem [shape: bf16[36,8], index: 3, kind: input, shape index: {}]
  %s4 = inlined_call_operand.vmem [shape: bf16[4,8], index: 4, kind: input, shape index: {}]
  %s5 = inlined_call_operand.vmem [shape: bf16[2,16,16,8], index: 5, kind: output, shape index: {0}]
  %s6 = inlined_call_operand.vmem [shape: bf16[2,16,16,8], index: 6, kind: output, shape index: {1}]
  %s7 = inlined_call_operand.vmem [shape: f32[2,4,8], index: 7, kind: output, shape index: {2}]
  %8 = xla_tuple %s5, %s6, %s7
  %s9 = sld [smem:[#allocation0]]
  $region69: #{preact_resblock.2} parent=0
    _
  %s11 = ssub.s32 1, %s9
  %s12 = scalar_select 0, %s11, %s9
  loop: start=0, step=1, limit=4
  $region2: #{preact_resblock.2} parent=0 // loop_pre_header
    _
  $region3: #{preact_resblock.2} parent=0 // loop_header
    %s14 = sphi 0, %s18
    %p15 = scmp.ge.s32.totalorder %s14, 4
    %s24 = sphi 0, %s26
    %s27 = sphi 0, %s24
    %s28 = sphi 0, %s27
    %s44 = sphi 0, %s28
    %s48 = sphi 0, %s48
    %s50 = sphi 0, %s48
    %s51 = sphi 0, %s50
    %s65 = sphi 0, %s51
    %s69 = sphi 0, %s69
    %s71 = sphi 0, %s69
    %s72 = sphi 0, %s71
    %s86 = sphi 0, %s72
    %s90 = sphi 0, %s90
    %s92 = sphi 0, %s90
    %s93 = sphi 0, %s92
    %s107 = sphi 0, %s93
    %s111 = sphi 0, %s111
    %s113 = sphi 0, %s111
    %s114 = sphi 0, %s113
    %s128 = sphi 0, %s114
    %s134 = sphi 0, %s136
    %s137 = sphi 0, %s134
    %s138 = sphi 0, %s137
    %s154 = sphi 0, %s138
    %s160 = sphi 0, %s162
    %s163 = sphi 0, %s160
    %s164 = sphi 0, %s163
    %s180 = sphi 0, %s164
    %s186 = sphi 0, %s188
    %s189 = sphi 0, %s186
    %s190 = sphi 0, %s189
    %s206 = sphi 0, %s190
  $region4: #{preact_resblock.2} parent=0 // loop_header_branch
    %17 = sbr.rel (%p15) target = $region8
  $region5: #{preact_resblock.2} parent=0 // loop_body
    %s19 = ssub.s32 %s14, 1
    %s20 = ssub.s32 %s14, 2
    %s21 = sadd.s32 %s14, 1
    %s22 = ssub.s32 %s14, %s21
    %p23 = scmp.eq.s32.totalorder %s22, 0
    %s25 = sadd.s32 %s24, 1
    %s26 = scalar_select %p23, %s24, %s25
    %p29 = pneg %p23
    %p30 = scmp.eq.s32.totalorder %s14, 1
    %p31 = por %p29, %p30
    %p32 = scmp.ne.s32.totalorder %s24, %s27
    %p33 = scmp.eq.s32.totalorder %s14, 0
    %p34 = por %p32, %p33
    %p35 = scmp.ne.s32.totalorder %s24, %s27
    %p36 = scmp.eq.s32.totalorder %s19, 1
    %p37 = por %p35, %p36
    %p38 = scmp.ne.s32.totalorder %s27, %s28
    %p39 = scmp.eq.s32.totalorder %s19, 0
    %p40 = por %p38, %p39
    %p41 = scmp.ne.s32.totalorder %s27, %s28
    %p42 = scmp.eq.s32.totalorder %s20, 1
    %p43 = por %p41, %p42
    %p45 = scmp.ne.s32.totalorder %s28, %s44
    %p46 = scmp.eq.s32.totalorder %s20, 0
    %p47 = por %p45, %p46
    %s49 = sadd.s32 %s48, 1
    %p52 = scmp.eq.s32.totalorder %s14, 1
    %p53 = scmp.ne.s32.totalorder %s48, %s50
    %p54 = scmp.eq.s32.totalorder %s14, 0
    %p55 = por %p53, %p54
    %p56 = scmp.ne.s32.totalorder %s48, %s50
    %p57 = scmp.eq.s32.totalorder %s19, 1
    %p58 = por %p56, %p57
    %p59 = scmp.ne.s32.totalorder %s50, %s51
    %p60 = scmp.eq.s32.totalorder %s19, 0
    %p61 = por %p59, %p60
    %p62 = scmp.ne.s32.totalorder %s50, %s51
    %p63 = scmp.eq.s32.totalorder %s20, 1
    %p64 = por %p62, %p63
    %p66 = scmp.ne.s32.totalorder %s51, %s65
    %p67 = scmp.eq.s32.totalorder %s20, 0
    %p68 = por %p66, %p67
    %s70 = sadd.s32 %s69, 1
    %p73 = scmp.eq.s32.totalorder %s14, 1
    %p74 = scmp.ne.s32.totalorder %s69, %s71
    %p75 = scmp.eq.s32.totalorder %s14, 0
    %p76 = por %p74, %p75
    %p77 = scmp.ne.s32.totalorder %s69, %s71
    %p78 = scmp.eq.s32.totalorder %s19, 1
    %p79 = por %p77, %p78
    %p80 = scmp.ne.s32.totalorder %s71, %s72
    %p81 = scmp.eq.s32.totalorder %s19, 0
    %p82 = por %p80, %p81
    %p83 = scmp.ne.s32.totalorder %s71, %s72
    %p84 = scmp.eq.s32.totalorder %s20, 1
    %p85 = por %p83, %p84
    %p87 = scmp.ne.s32.totalorder %s72, %s86
    %p88 = scmp.eq.s32.totalorder %s20, 0
    %p89 = por %p87, %p88
    %s91 = sadd.s32 %s90, 1
    %p94 = scmp.eq.s32.totalorder %s14, 1
    %p95 = scmp.ne.s32.totalorder %s90, %s92
    %p96 = scmp.eq.s32.totalorder %s14, 0
    %p97 = por %p95, %p96
    %p98 = scmp.ne.s32.totalorder %s90, %s92
    %p99 = scmp.eq.s32.totalorder %s19, 1
    %p100 = por %p98, %p99
    %p101 = scmp.ne.s32.totalorder %s92, %s93
    %p102 = scmp.eq.s32.totalorder %s19, 0
    %p103 = por %p101, %p102
    %p104 = scmp.ne.s32.totalorder %s92, %s93
    %p105 = scmp.eq.s32.totalorder %s20, 1
    %p106 = por %p104, %p105
    %p108 = scmp.ne.s32.totalorder %s93, %s107
    %p109 = scmp.eq.s32.totalorder %s20, 0
    %p110 = por %p108, %p109
    %s112 = sadd.s32 %s111, 1
    %p115 = scmp.eq.s32.totalorder %s14, 1
    %p116 = scmp.ne.s32.totalorder %s111, %s113
    %p117 = scmp.eq.s32.totalorder %s14, 0
    %p118 = por %p116, %p117
    %p119 = scmp.ne.s32.totalorder %s111, %s113
    %p120 = scmp.eq.s32.totalorder %s19, 1
    %p121 = por %p119, %p120
    %p122 = scmp.ne.s32.totalorder %s113, %s114
    %p123 = scmp.eq.s32.totalorder %s19, 0
    %p124 = por %p122, %p123
    %p125 = scmp.ne.s32.totalorder %s113, %s114
    %p126 = scmp.eq.s32.totalorder %s20, 1
    %p127 = por %p125, %p126
    %p129 = scmp.ne.s32.totalorder %s114, %s128
    %p130 = scmp.eq.s32.totalorder %s20, 0
    %p131 = por %p129, %p130
    %s132 = ssub.s32 %s14, %s21
    %p133 = scmp.eq.s32.totalorder %s132, 0
    %s135 = sadd.s32 %s134, 1
    %s136 = scalar_select %p133, %s134, %s135
    %p139 = pneg %p133
    %p140 = scmp.eq.s32.totalorder %s14, 1
    %p141 = por %p139, %p140
    %p142 = scmp.ne.s32.totalorder %s134, %s137
    %p143 = scmp.eq.s32.totalorder %s14, 0
    %p144 = por %p142, %p143
    %p145 = scmp.ne.s32.totalorder %s134, %s137
    %p146 = scmp.eq.s32.totalorder %s19, 1
    %p147 = por %p145, %p146
    %p148 = scmp.ne.s32.totalorder %s137, %s138
    %p149 = scmp.eq.s32.totalorder %s19, 0
    %p150 = por %p148, %p149
    %p151 = scmp.ne.s32.totalorder %s137, %s138
    %p152 = scmp.eq.s32.totalorder %s20, 1
    %p153 = por %p151, %p152
    %p155 = scmp.ne.s32.totalorder %s138, %s154
    %p156 = scmp.eq.s32.totalorder %s20, 0
    %p157 = por %p155, %p156
    %s158 = ssub.s32 %s14, %s21
    %p159 = scmp.eq.s32.totalorder %s158, 0
    %s161 = sadd.s32 %s160, 1
    %s162 = scalar_select %p159, %s160, %s161
    %p165 = pneg %p159
    %p166 = scmp.eq.s32.totalorder %s14, 1
    %p167 = por %p165, %p166
    %p168 = scmp.ne.s32.totalorder %s160, %s163
    %p169 = scmp.eq.s32.totalorder %s14, 0
    %p170 = por %p168, %p169
    %p171 = scmp.ne.s32.totalorder %s160, %s163
    %p172 = scmp.eq.s32.totalorder %s19, 1
    %p173 = por %p171, %p172
    %p174 = scmp.ne.s32.totalorder %s163, %s164
    %p175 = scmp.eq.s32.totalorder %s19, 0
    %p176 = por %p174, %p175
    %p177 = scmp.ne.s32.totalorder %s163, %s164
    %p178 = scmp.eq.s32.totalorder %s20, 1
    %p179 = por %p177, %p178
    %p181 = scmp.ne.s32.totalorder %s164, %s180
    %p182 = scmp.eq.s32.totalorder %s20, 0
    %p183 = por %p181, %p182
    %s184 = ssub.s32 %s14, %s21
    %p185 = scmp.eq.s32.totalorder %s184, 0
    %s187 = sadd.s32 %s186, 1
    %s188 = scalar_select %p185, %s186, %s187
    %p191 = pneg %p185
    %p192 = scmp.eq.s32.totalorder %s14, 1
    %p193 = por %p191, %p192
    %p194 = scmp.ne.s32.totalorder %s186, %s189
    %p195 = scmp.eq.s32.totalorder %s14, 0
    %p196 = por %p194, %p195
    %p197 = scmp.ne.s32.totalorder %s186, %s189
    %p198 = scmp.eq.s32.totalorder %s19, 1
    %p199 = por %p197, %p198
    %p200 = scmp.ne.s32.totalorder %s189, %s190
    %p201 = scmp.eq.s32.totalorder %s19, 0
    %p202 = por %p200, %p201
    %p203 = scmp.ne.s32.totalorder %s189, %s190
    %p204 = scmp.eq.s32.totalorder %s20, 1
    %p205 = por %p203, %p204
    %p207 = scmp.ne.s32.totalorder %s190, %s206
    %p208 = scmp.eq.s32.totalorder %s20, 0
    %p209 = por %p207, %p208
    %p210 = scmp.le.s32.totalorder 1, %s14
    %p211 = scmp.lt.s32.totalorder %s14, 3
    %p212 = pnand %p210, %p211
    %p213 = pneg %p212
    // Predicated region
    $region9: #{preact_resblock.2} parent=5 // pred_check
      _
    $region10: #{preact_resblock.2} parent=5 // pred_check_branch
      %215 = sbr.rel (%p212) target = $region12
    $region11: #{preact_resblock.2} parent=5 // pred_region
      %s216 = ssub.s32 %s14, 1
      // Predicated region
      $region13: #{preact_resblock.2} parent=11 // pred_check
        %p217 = pneg %p61
      $region14: #{preact_resblock.2} parent=11 // pred_check_branch
        %219 = sbr.rel (%p217) target = $region16
      $region15: #{preact_resblock.2} parent=11 // pred_region
        _
      $region16: #{preact_resblock.2} parent=11 // pred_fallthru
        _
      // Predicated region
      $region17: #{preact_resblock.2} parent=11 // pred_check
        %p220 = pneg %p82
      $region18: #{preact_resblock.2} parent=11 // pred_check_branch
        %222 = sbr.rel (%p220) target = $region20
      $region19: #{preact_resblock.2} parent=11 // pred_region
        _
      $region20: #{preact_resblock.2} parent=11 // pred_fallthru
        _
      // Predicated region
      $region21: #{preact_resblock.2} parent=11 // pred_check
        %p223 = pneg %p103
      $region22: #{preact_resblock.2} parent=11 // pred_check_branch
        %225 = sbr.rel (%p223) target = $region24
      $region23: #{preact_resblock.2} parent=11 // pred_region
        _
      $region24: #{preact_resblock.2} parent=11 // pred_fallthru
        _
      // Predicated region
      $region25: #{preact_resblock.2} parent=11 // pred_check
        %p226 = pneg %p124
      $region26: #{preact_resblock.2} parent=11 // pred_check_branch
        %228 = sbr.rel (%p226) target = $region28
      $region27: #{preact_resblock.2} parent=11 // pred_region
        _
      $region28: #{preact_resblock.2} parent=11 // pred_fallthru
        _
    $region12: #{preact_resblock.2} parent=5 // pred_fallthru
      _
    %p229 = scmp.lt.s32.totalorder %s14, 2
    // Predicated region
    $region29: #{preact_resblock.2} parent=5 // pred_check
      %p230 = pneg %p229
    $region30: #{preact_resblock.2} parent=5 // pred_check_branch
      %232 = sbr.rel (%p230) target = $region32
    $region31: #{preact_resblock.2} parent=5 // pred_region
      // Predicated region
      $region33: #{preact_resblock.2} parent=31 // pred_check
        %p233 = pneg %p34
      $region34: #{preact_resblock.2} parent=31 // pred_check_branch
        %235 = sbr.rel (%p233) target = $region36
      $region35: #{preact_resblock.2} parent=31 // pred_region
        %p236 = scmp.lt.s32.totalorder %s14, 1
        %s237 = scalar_select %p236, %s14, 1
        %s238 = smul.addr %s237, 32
        %s239 = smul.addr %s238, 8
        %s240 = scalar_lea.vmem %s0, %s239
      $region36: #{preact_resblock.2} parent=31 // pred_fallthru
        _
    $region32: #{preact_resblock.2} parent=5 // pred_fallthru
      _
    %p241 = scmp.le.s32.totalorder 1, %s14
    %p242 = scmp.lt.s32.totalorder %s14, 3
    %p243 = pnand %p241, %p242
    %p244 = pneg %p243
    // Predicated region
    $region37: #{preact_resblock.2} parent=5 // pred_check
      _
    $region38: #{preact_resblock.2} parent=5 // pred_check_branch
      %246 = sbr.rel (%p243) target = $region40
    $region39: #{preact_resblock.2} parent=5 // pred_region
      %s247 = ssub.s32 %s14, 1
      %p248 = scmp.lt.s32.totalorder %s19, 1
      %s249 = scalar_select %p248, %s19, 1
      %s250 = smul.addr %s249, 32
      %s251 = smul.addr %s250, 8
      %s252 = scalar_lea.vmem %s0, %s251
      %p253 = pneg %p40
      %p254 = pneg %p37
      %p255 = pneg %p61
      %p256 = pneg %p58
      %p257 = pneg %p82
      %p258 = pneg %p79
      %p259 = pneg %p103
      %p260 = pneg %p100
      %p261 = pneg %p124
      %p262 = pneg %p121
      %p263 = pneg %p150
      %p264 = pneg %p147
      %p265 = scmp.lt.s32.totalorder %s19, 1
      %s266 = scalar_select %p265, %s19, 1
      %s267 = smul.addr %s266, 32
      %s268 = smul.addr %s267, 4
      %s269 = scalar_lea.vmem %s5, %s268
      %p270 = pneg %p176
      %p271 = pneg %p173
      %p272 = scmp.lt.s32.totalorder %s19, 1
      %s273 = scalar_select %p272, %s19, 1
      %s274 = smul.addr %s273, 32
      %s275 = smul.addr %s274, 4
      %s276 = scalar_lea.vmem %s6, %s275
      %p277 = pneg %p202
      %p278 = pneg %p199
      %p279 = scmp.lt.s32.totalorder %s19, 1
      %s280 = scalar_select %p279, %s19, 1
      %s281 = smul.addr %s280, 4
      %s282 = scalar_lea.vmem %s7, %s281
      %p283 = scmp.lt.s32.totalorder %s19, 1
      %s284 = scalar_select %p283, %s19, 1
      %s285 = smul.addr %s284, 32
      %s286 = smul.addr %s285, 8
      %s287 = scalar_lea.vmem %s0, %s286
      %p288 = scmp.lt.s32.totalorder %s19, 1
      %s289 = scalar_select %p288, %s19, 1
      %s290 = smul.addr %s289, 32
      %s291 = smul.addr %s290, 4
      %s292 = scalar_lea.vmem %s5, %s291
      %p293 = scmp.lt.s32.totalorder %s19, 1
      %s294 = scalar_select %p293, %s19, 1
      %s295 = smul.addr %s294, 32
      %s296 = smul.addr %s295, 4
      %s297 = scalar_lea.vmem %s6, %s296
      %p298 = scmp.lt.s32.totalorder %s19, 1
      %s299 = scalar_select %p298, %s19, 1
      %s300 = smul.addr %s299, 4
      %s301 = scalar_lea.vmem %s7, %s300
      %v303 = vld [vmem:[%s287] sm:$0xff]
      %v304 = vld [vmem:[%s287 + $0x8] sm:$0xff]
      %v305 = vld [vmem:[%s287 + $0x10] sm:$0xff]
      %v306 = vld [vmem:[%s287 + $0x18] sm:$0xff]
      %v307 = vld [vmem:[%s287 + $0x20] sm:$0xff]
      %v308 = vld [vmem:[%s287 + $0x28] sm:$0xff]
      %v309 = vld [vmem:[%s287 + $0x30] sm:$0xff]
      %v310 = vld [vmem:[%s287 + $0x38] sm:$0xff]
      %v311 = vld [vmem:[%s287 + $0x40] sm:$0xff]
      %v312 = vld [vmem:[%s287 + $0x48] sm:$0xff]
      %v313 = vld [vmem:[%s287 + $0x50] sm:$0xff]
      %v314 = vld [vmem:[%s287 + $0x58] sm:$0xff]
      %v315 = vld [vmem:[%s287 + $0x60] sm:$0xff]
      %v316 = vld [vmem:[%s287 + $0x68] sm:$0xff]
      %v317 = vld [vmem:[%s287 + $0x70] sm:$0xff]
      %v318 = vld [vmem:[%s287 + $0x78] sm:$0xff]
      %v319 = vld [vmem:[%s287 + $0x80] sm:$0xff]
      %v320 = vld [vmem:[%s287 + $0x88] sm:$0xff]
      %v321 = vld [vmem:[%s287 + $0x90] sm:$0xff]
      %v322 = vld [vmem:[%s287 + $0x98] sm:$0xff]
      %v323 = vld [vmem:[%s287 + $0xa0] sm:$0xff]
      %v324 = vld [vmem:[%s287 + $0xa8] sm:$0xff]
      %v325 = vld [vmem:[%s287 + $0xb0] sm:$0xff]
      %v326 = vld [vmem:[%s287 + $0xb8] sm:$0xff]
      %v327 = vld [vmem:[%s287 + $0xc0] sm:$0xff]
      %v328 = vld [vmem:[%s287 + $0xc8] sm:$0xff]
      %v329 = vld [vmem:[%s287 + $0xd0] sm:$0xff]
      %v330 = vld [vmem:[%s287 + $0xd8] sm:$0xff]
      %v331 = vld [vmem:[%s287 + $0xe0] sm:$0xff]
      %v332 = vld [vmem:[%s287 + $0xe8] sm:$0xff]
      %v333 = vld [vmem:[%s287 + $0xf0] sm:$0xff]
      %v334 = vld [vmem:[%s287 + $0xf8] sm:$0xff]
      %v335 = vpack.c.bf16 %v304, %v303
      %v336 = vpack.c.bf16 %v306, %v305
      %v337 = vpack.c.bf16 %v308, %v307
      %v338 = vpack.c.bf16 %v310, %v309
      %v339 = vpack.c.bf16 %v312, %v311
      %v340 = vpack.c.bf16 %v314, %v313
      %v341 = vpack.c.bf16 %v316, %v315
      %v342 = vpack.c.bf16 %v318, %v317
      %v343 = vpack.c.bf16 %v320, %v319
      %v344 = vpack.c.bf16 %v322, %v321
      %v345 = vpack.c.bf16 %v324, %v323
      %v346 = vpack.c.bf16 %v326, %v325
      %v347 = vpack.c.bf16 %v328, %v327
      %v348 = vpack.c.bf16 %v330, %v329
      %v349 = vpack.c.bf16 %v332, %v331
      %v350 = vpack.c.bf16 %v334, %v333
      %v351 = vld [vmem:[%s4] sm:$0x3]
      %vm352 = vcmask 31744
      %v354 = vsel %vm352, %v335, 0
      %v357 = vsel %vm352, %v336, 0
      %v360 = vsel %vm352, %v337, 0
      %v363 = vsel %vm352, %v338, 0
      %v366 = vsel %vm352, %v339, 0
      %v369 = vsel %vm352, %v340, 0
      %v372 = vsel %vm352, %v341, 0
      %v375 = vsel %vm352, %v342, 0
      %v378 = vsel %vm352, %v343, 0
      %v381 = vsel %vm352, %v344, 0
      %v384 = vsel %vm352, %v345, 0
      %v387 = vsel %vm352, %v346, 0
      %v390 = vsel %vm352, %v347, 0
      %v393 = vsel %vm352, %v348, 0
      %v396 = vsel %vm352, %v349, 0
      %v399 = vsel %vm352, %v350, 0
      %vm401 = vcmask 1041408
      %v403 = vsel %vm401, %v351, 0
      %405 = vmatpush.bf16.msra.mxu0 0
      %406 = vmatpush.bf16.msra.mxu0 0
      %407 = vmatpush.bf16.msra.mxu0 0
      %408 = vmatpush.bf16.msra.mxu0 0
      %409 = vmatpush.bf16.msra.mxu0 0
      %410 = vmatpush.bf16.msra.mxu0 0
      %411 = vmatpush.bf16.msra.mxu0 0
      %412 = vmatpush.bf16.msra.mxu0 %v403
      %413 = vmatmul.bf16.gmra.mxu0 %v354
      %v414 = vpop.f32.mrf.mxu0
      %v415 = vadd.f32 0.0, %v414
      %v416 = vpop.f32.mrf.mxu0
      %v417 = vadd.f32 0.0, %v416
      %418 = vmatmul.bf16.gmra.mxu0 %v357
      %v419 = vpop.f32.mrf.mxu0
      %v420 = vadd.f32 0.0, %v419
      %v421 = vpop.f32.mrf.mxu0
      %v422 = vadd.f32 0.0, %v421
      %423 = vmatmul.bf16.gmra.mxu0 %v360
      %v424 = vpop.f32.mrf.mxu0
      %v425 = vadd.f32 0.0, %v424
      %v426 = vpop.f32.mrf.mxu0
      %v427 = vadd.f32 0.0, %v426
      %428 = vmatmul.bf16.gmra.mxu0 %v363
      %v429 = vpop.f32.mrf.mxu0
      %v430 = vadd.f32 0.0, %v429
      %v431 = vpop.f32.mrf.mxu0
      %v432 = vadd.f32 0.0, %v431
      %433 = vmatmul.bf16.gmra.mxu0 %v366
      %v434 = vpop.f32.mrf.mxu0
      %v435 = vadd.f32 0.0, %v434
      %v436 = vpop.f32.mrf.mxu0
      %v437 = vadd.f32 0.0, %v436
      %438 = vmatmul.bf16.gmra.mxu0 %v369
      %v439 = vpop.f32.mrf.mxu0
      %v440 = vadd.f32 0.0, %v439
      %v441 = vpop.f32.mrf.mxu0
      %v442 = vadd.f32 0.0, %v441
      %443 = vmatmul.bf16.gmra.mxu0 %v372
      %v444 = vpop.f32.mrf.mxu0
      %v445 = vadd.f32 0.0, %v444
      %v446 = vpop.f32.mrf.mxu0
      %v447 = vadd.f32 0.0, %v446
      %448 = vmatmul.bf16.gmra.mxu0 %v375
      %v449 = vpop.f32.mrf.mxu0
      %v450 = vadd.f32 0.0, %v449
      %v451 = vpop.f32.mrf.mxu0
      %v452 = vadd.f32 0.0, %v451
      %453 = vmatmul.bf16.gmra.mxu0 %v378
      %v454 = vpop.f32.mrf.mxu0
      %v455 = vadd.f32 0.0, %v454
      %v456 = vpop.f32.mrf.mxu0
      %v457 = vadd.f32 0.0, %v456
      %458 = vmatmul.bf16.gmra.mxu0 %v381
      %v459 = vpop.f32.mrf.mxu0
      %v460 = vadd.f32 0.0, %v459
      %v461 = vpop.f32.mrf.mxu0
      %v462 = vadd.f32 0.0, %v461
      %463 = vmatmul.bf16.gmra.mxu0 %v384
      %v464 = vpop.f32.mrf.mxu0
      %v465 = vadd.f32 0.0, %v464
      %v466 = vpop.f32.mrf.mxu0
      %v467 = vadd.f32 0.0, %v466
      %468 = vmatmul.bf16.gmra.mxu0 %v387
      %v469 = vpop.f32.mrf.mxu0
      %v470 = vadd.f32 0.0, %v469
      %v471 = vpop.f32.mrf.mxu0
      %v472 = vadd.f32 0.0, %v471
      %473 = vmatmul.bf16.gmra.mxu0 %v390
      %v474 = vpop.f32.mrf.mxu0
      %v475 = vadd.f32 0.0, %v474
      %v476 = vpop.f32.mrf.mxu0
      %v477 = vadd.f32 0.0, %v476
      %478 = vmatmul.bf16.gmra.mxu0 %v393
      %v479 = vpop.f32.mrf.mxu0
      %v480 = vadd.f32 0.0, %v479
      %v481 = vpop.f32.mrf.mxu0
      %v482 = vadd.f32 0.0, %v481
      %483 = vmatmul.bf16.gmra.mxu0 %v396
      %v484 = vpop.f32.mrf.mxu0
      %v485 = vadd.f32 0.0, %v484
      %v486 = vpop.f32.mrf.mxu0
      %v487 = vadd.f32 0.0, %v486
      %488 = vmatmul.bf16.gmra.mxu0 %v399
      %v489 = vpop.f32.mrf.mxu0
      %v490 = vadd.f32 0.0, %v489
      %v491 = vpop.f32.mrf.mxu0
      %v492 = vadd.f32 0.0, %v491
      %493 = vdwg.mxu0
      %v494 = vld [vmem:[%s1] sm:$0x1]
      %v496 = vperm.slane %v494, 0
      %v498 = vmul.f32 %v303, %v496
      %v499 = vmul.f32 %v304, %v496
      %v500 = vmul.f32 %v305, %v496
      %v501 = vmul.f32 %v306, %v496
      %v502 = vmul.f32 %v307, %v496
      %v503 = vmul.f32 %v308, %v496
      %v504 = vmul.f32 %v309, %v496
      %v505 = vmul.f32 %v310, %v496
      %v506 = vmul.f32 %v311, %v496
      %v507 = vmul.f32 %v312, %v496
      %v508 = vmul.f32 %v313, %v496
      %v509 = vmul.f32 %v314, %v496
      %v510 = vmul.f32 %v315, %v496
      %v511 = vmul.f32 %v316, %v496
      %v512 = vmul.f32 %v317, %v496
      %v513 = vmul.f32 %v318, %v496
      %v514 = vmul.f32 %v319, %v496
      %v515 = vmul.f32 %v320, %v496
      %v516 = vmul.f32 %v321, %v496
      %v517 = vmul.f32 %v322, %v496
      %v518 = vmul.f32 %v323, %v496
      %v519 = vmul.f32 %v324, %v496
      %v520 = vmul.f32 %v325, %v496
      %v521 = vmul.f32 %v326, %v496
      %v522 = vmul.f32 %v327, %v496
      %v523 = vmul.f32 %v328, %v496
      %v524 = vmul.f32 %v329, %v496
      %v525 = vmul.f32 %v330, %v496
      %v526 = vmul.f32 %v331, %v496
      %v527 = vmul.f32 %v332, %v496
      %v528 = vmul.f32 %v333, %v496
      %v529 = vmul.f32 %v334, %v496
      %v530 = vld [vmem:[%s2] sm:$0x1]
      %v532 = vperm.slane %v530, 0
      %v534 = vadd.f32 %v498, %v532
      %v535 = vadd.f32 %v499, %v532
      %v536 = vadd.f32 %v500, %v532
      %v537 = vadd.f32 %v501, %v532
      %v538 = vadd.f32 %v502, %v532
      %v539 = vadd.f32 %v503, %v532
      %v540 = vadd.f32 %v504, %v532
      %v541 = vadd.f32 %v505, %v532
      %v542 = vadd.f32 %v506, %v532
      %v543 = vadd.f32 %v507, %v532
      %v544 = vadd.f32 %v508, %v532
      %v545 = vadd.f32 %v509, %v532
      %v546 = vadd.f32 %v510, %v532
      %v547 = vadd.f32 %v511, %v532
      %v548 = vadd.f32 %v512, %v532
      %v549 = vadd.f32 %v513, %v532
      %v550 = vadd.f32 %v514, %v532
      %v551 = vadd.f32 %v515, %v532
      %v552 = vadd.f32 %v516, %v532
      %v553 = vadd.f32 %v517, %v532
      %v554 = vadd.f32 %v518, %v532
      %v555 = vadd.f32 %v519, %v532
      %v556 = vadd.f32 %v520, %v532
      %v557 = vadd.f32 %v521, %v532
      %v558 = vadd.f32 %v522, %v532
      %v559 = vadd.f32 %v523, %v532
      %v560 = vadd.f32 %v524, %v532
      %v561 = vadd.f32 %v525, %v532
      %v562 = vadd.f32 %v526, %v532
      %v563 = vadd.f32 %v527, %v532
      %v564 = vadd.f32 %v528, %v532
      %v565 = vadd.f32 %v529, %v532
      %v566 = vmax.f32 %v534, 0.0
      %v567 = vmax.f32 %v535, 0.0
      %v568 = vmax.f32 %v536, 0.0
      %v569 = vmax.f32 %v537, 0.0
      %v570 = vmax.f32 %v538, 0.0
      %v571 = vmax.f32 %v539, 0.0
      %v572 = vmax.f32 %v540, 0.0
      %v573 = vmax.f32 %v541, 0.0
      %v574 = vmax.f32 %v542, 0.0
      %v575 = vmax.f32 %v543, 0.0
      %v576 = vmax.f32 %v544, 0.0
      %v577 = vmax.f32 %v545, 0.0
      %v578 = vmax.f32 %v546, 0.0
      %v579 = vmax.f32 %v547, 0.0
      %v580 = vmax.f32 %v548, 0.0
      %v581 = vmax.f32 %v549, 0.0
      %v582 = vmax.f32 %v550, 0.0
      %v583 = vmax.f32 %v551, 0.0
      %v584 = vmax.f32 %v552, 0.0
      %v585 = vmax.f32 %v553, 0.0
      %v586 = vmax.f32 %v554, 0.0
      %v587 = vmax.f32 %v555, 0.0
      %v588 = vmax.f32 %v556, 0.0
      %v589 = vmax.f32 %v557, 0.0
      %v590 = vmax.f32 %v558, 0.0
      %v591 = vmax.f32 %v559, 0.0
      %v592 = vmax.f32 %v560, 0.0
      %v593 = vmax.f32 %v561, 0.0
      %v594 = vmax.f32 %v562, 0.0
      %v595 = vmax.f32 %v563, 0.0
      %v596 = vmax.f32 %v564, 0.0
      %v597 = vmax.f32 %v565, 0.0
      %vm598 = vcmask 27648
      %599 = vst.msk [vmem:[#allocation2] sm:$0xf] %vm598, 0
      %600 = vst.msk [vmem:[#allocation2 + $0x4] sm:$0xf] %vm598, 0
      %vm601 = vcmask 24576
      %602 = vst.msk [vmem:[#allocation2 + $0x8] sm:$0x1] %vm601, 0
      %s603 = scalar_lea.vmem [#allocation2], 204
      %604 = vst.msk [vmem:[%s603] sm:$0xf] %vm598, 0
      %605 = vst.msk [vmem:[%s603 + $0x4] sm:$0xf] %vm598, 0
      %606 = vst.msk [vmem:[%s603 + $0x8] sm:$0x1] %vm601, 0
      %vm607 = vcmask 24576
      %vm608 = vsmask.f32 256
      %vm609 = vmand %vm607, %vm608
      %v610 = vld [vmem:[#allocation2] sm:$0x1]
      %v611 = vsel %vm609, 0, %v610
      %612 = vst [vmem:[#allocation2] sm:$0x1] %v611
      %v613 = vld [vmem:[#allocation2 + $0xc] sm:$0x1]
      %v614 = vsel %vm609, 0, %v613
      %615 = vst [vmem:[#allocation2 + $0xc] sm:$0x1] %v614
      %v616 = vld [vmem:[#allocation2 + $0x18] sm:$0x1]
      %v617 = vsel %vm609, 0, %v616
      %618 = vst [vmem:[#allocation2 + $0x18] sm:$0x1] %v617
      %v619 = vld [vmem:[#allocation2 + $0x24] sm:$0x1]
      %v620 = vsel %vm609, 0, %v619
      %621 = vst [vmem:[#allocation2 + $0x24] sm:$0x1] %v620
      %v622 = vld [vmem:[#allocation2 + $0x30] sm:$0x1]
      %v623 = vsel %vm609, 0, %v622
      %624 = vst [vmem:[#allocation2 + $0x30] sm:$0x1] %v623
      %v625 = vld [vmem:[#allocation2 + $0x3c] sm:$0x1]
      %v626 = vsel %vm609, 0, %v625
      %627 = vst [vmem:[#allocation2 + $0x3c] sm:$0x1] %v626
      %v628 = vld [vmem:[#allocation2 + $0x48] sm:$0x1]
      %v629 = vsel %vm609, 0, %v628
      %630 = vst [vmem:[#allocation2 + $0x48] sm:$0x1] %v629
      %v631 = vld [vmem:[#allocation2 + $0x54] sm:$0x1]
      %v632 = vsel %vm609, 0, %v631
      %633 = vst [vmem:[#allocation2 + $0x54] sm:$0x1] %v632
      %v634 = vld [vmem:[#allocation2 + $0x60] sm:$0x1]
      %v635 = vsel %vm609, 0, %v634
      %636 = vst [vmem:[#allocation2 + $0x60] sm:$0x1] %v635
      %v637 = vld [vmem:[#allocation2 + $0x6c] sm:$0x1]
      %v638 = vsel %vm609, 0, %v637
      %639 = vst [vmem:[#allocation2 + $0x6c] sm:$0x1] %v638
      %v640 = vld [vmem:[#allocation2 + $0x78] sm:$0x1]
      %v641 = vsel %vm609, 0, %v640
      %642 = vst [vmem:[#allocation2 + $0x78] sm:$0x1] %v641
      %v643 = vld [vmem:[#allocation2 + $0x84] sm:$0x1]
      %v644 = vsel %vm609, 0, %v643
      %645 = vst [vmem:[#allocation2 + $0x84] sm:$0x1] %v644
      %v646 = vld [vmem:[#allocation2 + $0x90] sm:$0x1]
      %v647 = vsel %vm609, 0, %v646
      %648 = vst [vmem:[#allocation2 + $0x90] sm:$0x1] %v647
      %v649 = vld [vmem:[#allocation2 + $0x9c] sm:$0x1]
      %v650 = vsel %vm609, 0, %v649
      %651 = vst [vmem:[#allocation2 + $0x9c] sm:$0x1] %v650
      %v652 = vld [vmem:[#allocation2 + $0xa8] sm:$0x1]
      %v653 = vsel %vm609, 0, %v652
      %654 = vst [vmem:[#allocation2 + $0xa8] sm:$0x1] %v653
      %v655 = vld [vmem:[#allocation2 + $0xb4] sm:$0x1]
      %v656 = vsel %vm609, 0, %v655
      %657 = vst [vmem:[#allocation2 + $0xb4] sm:$0x1] %v656
      %v658 = vld [vmem:[#allocation2 + $0xc0] sm:$0x1]
      %v659 = vsel %vm609, 0, %v658
      %660 = vst [vmem:[#allocation2 + $0xc0] sm:$0x1] %v659
      %v661 = vld [vmem:[#allocation2 + $0xcc] sm:$0x1]
      %v662 = vsel %vm609, 0, %v661
      %663 = vst [vmem:[#allocation2 + $0xcc] sm:$0x1] %v662
      %vm664 = vsmask.f32 7938
      %vm665 = vmand %vm607, %vm664
      %v666 = vld [vmem:[#allocation2 + $0x8] sm:$0x1]
      %v667 = vsel %vm665, 0, %v666
      %668 = vst [vmem:[#allocation2 + $0x8] sm:$0x1] %v667
      %v669 = vld [vmem:[#allocation2 + $0x14] sm:$0x1]
      %v670 = vsel %vm665, 0, %v669
      %671 = vst [vmem:[#allocation2 + $0x14] sm:$0x1] %v670
      %v672 = vld [vmem:[#allocation2 + $0x20] sm:$0x1]
      %v673 = vsel %vm665, 0, %v672
      %674 = vst [vmem:[#allocation2 + $0x20] sm:$0x1] %v673
      %v675 = vld [vmem:[#allocation2 + $0x2c] sm:$0x1]
      %v676 = vsel %vm665, 0, %v675
      %677 = vst [vmem:[#allocation2 + $0x2c] sm:$0x1] %v676
      %v678 = vld [vmem:[#allocation2 + $0x38] sm:$0x1]
      %v679 = vsel %vm665, 0, %v678
      %680 = vst [vmem:[#allocation2 + $0x38] sm:$0x1] %v679
      %v681 = vld [vmem:[#allocation2 + $0x44] sm:$0x1]
      %v682 = vsel %vm665, 0, %v681
      %683 = vst [vmem:[#allocation2 + $0x44] sm:$0x1] %v682
      %v684 = vld [vmem:[#allocation2 + $0x50] sm:$0x1]
      %v685 = vsel %vm665, 0, %v684
      %686 = vst [vmem:[#allocation2 + $0x50] sm:$0x1] %v685
      %v687 = vld [vmem:[#allocation2 + $0x5c] sm:$0x1]
      %v688 = vsel %vm665, 0, %v687
      %689 = vst [vmem:[#allocation2 + $0x5c] sm:$0x1] %v688
      %v690 = vld [vmem:[#allocation2 + $0x68] sm:$0x1]
      %v691 = vsel %vm665, 0, %v690
      %692 = vst [vmem:[#allocation2 + $0x68] sm:$0x1] %v691
      %v693 = vld [vmem:[#allocation2 + $0x74] sm:$0x1]
      %v694 = vsel %vm665, 0, %v693
      %695 = vst [vmem:[#allocation2 + $0x74] sm:$0x1] %v694
      %v696 = vld [vmem:[#allocation2 + $0x80] sm:$0x1]
      %v697 = vsel %vm665, 0, %v696
      %698 = vst [vmem:[#allocation2 + $0x80] sm:$0x1] %v697
      %v699 = vld [vmem:[#allocation2 + $0x8c] sm:$0x1]
      %v700 = vsel %vm665, 0, %v699
      %701 = vst [vmem:[#allocation2 + $0x8c] sm:$0x1] %v700
      %v702 = vld [vmem:[#allocation2 + $0x98] sm:$0x1]
      %v703 = vsel %vm665, 0, %v702
      %704 = vst [vmem:[#allocation2 + $0x98] sm:$0x1] %v703
      %v705 = vld [vmem:[#allocation2 + $0xa4] sm:$0x1]
      %v706 = vsel %vm665, 0, %v705
      %707 = vst [vmem:[#allocation2 + $0xa4] sm:$0x1] %v706
      %v708 = vld [vmem:[#allocation2 + $0xb0] sm:$0x1]
      %v709 = vsel %vm665, 0, %v708
      %710 = vst [vmem:[#allocation2 + $0xb0] sm:$0x1] %v709
      %v711 = vld [vmem:[#allocation2 + $0xbc] sm:$0x1]
      %v712 = vsel %vm665, 0, %v711
      %713 = vst [vmem:[#allocation2 + $0xbc] sm:$0x1] %v712
      %v714 = vld [vmem:[#allocation2 + $0xc8] sm:$0x1]
      %v715 = vsel %vm665, 0, %v714
      %716 = vst [vmem:[#allocation2 + $0xc8] sm:$0x1] %v715
      %v717 = vld [vmem:[#allocation2 + $0xd4] sm:$0x1]
      %v718 = vsel %vm665, 0, %v717
      %719 = vst [vmem:[#allocation2 + $0xd4] sm:$0x1] %v718
      %v720 = vpack.c.bf16 %v566, %v566
      %v721 = vpack.c.bf16 %v567, %v567
      %v722 = vpack.c.bf16 %v568, %v568
      %v723 = vpack.c.bf16 %v569, %v569
      %v724 = vpack.c.bf16 %v570, %v570
      %v725 = vpack.c.bf16 %v571, %v571
      %v726 = vpack.c.bf16 %v572, %v572
      %v727 = vpack.c.bf16 %v573, %v573
      %v728 = vpack.c.bf16 %v574, %v574
      %v729 = vpack.c.bf16 %v575, %v575
      %v730 = vpack.c.bf16 %v576, %v576
      %v731 = vpack.c.bf16 %v577, %v577
      %v732 = vpack.c.bf16 %v578, %v578
      %v733 = vpack.c.bf16 %v579, %v579
      %v734 = vpack.c.bf16 %v580, %v580
      %v735 = vpack.c.bf16 %v581, %v581
      %v736 = vpack.c.bf16 %v582, %v582
      %v737 = vpack.c.bf16 %v583, %v583
      %v738 = vpack.c.bf16 %v584, %v584
      %v739 = vpack.c.bf16 %v585, %v585
      %v740 = vpack.c.bf16 %v586, %v586
      %v741 = vpack.c.bf16 %v587, %v587
      %v742 = vpack.c.bf16 %v588, %v588
      %v743 = vpack.c.bf16 %v589, %v589
      %v744 = vpack.c.bf16 %v590, %v590
      %v745 = vpack.c.bf16 %v591, %v591
      %v746 = vpack.c.bf16 %v592, %v592
      %v747 = vpack.c.bf16 %v593, %v593
      %v748 = vpack.c.bf16 %v594, %v594
      %v749 = vpack.c.bf16 %v595, %v595
      %v750 = vpack.c.bf16 %v596, %v596
      %v751 = vpack.c.bf16 %v597, %v597
      %vm752 = vsmask.f32 4368
      %vm753 = vmor %vm608, %vm752
      %v755 = vshrl.u32 %v720, 16
      %v757 = vrot.slane %v755, 7
      %v758 = vshll.u32 %v720, 16
      %v760 = vor.u32 %v757, %v758
      %v761 = vrot.slane %v757, 4
      %v763 = vshrl.u32 %v721, 16
      %v765 = vrot.slane %v763, 7
      %v766 = vshll.u32 %v721, 16
      %v768 = vor.u32 %v765, %v766
      %v769 = vsel %vm753, %v761, %v768
      %v770 = vrot.slane %v765, 4
      %v772 = vshrl.u32 %v722, 16
      %v774 = vrot.slane %v772, 7
      %v775 = vshll.u32 %v722, 16
      %v777 = vor.u32 %v774, %v775
      %v778 = vrot.slane %v774, 4
      %v780 = vshrl.u32 %v723, 16
      %v782 = vrot.slane %v780, 7
      %v783 = vshll.u32 %v723, 16
      %v785 = vor.u32 %v782, %v783
      %v786 = vsel %vm753, %v778, %v785
      %v787 = vrot.slane %v782, 4
      %v789 = vshrl.u32 %v724, 16
      %v791 = vrot.slane %v789, 7
      %v792 = vshll.u32 %v724, 16
      %v794 = vor.u32 %v791, %v792
      %v795 = vrot.slane %v791, 4
      %v797 = vshrl.u32 %v725, 16
      %v799 = vrot.slane %v797, 7
      %v800 = vshll.u32 %v725, 16
      %v802 = vor.u32 %v799, %v800
      %v803 = vsel %vm753, %v795, %v802
      %v804 = vrot.slane %v799, 4
      %v806 = vshrl.u32 %v726, 16
      %v808 = vrot.slane %v806, 7
      %v809 = vshll.u32 %v726, 16
      %v811 = vor.u32 %v808, %v809
      %v812 = vrot.slane %v808, 4
      %v814 = vshrl.u32 %v727, 16
      %v816 = vrot.slane %v814, 7
      %v817 = vshll.u32 %v727, 16
      %v819 = vor.u32 %v816, %v817
      %v820 = vsel %vm753, %v812, %v819
      %v821 = vrot.slane %v816, 4
      %v823 = vshrl.u32 %v728, 16
      %v825 = vrot.slane %v823, 7
      %v826 = vshll.u32 %v728, 16
      %v828 = vor.u32 %v825, %v826
      %v829 = vrot.slane %v825, 4
      %v831 = vshrl.u32 %v729, 16
      %v833 = vrot.slane %v831, 7
      %v834 = vshll.u32 %v729, 16
      %v836 = vor.u32 %v833, %v834
      %v837 = vsel %vm753, %v829, %v836
      %v838 = vrot.slane %v833, 4
      %v840 = vshrl.u32 %v730, 16
      %v842 = vrot.slane %v840, 7
      %v843 = vshll.u32 %v730, 16
      %v845 = vor.u32 %v842, %v843
      %v846 = vrot.slane %v842, 4
      %v848 = vshrl.u32 %v731, 16
      %v850 = vrot.slane %v848, 7
      %v851 = vshll.u32 %v731, 16
      %v853 = vor.u32 %v850, %v851
      %v854 = vsel %vm753, %v846, %v853
      %v855 = vrot.slane %v850, 4
      %v857 = vshrl.u32 %v732, 16
      %v859 = vrot.slane %v857, 7
      %v860 = vshll.u32 %v732, 16
      %v862 = vor.u32 %v859, %v860
      %v863 = vrot.slane %v859, 4
      %v865 = vshrl.u32 %v733, 16
      %v867 = vrot.slane %v865, 7
      %v868 = vshll.u32 %v733, 16
      %v870 = vor.u32 %v867, %v868
      %v871 = vsel %vm753, %v863, %v870
      %v872 = vrot.slane %v867, 4
      %v874 = vshrl.u32 %v734, 16
      %v876 = vrot.slane %v874, 7
      %v877 = vshll.u32 %v734, 16
      %v879 = vor.u32 %v876, %v877
      %v880 = vrot.slane %v876, 4
      %v882 = vshrl.u32 %v735, 16
      %v884 = vrot.slane %v882, 7
      %v885 = vshll.u32 %v735, 16
      %v887 = vor.u32 %v884, %v885
      %v888 = vsel %vm753, %v880, %v887
      %v889 = vrot.slane %v884, 4
      %v891 = vshrl.u32 %v736, 16
      %v893 = vrot.slane %v891, 7
      %v894 = vshll.u32 %v736, 16
      %v896 = vor.u32 %v893, %v894
      %v897 = vrot.slane %v893, 4
      %v899 = vshrl.u32 %v737, 16
      %v901 = vrot.slane %v899, 7
      %v902 = vshll.u32 %v737, 16
      %v904 = vor.u32 %v901, %v902
      %v905 = vsel %vm753, %v897, %v904
      %v906 = vrot.slane %v901, 4
      %v908 = vshrl.u32 %v738, 16
      %v910 = vrot.slane %v908, 7
      %v911 = vshll.u32 %v738, 16
      %v913 = vor.u32 %v910, %v911
      %v914 = vrot.slane %v910, 4
      %v916 = vshrl.u32 %v739, 16
      %v918 = vrot.slane %v916, 7
      %v919 = vshll.u32 %v739, 16
      %v921 = vor.u32 %v918, %v919
      %v922 = vsel %vm753, %v914, %v921
      %v923 = vrot.slane %v918, 4
      %v925 = vshrl.u32 %v740, 16
      %v927 = vrot.slane %v925, 7
      %v928 = vshll.u32 %v740, 16
      %v930 = vor.u32 %v927, %v928
      %v931 = vrot.slane %v927, 4
      %v933 = vshrl.u32 %v741, 16
      %v935 = vrot.slane %v933, 7
      %v936 = vshll.u32 %v741, 16
      %v938 = vor.u32 %v935, %v936
      %v939 = vsel %vm753, %v931, %v938
      %v940 = vrot.slane %v935, 4
      %v942 = vshrl.u32 %v742, 16
      %v944 = vrot.slane %v942, 7
      %v945 = vshll.u32 %v742, 16
      %v947 = vor.u32 %v944, %v945
      %v948 = vrot.slane %v944, 4
      %v950 = vshrl.u32 %v743, 16
      %v952 = vrot.slane %v950, 7
      %v953 = vshll.u32 %v743, 16
      %v955 = vor.u32 %v952, %v953
      %v956 = vsel %vm753, %v948, %v955
      %v957 = vrot.slane %v952, 4
      %v959 = vshrl.u32 %v744, 16
      %v961 = vrot.slane %v959, 7
      %v962 = vshll.u32 %v744, 16
      %v964 = vor.u32 %v961, %v962
      %v965 = vrot.slane %v961, 4
      %v967 = vshrl.u32 %v745, 16
      %v969 = vrot.slane %v967, 7
      %v970 = vshll.u32 %v745, 16
      %v972 = vor.u32 %v969, %v970
      %v973 = vsel %vm753, %v965, %v972
      %v974 = vrot.slane %v969, 4
      %v976 = vshrl.u32 %v746, 16
      %v978 = vrot.slane %v976, 7
      %v979 = vshll.u32 %v746, 16
      %v981 = vor.u32 %v978, %v979
      %v982 = vrot.slane %v978, 4
      %v984 = vshrl.u32 %v747, 16
      %v986 = vrot.slane %v984, 7
      %v987 = vshll.u32 %v747, 16
      %v989 = vor.u32 %v986, %v987
      %v990 = vsel %vm753, %v982, %v989
      %v991 = vrot.slane %v986, 4
      %v993 = vshrl.u32 %v748, 16
      %v995 = vrot.slane %v993, 7
      %v996 = vshll.u32 %v748, 16
      %v998 = vor.u32 %v995, %v996
      %v999 = vrot.slane %v995, 4
      %v1001 = vshrl.u32 %v749, 16
      %v1003 = vrot.slane %v1001, 7
      %v1004 = vshll.u32 %v749, 16
      %v1006 = vor.u32 %v1003, %v1004
      %v1007 = vsel %vm753, %v999, %v1006
      %v1008 = vrot.slane %v1003, 4
      %v1010 = vshrl.u32 %v750, 16
      %v1012 = vrot.slane %v1010, 7
      %v1013 = vshll.u32 %v750, 16
      %v1015 = vor.u32 %v1012, %v1013
      %v1016 = vrot.slane %v1012, 4
      %v1018 = vshrl.u32 %v751, 16
      %v1020 = vrot.slane %v1018, 7
      %v1021 = vshll.u32 %v751, 16
      %v1023 = vor.u32 %v1020, %v1021
      %v1024 = vsel %vm753, %v1016, %v1023
      %v1025 = vrot.slane %v1020, 4
      %s1074 = scalar_lea.vmem [#allocation2], 12
      %vm1075 = vcmask 27648
      %vm1076 = vmand %vm1075, %vm664
      %v1077 = vld [vmem:[%s1074] sm:$0xf]
      %v1078 = vsel %vm1076, %v760, %v1077
      %1079 = vst [vmem:[%s1074] sm:$0xf] %v1078
      %1080 = vst.msk [vmem:[%s1074 + $0x4] sm:$0xf] %vm598, %v769
      %v1081 = vld [vmem:[%s1074 + $0x8] sm:$0x1]
      %v1082 = vsel %vm609, %v770, %v1081
      %1083 = vst [vmem:[%s1074 + $0x8] sm:$0x1] %v1082
      %v1084 = vld [vmem:[%s1074 + $0xc] sm:$0xf]
      %v1085 = vsel %vm1076, %v777, %v1084
      %1086 = vst [vmem:[%s1074 + $0xc] sm:$0xf] %v1085
      %1087 = vst.msk [vmem:[%s1074 + $0x10] sm:$0xf] %vm598, %v786
      %v1088 = vld [vmem:[%s1074 + $0x14] sm:$0x1]
      %v1089 = vsel %vm609, %v787, %v1088
      %1090 = vst [vmem:[%s1074 + $0x14] sm:$0x1] %v1089
      %v1091 = vld [vmem:[%s1074 + $0x18] sm:$0xf]
      %v1092 = vsel %vm1076, %v794, %v1091
      %1093 = vst [vmem:[%s1074 + $0x18] sm:$0xf] %v1092
      %1094 = vst.msk [vmem:[%s1074 + $0x1c] sm:$0xf] %vm598, %v803
      %v1095 = vld [vmem:[%s1074 + $0x20] sm:$0x1]
      %v1096 = vsel %vm609, %v804, %v1095
      %1097 = vst [vmem:[%s1074 + $0x20] sm:$0x1] %v1096
      %v1098 = vld [vmem:[%s1074 + $0x24] sm:$0xf]
      %v1099 = vsel %vm1076, %v811, %v1098
      %1100 = vst [vmem:[%s1074 + $0x24] sm:$0xf] %v1099
      %1101 = vst.msk [vmem:[%s1074 + $0x28] sm:$0xf] %vm598, %v820
      %v1102 = vld [vmem:[%s1074 + $0x2c] sm:$0x1]
      %v1103 = vsel %vm609, %v821, %v1102
      %1104 = vst [vmem:[%s1074 + $0x2c] sm:$0x1] %v1103
      %v1105 = vld [vmem:[%s1074 + $0x30] sm:$0xf]
      %v1106 = vsel %vm1076, %v828, %v1105
      %1107 = vst [vmem:[%s1074 + $0x30] sm:$0xf] %v1106
      %1108 = vst.msk [vmem:[%s1074 + $0x34] sm:$0xf] %vm598, %v837
      %v1109 = vld [vmem:[%s1074 + $0x38] sm:$0x1]
      %v1110 = vsel %vm609, %v838, %v1109
      %1111 = vst [vmem:[%s1074 + $0x38] sm:$0x1] %v1110
      %v1112 = vld [vmem:[%s1074 + $0x3c] sm:$0xf]
      %v1113 = vsel %vm1076, %v845, %v1112
      %1114 = vst [vmem:[%s1074 + $0x3c] sm:$0xf] %v1113
      %1115 = vst.msk [vmem:[%s1074 + $0x40] sm:$0xf] %vm598, %v854
      %v1116 = vld [vmem:[%s1074 + $0x44] sm:$0x1]
      %v1117 = vsel %vm609, %v855, %v1116
      %1118 = vst [vmem:[%s1074 + $0x44] sm:$0x1] %v1117
      %v1119 = vld [vmem:[%s1074 + $0x48] sm:$0xf]
      %v1120 = vsel %vm1076, %v862, %v1119
      %1121 = vst [vmem:[%s1074 + $0x48] sm:$0xf] %v1120
      %1122 = vst.msk [vmem:[%s1074 + $0x4c] sm:$0xf] %vm598, %v871
      %v1123 = vld [vmem:[%s1074 + $0x50] sm:$0x1]
      %v1124 = vsel %vm609, %v872, %v1123
      %1125 = vst [vmem:[%s1074 + $0x50] sm:$0x1] %v1124
      %v1126 = vld [vmem:[%s1074 + $0x54] sm:$0xf]
      %v1127 = vsel %vm1076, %v879, %v1126
      %1128 = vst [vmem:[%s1074 + $0x54] sm:$0xf] %v1127
      %1129 = vst.msk [vmem:[%s1074 + $0x58] sm:$0xf] %vm598, %v888
      %v1130 = vld [vmem:[%s1074 + $0x5c] sm:$0x1]
      %v1131 = vsel %vm609, %v889, %v1130
      %1132 = vst [vmem:[%s1074 + $0x5c] sm:$0x1] %v1131
      %v1133 = vld [vmem:[%s1074 + $0x60] sm:$0xf]
      %v1134 = vsel %vm1076, %v896, %v1133
      %1135 = vst [vmem:[%s1074 + $0x60] sm:$0xf] %v1134
      %1136 = vst.msk [vmem:[%s1074 + $0x64] sm:$0xf] %vm598, %v905
      %v1137 = vld [vmem:[%s1074 + $0x68] sm:$0x1]
      %v1138 = vsel %vm609, %v906, %v1137
      %1139 = vst [vmem:[%s1074 + $0x68] sm:$0x1] %v1138
      %v1140 = vld [vmem:[%s1074 + $0x6c] sm:$0xf]
      %v1141 = vsel %vm1076, %v913, %v1140
      %1142 = vst [vmem:[%s1074 + $0x6c] sm:$0xf] %v1141
      %1143 = vst.msk [vmem:[%s1074 + $0x70] sm:$0xf] %vm598, %v922
      %v1144 = vld [vmem:[%s1074 + $0x74] sm:$0x1]
      %v1145 = vsel %vm609, %v923, %v1144
      %1146 = vst [vmem:[%s1074 + $0x74] sm:$0x1] %v1145
      %v1147 = vld [vmem:[%s1074 + $0x78] sm:$0xf]
      %v1148 = vsel %vm1076, %v930, %v1147
      %1149 = vst [vmem:[%s1074 + $0x78] sm:$0xf] %v1148
      %1150 = vst.msk [vmem:[%s1074 + $0x7c] sm:$0xf] %vm598, %v939
      %v1151 = vld [vmem:[%s1074 + $0x80] sm:$0x1]
      %v1152 = vsel %vm609, %v940, %v1151
      %1153 = vst [vmem:[%s1074 + $0x80] sm:$0x1] %v1152
      %v1154 = vld [vmem:[%s1074 + $0x84] sm:$0xf]
      %v1155 = vsel %vm1076, %v947, %v1154
      %1156 = vst [vmem:[%s1074 + $0x84] sm:$0xf] %v1155
      %1157 = vst.msk [vmem:[%s1074 + $0x88] sm:$0xf] %vm598, %v956
      %v1158 = vld [vmem:[%s1074 + $0x8c] sm:$0x1]
      %v1159 = vsel %vm609, %v957, %v1158
      %1160 = vst [vmem:[%s1074 + $0x8c] sm:$0x1] %v1159
      %v1161 = vld [vmem:[%s1074 + $0x90] sm:$0xf]
      %v1162 = vsel %vm1076, %v964, %v1161
      %1163 = vst [vmem:[%s1074 + $0x90] sm:$0xf] %v1162
      %1164 = vst.msk [vmem:[%s1074 + $0x94] sm:$0xf] %vm598, %v973
      %v1165 = vld [vmem:[%s1074 + $0x98] sm:$0x1]
      %v1166 = vsel %vm609, %v974, %v1165
      %1167 = vst [vmem:[%s1074 + $0x98] sm:$0x1] %v1166
      %v1168 = vld [vmem:[%s1074 + $0x9c] sm:$0xf]
      %v1169 = vsel %vm1076, %v981, %v1168
      %1170 = vst [vmem:[%s1074 + $0x9c] sm:$0xf] %v1169
      %1171 = vst.msk [vmem:[%s1074 + $0xa0] sm:$0xf] %vm598, %v990
      %v1172 = vld [vmem:[%s1074 + $0xa4] sm:$0x1]
      %v1173 = vsel %vm609, %v991, %v1172
      %1174 = vst [vmem:[%s1074 + $0xa4] sm:$0x1] %v1173
      %v1175 = vld [vmem:[%s1074 + $0xa8] sm:$0xf]
      %v1176 = vsel %vm1076, %v998, %v1175
      %1177 = vst [vmem:[%s1074 + $0xa8] sm:$0xf] %v1176
      %1178 = vst.msk [vmem:[%s1074 + $0xac] sm:$0xf] %vm598, %v1007
      %v1179 = vld [vmem:[%s1074 + $0xb0] sm:$0x1]
      %v1180 = vsel %vm609, %v1008, %v1179
      %1181 = vst [vmem:[%s1074 + $0xb0] sm:$0x1] %v1180
      %v1182 = vld [vmem:[%s1074 + $0xb4] sm:$0xf]
      %v1183 = vsel %vm1076, %v1015, %v1182
      %1184 = vst [vmem:[%s1074 + $0xb4] sm:$0xf] %v1183
      %1185 = vst.msk [vmem:[%s1074 + $0xb8] sm:$0xf] %vm598, %v1024
      %v1186 = vld [vmem:[%s1074 + $0xbc] sm:$0x1]
      %v1187 = vsel %vm609, %v1025, %v1186
      %1188 = vst [vmem:[%s1074 + $0xbc] sm:$0x1] %v1187
      %v1189 = vld [vmem:[#allocation2] sm:$0xf]
      %v1190 = vld [vmem:[#allocation2 + $0x4] sm:$0xf]
      %v1191 = vld [vmem:[#allocation2 + $0xc] sm:$0xf]
      %v1192 = vld [vmem:[#allocation2 + $0x10] sm:$0xf]
      %v1193 = vld [vmem:[#allocation2 + $0x18] sm:$0xf]
      %v1194 = vld [vmem:[#allocation2 + $0x1c] sm:$0xf]
      %v1195 = vld [vmem:[#allocation2 + $0x24] sm:$0xf]
      %v1196 = vld [vmem:[#allocation2 + $0x28] sm:$0xf]
      %v1197 = vld [vmem:[#allocation2 + $0x30] sm:$0xf]
      %v1198 = vld [vmem:[#allocation2 + $0x34] sm:$0xf]
      %v1199 = vld [vmem:[#allocation2 + $0x3c] sm:$0xf]
      %v1200 = vld [vmem:[#allocation2 + $0x40] sm:$0xf]
      %v1201 = vld [vmem:[#allocation2 + $0x48] sm:$0xf]
      %v1202 = vld [vmem:[#allocation2 + $0x4c] sm:$0xf]
      %v1203 = vld [vmem:[#allocation2 + $0x54] sm:$0xf]
      %v1204 = vld [vmem:[#allocation2 + $0x58] sm:$0xf]
      %v1205 = vld [vmem:[#allocation2 + $0x60] sm:$0xf]
      %v1206 = vld [vmem:[#allocation2 + $0x64] sm:$0xf]
      %v1207 = vld [vmem:[#allocation2 + $0x6c] sm:$0xf]
      %v1208 = vld [vmem:[#allocation2 + $0x70] sm:$0xf]
      %v1209 = vld [vmem:[#allocation2 + $0x78] sm:$0xf]
      %v1210 = vld [vmem:[#allocation2 + $0x7c] sm:$0xf]
      %v1211 = vld [vmem:[#allocation2 + $0x84] sm:$0xf]
      %v1212 = vld [vmem:[#allocation2 + $0x88] sm:$0xf]
      %v1213 = vld [vmem:[#allocation2 + $0x90] sm:$0xf]
      %v1214 = vld [vmem:[#allocation2 + $0x94] sm:$0xf]
      %v1215 = vld [vmem:[#allocation2 + $0x9c] sm:$0xf]
      %v1216 = vld [vmem:[#allocation2 + $0xa0] sm:$0xf]
      %v1217 = vld [vmem:[#allocation2 + $0xa8] sm:$0xf]
      %v1218 = vld [vmem:[#allocation2 + $0xac] sm:$0xf]
      %v1219 = vld [vmem:[#allocation2 + $0xb4] sm:$0xf]
      %v1220 = vld [vmem:[#allocation2 + $0xb8] sm:$0xf]
      %v1221 = vld [vmem:[#allocation2 + $0x8] sm:$0x1]
      %v1222 = vld [vmem:[#allocation2 + $0x14] sm:$0x1]
      %v1223 = vld [vmem:[#allocation2 + $0x20] sm:$0x1]
      %v1224 = vld [vmem:[#allocation2 + $0x2c] sm:$0x1]
      %v1225 = vld [vmem:[#allocation2 + $0x38] sm:$0x1]
      %v1226 = vld [vmem:[#allocation2 + $0x44] sm:$0x1]
      %v1227 = vld [vmem:[#allocation2 + $0x50] sm:$0x1]
      %v1228 = vld [vmem:[#allocation2 + $0x5c] sm:$0x1]
      %v1229 = vld [vmem:[#allocation2 + $0x68] sm:$0x1]
      %v1230 = vld [vmem:[#allocation2 + $0x74] sm:$0x1]
      %v1231 = vld [vmem:[#allocation2 + $0x80] sm:$0x1]
      %v1232 = vld [vmem:[#allocation2 + $0x8c] sm:$0x1]
      %v1233 = vld [vmem:[#allocation2 + $0x98] sm:$0x1]
      %v1234 = vld [vmem:[#allocation2 + $0xa4] sm:$0x1]
      %v1235 = vld [vmem:[#allocation2 + $0xb0] sm:$0x1]
      %v1236 = vld [vmem:[#allocation2 + $0xbc] sm:$0x1]
      %v1237 = vld [vmem:[#allocation2] sm:$0xe]
      %v1238 = vld [vmem:[#allocation2 + $0xc] sm:$0xe]
      %v1239 = vld [vmem:[#allocation2 + $0x18] sm:$0xe]
      %v1240 = vld [vmem:[#allocation2 + $0x24] sm:$0xe]
      %v1241 = vld [vmem:[#allocation2 + $0x30] sm:$0xe]
      %v1242 = vld [vmem:[#allocation2 + $0x3c] sm:$0xe]
      %v1243 = vld [vmem:[#allocation2 + $0x48] sm:$0xe]
      %v1244 = vld [vmem:[#allocation2 + $0x54] sm:$0xe]
      %v1245 = vld [vmem:[#allocation2 + $0x60] sm:$0xe]
      %v1246 = vld [vmem:[#allocation2 + $0x6c] sm:$0xe]
      %v1247 = vld [vmem:[#allocation2 + $0x78] sm:$0xe]
      %v1248 = vld [vmem:[#allocation2 + $0x84] sm:$0xe]
      %v1249 = vld [vmem:[#allocation2 + $0x90] sm:$0xe]
      %v1250 = vld [vmem:[#allocation2 + $0x9c] sm:$0xe]
      %v1251 = vld [vmem:[#allocation2 + $0xa8] sm:$0xe]
      %v1252 = vld [vmem:[#allocation2 + $0xb4] sm:$0xe]
      %v1253 = vld [vmem:[%s1074] sm:$0xf]
      %v1254 = vld [vmem:[%s1074 + $0x4] sm:$0xf]
      %v1255 = vld [vmem:[%s1074 + $0xc] sm:$0xf]
      %v1256 = vld [vmem:[%s1074 + $0x10] sm:$0xf]
      %v1257 = vld [vmem:[%s1074 + $0x18] sm:$0xf]
      %v1258 = vld [vmem:[%s1074 + $0x1c] sm:$0xf]
      %v1259 = vld [vmem:[%s1074 + $0x24] sm:$0xf]
      %v1260 = vld [vmem:[%s1074 + $0x28] sm:$0xf]
      %v1261 = vld [vmem:[%s1074 + $0x30] sm:$0xf]
      %v1262 = vld [vmem:[%s1074 + $0x34] sm:$0xf]
      %v1263 = vld [vmem:[%s1074 + $0x3c] sm:$0xf]
      %v1264 = vld [vmem:[%s1074 + $0x40] sm:$0xf]
      %v1265 = vld [vmem:[%s1074 + $0x48] sm:$0xf]
      %v1266 = vld [vmem:[%s1074 + $0x4c] sm:$0xf]
      %v1267 = vld [vmem:[%s1074 + $0x54] sm:$0xf]
      %v1268 = vld [vmem:[%s1074 + $0x58] sm:$0xf]
      %v1269 = vld [vmem:[%s1074 + $0x60] sm:$0xf]
      %v1270 = vld [vmem:[%s1074 + $0x64] sm:$0xf]
      %v1271 = vld [vmem:[%s1074 + $0x6c] sm:$0xf]
      %v1272 = vld [vmem:[%s1074 + $0x70] sm:$0xf]
      %v1273 = vld [vmem:[%s1074 + $0x78] sm:$0xf]
      %v1274 = vld [vmem:[%s1074 + $0x7c] sm:$0xf]
      %v1275 = vld [vmem:[%s1074 + $0x84] sm:$0xf]
      %v1276 = vld [vmem:[%s1074 + $0x88] sm:$0xf]
      %v1277 = vld [vmem:[%s1074 + $0x90] sm:$0xf]
      %v1278 = vld [vmem:[%s1074 + $0x94] sm:$0xf]
      %v1279 = vld [vmem:[%s1074 + $0x9c] sm:$0xf]
      %v1280 = vld [vmem:[%s1074 + $0xa0] sm:$0xf]
      %v1281 = vld [vmem:[%s1074 + $0xa8] sm:$0xf]
      %v1282 = vld [vmem:[%s1074 + $0xac] sm:$0xf]
      %v1283 = vld [vmem:[%s1074 + $0xb4] sm:$0xf]
      %v1284 = vld [vmem:[%s1074 + $0xb8] sm:$0xf]
      %v1285 = vld [vmem:[%s1074 + $0x8] sm:$0x1]
      %v1286 = vld [vmem:[%s1074 + $0x14] sm:$0x1]
      %v1287 = vld [vmem:[%s1074 + $0x20] sm:$0x1]
      %v1288 = vld [vmem:[%s1074 + $0x2c] sm:$0x1]
      %v1289 = vld [vmem:[%s1074 + $0x38] sm:$0x1]
      %v1290 = vld [vmem:[%s1074 + $0x44] sm:$0x1]
      %v1291 = vld [vmem:[%s1074 + $0x50] sm:$0x1]
      %v1292 = vld [vmem:[%s1074 + $0x5c] sm:$0x1]
      %v1293 = vld [vmem:[%s1074 + $0x68] sm:$0x1]
      %v1294 = vld [vmem:[%s1074 + $0x74] sm:$0x1]
      %v1295 = vld [vmem:[%s1074 + $0x80] sm:$0x1]
      %v1296 = vld [vmem:[%s1074 + $0x8c] sm:$0x1]
      %v1297 = vld [vmem:[%s1074 + $0x98] sm:$0x1]
      %v1298 = vld [vmem:[%s1074 + $0xa4] sm:$0x1]
      %v1299 = vld [vmem:[%s1074 + $0xb0] sm:$0x1]
      %v1300 = vld [vmem:[%s1074 + $0xbc] sm:$0x1]
      %v1301 = vld [vmem:[%s1074] sm:$0xe]
      %v1302 = vld [vmem:[%s1074 + $0xc] sm:$0xe]
      %v1303 = vld [vmem:[%s1074 + $0x18] sm:$0xe]
      %v1304 = vld [vmem:[%s1074 + $0x24] sm:$0xe]
      %v1305 = vld [vmem:[%s1074 + $0x30] sm:$0xe]
      %v1306 = vld [vmem:[%s1074 + $0x3c] sm:$0xe]
      %v1307 = vld [vmem:[%s1074 + $0x48] sm:$0xe]
      %v1308 = vld [vmem:[%s1074 + $0x54] sm:$0xe]
      %v1309 = vld [vmem:[%s1074 + $0x60] sm:$0xe]
      %v1310 = vld [vmem:[%s1074 + $0x6c] sm:$0xe]
      %v1311 = vld [vmem:[%s1074 + $0x78] sm:$0xe]
      %v1312 = vld [vmem:[%s1074 + $0x84] sm:$0xe]
      %v1313 = vld [vmem:[%s1074 + $0x90] sm:$0xe]
      %v1314 = vld [vmem:[%s1074 + $0x9c] sm:$0xe]
      %v1315 = vld [vmem:[%s1074 + $0xa8] sm:$0xe]
      %v1316 = vld [vmem:[%s1074 + $0xb4] sm:$0xe]
      %s1317 = scalar_lea.vmem [#allocation2], 24
      %v1318 = vld [vmem:[%s1317] sm:$0xf]
      %v1319 = vld [vmem:[%s1317 + $0x4] sm:$0xf]
      %v1320 = vld [vmem:[%s1317 + $0xc] sm:$0xf]
      %v1321 = vld [vmem:[%s1317 + $0x10] sm:$0xf]
      %v1322 = vld [vmem:[%s1317 + $0x18] sm:$0xf]
      %v1323 = vld [vmem:[%s1317 + $0x1c] sm:$0xf]
      %v1324 = vld [vmem:[%s1317 + $0x24] sm:$0xf]
      %v1325 = vld [vmem:[%s1317 + $0x28] sm:$0xf]
      %v1326 = vld [vmem:[%s1317 + $0x30] sm:$0xf]
      %v1327 = vld [vmem:[%s1317 + $0x34] sm:$0xf]
      %v1328 = vld [vmem:[%s1317 + $0x3c] sm:$0xf]
      %v1329 = vld [vmem:[%s1317 + $0x40] sm:$0xf]
      %v1330 = vld [vmem:[%s1317 + $0x48] sm:$0xf]
      %v1331 = vld [vmem:[%s1317 + $0x4c] sm:$0xf]
      %v1332 = vld [vmem:[%s1317 + $0x54] sm:$0xf]
      %v1333 = vld [vmem:[%s1317 + $0x58] sm:$0xf]
      %v1334 = vld [vmem:[%s1317 + $0x60] sm:$0xf]
      %v1335 = vld [vmem:[%s1317 + $0x64] sm:$0xf]
      %v1336 = vld [vmem:[%s1317 + $0x6c] sm:$0xf]
      %v1337 = vld [vmem:[%s1317 + $0x70] sm:$0xf]
      %v1338 = vld [vmem:[%s1317 + $0x78] sm:$0xf]
      %v1339 = vld [vmem:[%s1317 + $0x7c] sm:$0xf]
      %v1340 = vld [vmem:[%s1317 + $0x84] sm:$0xf]
      %v1341 = vld [vmem:[%s1317 + $0x88] sm:$0xf]
      %v1342 = vld [vmem:[%s1317 + $0x90] sm:$0xf]
      %v1343 = vld [vmem:[%s1317 + $0x94] sm:$0xf]
      %v1344 = vld [vmem:[%s1317 + $0x9c] sm:$0xf]
      %v1345 = vld [vmem:[%s1317 + $0xa0] sm:$0xf]
      %v1346 = vld [vmem:[%s1317 + $0xa8] sm:$0xf]
      %v1347 = vld [vmem:[%s1317 + $0xac] sm:$0xf]
      %v1348 = vld [vmem:[%s1317 + $0xb4] sm:$0xf]
      %v1349 = vld [vmem:[%s1317 + $0xb8] sm:$0xf]
      %v1350 = vld [vmem:[%s1317 + $0x8] sm:$0x1]
      %v1351 = vld [vmem:[%s1317 + $0x14] sm:$0x1]
      %v1352 = vld [vmem:[%s1317 + $0x20] sm:$0x1]
      %v1353 = vld [vmem:[%s1317 + $0x2c] sm:$0x1]
      %v1354 = vld [vmem:[%s1317 + $0x38] sm:$0x1]
      %v1355 = vld [vmem:[%s1317 + $0x44] sm:$0x1]
      %v1356 = vld [vmem:[%s1317 + $0x50] sm:$0x1]
      %v1357 = vld [vmem:[%s1317 + $0x5c] sm:$0x1]
      %v1358 = vld [vmem:[%s1317 + $0x68] sm:$0x1]
      %v1359 = vld [vmem:[%s1317 + $0x74] sm:$0x1]
      %v1360 = vld [vmem:[%s1317 + $0x80] sm:$0x1]
      %v1361 = vld [vmem:[%s1317 + $0x8c] sm:$0x1]
      %v1362 = vld [vmem:[%s1317 + $0x98] sm:$0x1]
      %v1363 = vld [vmem:[%s1317 + $0xa4] sm:$0x1]
      %v1364 = vld [vmem:[%s1317 + $0xb0] sm:$0x1]
      %v1365 = vld [vmem:[%s1317 + $0xbc] sm:$0x1]
      %v1366 = vld [vmem:[%s1317] sm:$0xe]
      %v1367 = vld [vmem:[%s1317 + $0xc] sm:$0xe]
      %v1368 = vld [vmem:[%s1317 + $0x18] sm:$0xe]
      %v1369 = vld [vmem:[%s1317 + $0x24] sm:$0xe]
      %v1370 = vld [vmem:[%s1317 + $0x30] sm:$0xe]
      %v1371 = vld [vmem:[%s1317 + $0x3c] sm:$0xe]
      %v1372 = vld [vmem:[%s1317 + $0x48] sm:$0xe]
      %v1373 = vld [vmem:[%s1317 + $0x54] sm:$0xe]
      %v1374 = vld [vmem:[%s1317 + $0x60] sm:$0xe]
      %v1375 = vld [vmem:[%s1317 + $0x6c] sm:$0xe]
      %v1376 = vld [vmem:[%s1317 + $0x78] sm:$0xe]
      %v1377 = vld [vmem:[%s1317 + $0x84] sm:$0xe]
      %v1378 = vld [vmem:[%s1317 + $0x90] sm:$0xe]
      %v1379 = vld [vmem:[%s1317 + $0x9c] sm:$0xe]
      %v1380 = vld [vmem:[%s1317 + $0xa8] sm:$0xe]
      %v1381 = vld [vmem:[%s1317 + $0xb4] sm:$0xe]
      %v1414 = vunpack.c.l.b16 %v1189
      %v1415 = vunpack.c.l.b16 %v1190
      %v1416 = vunpack.c.l.b16 %v1191
      %v1417 = vunpack.c.l.b16 %v1192
      %v1418 = vunpack.c.l.b16 %v1193
      %v1419 = vunpack.c.l.b16 %v1194
      %v1420 = vunpack.c.l.b16 %v1195
      %v1421 = vunpack.c.l.b16 %v1196
      %v1422 = vunpack.c.l.b16 %v1197
      %v1423 = vunpack.c.l.b16 %v1198
      %v1424 = vunpack.c.l.b16 %v1199
      %v1425 = vunpack.c.l.b16 %v1200
      %v1426 = vunpack.c.l.b16 %v1201
      %v1427 = vunpack.c.l.b16 %v1202
      %v1428 = vunpack.c.l.b16 %v1203
      %v1429 = vunpack.c.l.b16 %v1204
      %v1430 = vunpack.c.l.b16 %v1205
      %v1431 = vunpack.c.l.b16 %v1206
      %v1432 = vunpack.c.l.b16 %v1207
      %v1433 = vunpack.c.l.b16 %v1208
      %v1434 = vunpack.c.l.b16 %v1209
      %v1435 = vunpack.c.l.b16 %v1210
      %v1436 = vunpack.c.l.b16 %v1211
      %v1437 = vunpack.c.l.b16 %v1212
      %v1438 = vunpack.c.l.b16 %v1213
      %v1439 = vunpack.c.l.b16 %v1214
      %v1440 = vunpack.c.l.b16 %v1215
      %v1441 = vunpack.c.l.b16 %v1216
      %v1442 = vunpack.c.l.b16 %v1217
      %v1443 = vunpack.c.l.b16 %v1218
      %v1444 = vunpack.c.l.b16 %v1219
      %v1445 = vunpack.c.l.b16 %v1220
      %v1446 = vpack.c.b16 %v1415, %v1414
      %v1447 = vpack.c.b16 %v1417, %v1416
      %v1448 = vpack.c.b16 %v1419, %v1418
      %v1449 = vpack.c.b16 %v1421, %v1420
      %v1450 = vpack.c.b16 %v1423, %v1422
      %v1451 = vpack.c.b16 %v1425, %v1424
      %v1452 = vpack.c.b16 %v1427, %v1426
      %v1453 = vpack.c.b16 %v1429, %v1428
      %v1454 = vpack.c.b16 %v1431, %v1430
      %v1455 = vpack.c.b16 %v1433, %v1432
      %v1456 = vpack.c.b16 %v1435, %v1434
      %v1457 = vpack.c.b16 %v1437, %v1436
      %v1458 = vpack.c.b16 %v1439, %v1438
      %v1459 = vpack.c.b16 %v1441, %v1440
      %v1460 = vpack.c.b16 %v1443, %v1442
      %v1461 = vpack.c.b16 %v1445, %v1444
      %v1478 = vunpack.c.l.b16 %v1221
      %v1479 = vunpack.c.l.b16 %v1222
      %v1480 = vunpack.c.l.b16 %v1223
      %v1481 = vunpack.c.l.b16 %v1224
      %v1482 = vunpack.c.l.b16 %v1225
      %v1483 = vunpack.c.l.b16 %v1226
      %v1484 = vunpack.c.l.b16 %v1227
      %v1485 = vunpack.c.l.b16 %v1228
      %v1486 = vunpack.c.l.b16 %v1229
      %v1487 = vunpack.c.l.b16 %v1230
      %v1488 = vunpack.c.l.b16 %v1231
      %v1489 = vunpack.c.l.b16 %v1232
      %v1490 = vunpack.c.l.b16 %v1233
      %v1491 = vunpack.c.l.b16 %v1234
      %v1492 = vunpack.c.l.b16 %v1235
      %v1493 = vunpack.c.l.b16 %v1236
      %v1494 = vpack.c.b16 %v1478, %v1478
      %v1495 = vpack.c.b16 %v1479, %v1479
      %v1496 = vpack.c.b16 %v1480, %v1480
      %v1497 = vpack.c.b16 %v1481, %v1481
      %v1498 = vpack.c.b16 %v1482, %v1482
      %v1499 = vpack.c.b16 %v1483, %v1483
      %v1500 = vpack.c.b16 %v1484, %v1484
      %v1501 = vpack.c.b16 %v1485, %v1485
      %v1502 = vpack.c.b16 %v1486, %v1486
      %v1503 = vpack.c.b16 %v1487, %v1487
      %v1504 = vpack.c.b16 %v1488, %v1488
      %v1505 = vpack.c.b16 %v1489, %v1489
      %v1506 = vpack.c.b16 %v1490, %v1490
      %v1507 = vpack.c.b16 %v1491, %v1491
      %v1508 = vpack.c.b16 %v1492, %v1492
      %v1509 = vpack.c.b16 %v1493, %v1493
      %vm1510 = vsmask.f32 7424
      %v1512 = vshrl.u32 %v1446, 16
      %v1514 = vshll.u32 %v1446, 16
      %v1516 = vrot.slane %v1514, 1
      %v1517 = vor.u32 %v1512, %v1516
      %v1519 = vshll.u32 %v1494, 16
      %v1521 = vrot.slane %v1519, 1
      %v1522 = vsel %vm1510, %v1517, %v1521
      %v1524 = vshrl.u32 %v1447, 16
      %v1526 = vshll.u32 %v1447, 16
      %v1528 = vrot.slane %v1526, 1
      %v1529 = vor.u32 %v1524, %v1528
      %v1531 = vshll.u32 %v1495, 16
      %v1533 = vrot.slane %v1531, 1
      %v1534 = vsel %vm1510, %v1529, %v1533
      %v1536 = vshrl.u32 %v1448, 16
      %v1538 = vshll.u32 %v1448, 16
      %v1540 = vrot.slane %v1538, 1
      %v1541 = vor.u32 %v1536, %v1540
      %v1543 = vshll.u32 %v1496, 16
      %v1545 = vrot.slane %v1543, 1
      %v1546 = vsel %vm1510, %v1541, %v1545
      %v1548 = vshrl.u32 %v1449, 16
      %v1550 = vshll.u32 %v1449, 16
      %v1552 = vrot.slane %v1550, 1
      %v1553 = vor.u32 %v1548, %v1552
      %v1555 = vshll.u32 %v1497, 16
      %v1557 = vrot.slane %v1555, 1
      %v1558 = vsel %vm1510, %v1553, %v1557
      %v1560 = vshrl.u32 %v1450, 16
      %v1562 = vshll.u32 %v1450, 16
      %v1564 = vrot.slane %v1562, 1
      %v1565 = vor.u32 %v1560, %v1564
      %v1567 = vshll.u32 %v1498, 16
      %v1569 = vrot.slane %v1567, 1
      %v1570 = vsel %vm1510, %v1565, %v1569
      %v1572 = vshrl.u32 %v1451, 16
      %v1574 = vshll.u32 %v1451, 16
      %v1576 = vrot.slane %v1574, 1
      %v1577 = vor.u32 %v1572, %v1576
      %v1579 = vshll.u32 %v1499, 16
      %v1581 = vrot.slane %v1579, 1
      %v1582 = vsel %vm1510, %v1577, %v1581
      %v1584 = vshrl.u32 %v1452, 16
      %v1586 = vshll.u32 %v1452, 16
      %v1588 = vrot.slane %v1586, 1
      %v1589 = vor.u32 %v1584, %v1588
      %v1591 = vshll.u32 %v1500, 16
      %v1593 = vrot.slane %v1591, 1
      %v1594 = vsel %vm1510, %v1589, %v1593
      %v1596 = vshrl.u32 %v1453, 16
      %v1598 = vshll.u32 %v1453, 16
      %v1600 = vrot.slane %v1598, 1
      %v1601 = vor.u32 %v1596, %v1600
      %v1603 = vshll.u32 %v1501, 16
      %v1605 = vrot.slane %v1603, 1
      %v1606 = vsel %vm1510, %v1601, %v1605
      %v1608 = vshrl.u32 %v1454, 16
      %v1610 = vshll.u32 %v1454, 16
      %v1612 = vrot.slane %v1610, 1
      %v1613 = vor.u32 %v1608, %v1612
      %v1615 = vshll.u32 %v1502, 16
      %v1617 = vrot.slane %v1615, 1
      %v1618 = vsel %vm1510, %v1613, %v1617
      %v1620 = vshrl.u32 %v1455, 16
      %v1622 = vshll.u32 %v1455, 16
      %v1624 = vrot.slane %v1622, 1
      %v1625 = vor.u32 %v1620, %v1624
      %v1627 = vshll.u32 %v1503, 16
      %v1629 = vrot.slane %v1627, 1
      %v1630 = vsel %vm1510, %v1625, %v1629
      %v1632 = vshrl.u32 %v1456, 16
      %v1634 = vshll.u32 %v1456, 16
      %v1636 = vrot.slane %v1634, 1
      %v1637 = vor.u32 %v1632, %v1636
      %v1639 = vshll.u32 %v1504, 16
      %v1641 = vrot.slane %v1639, 1
      %v1642 = vsel %vm1510, %v1637, %v1641
      %v1644 = vshrl.u32 %v1457, 16
      %v1646 = vshll.u32 %v1457, 16
      %v1648 = vrot.slane %v1646, 1
      %v1649 = vor.u32 %v1644, %v1648
      %v1651 = vshll.u32 %v1505, 16
      %v1653 = vrot.slane %v1651, 1
      %v1654 = vsel %vm1510, %v1649, %v1653
      %v1656 = vshrl.u32 %v1458, 16
      %v1658 = vshll.u32 %v1458, 16
      %v1660 = vrot.slane %v1658, 1
      %v1661 = vor.u32 %v1656, %v1660
      %v1663 = vshll.u32 %v1506, 16
      %v1665 = vrot.slane %v1663, 1
      %v1666 = vsel %vm1510, %v1661, %v1665
      %v1668 = vshrl.u32 %v1459, 16
      %v1670 = vshll.u32 %v1459, 16
      %v1672 = vrot.slane %v1670, 1
      %v1673 = vor.u32 %v1668, %v1672
      %v1675 = vshll.u32 %v1507, 16
      %v1677 = vrot.slane %v1675, 1
      %v1678 = vsel %vm1510, %v1673, %v1677
      %v1680 = vshrl.u32 %v1460, 16
      %v1682 = vshll.u32 %v1460, 16
      %v1684 = vrot.slane %v1682, 1
      %v1685 = vor.u32 %v1680, %v1684
      %v1687 = vshll.u32 %v1508, 16
      %v1689 = vrot.slane %v1687, 1
      %v1690 = vsel %vm1510, %v1685, %v1689
      %v1692 = vshrl.u32 %v1461, 16
      %v1694 = vshll.u32 %v1461, 16
      %v1696 = vrot.slane %v1694, 1
      %v1697 = vor.u32 %v1692, %v1696
      %v1699 = vshll.u32 %v1509, 16
      %v1701 = vrot.slane %v1699, 1
      %v1702 = vsel %vm1510, %v1697, %v1701
      %1703 = vrot.lane.b32.xlu0 %v1522, 4
      %v1704 = vpop.permute.xlu0 %1703
      %1705 = vrot.lane.b32.xlu0 %v1534, 4
      %v1706 = vpop.permute.xlu0 %1705
      %1707 = vrot.lane.b32.xlu0 %v1546, 4
      %v1708 = vpop.permute.xlu0 %1707
      %1709 = vrot.lane.b32.xlu0 %v1558, 4
      %v1710 = vpop.permute.xlu0 %1709
      %1711 = vrot.lane.b32.xlu0 %v1570, 4
      %v1712 = vpop.permute.xlu0 %1711
      %1713 = vrot.lane.b32.xlu0 %v1582, 4
      %v1714 = vpop.permute.xlu0 %1713
      %1715 = vrot.lane.b32.xlu0 %v1594, 4
      %v1716 = vpop.permute.xlu0 %1715
      %1717 = vrot.lane.b32.xlu0 %v1606, 4
      %v1718 = vpop.permute.xlu0 %1717
      %1719 = vrot.lane.b32.xlu0 %v1618, 4
      %v1720 = vpop.permute.xlu0 %1719
      %1721 = vrot.lane.b32.xlu0 %v1630, 4
      %v1722 = vpop.permute.xlu0 %1721
      %1723 = vrot.lane.b32.xlu0 %v1642, 4
      %v1724 = vpop.permute.xlu0 %1723
      %1725 = vrot.lane.b32.xlu0 %v1654, 4
      %v1726 = vpop.permute.xlu0 %1725
      %1727 = vrot.lane.b32.xlu0 %v1666, 4
      %v1728 = vpop.permute.xlu0 %1727
      %1729 = vrot.lane.b32.xlu0 %v1678, 4
      %v1730 = vpop.permute.xlu0 %1729
      %1731 = vrot.lane.b32.xlu0 %v1690, 4
      %v1732 = vpop.permute.xlu0 %1731
      %1733 = vrot.lane.b32.xlu0 %v1702, 4
      %v1734 = vpop.permute.xlu0 %1733
      %v1751 = vunpack.c.l.b16 %v1237
      %v1752 = vunpack.c.l.b16 %v1238
      %v1753 = vunpack.c.l.b16 %v1239
      %v1754 = vunpack.c.l.b16 %v1240
      %v1755 = vunpack.c.l.b16 %v1241
      %v1756 = vunpack.c.l.b16 %v1242
      %v1757 = vunpack.c.l.b16 %v1243
      %v1758 = vunpack.c.l.b16 %v1244
      %v1759 = vunpack.c.l.b16 %v1245
      %v1760 = vunpack.c.l.b16 %v1246
      %v1761 = vunpack.c.l.b16 %v1247
      %v1762 = vunpack.c.l.b16 %v1248
      %v1763 = vunpack.c.l.b16 %v1249
      %v1764 = vunpack.c.l.b16 %v1250
      %v1765 = vunpack.c.l.b16 %v1251
      %v1766 = vunpack.c.l.b16 %v1252
      %v1767 = vpack.c.b16 %v1415, %v1751
      %v1768 = vpack.c.b16 %v1417, %v1752
      %v1769 = vpack.c.b16 %v1419, %v1753
      %v1770 = vpack.c.b16 %v1421, %v1754
      %v1771 = vpack.c.b16 %v1423, %v1755
      %v1772 = vpack.c.b16 %v1425, %v1756
      %v1773 = vpack.c.b16 %v1427, %v1757
      %v1774 = vpack.c.b16 %v1429, %v1758
      %v1775 = vpack.c.b16 %v1431, %v1759
      %v1776 = vpack.c.b16 %v1433, %v1760
      %v1777 = vpack.c.b16 %v1435, %v1761
      %v1778 = vpack.c.b16 %v1437, %v1762
      %v1779 = vpack.c.b16 %v1439, %v1763
      %v1780 = vpack.c.b16 %v1441, %v1764
      %v1781 = vpack.c.b16 %v1443, %v1765
      %v1782 = vpack.c.b16 %v1445, %v1766
      %vm1783 = vcmask 1046528
      %v1784 = vrot.slane %v1767, 1
      %v1785 = vrot.slane %v1494, 1
      %v1786 = vsel %vm1783, %v1784, %v1785
      %v1787 = vrot.slane %v1768, 1
      %v1788 = vrot.slane %v1495, 1
      %v1789 = vsel %vm1783, %v1787, %v1788
      %v1790 = vrot.slane %v1769, 1
      %v1791 = vrot.slane %v1496, 1
      %v1792 = vsel %vm1783, %v1790, %v1791
      %v1793 = vrot.slane %v1770, 1
      %v1794 = vrot.slane %v1497, 1
      %v1795 = vsel %vm1783, %v1793, %v1794
      %v1796 = vrot.slane %v1771, 1
      %v1797 = vrot.slane %v1498, 1
      %v1798 = vsel %vm1783, %v1796, %v1797
      %v1799 = vrot.slane %v1772, 1
      %v1800 = vrot.slane %v1499, 1
      %v1801 = vsel %vm1783, %v1799, %v1800
      %v1802 = vrot.slane %v1773, 1
      %v1803 = vrot.slane %v1500, 1
      %v1804 = vsel %vm1783, %v1802, %v1803
      %v1805 = vrot.slane %v1774, 1
      %v1806 = vrot.slane %v1501, 1
      %v1807 = vsel %vm1783, %v1805, %v1806
      %v1808 = vrot.slane %v1775, 1
      %v1809 = vrot.slane %v1502, 1
      %v1810 = vsel %vm1783, %v1808, %v1809
      %v1811 = vrot.slane %v1776, 1
      %v1812 = vrot.slane %v1503, 1
      %v1813 = vsel %vm1783, %v1811, %v1812
      %v1814 = vrot.slane %v1777, 1
      %v1815 = vrot.slane %v1504, 1
      %v1816 = vsel %vm1783, %v1814, %v1815
      %v1817 = vrot.slane %v1778, 1
      %v1818 = vrot.slane %v1505, 1
      %v1819 = vsel %vm1783, %v1817, %v1818
      %v1820 = vrot.slane %v1779, 1
      %v1821 = vrot.slane %v1506, 1
      %v1822 = vsel %vm1783, %v1820, %v1821
      %v1823 = vrot.slane %v1780, 1
      %v1824 = vrot.slane %v1507, 1
      %v1825 = vsel %vm1783, %v1823, %v1824
      %v1826 = vrot.slane %v1781, 1
      %v1827 = vrot.slane %v1508, 1
      %v1828 = vsel %vm1783, %v1826, %v1827
      %v1829 = vrot.slane %v1782, 1
      %v1830 = vrot.slane %v1509, 1
      %v1831 = vsel %vm1783, %v1829, %v1830
      %1832 = vrot.lane.b32.xlu0 %v1786, 8
      %v1833 = vpop.permute.xlu0 %1832
      %1834 = vrot.lane.b32.xlu0 %v1789, 8
      %v1835 = vpop.permute.xlu0 %1834
      %1836 = vrot.lane.b32.xlu0 %v1792, 8
      %v1837 = vpop.permute.xlu0 %1836
      %1838 = vrot.lane.b32.xlu0 %v1795, 8
      %v1839 = vpop.permute.xlu0 %1838
      %1840 = vrot.lane.b32.xlu0 %v1798, 8
      %v1841 = vpop.permute.xlu0 %1840
      %1842 = vrot.lane.b32.xlu0 %v1801, 8
      %v1843 = vpop.permute.xlu0 %1842
      %1844 = vrot.lane.b32.xlu0 %v1804, 8
      %v1845 = vpop.permute.xlu0 %1844
      %1846 = vrot.lane.b32.xlu0 %v1807, 8
      %v1847 = vpop.permute.xlu0 %1846
      %1848 = vrot.lane.b32.xlu0 %v1810, 8
      %v1849 = vpop.permute.xlu0 %1848
      %1850 = vrot.lane.b32.xlu0 %v1813, 8
      %v1851 = vpop.permute.xlu0 %1850
      %1852 = vrot.lane.b32.xlu0 %v1816, 8
      %v1853 = vpop.permute.xlu0 %1852
      %1854 = vrot.lane.b32.xlu0 %v1819, 8
      %v1855 = vpop.permute.xlu0 %1854
      %1856 = vrot.lane.b32.xlu0 %v1822, 8
      %v1857 = vpop.permute.xlu0 %1856
      %1858 = vrot.lane.b32.xlu0 %v1825, 8
      %v1859 = vpop.permute.xlu0 %1858
      %1860 = vrot.lane.b32.xlu0 %v1828, 8
      %v1861 = vpop.permute.xlu0 %1860
      %1862 = vrot.lane.b32.xlu0 %v1831, 8
      %v1863 = vpop.permute.xlu0 %1862
      %v1896 = vunpack.c.l.b16 %v1253
      %v1897 = vunpack.c.l.b16 %v1254
      %v1898 = vunpack.c.l.b16 %v1255
      %v1899 = vunpack.c.l.b16 %v1256
      %v1900 = vunpack.c.l.b16 %v1257
      %v1901 = vunpack.c.l.b16 %v1258
      %v1902 = vunpack.c.l.b16 %v1259
      %v1903 = vunpack.c.l.b16 %v1260
      %v1904 = vunpack.c.l.b16 %v1261
      %v1905 = vunpack.c.l.b16 %v1262
      %v1906 = vunpack.c.l.b16 %v1263
      %v1907 = vunpack.c.l.b16 %v1264
      %v1908 = vunpack.c.l.b16 %v1265
      %v1909 = vunpack.c.l.b16 %v1266
      %v1910 = vunpack.c.l.b16 %v1267
      %v1911 = vunpack.c.l.b16 %v1268
      %v1912 = vunpack.c.l.b16 %v1269
      %v1913 = vunpack.c.l.b16 %v1270
      %v1914 = vunpack.c.l.b16 %v1271
      %v1915 = vunpack.c.l.b16 %v1272
      %v1916 = vunpack.c.l.b16 %v1273
      %v1917 = vunpack.c.l.b16 %v1274
      %v1918 = vunpack.c.l.b16 %v1275
      %v1919 = vunpack.c.l.b16 %v1276
      %v1920 = vunpack.c.l.b16 %v1277
      %v1921 = vunpack.c.l.b16 %v1278
      %v1922 = vunpack.c.l.b16 %v1279
      %v1923 = vunpack.c.l.b16 %v1280
      %v1924 = vunpack.c.l.b16 %v1281
      %v1925 = vunpack.c.l.b16 %v1282
      %v1926 = vunpack.c.l.b16 %v1283
      %v1927 = vunpack.c.l.b16 %v1284
      %v1928 = vpack.c.b16 %v1897, %v1896
      %v1929 = vpack.c.b16 %v1899, %v1898
      %v1930 = vpack.c.b16 %v1901, %v1900
      %v1931 = vpack.c.b16 %v1903, %v1902
      %v1932 = vpack.c.b16 %v1905, %v1904
      %v1933 = vpack.c.b16 %v1907, %v1906
      %v1934 = vpack.c.b16 %v1909, %v1908
      %v1935 = vpack.c.b16 %v1911, %v1910
      %v1936 = vpack.c.b16 %v1913, %v1912
      %v1937 = vpack.c.b16 %v1915, %v1914
      %v1938 = vpack.c.b16 %v1917, %v1916
      %v1939 = vpack.c.b16 %v1919, %v1918
      %v1940 = vpack.c.b16 %v1921, %v1920
      %v1941 = vpack.c.b16 %v1923, %v1922
      %v1942 = vpack.c.b16 %v1925, %v1924
      %v1943 = vpack.c.b16 %v1927, %v1926
      %1944 = vrot.lane.b32.xlu0 %v1928, 12
      %v1945 = vpop.permute.xlu0 %1944
      %1946 = vrot.lane.b32.xlu0 %v1929, 12
      %v1947 = vpop.permute.xlu0 %1946
      %1948 = vrot.lane.b32.xlu0 %v1930, 12
      %v1949 = vpop.permute.xlu0 %1948
      %1950 = vrot.lane.b32.xlu0 %v1931, 12
      %v1951 = vpop.permute.xlu0 %1950
      %1952 = vrot.lane.b32.xlu0 %v1932, 12
      %v1953 = vpop.permute.xlu0 %1952
      %1954 = vrot.lane.b32.xlu0 %v1933, 12
      %v1955 = vpop.permute.xlu0 %1954
      %1956 = vrot.lane.b32.xlu0 %v1934, 12
      %v1957 = vpop.permute.xlu0 %1956
      %1958 = vrot.lane.b32.xlu0 %v1935, 12
      %v1959 = vpop.permute.xlu0 %1958
      %1960 = vrot.lane.b32.xlu0 %v1936, 12
      %v1961 = vpop.permute.xlu0 %1960
      %1962 = vrot.lane.b32.xlu0 %v1937, 12
      %v1963 = vpop.permute.xlu0 %1962
      %1964 = vrot.lane.b32.xlu0 %v1938, 12
      %v1965 = vpop.permute.xlu0 %1964
      %1966 = vrot.lane.b32.xlu0 %v1939, 12
      %v1967 = vpop.permute.xlu0 %1966
      %1968 = vrot.lane.b32.xlu0 %v1940, 12
      %v1969 = vpop.permute.xlu0 %1968
      %1970 = vrot.lane.b32.xlu0 %v1941, 12
      %v1971 = vpop.permute.xlu0 %1970
      %1972 = vrot.lane.b32.xlu0 %v1942, 12
      %v1973 = vpop.permute.xlu0 %1972
      %1974 = vrot.lane.b32.xlu0 %v1943, 12
      %v1975 = vpop.permute.xlu0 %1974
      %v1992 = vunpack.c.l.b16 %v1285
      %v1993 = vunpack.c.l.b16 %v1286
      %v1994 = vunpack.c.l.b16 %v1287
      %v1995 = vunpack.c.l.b16 %v1288
      %v1996 = vunpack.c.l.b16 %v1289
      %v1997 = vunpack.c.l.b16 %v1290
      %v1998 = vunpack.c.l.b16 %v1291
      %v1999 = vunpack.c.l.b16 %v1292
      %v2000 = vunpack.c.l.b16 %v1293
      %v2001 = vunpack.c.l.b16 %v1294
      %v2002 = vunpack.c.l.b16 %v1295
      %v2003 = vunpack.c.l.b16 %v1296
      %v2004 = vunpack.c.l.b16 %v1297
      %v2005 = vunpack.c.l.b16 %v1298
      %v2006 = vunpack.c.l.b16 %v1299
      %v2007 = vunpack.c.l.b16 %v1300
      %v2008 = vpack.c.b16 %v1992, %v1992
      %v2009 = vpack.c.b16 %v1993, %v1993
      %v2010 = vpack.c.b16 %v1994, %v1994
      %v2011 = vpack.c.b16 %v1995, %v1995
      %v2012 = vpack.c.b16 %v1996, %v1996
      %v2013 = vpack.c.b16 %v1997, %v1997
      %v2014 = vpack.c.b16 %v1998, %v1998
      %v2015 = vpack.c.b16 %v1999, %v1999
      %v2016 = vpack.c.b16 %v2000, %v2000
      %v2017 = vpack.c.b16 %v2001, %v2001
      %v2018 = vpack.c.b16 %v2002, %v2002
      %v2019 = vpack.c.b16 %v2003, %v2003
      %v2020 = vpack.c.b16 %v2004, %v2004
      %v2021 = vpack.c.b16 %v2005, %v2005
      %v2022 = vpack.c.b16 %v2006, %v2006
      %v2023 = vpack.c.b16 %v2007, %v2007
      %v2025 = vshrl.u32 %v1928, 16
      %v2027 = vshll.u32 %v1928, 16
      %v2029 = vrot.slane %v2027, 1
      %v2030 = vor.u32 %v2025, %v2029
      %v2032 = vshll.u32 %v2008, 16
      %v2034 = vrot.slane %v2032, 1
      %v2035 = vsel %vm1510, %v2030, %v2034
      %v2037 = vshrl.u32 %v1929, 16
      %v2039 = vshll.u32 %v1929, 16
      %v2041 = vrot.slane %v2039, 1
      %v2042 = vor.u32 %v2037, %v2041
      %v2044 = vshll.u32 %v2009, 16
      %v2046 = vrot.slane %v2044, 1
      %v2047 = vsel %vm1510, %v2042, %v2046
      %v2049 = vshrl.u32 %v1930, 16
      %v2051 = vshll.u32 %v1930, 16
      %v2053 = vrot.slane %v2051, 1
      %v2054 = vor.u32 %v2049, %v2053
      %v2056 = vshll.u32 %v2010, 16
      %v2058 = vrot.slane %v2056, 1
      %v2059 = vsel %vm1510, %v2054, %v2058
      %v2061 = vshrl.u32 %v1931, 16
      %v2063 = vshll.u32 %v1931, 16
      %v2065 = vrot.slane %v2063, 1
      %v2066 = vor.u32 %v2061, %v2065
      %v2068 = vshll.u32 %v2011, 16
      %v2070 = vrot.slane %v2068, 1
      %v2071 = vsel %vm1510, %v2066, %v2070
      %v2073 = vshrl.u32 %v1932, 16
      %v2075 = vshll.u32 %v1932, 16
      %v2077 = vrot.slane %v2075, 1
      %v2078 = vor.u32 %v2073, %v2077
      %v2080 = vshll.u32 %v2012, 16
      %v2082 = vrot.slane %v2080, 1
      %v2083 = vsel %vm1510, %v2078, %v2082
      %v2085 = vshrl.u32 %v1933, 16
      %v2087 = vshll.u32 %v1933, 16
      %v2089 = vrot.slane %v2087, 1
      %v2090 = vor.u32 %v2085, %v2089
      %v2092 = vshll.u32 %v2013, 16
      %v2094 = vrot.slane %v2092, 1
      %v2095 = vsel %vm1510, %v2090, %v2094
      %v2097 = vshrl.u32 %v1934, 16
      %v2099 = vshll.u32 %v1934, 16
      %v2101 = vrot.slane %v2099, 1
      %v2102 = vor.u32 %v2097, %v2101
      %v2104 = vshll.u32 %v2014, 16
      %v2106 = vrot.slane %v2104, 1
      %v2107 = vsel %vm1510, %v2102, %v2106
      %v2109 = vshrl.u32 %v1935, 16
      %v2111 = vshll.u32 %v1935, 16
      %v2113 = vrot.slane %v2111, 1
      %v2114 = vor.u32 %v2109, %v2113
      %v2116 = vshll.u32 %v2015, 16
      %v2118 = vrot.slane %v2116, 1
      %v2119 = vsel %vm1510, %v2114, %v2118
      %v2121 = vshrl.u32 %v1936, 16
      %v2123 = vshll.u32 %v1936, 16
      %v2125 = vrot.slane %v2123, 1
      %v2126 = vor.u32 %v2121, %v2125
      %v2128 = vshll.u32 %v2016, 16
      %v2130 = vrot.slane %v2128, 1
      %v2131 = vsel %vm1510, %v2126, %v2130
      %v2133 = vshrl.u32 %v1937, 16
      %v2135 = vshll.u32 %v1937, 16
      %v2137 = vrot.slane %v2135, 1
      %v2138 = vor.u32 %v2133, %v2137
      %v2140 = vshll.u32 %v2017, 16
      %v2142 = vrot.slane %v2140, 1
      %v2143 = vsel %vm1510, %v2138, %v2142
      %v2145 = vshrl.u32 %v1938, 16
      %v2147 = vshll.u32 %v1938, 16
      %v2149 = vrot.slane %v2147, 1
      %v2150 = vor.u32 %v2145, %v2149
      %v2152 = vshll.u32 %v2018, 16
      %v2154 = vrot.slane %v2152, 1
      %v2155 = vsel %vm1510, %v2150, %v2154
      %v2157 = vshrl.u32 %v1939, 16
      %v2159 = vshll.u32 %v1939, 16
      %v2161 = vrot.slane %v2159, 1
      %v2162 = vor.u32 %v2157, %v2161
      %v2164 = vshll.u32 %v2019, 16
      %v2166 = vrot.slane %v2164, 1
      %v2167 = vsel %vm1510, %v2162, %v2166
      %v2169 = vshrl.u32 %v1940, 16
      %v2171 = vshll.u32 %v1940, 16
      %v2173 = vrot.slane %v2171, 1
      %v2174 = vor.u32 %v2169, %v2173
      %v2176 = vshll.u32 %v2020, 16
      %v2178 = vrot.slane %v2176, 1
      %v2179 = vsel %vm1510, %v2174, %v2178
      %v2181 = vshrl.u32 %v1941, 16
      %v2183 = vshll.u32 %v1941, 16
      %v2185 = vrot.slane %v2183, 1
      %v2186 = vor.u32 %v2181, %v2185
      %v2188 = vshll.u32 %v2021, 16
      %v2190 = vrot.slane %v2188, 1
      %v2191 = vsel %vm1510, %v2186, %v2190
      %v2193 = vshrl.u32 %v1942, 16
      %v2195 = vshll.u32 %v1942, 16
      %v2197 = vrot.slane %v2195, 1
      %v2198 = vor.u32 %v2193, %v2197
      %v2200 = vshll.u32 %v2022, 16
      %v2202 = vrot.slane %v2200, 1
      %v2203 = vsel %vm1510, %v2198, %v2202
      %v2205 = vshrl.u32 %v1943, 16
      %v2207 = vshll.u32 %v1943, 16
      %v2209 = vrot.slane %v2207, 1
      %v2210 = vor.u32 %v2205, %v2209
      %v2212 = vshll.u32 %v2023, 16
      %v2214 = vrot.slane %v2212, 1
      %v2215 = vsel %vm1510, %v2210, %v2214
      %2216 = vrot.lane.b32.xlu0 %v2035, 16
      %v2217 = vpop.permute.xlu0 %2216
      %2218 = vrot.lane.b32.xlu0 %v2047, 16
      %v2219 = vpop.permute.xlu0 %2218
      %2220 = vrot.lane.b32.xlu0 %v2059, 16
      %v2221 = vpop.permute.xlu0 %2220
      %2222 = vrot.lane.b32.xlu0 %v2071, 16
      %v2223 = vpop.permute.xlu0 %2222
      %2224 = vrot.lane.b32.xlu0 %v2083, 16
      %v2225 = vpop.permute.xlu0 %2224
      %2226 = vrot.lane.b32.xlu0 %v2095, 16
      %v2227 = vpop.permute.xlu0 %2226
      %2228 = vrot.lane.b32.xlu0 %v2107, 16
      %v2229 = vpop.permute.xlu0 %2228
      %2230 = vrot.lane.b32.xlu0 %v2119, 16
      %v2231 = vpop.permute.xlu0 %2230
      %2232 = vrot.lane.b32.xlu0 %v2131, 16
      %v2233 = vpop.permute.xlu0 %2232
      %2234 = vrot.lane.b32.xlu0 %v2143, 16
      %v2235 = vpop.permute.xlu0 %2234
      %2236 = vrot.lane.b32.xlu0 %v2155, 16
      %v2237 = vpop.permute.xlu0 %2236
      %2238 = vrot.lane.b32.xlu0 %v2167, 16
      %v2239 = vpop.permute.xlu0 %2238
      %2240 = vrot.lane.b32.xlu0 %v2179, 16
      %v2241 = vpop.permute.xlu0 %2240
      %2242 = vrot.lane.b32.xlu0 %v2191, 16
      %v2243 = vpop.permute.xlu0 %2242
      %2244 = vrot.lane.b32.xlu0 %v2203, 16
      %v2245 = vpop.permute.xlu0 %2244
      %2246 = vrot.lane.b32.xlu0 %v2215, 16
      %v2247 = vpop.permute.xlu0 %2246
      %v2264 = vunpack.c.l.b16 %v1301
      %v2265 = vunpack.c.l.b16 %v1302
      %v2266 = vunpack.c.l.b16 %v1303
      %v2267 = vunpack.c.l.b16 %v1304
      %v2268 = vunpack.c.l.b16 %v1305
      %v2269 = vunpack.c.l.b16 %v1306
      %v2270 = vunpack.c.l.b16 %v1307
      %v2271 = vunpack.c.l.b16 %v1308
      %v2272 = vunpack.c.l.b16 %v1309
      %v2273 = vunpack.c.l.b16 %v1310
      %v2274 = vunpack.c.l.b16 %v1311
      %v2275 = vunpack.c.l.b16 %v1312
      %v2276 = vunpack.c.l.b16 %v1313
      %v2277 = vunpack.c.l.b16 %v1314
      %v2278 = vunpack.c.l.b16 %v1315
      %v2279 = vunpack.c.l.b16 %v1316
      %v2280 = vpack.c.b16 %v1897, %v2264
      %v2281 = vpack.c.b16 %v1899, %v2265
      %v2282 = vpack.c.b16 %v1901, %v2266
      %v2283 = vpack.c.b16 %v1903, %v2267
      %v2284 = vpack.c.b16 %v1905, %v2268
      %v2285 = vpack.c.b16 %v1907, %v2269
      %v2286 = vpack.c.b16 %v1909, %v2270
      %v2287 = vpack.c.b16 %v1911, %v2271
      %v2288 = vpack.c.b16 %v1913, %v2272
      %v2289 = vpack.c.b16 %v1915, %v2273
      %v2290 = vpack.c.b16 %v1917, %v2274
      %v2291 = vpack.c.b16 %v1919, %v2275
      %v2292 = vpack.c.b16 %v1921, %v2276
      %v2293 = vpack.c.b16 %v1923, %v2277
      %v2294 = vpack.c.b16 %v1925, %v2278
      %v2295 = vpack.c.b16 %v1927, %v2279
      %v2296 = vrot.slane %v2280, 1
      %v2297 = vrot.slane %v2008, 1
      %v2298 = vsel %vm1783, %v2296, %v2297
      %v2299 = vrot.slane %v2281, 1
      %v2300 = vrot.slane %v2009, 1
      %v2301 = vsel %vm1783, %v2299, %v2300
      %v2302 = vrot.slane %v2282, 1
      %v2303 = vrot.slane %v2010, 1
      %v2304 = vsel %vm1783, %v2302, %v2303
      %v2305 = vrot.slane %v2283, 1
      %v2306 = vrot.slane %v2011, 1
      %v2307 = vsel %vm1783, %v2305, %v2306
      %v2308 = vrot.slane %v2284, 1
      %v2309 = vrot.slane %v2012, 1
      %v2310 = vsel %vm1783, %v2308, %v2309
      %v2311 = vrot.slane %v2285, 1
      %v2312 = vrot.slane %v2013, 1
      %v2313 = vsel %vm1783, %v2311, %v2312
      %v2314 = vrot.slane %v2286, 1
      %v2315 = vrot.slane %v2014, 1
      %v2316 = vsel %vm1783, %v2314, %v2315
      %v2317 = vrot.slane %v2287, 1
      %v2318 = vrot.slane %v2015, 1
      %v2319 = vsel %vm1783, %v2317, %v2318
      %v2320 = vrot.slane %v2288, 1
      %v2321 = vrot.slane %v2016, 1
      %v2322 = vsel %vm1783, %v2320, %v2321
      %v2323 = vrot.slane %v2289, 1
      %v2324 = vrot.slane %v2017, 1
      %v2325 = vsel %vm1783, %v2323, %v2324
      %v2326 = vrot.slane %v2290, 1
      %v2327 = vrot.slane %v2018, 1
      %v2328 = vsel %vm1783, %v2326, %v2327
      %v2329 = vrot.slane %v2291, 1
      %v2330 = vrot.slane %v2019, 1
      %v2331 = vsel %vm1783, %v2329, %v2330
      %v2332 = vrot.slane %v2292, 1
      %v2333 = vrot.slane %v2020, 1
      %v2334 = vsel %vm1783, %v2332, %v2333
      %v2335 = vrot.slane %v2293, 1
      %v2336 = vrot.slane %v2021, 1
      %v2337 = vsel %vm1783, %v2335, %v2336
      %v2338 = vrot.slane %v2294, 1
      %v2339 = vrot.slane %v2022, 1
      %v2340 = vsel %vm1783, %v2338, %v2339
      %v2341 = vrot.slane %v2295, 1
      %v2342 = vrot.slane %v2023, 1
      %v2343 = vsel %vm1783, %v2341, %v2342
      %2344 = vrot.lane.b32.xlu0 %v2298, 20
      %v2345 = vpop.permute.xlu0 %2344
      %2346 = vrot.lane.b32.xlu0 %v2301, 20
      %v2347 = vpop.permute.xlu0 %2346
      %2348 = vrot.lane.b32.xlu0 %v2304, 20
      %v2349 = vpop.permute.xlu0 %2348
      %2350 = vrot.lane.b32.xlu0 %v2307, 20
      %v2351 = vpop.permute.xlu0 %2350
      %2352 = vrot.lane.b32.xlu0 %v2310, 20
      %v2353 = vpop.permute.xlu0 %2352
      %2354 = vrot.lane.b32.xlu0 %v2313, 20
      %v2355 = vpop.permute.xlu0 %2354
      %2356 = vrot.lane.b32.xlu0 %v2316, 20
      %v2357 = vpop.permute.xlu0 %2356
      %2358 = vrot.lane.b32.xlu0 %v2319, 20
      %v2359 = vpop.permute.xlu0 %2358
      %2360 = vrot.lane.b32.xlu0 %v2322, 20
      %v2361 = vpop.permute.xlu0 %2360
      %2362 = vrot.lane.b32.xlu0 %v2325, 20
      %v2363 = vpop.permute.xlu0 %2362
      %2364 = vrot.lane.b32.xlu0 %v2328, 20
      %v2365 = vpop.permute.xlu0 %2364
      %2366 = vrot.lane.b32.xlu0 %v2331, 20
      %v2367 = vpop.permute.xlu0 %2366
      %2368 = vrot.lane.b32.xlu0 %v2334, 20
      %v2369 = vpop.permute.xlu0 %2368
      %2370 = vrot.lane.b32.xlu0 %v2337, 20
      %v2371 = vpop.permute.xlu0 %2370
      %2372 = vrot.lane.b32.xlu0 %v2340, 20
      %v2373 = vpop.permute.xlu0 %2372
      %2374 = vrot.lane.b32.xlu0 %v2343, 20
      %v2375 = vpop.permute.xlu0 %2374
      %v2408 = vunpack.c.l.b16 %v1318
      %v2409 = vunpack.c.l.b16 %v1319
      %v2410 = vunpack.c.l.b16 %v1320
      %v2411 = vunpack.c.l.b16 %v1321
      %v2412 = vunpack.c.l.b16 %v1322
      %v2413 = vunpack.c.l.b16 %v1323
      %v2414 = vunpack.c.l.b16 %v1324
      %v2415 = vunpack.c.l.b16 %v1325
      %v2416 = vunpack.c.l.b16 %v1326
      %v2417 = vunpack.c.l.b16 %v1327
      %v2418 = vunpack.c.l.b16 %v1328
      %v2419 = vunpack.c.l.b16 %v1329
      %v2420 = vunpack.c.l.b16 %v1330
      %v2421 = vunpack.c.l.b16 %v1331
      %v2422 = vunpack.c.l.b16 %v1332
      %v2423 = vunpack.c.l.b16 %v1333
      %v2424 = vunpack.c.l.b16 %v1334
      %v2425 = vunpack.c.l.b16 %v1335
      %v2426 = vunpack.c.l.b16 %v1336
      %v2427 = vunpack.c.l.b16 %v1337
      %v2428 = vunpack.c.l.b16 %v1338
      %v2429 = vunpack.c.l.b16 %v1339
      %v2430 = vunpack.c.l.b16 %v1340
      %v2431 = vunpack.c.l.b16 %v1341
      %v2432 = vunpack.c.l.b16 %v1342
      %v2433 = vunpack.c.l.b16 %v1343
      %v2434 = vunpack.c.l.b16 %v1344
      %v2435 = vunpack.c.l.b16 %v1345
      %v2436 = vunpack.c.l.b16 %v1346
      %v2437 = vunpack.c.l.b16 %v1347
      %v2438 = vunpack.c.l.b16 %v1348
      %v2439 = vunpack.c.l.b16 %v1349
      %v2440 = vpack.c.b16 %v2409, %v2408
      %v2441 = vpack.c.b16 %v2411, %v2410
      %v2442 = vpack.c.b16 %v2413, %v2412
      %v2443 = vpack.c.b16 %v2415, %v2414
      %v2444 = vpack.c.b16 %v2417, %v2416
      %v2445 = vpack.c.b16 %v2419, %v2418
      %v2446 = vpack.c.b16 %v2421, %v2420
      %v2447 = vpack.c.b16 %v2423, %v2422
      %v2448 = vpack.c.b16 %v2425, %v2424
      %v2449 = vpack.c.b16 %v2427, %v2426
      %v2450 = vpack.c.b16 %v2429, %v2428
      %v2451 = vpack.c.b16 %v2431, %v2430
      %v2452 = vpack.c.b16 %v2433, %v2432
      %v2453 = vpack.c.b16 %v2435, %v2434
      %v2454 = vpack.c.b16 %v2437, %v2436
      %v2455 = vpack.c.b16 %v2439, %v2438
      %2456 = vrot.lane.b32.xlu0 %v2440, 24
      %v2457 = vpop.permute.xlu0 %2456
      %2458 = vrot.lane.b32.xlu0 %v2441, 24
      %v2459 = vpop.permute.xlu0 %2458
      %2460 = vrot.lane.b32.xlu0 %v2442, 24
      %v2461 = vpop.permute.xlu0 %2460
      %2462 = vrot.lane.b32.xlu0 %v2443, 24
      %v2463 = vpop.permute.xlu0 %2462
      %2464 = vrot.lane.b32.xlu0 %v2444, 24
      %v2465 = vpop.permute.xlu0 %2464
      %2466 = vrot.lane.b32.xlu0 %v2445, 24
      %v2467 = vpop.permute.xlu0 %2466
      %2468 = vrot.lane.b32.xlu0 %v2446, 24
      %v2469 = vpop.permute.xlu0 %2468
      %2470 = vrot.lane.b32.xlu0 %v2447, 24
      %v2471 = vpop.permute.xlu0 %2470
      %2472 = vrot.lane.b32.xlu0 %v2448, 24
      %v2473 = vpop.permute.xlu0 %2472
      %2474 = vrot.lane.b32.xlu0 %v2449, 24
      %v2475 = vpop.permute.xlu0 %2474
      %2476 = vrot.lane.b32.xlu0 %v2450, 24
      %v2477 = vpop.permute.xlu0 %2476
      %2478 = vrot.lane.b32.xlu0 %v2451, 24
      %v2479 = vpop.permute.xlu0 %2478
      %2480 = vrot.lane.b32.xlu0 %v2452, 24
      %v2481 = vpop.permute.xlu0 %2480
      %2482 = vrot.lane.b32.xlu0 %v2453, 24
      %v2483 = vpop.permute.xlu0 %2482
      %2484 = vrot.lane.b32.xlu0 %v2454, 24
      %v2485 = vpop.permute.xlu0 %2484
      %2486 = vrot.lane.b32.xlu0 %v2455, 24
      %v2487 = vpop.permute.xlu0 %2486
      %v2504 = vunpack.c.l.b16 %v1350
      %v2505 = vunpack.c.l.b16 %v1351
      %v2506 = vunpack.c.l.b16 %v1352
      %v2507 = vunpack.c.l.b16 %v1353
      %v2508 = vunpack.c.l.b16 %v1354
      %v2509 = vunpack.c.l.b16 %v1355
      %v2510 = vunpack.c.l.b16 %v1356
      %v2511 = vunpack.c.l.b16 %v1357
      %v2512 = vunpack.c.l.b16 %v1358
      %v2513 = vunpack.c.l.b16 %v1359
      %v2514 = vunpack.c.l.b16 %v1360
      %v2515 = vunpack.c.l.b16 %v1361
      %v2516 = vunpack.c.l.b16 %v1362
      %v2517 = vunpack.c.l.b16 %v1363
      %v2518 = vunpack.c.l.b16 %v1364
      %v2519 = vunpack.c.l.b16 %v1365
      %v2520 = vpack.c.b16 %v2504, %v2504
      %v2521 = vpack.c.b16 %v2505, %v2505
      %v2522 = vpack.c.b16 %v2506, %v2506
      %v2523 = vpack.c.b16 %v2507, %v2507
      %v2524 = vpack.c.b16 %v2508, %v2508
      %v2525 = vpack.c.b16 %v2509, %v2509
      %v2526 = vpack.c.b16 %v2510, %v2510
      %v2527 = vpack.c.b16 %v2511, %v2511
      %v2528 = vpack.c.b16 %v2512, %v2512
      %v2529 = vpack.c.b16 %v2513, %v2513
      %v2530 = vpack.c.b16 %v2514, %v2514
      %v2531 = vpack.c.b16 %v2515, %v2515
      %v2532 = vpack.c.b16 %v2516, %v2516
      %v2533 = vpack.c.b16 %v2517, %v2517
      %v2534 = vpack.c.b16 %v2518, %v2518
      %v2535 = vpack.c.b16 %v2519, %v2519
      %v2537 = vshrl.u32 %v2440, 16
      %v2539 = vshll.u32 %v2440, 16
      %v2541 = vrot.slane %v2539, 1
      %v2542 = vor.u32 %v2537, %v2541
      %v2544 = vshll.u32 %v2520, 16
      %v2546 = vrot.slane %v2544, 1
      %v2547 = vsel %vm1510, %v2542, %v2546
      %v2549 = vshrl.u32 %v2441, 16
      %v2551 = vshll.u32 %v2441, 16
      %v2553 = vrot.slane %v2551, 1
      %v2554 = vor.u32 %v2549, %v2553
      %v2556 = vshll.u32 %v2521, 16
      %v2558 = vrot.slane %v2556, 1
      %v2559 = vsel %vm1510, %v2554, %v2558
      %v2561 = vshrl.u32 %v2442, 16
      %v2563 = vshll.u32 %v2442, 16
      %v2565 = vrot.slane %v2563, 1
      %v2566 = vor.u32 %v2561, %v2565
      %v2568 = vshll.u32 %v2522, 16
      %v2570 = vrot.slane %v2568, 1
      %v2571 = vsel %vm1510, %v2566, %v2570
      %v2573 = vshrl.u32 %v2443, 16
      %v2575 = vshll.u32 %v2443, 16
      %v2577 = vrot.slane %v2575, 1
      %v2578 = vor.u32 %v2573, %v2577
      %v2580 = vshll.u32 %v2523, 16
      %v2582 = vrot.slane %v2580, 1
      %v2583 = vsel %vm1510, %v2578, %v2582
      %v2585 = vshrl.u32 %v2444, 16
      %v2587 = vshll.u32 %v2444, 16
      %v2589 = vrot.slane %v2587, 1
      %v2590 = vor.u32 %v2585, %v2589
      %v2592 = vshll.u32 %v2524, 16
      %v2594 = vrot.slane %v2592, 1
      %v2595 = vsel %vm1510, %v2590, %v2594
      %v2597 = vshrl.u32 %v2445, 16
      %v2599 = vshll.u32 %v2445, 16
      %v2601 = vrot.slane %v2599, 1
      %v2602 = vor.u32 %v2597, %v2601
      %v2604 = vshll.u32 %v2525, 16
      %v2606 = vrot.slane %v2604, 1
      %v2607 = vsel %vm1510, %v2602, %v2606
      %v2609 = vshrl.u32 %v2446, 16
      %v2611 = vshll.u32 %v2446, 16
      %v2613 = vrot.slane %v2611, 1
      %v2614 = vor.u32 %v2609, %v2613
      %v2616 = vshll.u32 %v2526, 16
      %v2618 = vrot.slane %v2616, 1
      %v2619 = vsel %vm1510, %v2614, %v2618
      %v2621 = vshrl.u32 %v2447, 16
      %v2623 = vshll.u32 %v2447, 16
      %v2625 = vrot.slane %v2623, 1
      %v2626 = vor.u32 %v2621, %v2625
      %v2628 = vshll.u32 %v2527, 16
      %v2630 = vrot.slane %v2628, 1
      %v2631 = vsel %vm1510, %v2626, %v2630
      %v2633 = vshrl.u32 %v2448, 16
      %v2635 = vshll.u32 %v2448, 16
      %v2637 = vrot.slane %v2635, 1
      %v2638 = vor.u32 %v2633, %v2637
      %v2640 = vshll.u32 %v2528, 16
      %v2642 = vrot.slane %v2640, 1
      %v2643 = vsel %vm1510, %v2638, %v2642
      %v2645 = vshrl.u32 %v2449, 16
      %v2647 = vshll.u32 %v2449, 16
      %v2649 = vrot.slane %v2647, 1
      %v2650 = vor.u32 %v2645, %v2649
      %v2652 = vshll.u32 %v2529, 16
      %v2654 = vrot.slane %v2652, 1
      %v2655 = vsel %vm1510, %v2650, %v2654
      %v2657 = vshrl.u32 %v2450, 16
      %v2659 = vshll.u32 %v2450, 16
      %v2661 = vrot.slane %v2659, 1
      %v2662 = vor.u32 %v2657, %v2661
      %v2664 = vshll.u32 %v2530, 16
      %v2666 = vrot.slane %v2664, 1
      %v2667 = vsel %vm1510, %v2662, %v2666
      %v2669 = vshrl.u32 %v2451, 16
      %v2671 = vshll.u32 %v2451, 16
      %v2673 = vrot.slane %v2671, 1
      %v2674 = vor.u32 %v2669, %v2673
      %v2676 = vshll.u32 %v2531, 16
      %v2678 = vrot.slane %v2676, 1
      %v2679 = vsel %vm1510, %v2674, %v2678
      %v2681 = vshrl.u32 %v2452, 16
      %v2683 = vshll.u32 %v2452, 16
      %v2685 = vrot.slane %v2683, 1
      %v2686 = vor.u32 %v2681, %v2685
      %v2688 = vshll.u32 %v2532, 16
      %v2690 = vrot.slane %v2688, 1
      %v2691 = vsel %vm1510, %v2686, %v2690
      %v2693 = vshrl.u32 %v2453, 16
      %v2695 = vshll.u32 %v2453, 16
      %v2697 = vrot.slane %v2695, 1
      %v2698 = vor.u32 %v2693, %v2697
      %v2700 = vshll.u32 %v2533, 16
      %v2702 = vrot.slane %v2700, 1
      %v2703 = vsel %vm1510, %v2698, %v2702
      %v2705 = vshrl.u32 %v2454, 16
      %v2707 = vshll.u32 %v2454, 16
      %v2709 = vrot.slane %v2707, 1
      %v2710 = vor.u32 %v2705, %v2709
      %v2712 = vshll.u32 %v2534, 16
      %v2714 = vrot.slane %v2712, 1
      %v2715 = vsel %vm1510, %v2710, %v2714
      %v2717 = vshrl.u32 %v2455, 16
      %v2719 = vshll.u32 %v2455, 16
      %v2721 = vrot.slane %v2719, 1
      %v2722 = vor.u32 %v2717, %v2721
      %v2724 = vshll.u32 %v2535, 16
      %v2726 = vrot.slane %v2724, 1
      %v2727 = vsel %vm1510, %v2722, %v2726
      %2728 = vrot.lane.b32.xlu0 %v2547, 28
      %v2729 = vpop.permute.xlu0 %2728
      %2730 = vrot.lane.b32.xlu0 %v2559, 28
      %v2731 = vpop.permute.xlu0 %2730
      %2732 = vrot.lane.b32.xlu0 %v2571, 28
      %v2733 = vpop.permute.xlu0 %2732
      %2734 = vrot.lane.b32.xlu0 %v2583, 28
      %v2735 = vpop.permute.xlu0 %2734
      %2736 = vrot.lane.b32.xlu0 %v2595, 28
      %v2737 = vpop.permute.xlu0 %2736
      %2738 = vrot.lane.b32.xlu0 %v2607, 28
      %v2739 = vpop.permute.xlu0 %2738
      %2740 = vrot.lane.b32.xlu0 %v2619, 28
      %v2741 = vpop.permute.xlu0 %2740
      %2742 = vrot.lane.b32.xlu0 %v2631, 28
      %v2743 = vpop.permute.xlu0 %2742
      %2744 = vrot.lane.b32.xlu0 %v2643, 28
      %v2745 = vpop.permute.xlu0 %2744
      %2746 = vrot.lane.b32.xlu0 %v2655, 28
      %v2747 = vpop.permute.xlu0 %2746
      %2748 = vrot.lane.b32.xlu0 %v2667, 28
      %v2749 = vpop.permute.xlu0 %2748
      %2750 = vrot.lane.b32.xlu0 %v2679, 28
      %v2751 = vpop.permute.xlu0 %2750
      %2752 = vrot.lane.b32.xlu0 %v2691, 28
      %v2753 = vpop.permute.xlu0 %2752
      %2754 = vrot.lane.b32.xlu0 %v2703, 28
      %v2755 = vpop.permute.xlu0 %2754
      %2756 = vrot.lane.b32.xlu0 %v2715, 28
      %v2757 = vpop.permute.xlu0 %2756
      %2758 = vrot.lane.b32.xlu0 %v2727, 28
      %v2759 = vpop.permute.xlu0 %2758
      %v2776 = vunpack.c.l.b16 %v1366
      %v2777 = vunpack.c.l.b16 %v1367
      %v2778 = vunpack.c.l.b16 %v1368
      %v2779 = vunpack.c.l.b16 %v1369
      %v2780 = vunpack.c.l.b16 %v1370
      %v2781 = vunpack.c.l.b16 %v1371
      %v2782 = vunpack.c.l.b16 %v1372
      %v2783 = vunpack.c.l.b16 %v1373
      %v2784 = vunpack.c.l.b16 %v1374
      %v2785 = vunpack.c.l.b16 %v1375
      %v2786 = vunpack.c.l.b16 %v1376
      %v2787 = vunpack.c.l.b16 %v1377
      %v2788 = vunpack.c.l.b16 %v1378
      %v2789 = vunpack.c.l.b16 %v1379
      %v2790 = vunpack.c.l.b16 %v1380
      %v2791 = vunpack.c.l.b16 %v1381
      %v2792 = vpack.c.b16 %v2409, %v2776
      %v2793 = vpack.c.b16 %v2411, %v2777
      %v2794 = vpack.c.b16 %v2413, %v2778
      %v2795 = vpack.c.b16 %v2415, %v2779
      %v2796 = vpack.c.b16 %v2417, %v2780
      %v2797 = vpack.c.b16 %v2419, %v2781
      %v2798 = vpack.c.b16 %v2421, %v2782
      %v2799 = vpack.c.b16 %v2423, %v2783
      %v2800 = vpack.c.b16 %v2425, %v2784
      %v2801 = vpack.c.b16 %v2427, %v2785
      %v2802 = vpack.c.b16 %v2429, %v2786
      %v2803 = vpack.c.b16 %v2431, %v2787
      %v2804 = vpack.c.b16 %v2433, %v2788
      %v2805 = vpack.c.b16 %v2435, %v2789
      %v2806 = vpack.c.b16 %v2437, %v2790
      %v2807 = vpack.c.b16 %v2439, %v2791
      %v2808 = vrot.slane %v2792, 1
      %v2809 = vrot.slane %v2520, 1
      %v2810 = vsel %vm1783, %v2808, %v2809
      %v2811 = vrot.slane %v2793, 1
      %v2812 = vrot.slane %v2521, 1
      %v2813 = vsel %vm1783, %v2811, %v2812
      %v2814 = vrot.slane %v2794, 1
      %v2815 = vrot.slane %v2522, 1
      %v2816 = vsel %vm1783, %v2814, %v2815
      %v2817 = vrot.slane %v2795, 1
      %v2818 = vrot.slane %v2523, 1
      %v2819 = vsel %vm1783, %v2817, %v2818
      %v2820 = vrot.slane %v2796, 1
      %v2821 = vrot.slane %v2524, 1
      %v2822 = vsel %vm1783, %v2820, %v2821
      %v2823 = vrot.slane %v2797, 1
      %v2824 = vrot.slane %v2525, 1
      %v2825 = vsel %vm1783, %v2823, %v2824
      %v2826 = vrot.slane %v2798, 1
      %v2827 = vrot.slane %v2526, 1
      %v2828 = vsel %vm1783, %v2826, %v2827
      %v2829 = vrot.slane %v2799, 1
      %v2830 = vrot.slane %v2527, 1
      %v2831 = vsel %vm1783, %v2829, %v2830
      %v2832 = vrot.slane %v2800, 1
      %v2833 = vrot.slane %v2528, 1
      %v2834 = vsel %vm1783, %v2832, %v2833
      %v2835 = vrot.slane %v2801, 1
      %v2836 = vrot.slane %v2529, 1
      %v2837 = vsel %vm1783, %v2835, %v2836
      %v2838 = vrot.slane %v2802, 1
      %v2839 = vrot.slane %v2530, 1
      %v2840 = vsel %vm1783, %v2838, %v2839
      %v2841 = vrot.slane %v2803, 1
      %v2842 = vrot.slane %v2531, 1
      %v2843 = vsel %vm1783, %v2841, %v2842
      %v2844 = vrot.slane %v2804, 1
      %v2845 = vrot.slane %v2532, 1
      %v2846 = vsel %vm1783, %v2844, %v2845
      %v2847 = vrot.slane %v2805, 1
      %v2848 = vrot.slane %v2533, 1
      %v2849 = vsel %vm1783, %v2847, %v2848
      %v2850 = vrot.slane %v2806, 1
      %v2851 = vrot.slane %v2534, 1
      %v2852 = vsel %vm1783, %v2850, %v2851
      %v2853 = vrot.slane %v2807, 1
      %v2854 = vrot.slane %v2535, 1
      %v2855 = vsel %vm1783, %v2853, %v2854
      %2856 = vrot.lane.b32.xlu0 %v2810, 32
      %v2857 = vpop.permute.xlu0 %2856
      %2858 = vrot.lane.b32.xlu0 %v2813, 32
      %v2859 = vpop.permute.xlu0 %2858
      %2860 = vrot.lane.b32.xlu0 %v2816, 32
      %v2861 = vpop.permute.xlu0 %2860
      %2862 = vrot.lane.b32.xlu0 %v2819, 32
      %v2863 = vpop.permute.xlu0 %2862
      %2864 = vrot.lane.b32.xlu0 %v2822, 32
      %v2865 = vpop.permute.xlu0 %2864
      %2866 = vrot.lane.b32.xlu0 %v2825, 32
      %v2867 = vpop.permute.xlu0 %2866
      %2868 = vrot.lane.b32.xlu0 %v2828, 32
      %v2869 = vpop.permute.xlu0 %2868
      %2870 = vrot.lane.b32.xlu0 %v2831, 32
      %v2871 = vpop.permute.xlu0 %2870
      %2872 = vrot.lane.b32.xlu0 %v2834, 32
      %v2873 = vpop.permute.xlu0 %2872
      %2874 = vrot.lane.b32.xlu0 %v2837, 32
      %v2875 = vpop.permute.xlu0 %2874
      %2876 = vrot.lane.b32.xlu0 %v2840, 32
      %v2877 = vpop.permute.xlu0 %2876
      %2878 = vrot.lane.b32.xlu0 %v2843, 32
      %v2879 = vpop.permute.xlu0 %2878
      %2880 = vrot.lane.b32.xlu0 %v2846, 32
      %v2881 = vpop.permute.xlu0 %2880
      %2882 = vrot.lane.b32.xlu0 %v2849, 32
      %v2883 = vpop.permute.xlu0 %2882
      %2884 = vrot.lane.b32.xlu0 %v2852, 32
      %v2885 = vpop.permute.xlu0 %2884
      %2886 = vrot.lane.b32.xlu0 %v2855, 32
      %v2887 = vpop.permute.xlu0 %2886
      %v2889 = vsel %vm352, %v1446, %v1704
      %v2891 = vsel %vm352, %v1447, %v1706
      %v2893 = vsel %vm352, %v1448, %v1708
      %v2895 = vsel %vm352, %v1449, %v1710
      %v2897 = vsel %vm352, %v1450, %v1712
      %v2899 = vsel %vm352, %v1451, %v1714
      %v2901 = vsel %vm352, %v1452, %v1716
      %v2903 = vsel %vm352, %v1453, %v1718
      %v2905 = vsel %vm352, %v1454, %v1720
      %v2907 = vsel %vm352, %v1455, %v1722
      %v2909 = vsel %vm352, %v1456, %v1724
      %v2911 = vsel %vm352, %v1457, %v1726
      %v2913 = vsel %vm352, %v1458, %v1728
      %v2915 = vsel %vm352, %v1459, %v1730
      %v2917 = vsel %vm352, %v1460, %v1732
      %v2919 = vsel %vm352, %v1461, %v1734
      %vm2920 = vcmask 64512
      %v2922 = vsel %vm2920, %v2889, %v1833
      %v2924 = vsel %vm2920, %v2891, %v1835
      %v2926 = vsel %vm2920, %v2893, %v1837
      %v2928 = vsel %vm2920, %v2895, %v1839
      %v2930 = vsel %vm2920, %v2897, %v1841
      %v2932 = vsel %vm2920, %v2899, %v1843
      %v2934 = vsel %vm2920, %v2901, %v1845
      %v2936 = vsel %vm2920, %v2903, %v1847
      %v2938 = vsel %vm2920, %v2905, %v1849
      %v2940 = vsel %vm2920, %v2907, %v1851
      %v2942 = vsel %vm2920, %v2909, %v1853
      %v2944 = vsel %vm2920, %v2911, %v1855
      %v2946 = vsel %vm2920, %v2913, %v1857
      %v2948 = vsel %vm2920, %v2915, %v1859
      %v2950 = vsel %vm2920, %v2917, %v1861
      %v2952 = vsel %vm2920, %v2919, %v1863
      %vm2953 = vcmask 97280
      %v2955 = vsel %vm2953, %v2922, %v1945
      %v2957 = vsel %vm2953, %v2924, %v1947
      %v2959 = vsel %vm2953, %v2926, %v1949
      %v2961 = vsel %vm2953, %v2928, %v1951
      %v2963 = vsel %vm2953, %v2930, %v1953
      %v2965 = vsel %vm2953, %v2932, %v1955
      %v2967 = vsel %vm2953, %v2934, %v1957
      %v2969 = vsel %vm2953, %v2936, %v1959
      %v2971 = vsel %vm2953, %v2938, %v1961
      %v2973 = vsel %vm2953, %v2940, %v1963
      %v2975 = vsel %vm2953, %v2942, %v1965
      %v2977 = vsel %vm2953, %v2944, %v1967
      %v2979 = vsel %vm2953, %v2946, %v1969
      %v2981 = vsel %vm2953, %v2948, %v1971
      %v2983 = vsel %vm2953, %v2950, %v1973
      %v2985 = vsel %vm2953, %v2952, %v1975
      %vm2986 = vcmask 130048
      %v2988 = vsel %vm2986, %v2955, %v2217
      %v2990 = vsel %vm2986, %v2957, %v2219
      %v2992 = vsel %vm2986, %v2959, %v2221
      %v2994 = vsel %vm2986, %v2961, %v2223
      %v2996 = vsel %vm2986, %v2963, %v2225
      %v2998 = vsel %vm2986, %v2965, %v2227
      %v3000 = vsel %vm2986, %v2967, %v2229
      %v3002 = vsel %vm2986, %v2969, %v2231
      %v3004 = vsel %vm2986, %v2971, %v2233
      %v3006 = vsel %vm2986, %v2973, %v2235
      %v3008 = vsel %vm2986, %v2975, %v2237
      %v3010 = vsel %vm2986, %v2977, %v2239
      %v3012 = vsel %vm2986, %v2979, %v2241
      %v3014 = vsel %vm2986, %v2981, %v2243
      %v3016 = vsel %vm2986, %v2983, %v2245
      %v3018 = vsel %vm2986, %v2985, %v2247
      %vm3019 = vcmask 162816
      %v3021 = vsel %vm3019, %v2988, %v2345
      %v3023 = vsel %vm3019, %v2990, %v2347
      %v3025 = vsel %vm3019, %v2992, %v2349
      %v3027 = vsel %vm3019, %v2994, %v2351
      %v3029 = vsel %vm3019, %v2996, %v2353
      %v3031 = vsel %vm3019, %v2998, %v2355
      %v3033 = vsel %vm3019, %v3000, %v2357
      %v3035 = vsel %vm3019, %v3002, %v2359
      %v3037 = vsel %vm3019, %v3004, %v2361
      %v3039 = vsel %vm3019, %v3006, %v2363
      %v3041 = vsel %vm3019, %v3008, %v2365
      %v3043 = vsel %vm3019, %v3010, %v2367
      %v3045 = vsel %vm3019, %v3012, %v2369
      %v3047 = vsel %vm3019, %v3014, %v2371
      %v3049 = vsel %vm3019, %v3016, %v2373
      %v3051 = vsel %vm3019, %v3018, %v2375
      %vm3052 = vcmask 195584
      %v3054 = vsel %vm3052, %v3021, %v2457
      %v3056 = vsel %vm3052, %v3023, %v2459
      %v3058 = vsel %vm3052, %v3025, %v2461
      %v3060 = vsel %vm3052, %v3027, %v2463
      %v3062 = vsel %vm3052, %v3029, %v2465
      %v3064 = vsel %vm3052, %v3031, %v2467
      %v3066 = vsel %vm3052, %v3033, %v2469
      %v3068 = vsel %vm3052, %v3035, %v2471
      %v3070 = vsel %vm3052, %v3037, %v2473
      %v3072 = vsel %vm3052, %v3039, %v2475
      %v3074 = vsel %vm3052, %v3041, %v2477
      %v3076 = vsel %vm3052, %v3043, %v2479
      %v3078 = vsel %vm3052, %v3045, %v2481
      %v3080 = vsel %vm3052, %v3047, %v2483
      %v3082 = vsel %vm3052, %v3049, %v2485
      %v3084 = vsel %vm3052, %v3051, %v2487
      %vm3085 = vcmask 228352
      %v3087 = vsel %vm3085, %v3054, %v2729
      %v3089 = vsel %vm3085, %v3056, %v2731
      %v3091 = vsel %vm3085, %v3058, %v2733
      %v3093 = vsel %vm3085, %v3060, %v2735
      %v3095 = vsel %vm3085, %v3062, %v2737
      %v3097 = vsel %vm3085, %v3064, %v2739
      %v3099 = vsel %vm3085, %v3066, %v2741
      %v3101 = vsel %vm3085, %v3068, %v2743
      %v3103 = vsel %vm3085, %v3070, %v2745
      %v3105 = vsel %vm3085, %v3072, %v2747
      %v3107 = vsel %vm3085, %v3074, %v2749
      %v3109 = vsel %vm3085, %v3076, %v2751
      %v3111 = vsel %vm3085, %v3078, %v2753
      %v3113 = vsel %vm3085, %v3080, %v2755
      %v3115 = vsel %vm3085, %v3082, %v2757
      %v3117 = vsel %vm3085, %v3084, %v2759
      %vm3118 = vcmask 261120
      %v3120 = vsel %vm3118, %v3087, %v2857
      %v3122 = vsel %vm3118, %v3089, %v2859
      %v3124 = vsel %vm3118, %v3091, %v2861
      %v3126 = vsel %vm3118, %v3093, %v2863
      %v3128 = vsel %vm3118, %v3095, %v2865
      %v3130 = vsel %vm3118, %v3097, %v2867
      %v3132 = vsel %vm3118, %v3099, %v2869
      %v3134 = vsel %vm3118, %v3101, %v2871
      %v3136 = vsel %vm3118, %v3103, %v2873
      %v3138 = vsel %vm3118, %v3105, %v2875
      %v3140 = vsel %vm3118, %v3107, %v2877
      %v3142 = vsel %vm3118, %v3109, %v2879
      %v3144 = vsel %vm3118, %v3111, %v2881
      %v3146 = vsel %vm3118, %v3113, %v2883
      %v3148 = vsel %vm3118, %v3115, %v2885
      %v3150 = vsel %vm3118, %v3117, %v2887
      %v3151 = vld [vmem:[%s3] sm:$0xf]
      %v3152 = vld [vmem:[%s3 + $0x4] sm:$0xf]
      %v3153 = vld [vmem:[%s3 + $0x8] sm:$0xf]
      %v3154 = vld [vmem:[%s3 + $0xc] sm:$0xf]
      %v3155 = vld [vmem:[%s3 + $0x10] sm:$0x3]
      %v3161 = vunpack.c.l.b16 %v3151
      %v3162 = vunpack.c.l.b16 %v3152
      %v3163 = vunpack.c.l.b16 %v3153
      %v3164 = vunpack.c.l.b16 %v3154
      %v3165 = vunpack.c.l.b16 %v3155
      %v3166 = vpack.c.b16 %v3162, %v3161
      %v3167 = vpack.c.b16 %v3164, %v3163
      %v3168 = vpack.c.b16 %v3165, %v3165
      %vm3171 = vcmask 293888
      %v3172 = vsel %vm3171, %v3120, 0
      %v3174 = vsel %vm3171, %v3122, 0
      %v3176 = vsel %vm3171, %v3124, 0
      %v3178 = vsel %vm3171, %v3126, 0
      %v3180 = vsel %vm3171, %v3128, 0
      %v3182 = vsel %vm3171, %v3130, 0
      %v3184 = vsel %vm3171, %v3132, 0
      %v3186 = vsel %vm3171, %v3134, 0
      %v3188 = vsel %vm3171, %v3136, 0
      %v3190 = vsel %vm3171, %v3138, 0
      %v3192 = vsel %vm3171, %v3140, 0
      %v3194 = vsel %vm3171, %v3142, 0
      %v3196 = vsel %vm3171, %v3144, 0
      %v3198 = vsel %vm3171, %v3146, 0
      %v3200 = vsel %vm3171, %v3148, 0
      %v3202 = vsel %vm3171, %v3150, 0
      %v3205 = vsel %vm401, %v3168, 0
      %3207 = vmatpush.bf16.msra.mxu0 0
      %3208 = vmatpush.bf16.msra.mxu0 0
      %3209 = vmatpush.bf16.msra.mxu0 0
      %3210 = vmatpush.bf16.msra.mxu0 0
      %3211 = vmatpush.bf16.msra.mxu0 0
      %3212 = vmatpush.bf16.msra.mxu0 %v3205
      %3213 = vmatpush.bf16.msra.mxu0 %v3167
      %3214 = vmatpush.bf16.msra.mxu0 %v3166
      %3215 = vmatmul.bf16.gmra.mxu0 %v3172
      %v3216 = vpop.f32.mrf.mxu0
      %v3217 = vadd.f32 0.0, %v3216
      %v3218 = vpop.f32.mrf.mxu0
      %v3219 = vadd.f32 0.0, %v3218
      %3220 = vmatmul.bf16.gmra.mxu0 %v3174
      %v3221 = vpop.f32.mrf.mxu0
      %v3222 = vadd.f32 0.0, %v3221
      %v3223 = vpop.f32.mrf.mxu0
      %v3224 = vadd.f32 0.0, %v3223
      %3225 = vmatmul.bf16.gmra.mxu0 %v3176
      %v3226 = vpop.f32.mrf.mxu0
      %v3227 = vadd.f32 0.0, %v3226
      %v3228 = vpop.f32.mrf.mxu0
      %v3229 = vadd.f32 0.0, %v3228
      %3230 = vmatmul.bf16.gmra.mxu0 %v3178
      %v3231 = vpop.f32.mrf.mxu0
      %v3232 = vadd.f32 0.0, %v3231
      %v3233 = vpop.f32.mrf.mxu0
      %v3234 = vadd.f32 0.0, %v3233
      %3235 = vmatmul.bf16.gmra.mxu0 %v3180
      %v3236 = vpop.f32.mrf.mxu0
      %v3237 = vadd.f32 0.0, %v3236
      %v3238 = vpop.f32.mrf.mxu0
      %v3239 = vadd.f32 0.0, %v3238
      %3240 = vmatmul.bf16.gmra.mxu0 %v3182
      %v3241 = vpop.f32.mrf.mxu0
      %v3242 = vadd.f32 0.0, %v3241
      %v3243 = vpop.f32.mrf.mxu0
      %v3244 = vadd.f32 0.0, %v3243
      %3245 = vmatmul.bf16.gmra.mxu0 %v3184
      %v3246 = vpop.f32.mrf.mxu0
      %v3247 = vadd.f32 0.0, %v3246
      %v3248 = vpop.f32.mrf.mxu0
      %v3249 = vadd.f32 0.0, %v3248
      %3250 = vmatmul.bf16.gmra.mxu0 %v3186
      %v3251 = vpop.f32.mrf.mxu0
      %v3252 = vadd.f32 0.0, %v3251
      %v3253 = vpop.f32.mrf.mxu0
      %v3254 = vadd.f32 0.0, %v3253
      %3255 = vmatmul.bf16.gmra.mxu0 %v3188
      %v3256 = vpop.f32.mrf.mxu0
      %v3257 = vadd.f32 0.0, %v3256
      %v3258 = vpop.f32.mrf.mxu0
      %v3259 = vadd.f32 0.0, %v3258
      %3260 = vmatmul.bf16.gmra.mxu0 %v3190
      %v3261 = vpop.f32.mrf.mxu0
      %v3262 = vadd.f32 0.0, %v3261
      %v3263 = vpop.f32.mrf.mxu0
      %v3264 = vadd.f32 0.0, %v3263
      %3265 = vmatmul.bf16.gmra.mxu0 %v3192
      %v3266 = vpop.f32.mrf.mxu0
      %v3267 = vadd.f32 0.0, %v3266
      %v3268 = vpop.f32.mrf.mxu0
      %v3269 = vadd.f32 0.0, %v3268
      %3270 = vmatmul.bf16.gmra.mxu0 %v3194
      %v3271 = vpop.f32.mrf.mxu0
      %v3272 = vadd.f32 0.0, %v3271
      %v3273 = vpop.f32.mrf.mxu0
      %v3274 = vadd.f32 0.0, %v3273
      %3275 = vmatmul.bf16.gmra.mxu0 %v3196
      %v3276 = vpop.f32.mrf.mxu0
      %v3277 = vadd.f32 0.0, %v3276
      %v3278 = vpop.f32.mrf.mxu0
      %v3279 = vadd.f32 0.0, %v3278
      %3280 = vmatmul.bf16.gmra.mxu0 %v3198
      %v3281 = vpop.f32.mrf.mxu0
      %v3282 = vadd.f32 0.0, %v3281
      %v3283 = vpop.f32.mrf.mxu0
      %v3284 = vadd.f32 0.0, %v3283
      %3285 = vmatmul.bf16.gmra.mxu0 %v3200
      %v3286 = vpop.f32.mrf.mxu0
      %v3287 = vadd.f32 0.0, %v3286
      %v3288 = vpop.f32.mrf.mxu0
      %v3289 = vadd.f32 0.0, %v3288
      %3290 = vmatmul.bf16.gmra.mxu0 %v3202
      %v3291 = vpop.f32.mrf.mxu0
      %v3292 = vadd.f32 0.0, %v3291
      %v3293 = vpop.f32.mrf.mxu0
      %v3294 = vadd.f32 0.0, %v3293
      %3295 = vdwg.mxu0
      %v3296 = vpack.c.bf16 %v3217, %v3217
      %v3297 = vpack.c.bf16 %v3219, %v3219
      %v3298 = vpack.c.bf16 %v3222, %v3222
      %v3299 = vpack.c.bf16 %v3224, %v3224
      %v3300 = vpack.c.bf16 %v3227, %v3227
      %v3301 = vpack.c.bf16 %v3229, %v3229
      %v3302 = vpack.c.bf16 %v3232, %v3232
      %v3303 = vpack.c.bf16 %v3234, %v3234
      %v3304 = vpack.c.bf16 %v3237, %v3237
      %v3305 = vpack.c.bf16 %v3239, %v3239
      %v3306 = vpack.c.bf16 %v3242, %v3242
      %v3307 = vpack.c.bf16 %v3244, %v3244
      %v3308 = vpack.c.bf16 %v3247, %v3247
      %v3309 = vpack.c.bf16 %v3249, %v3249
      %v3310 = vpack.c.bf16 %v3252, %v3252
      %v3311 = vpack.c.bf16 %v3254, %v3254
      %v3312 = vpack.c.bf16 %v3257, %v3257
      %v3313 = vpack.c.bf16 %v3259, %v3259
      %v3314 = vpack.c.bf16 %v3262, %v3262
      %v3315 = vpack.c.bf16 %v3264, %v3264
      %v3316 = vpack.c.bf16 %v3267, %v3267
      %v3317 = vpack.c.bf16 %v3269, %v3269
      %v3318 = vpack.c.bf16 %v3272, %v3272
      %v3319 = vpack.c.bf16 %v3274, %v3274
      %v3320 = vpack.c.bf16 %v3277, %v3277
      %v3321 = vpack.c.bf16 %v3279, %v3279
      %v3322 = vpack.c.bf16 %v3282, %v3282
      %v3323 = vpack.c.bf16 %v3284, %v3284
      %v3324 = vpack.c.bf16 %v3287, %v3287
      %v3325 = vpack.c.bf16 %v3289, %v3289
      %v3326 = vpack.c.bf16 %v3292, %v3292
      %v3327 = vpack.c.bf16 %v3294, %v3294
      %vm3328 = vcmask 60416
      %3329 = vst.msk [vmem:[%s292] sm:$0xf] %vm3328, %v3296
      %3330 = vst.msk [vmem:[%s292 + $0x4] sm:$0xf] %vm3328, %v3297
      %3331 = vst.msk [vmem:[%s292 + $0x8] sm:$0xf] %vm3328, %v3298
      %3332 = vst.msk [vmem:[%s292 + $0xc] sm:$0xf] %vm3328, %v3299
      %3333 = vst.msk [vmem:[%s292 + $0x10] sm:$0xf] %vm3328, %v3300
      %3334 = vst.msk [vmem:[%s292 + $0x14] sm:$0xf] %vm3328, %v3301
      %3335 = vst.msk [vmem:[%s292 + $0x18] sm:$0xf] %vm3328, %v3302
      %3336 = vst.msk [vmem:[%s292 + $0x1c] sm:$0xf] %vm3328, %v3303
      %3337 = vst.msk [vmem:[%s292 + $0x20] sm:$0xf] %vm3328, %v3304
      %3338 = vst.msk [vmem:[%s292 + $0x24] sm:$0xf] %vm3328, %v3305
      %3339 = vst.msk [vmem:[%s292 + $0x28] sm:$0xf] %vm3328, %v3306
      %3340 = vst.msk [vmem:[%s292 + $0x2c] sm:$0xf] %vm3328, %v3307
      %3341 = vst.msk [vmem:[%s292 + $0x30] sm:$0xf] %vm3328, %v3308
      %3342 = vst.msk [vmem:[%s292 + $0x34] sm:$0xf] %vm3328, %v3309
      %3343 = vst.msk [vmem:[%s292 + $0x38] sm:$0xf] %vm3328, %v3310
      %3344 = vst.msk [vmem:[%s292 + $0x3c] sm:$0xf] %vm3328, %v3311
      %3345 = vst.msk [vmem:[%s292 + $0x40] sm:$0xf] %vm3328, %v3312
      %3346 = vst.msk [vmem:[%s292 + $0x44] sm:$0xf] %vm3328, %v3313
      %3347 = vst.msk [vmem:[%s292 + $0x48] sm:$0xf] %vm3328, %v3314
      %3348 = vst.msk [vmem:[%s292 + $0x4c] sm:$0xf] %vm3328, %v3315
      %3349 = vst.msk [vmem:[%s292 + $0x50] sm:$0xf] %vm3328, %v3316
      %3350 = vst.msk [vmem:[%s292 + $0x54] sm:$0xf] %vm3328, %v3317
      %3351 = vst.msk [vmem:[%s292 + $0x58] sm:$0xf] %vm3328, %v3318
      %3352 = vst.msk [vmem:[%s292 + $0x5c] sm:$0xf] %vm3328, %v3319
      %3353 = vst.msk [vmem:[%s292 + $0x60] sm:$0xf] %vm3328, %v3320
      %3354 = vst.msk [vmem:[%s292 + $0x64] sm:$0xf] %vm3328, %v3321
      %3355 = vst.msk [vmem:[%s292 + $0x68] sm:$0xf] %vm3328, %v3322
      %3356 = vst.msk [vmem:[%s292 + $0x6c] sm:$0xf] %vm3328, %v3323
      %3357 = vst.msk [vmem:[%s292 + $0x70] sm:$0xf] %vm3328, %v3324
      %3358 = vst.msk [vmem:[%s292 + $0x74] sm:$0xf] %vm3328, %v3325
      %3359 = vst.msk [vmem:[%s292 + $0x78] sm:$0xf] %vm3328, %v3326
      %3360 = vst.msk [vmem:[%s292 + $0x7c] sm:$0xf] %vm3328, %v3327
      %v3361 = vpack.c.bf16 %v415, %v415
      %v3362 = vpack.c.bf16 %v417, %v417
      %v3363 = vpack.c.bf16 %v420, %v420
      %v3364 = vpack.c.bf16 %v422, %v422
      %v3365 = vpack.c.bf16 %v425, %v425
      %v3366 = vpack.c.bf16 %v427, %v427
      %v3367 = vpack.c.bf16 %v430, %v430
      %v3368 = vpack.c.bf16 %v432, %v432
      %v3369 = vpack.c.bf16 %v435, %v435
      %v3370 = vpack.c.bf16 %v437, %v437
      %v3371 = vpack.c.bf16 %v440, %v440
      %v3372 = vpack.c.bf16 %v442, %v442
      %v3373 = vpack.c.bf16 %v445, %v445
      %v3374 = vpack.c.bf16 %v447, %v447
      %v3375 = vpack.c.bf16 %v450, %v450
      %v3376 = vpack.c.bf16 %v452, %v452
      %v3377 = vpack.c.bf16 %v455, %v455
      %v3378 = vpack.c.bf16 %v457, %v457
      %v3379 = vpack.c.bf16 %v460, %v460
      %v3380 = vpack.c.bf16 %v462, %v462
      %v3381 = vpack.c.bf16 %v465, %v465
      %v3382 = vpack.c.bf16 %v467, %v467
      %v3383 = vpack.c.bf16 %v470, %v470
      %v3384 = vpack.c.bf16 %v472, %v472
      %v3385 = vpack.c.bf16 %v475, %v475
      %v3386 = vpack.c.bf16 %v477, %v477
      %v3387 = vpack.c.bf16 %v480, %v480
      %v3388 = vpack.c.bf16 %v482, %v482
      %v3389 = vpack.c.bf16 %v485, %v485
      %v3390 = vpack.c.bf16 %v487, %v487
      %v3391 = vpack.c.bf16 %v490, %v490
      %v3392 = vpack.c.bf16 %v492, %v492
      %3393 = vst.msk [vmem:[%s297] sm:$0xf] %vm3328, %v3361
      %3394 = vst.msk [vmem:[%s297 + $0x4] sm:$0xf] %vm3328, %v3362
      %3395 = vst.msk [vmem:[%s297 + $0x8] sm:$0xf] %vm3328, %v3363
      %3396 = vst.msk [vmem:[%s297 + $0xc] sm:$0xf] %vm3328, %v3364
      %3397 = vst.msk [vmem:[%s297 + $0x10] sm:$0xf] %vm3328, %v3365
      %3398 = vst.msk [vmem:[%s297 + $0x14] sm:$0xf] %vm3328, %v3366
      %3399 = vst.msk [vmem:[%s297 + $0x18] sm:$0xf] %vm3328, %v3367
      %3400 = vst.msk [vmem:[%s297 + $0x1c] sm:$0xf] %vm3328, %v3368
      %3401 = vst.msk [vmem:[%s297 + $0x20] sm:$0xf] %vm3328, %v3369
      %3402 = vst.msk [vmem:[%s297 + $0x24] sm:$0xf] %vm3328, %v3370
      %3403 = vst.msk [vmem:[%s297 + $0x28] sm:$0xf] %vm3328, %v3371
      %3404 = vst.msk [vmem:[%s297 + $0x2c] sm:$0xf] %vm3328, %v3372
      %3405 = vst.msk [vmem:[%s297 + $0x30] sm:$0xf] %vm3328, %v3373
      %3406 = vst.msk [vmem:[%s297 + $0x34] sm:$0xf] %vm3328, %v3374
      %3407 = vst.msk [vmem:[%s297 + $0x38] sm:$0xf] %vm3328, %v3375
      %3408 = vst.msk [vmem:[%s297 + $0x3c] sm:$0xf] %vm3328, %v3376
      %3409 = vst.msk [vmem:[%s297 + $0x40] sm:$0xf] %vm3328, %v3377
      %3410 = vst.msk [vmem:[%s297 + $0x44] sm:$0xf] %vm3328, %v3378
      %3411 = vst.msk [vmem:[%s297 + $0x48] sm:$0xf] %vm3328, %v3379
      %3412 = vst.msk [vmem:[%s297 + $0x4c] sm:$0xf] %vm3328, %v3380
      %3413 = vst.msk [vmem:[%s297 + $0x50] sm:$0xf] %vm3328, %v3381
      %3414 = vst.msk [vmem:[%s297 + $0x54] sm:$0xf] %vm3328, %v3382
      %3415 = vst.msk [vmem:[%s297 + $0x58] sm:$0xf] %vm3328, %v3383
      %3416 = vst.msk [vmem:[%s297 + $0x5c] sm:$0xf] %vm3328, %v3384
      %3417 = vst.msk [vmem:[%s297 + $0x60] sm:$0xf] %vm3328, %v3385
      %3418 = vst.msk [vmem:[%s297 + $0x64] sm:$0xf] %vm3328, %v3386
      %3419 = vst.msk [vmem:[%s297 + $0x68] sm:$0xf] %vm3328, %v3387
      %3420 = vst.msk [vmem:[%s297 + $0x6c] sm:$0xf] %vm3328, %v3388
      %3421 = vst.msk [vmem:[%s297 + $0x70] sm:$0xf] %vm3328, %v3389
      %3422 = vst.msk [vmem:[%s297 + $0x74] sm:$0xf] %vm3328, %v3390
      %3423 = vst.msk [vmem:[%s297 + $0x78] sm:$0xf] %vm3328, %v3391
      %3424 = vst.msk [vmem:[%s297 + $0x7c] sm:$0xf] %vm3328, %v3392
      %v3425 = vsel %vm2920, %v3217, 0.0
      %v3426 = vsel %vm2920, %v3219, 0.0
      %v3427 = vadd.f32 %v3425, %v3426
      %v3428 = vsel %vm2920, %v3222, 0.0
      %v3429 = vadd.f32 %v3427, %v3428
      %v3430 = vsel %vm2920, %v3224, 0.0
      %v3431 = vadd.f32 %v3429, %v3430
      %v3432 = vsel %vm2920, %v3227, 0.0
      %v3433 = vadd.f32 %v3431, %v3432
      %v3434 = vsel %vm2920, %v3229, 0.0
      %v3435 = vadd.f32 %v3433, %v3434
      %v3436 = vsel %vm2920, %v3232, 0.0
      %v3437 = vadd.f32 %v3435, %v3436
      %v3438 = vsel %vm2920, %v3234, 0.0
      %v3439 = vadd.f32 %v3437, %v3438
      %v3440 = vsel %vm2920, %v3237, 0.0
      %v3441 = vadd.f32 %v3439, %v3440
      %v3442 = vsel %vm2920, %v3239, 0.0
      %v3443 = vadd.f32 %v3441, %v3442
      %v3444 = vsel %vm2920, %v3242, 0.0
      %v3445 = vadd.f32 %v3443, %v3444
      %v3446 = vsel %vm2920, %v3244, 0.0
      %v3447 = vadd.f32 %v3445, %v3446
      %v3448 = vsel %vm2920, %v3247, 0.0
      %v3449 = vadd.f32 %v3447, %v3448
      %v3450 = vsel %vm2920, %v3249, 0.0
      %v3451 = vadd.f32 %v3449, %v3450
      %v3452 = vsel %vm2920, %v3252, 0.0
      %v3453 = vadd.f32 %v3451, %v3452
      %v3454 = vsel %vm2920, %v3254, 0.0
      %v3455 = vadd.f32 %v3453, %v3454
      %v3456 = vsel %vm2920, %v3257, 0.0
      %v3457 = vadd.f32 %v3455, %v3456
      %v3458 = vsel %vm2920, %v3259, 0.0
      %v3459 = vadd.f32 %v3457, %v3458
      %v3460 = vsel %vm2920, %v3262, 0.0
      %v3461 = vadd.f32 %v3459, %v3460
      %v3462 = vsel %vm2920, %v3264, 0.0
      %v3463 = vadd.f32 %v3461, %v3462
      %v3464 = vsel %vm2920, %v3267, 0.0
      %v3465 = vadd.f32 %v3463, %v3464
      %v3466 = vsel %vm2920, %v3269, 0.0
      %v3467 = vadd.f32 %v3465, %v3466
      %v3468 = vsel %vm2920, %v3272, 0.0
      %v3469 = vadd.f32 %v3467, %v3468
      %v3470 = vsel %vm2920, %v3274, 0.0
      %v3471 = vadd.f32 %v3469, %v3470
      %v3472 = vsel %vm2920, %v3277, 0.0
      %v3473 = vadd.f32 %v3471, %v3472
      %v3474 = vsel %vm2920, %v3279, 0.0
      %v3475 = vadd.f32 %v3473, %v3474
      %v3476 = vsel %vm2920, %v3282, 0.0
      %v3477 = vadd.f32 %v3475, %v3476
      %v3478 = vsel %vm2920, %v3284, 0.0
      %v3479 = vadd.f32 %v3477, %v3478
      %v3480 = vsel %vm2920, %v3287, 0.0
      %v3481 = vadd.f32 %v3479, %v3480
      %v3482 = vsel %vm2920, %v3289, 0.0
      %v3483 = vadd.f32 %v3481, %v3482
      %v3484 = vsel %vm2920, %v3292, 0.0
      %v3485 = vadd.f32 %v3483, %v3484
      %v3486 = vsel %vm2920, %v3294, 0.0
      %v3487 = vadd.f32 %v3485, %v3486
      %v3488 = vrot.slane %v3487, 4
      %v3489 = vadd.f32 %v3487, %v3488
      %v3490 = vrot.slane %v3489, 2
      %v3491 = vadd.f32 %v3489, %v3490
      %v3492 = vrot.slane %v3491, 1
      %v3493 = vadd.f32 %v3491, %v3492
      %v3494 = vmul.f32 %v3217, %v3217
      %v3495 = vmul.f32 %v3219, %v3219
      %v3496 = vmul.f32 %v3222, %v3222
      %v3497 = vmul.f32 %v3224, %v3224
      %v3498 = vmul.f32 %v3227, %v3227
      %v3499 = vmul.f32 %v3229, %v3229
      %v3500 = vmul.f32 %v3232, %v3232
      %v3501 = vmul.f32 %v3234, %v3234
      %v3502 = vmul.f32 %v3237, %v3237
      %v3503 = vmul.f32 %v3239, %v3239
      %v3504 = vmul.f32 %v3242, %v3242
      %v3505 = vmul.f32 %v3244, %v3244
      %v3506 = vmul.f32 %v3247, %v3247
      %v3507 = vmul.f32 %v3249, %v3249
      %v3508 = vmul.f32 %v3252, %v3252
      %v3509 = vmul.f32 %v3254, %v3254
      %v3510 = vmul.f32 %v3257, %v3257
      %v3511 = vmul.f32 %v3259, %v3259
      %v3512 = vmul.f32 %v3262, %v3262
      %v3513 = vmul.f32 %v3264, %v3264
      %v3514 = vmul.f32 %v3267, %v3267
      %v3515 = vmul.f32 %v3269, %v3269
      %v3516 = vmul.f32 %v3272, %v3272
      %v3517 = vmul.f32 %v3274, %v3274
      %v3518 = vmul.f32 %v3277, %v3277
      %v3519 = vmul.f32 %v3279, %v3279
      %v3520 = vmul.f32 %v3282, %v3282
      %v3521 = vmul.f32 %v3284, %v3284
      %v3522 = vmul.f32 %v3287, %v3287
      %v3523 = vmul.f32 %v3289, %v3289
      %v3524 = vmul.f32 %v3292, %v3292
      %v3525 = vmul.f32 %v3294, %v3294
      %v3526 = vsel %vm2920, %v3494, 0.0
      %v3527 = vsel %vm2920, %v3495, 0.0
      %v3528 = vadd.f32 %v3526, %v3527
      %v3529 = vsel %vm2920, %v3496, 0.0
      %v3530 = vadd.f32 %v3528, %v3529
      %v3531 = vsel %vm2920, %v3497, 0.0
      %v3532 = vadd.f32 %v3530, %v3531
      %v3533 = vsel %vm2920, %v3498, 0.0
      %v3534 = vadd.f32 %v3532, %v3533
      %v3535 = vsel %vm2920, %v3499, 0.0
      %v3536 = vadd.f32 %v3534, %v3535
      %v3537 = vsel %vm2920, %v3500, 0.0
      %v3538 = vadd.f32 %v3536, %v3537
      %v3539 = vsel %vm2920, %v3501, 0.0
      %v3540 = vadd.f32 %v3538, %v3539
      %v3541 = vsel %vm2920, %v3502, 0.0
      %v3542 = vadd.f32 %v3540, %v3541
      %v3543 = vsel %vm2920, %v3503, 0.0
      %v3544 = vadd.f32 %v3542, %v3543
      %v3545 = vsel %vm2920, %v3504, 0.0
      %v3546 = vadd.f32 %v3544, %v3545
      %v3547 = vsel %vm2920, %v3505, 0.0
      %v3548 = vadd.f32 %v3546, %v3547
      %v3549 = vsel %vm2920, %v3506, 0.0
      %v3550 = vadd.f32 %v3548, %v3549
      %v3551 = vsel %vm2920, %v3507, 0.0
      %v3552 = vadd.f32 %v3550, %v3551
      %v3553 = vsel %vm2920, %v3508, 0.0
      %v3554 = vadd.f32 %v3552, %v3553
      %v3555 = vsel %vm2920, %v3509, 0.0
      %v3556 = vadd.f32 %v3554, %v3555
      %v3557 = vsel %vm2920, %v3510, 0.0
      %v3558 = vadd.f32 %v3556, %v3557
      %v3559 = vsel %vm2920, %v3511, 0.0
      %v3560 = vadd.f32 %v3558, %v3559
      %v3561 = vsel %vm2920, %v3512, 0.0
      %v3562 = vadd.f32 %v3560, %v3561
      %v3563 = vsel %vm2920, %v3513, 0.0
      %v3564 = vadd.f32 %v3562, %v3563
      %v3565 = vsel %vm2920, %v3514, 0.0
      %v3566 = vadd.f32 %v3564, %v3565
      %v3567 = vsel %vm2920, %v3515, 0.0
      %v3568 = vadd.f32 %v3566, %v3567
      %v3569 = vsel %vm2920, %v3516, 0.0
      %v3570 = vadd.f32 %v3568, %v3569
      %v3571 = vsel %vm2920, %v3517, 0.0
      %v3572 = vadd.f32 %v3570, %v3571
      %v3573 = vsel %vm2920, %v3518, 0.0
      %v3574 = vadd.f32 %v3572, %v3573
      %v3575 = vsel %vm2920, %v3519, 0.0
      %v3576 = vadd.f32 %v3574, %v3575
      %v3577 = vsel %vm2920, %v3520, 0.0
      %v3578 = vadd.f32 %v3576, %v3577
      %v3579 = vsel %vm2920, %v3521, 0.0
      %v3580 = vadd.f32 %v3578, %v3579
      %v3581 = vsel %vm2920, %v3522, 0.0
      %v3582 = vadd.f32 %v3580, %v3581
      %v3583 = vsel %vm2920, %v3523, 0.0
      %v3584 = vadd.f32 %v3582, %v3583
      %v3585 = vsel %vm2920, %v3524, 0.0
      %v3586 = vadd.f32 %v3584, %v3585
      %v3587 = vsel %vm2920, %v3525, 0.0
      %v3588 = vadd.f32 %v3586, %v3587
      %v3589 = vrot.slane %v3588, 4
      %v3590 = vadd.f32 %v3588, %v3589
      %v3591 = vrot.slane %v3590, 2
      %v3592 = vadd.f32 %v3590, %v3591
      %v3593 = vrot.slane %v3592, 1
      %v3594 = vadd.f32 %v3592, %v3593
      %v3595 = vsel %vm2920, %v415, 0.0
      %v3596 = vsel %vm2920, %v417, 0.0
      %v3597 = vadd.f32 %v3595, %v3596
      %v3598 = vsel %vm2920, %v420, 0.0
      %v3599 = vadd.f32 %v3597, %v3598
      %v3600 = vsel %vm2920, %v422, 0.0
      %v3601 = vadd.f32 %v3599, %v3600
      %v3602 = vsel %vm2920, %v425, 0.0
      %v3603 = vadd.f32 %v3601, %v3602
      %v3604 = vsel %vm2920, %v427, 0.0
      %v3605 = vadd.f32 %v3603, %v3604
      %v3606 = vsel %vm2920, %v430, 0.0
      %v3607 = vadd.f32 %v3605, %v3606
      %v3608 = vsel %vm2920, %v432, 0.0
      %v3609 = vadd.f32 %v3607, %v3608
      %v3610 = vsel %vm2920, %v435, 0.0
      %v3611 = vadd.f32 %v3609, %v3610
      %v3612 = vsel %vm2920, %v437, 0.0
      %v3613 = vadd.f32 %v3611, %v3612
      %v3614 = vsel %vm2920, %v440, 0.0
      %v3615 = vadd.f32 %v3613, %v3614
      %v3616 = vsel %vm2920, %v442, 0.0
      %v3617 = vadd.f32 %v3615, %v3616
      %v3618 = vsel %vm2920, %v445, 0.0
      %v3619 = vadd.f32 %v3617, %v3618
      %v3620 = vsel %vm2920, %v447, 0.0
      %v3621 = vadd.f32 %v3619, %v3620
      %v3622 = vsel %vm2920, %v450, 0.0
      %v3623 = vadd.f32 %v3621, %v3622
      %v3624 = vsel %vm2920, %v452, 0.0
      %v3625 = vadd.f32 %v3623, %v3624
      %v3626 = vsel %vm2920, %v455, 0.0
      %v3627 = vadd.f32 %v3625, %v3626
      %v3628 = vsel %vm2920, %v457, 0.0
      %v3629 = vadd.f32 %v3627, %v3628
      %v3630 = vsel %vm2920, %v460, 0.0
      %v3631 = vadd.f32 %v3629, %v3630
      %v3632 = vsel %vm2920, %v462, 0.0
      %v3633 = vadd.f32 %v3631, %v3632
      %v3634 = vsel %vm2920, %v465, 0.0
      %v3635 = vadd.f32 %v3633, %v3634
      %v3636 = vsel %vm2920, %v467, 0.0
      %v3637 = vadd.f32 %v3635, %v3636
      %v3638 = vsel %vm2920, %v470, 0.0
      %v3639 = vadd.f32 %v3637, %v3638
      %v3640 = vsel %vm2920, %v472, 0.0
      %v3641 = vadd.f32 %v3639, %v3640
      %v3642 = vsel %vm2920, %v475, 0.0
      %v3643 = vadd.f32 %v3641, %v3642
      %v3644 = vsel %vm2920, %v477, 0.0
      %v3645 = vadd.f32 %v3643, %v3644
      %v3646 = vsel %vm2920, %v480, 0.0
      %v3647 = vadd.f32 %v3645, %v3646
      %v3648 = vsel %vm2920, %v482, 0.0
      %v3649 = vadd.f32 %v3647, %v3648
      %v3650 = vsel %vm2920, %v485, 0.0
      %v3651 = vadd.f32 %v3649, %v3650
      %v3652 = vsel %vm2920, %v487, 0.0
      %v3653 = vadd.f32 %v3651, %v3652
      %v3654 = vsel %vm2920, %v490, 0.0
      %v3655 = vadd.f32 %v3653, %v3654
      %v3656 = vsel %vm2920, %v492, 0.0
      %v3657 = vadd.f32 %v3655, %v3656
      %v3658 = vrot.slane %v3657, 4
      %v3659 = vadd.f32 %v3657, %v3658
      %v3660 = vrot.slane %v3659, 2
      %v3661 = vadd.f32 %v3659, %v3660
      %v3662 = vrot.slane %v3661, 1
      %v3663 = vadd.f32 %v3661, %v3662
      %v3664 = vmul.f32 %v415, %v415
      %v3665 = vmul.f32 %v417, %v417
      %v3666 = vmul.f32 %v420, %v420
      %v3667 = vmul.f32 %v422, %v422
      %v3668 = vmul.f32 %v425, %v425
      %v3669 = vmul.f32 %v427, %v427
      %v3670 = vmul.f32 %v430, %v430
      %v3671 = vmul.f32 %v432, %v432
      %v3672 = vmul.f32 %v435, %v435
      %v3673 = vmul.f32 %v437, %v437
      %v3674 = vmul.f32 %v440, %v440
      %v3675 = vmul.f32 %v442, %v442
      %v3676 = vmul.f32 %v445, %v445
      %v3677 = vmul.f32 %v447, %v447
      %v3678 = vmul.f32 %v450, %v450
      %v3679 = vmul.f32 %v452, %v452
      %v3680 = vmul.f32 %v455, %v455
      %v3681 = vmul.f32 %v457, %v457
      %v3682 = vmul.f32 %v460, %v460
      %v3683 = vmul.f32 %v462, %v462
      %v3684 = vmul.f32 %v465, %v465
      %v3685 = vmul.f32 %v467, %v467
      %v3686 = vmul.f32 %v470, %v470
      %v3687 = vmul.f32 %v472, %v472
      %v3688 = vmul.f32 %v475, %v475
      %v3689 = vmul.f32 %v477, %v477
      %v3690 = vmul.f32 %v480, %v480
      %v3691 = vmul.f32 %v482, %v482
      %v3692 = vmul.f32 %v485, %v485
      %v3693 = vmul.f32 %v487, %v487
      %v3694 = vmul.f32 %v490, %v490
      %v3695 = vmul.f32 %v492, %v492
      %v3696 = vsel %vm2920, %v3664, 0.0
      %v3697 = vsel %vm2920, %v3665, 0.0
      %v3698 = vadd.f32 %v3696, %v3697
      %v3699 = vsel %vm2920, %v3666, 0.0
      %v3700 = vadd.f32 %v3698, %v3699
      %v3701 = vsel %vm2920, %v3667, 0.0
      %v3702 = vadd.f32 %v3700, %v3701
      %v3703 = vsel %vm2920, %v3668, 0.0
      %v3704 = vadd.f32 %v3702, %v3703
      %v3705 = vsel %vm2920, %v3669, 0.0
      %v3706 = vadd.f32 %v3704, %v3705
      %v3707 = vsel %vm2920, %v3670, 0.0
      %v3708 = vadd.f32 %v3706, %v3707
      %v3709 = vsel %vm2920, %v3671, 0.0
      %v3710 = vadd.f32 %v3708, %v3709
      %v3711 = vsel %vm2920, %v3672, 0.0
      %v3712 = vadd.f32 %v3710, %v3711
      %v3713 = vsel %vm2920, %v3673, 0.0
      %v3714 = vadd.f32 %v3712, %v3713
      %v3715 = vsel %vm2920, %v3674, 0.0
      %v3716 = vadd.f32 %v3714, %v3715
      %v3717 = vsel %vm2920, %v3675, 0.0
      %v3718 = vadd.f32 %v3716, %v3717
      %v3719 = vsel %vm2920, %v3676, 0.0
      %v3720 = vadd.f32 %v3718, %v3719
      %v3721 = vsel %vm2920, %v3677, 0.0
      %v3722 = vadd.f32 %v3720, %v3721
      %v3723 = vsel %vm2920, %v3678, 0.0
      %v3724 = vadd.f32 %v3722, %v3723
      %v3725 = vsel %vm2920, %v3679, 0.0
      %v3726 = vadd.f32 %v3724, %v3725
      %v3727 = vsel %vm2920, %v3680, 0.0
      %v3728 = vadd.f32 %v3726, %v3727
      %v3729 = vsel %vm2920, %v3681, 0.0
      %v3730 = vadd.f32 %v3728, %v3729
      %v3731 = vsel %vm2920, %v3682, 0.0
      %v3732 = vadd.f32 %v3730, %v3731
      %v3733 = vsel %vm2920, %v3683, 0.0
      %v3734 = vadd.f32 %v3732, %v3733
      %v3735 = vsel %vm2920, %v3684, 0.0
      %v3736 = vadd.f32 %v3734, %v3735
      %v3737 = vsel %vm2920, %v3685, 0.0
      %v3738 = vadd.f32 %v3736, %v3737
      %v3739 = vsel %vm2920, %v3686, 0.0
      %v3740 = vadd.f32 %v3738, %v3739
      %v3741 = vsel %vm2920, %v3687, 0.0
      %v3742 = vadd.f32 %v3740, %v3741
      %v3743 = vsel %vm2920, %v3688, 0.0
      %v3744 = vadd.f32 %v3742, %v3743
      %v3745 = vsel %vm2920, %v3689, 0.0
      %v3746 = vadd.f32 %v3744, %v3745
      %v3747 = vsel %vm2920, %v3690, 0.0
      %v3748 = vadd.f32 %v3746, %v3747
      %v3749 = vsel %vm2920, %v3691, 0.0
      %v3750 = vadd.f32 %v3748, %v3749
      %v3751 = vsel %vm2920, %v3692, 0.0
      %v3752 = vadd.f32 %v3750, %v3751
      %v3753 = vsel %vm2920, %v3693, 0.0
      %v3754 = vadd.f32 %v3752, %v3753
      %v3755 = vsel %vm2920, %v3694, 0.0
      %v3756 = vadd.f32 %v3754, %v3755
      %v3757 = vsel %vm2920, %v3695, 0.0
      %v3758 = vadd.f32 %v3756, %v3757
      %v3759 = vrot.slane %v3758, 4
      %v3760 = vadd.f32 %v3758, %v3759
      %v3761 = vrot.slane %v3760, 2
      %v3762 = vadd.f32 %v3760, %v3761
      %v3763 = vrot.slane %v3762, 1
      %v3764 = vadd.f32 %v3762, %v3763
      %vm3765 = vcmask 1040384
      %v3766 = vsel %vm3765, %v3493, %v3594
      %v3767 = vsel %vm401, %v3766, %v3663
      %vm3768 = vcmask 1042432
      %v3769 = vsel %vm3768, %v3767, %v3764
      %3770 = vst.msk [vmem:[%s301] sm:$0xf] %vm3328, %v3769
      %p3771 = scmp.lt.s32.totalorder %s19, 1
      %s3772 = scalar_select %p3771, %s19, 1
      %s3773 = smul.addr %s3772, 32
      %s3774 = smul.addr %s3773, 4
      %s3775 = scalar_lea.vmem %s5, %s3774
      %p3776 = scmp.lt.s32.totalorder %s19, 1
      %s3777 = scalar_select %p3776, %s19, 1
      %s3778 = smul.addr %s3777, 32
      %s3779 = smul.addr %s3778, 4
      %s3780 = scalar_lea.vmem %s6, %s3779
      %p3781 = scmp.lt.s32.totalorder %s19, 1
      %s3782 = scalar_select %p3781, %s19, 1
      %s3783 = smul.addr %s3782, 4
      %s3784 = scalar_lea.vmem %s7, %s3783
      // Predicated region
      $region41: #{preact_resblock.2} parent=39 // pred_check
        %p3785 = pneg %p147
      $region42: #{preact_resblock.2} parent=39 // pred_check_branch
        %3787 = sbr.rel (%p3785) target = $region44
      $region43: #{preact_resblock.2} parent=39 // pred_region
        _
      $region44: #{preact_resblock.2} parent=39 // pred_fallthru
        _
      // Predicated region
      $region45: #{preact_resblock.2} parent=39 // pred_check
        %p3788 = pneg %p173
      $region46: #{preact_resblock.2} parent=39 // pred_check_branch
        %3790 = sbr.rel (%p3788) target = $region48
      $region47: #{preact_resblock.2} parent=39 // pred_region
        _
      $region48: #{preact_resblock.2} parent=39 // pred_fallthru
        _
      // Predicated region
      $region49: #{preact_resblock.2} parent=39 // pred_check
        %p3791 = pneg %p199
      $region50: #{preact_resblock.2} parent=39 // pred_check_branch
        %3793 = sbr.rel (%p3791) target = $region52
      $region51: #{preact_resblock.2} parent=39 // pred_region
        _
      $region52: #{preact_resblock.2} parent=39 // pred_fallthru
        _
    $region40: #{preact_resblock.2} parent=5 // pred_fallthru
      _
    %p3794 = scmp.le.s32.totalorder 2, %s14
    // Predicated region
    $region53: #{preact_resblock.2} parent=5 // pred_check
      %p3795 = pneg %p3794
    $region54: #{preact_resblock.2} parent=5 // pred_check_branch
      %3797 = sbr.rel (%p3795) target = $region56
    $region55: #{preact_resblock.2} parent=5 // pred_region
      %s3798 = ssub.s32 %s14, 2
      // Predicated region
      $region57: #{preact_resblock.2} parent=55 // pred_check
        %p3799 = pneg %p153
      $region58: #{preact_resblock.2} parent=55 // pred_check_branch
        %3801 = sbr.rel (%p3799) target = $region60
      $region59: #{preact_resblock.2} parent=55 // pred_region
        %p3802 = scmp.lt.s32.totalorder %s20, 1
        %s3803 = scalar_select %p3802, %s20, 1
        %s3804 = smul.addr %s3803, 32
        %s3805 = smul.addr %s3804, 4
        %s3806 = scalar_lea.vmem %s5, %s3805
      $region60: #{preact_resblock.2} parent=55 // pred_fallthru
        _
      // Predicated region
      $region61: #{preact_resblock.2} parent=55 // pred_check
        %p3807 = pneg %p179
      $region62: #{preact_resblock.2} parent=55 // pred_check_branch
        %3809 = sbr.rel (%p3807) target = $region64
      $region63: #{preact_resblock.2} parent=55 // pred_region
        %p3810 = scmp.lt.s32.totalorder %s20, 1
        %s3811 = scalar_select %p3810, %s20, 1
        %s3812 = smul.addr %s3811, 32
        %s3813 = smul.addr %s3812, 4
        %s3814 = scalar_lea.vmem %s6, %s3813
      $region64: #{preact_resblock.2} parent=55 // pred_fallthru
        _
      // Predicated region
      $region65: #{preact_resblock.2} parent=55 // pred_check
        %p3815 = pneg %p205
      $region66: #{preact_resblock.2} parent=55 // pred_check_branch
        %3817 = sbr.rel (%p3815) target = $region68
      $region67: #{preact_resblock.2} parent=55 // pred_region
        %p3818 = scmp.lt.s32.totalorder %s20, 1
        %s3819 = scalar_select %p3818, %s20, 1
        %s3820 = smul.addr %s3819, 4
        %s3821 = scalar_lea.vmem %s7, %s3820
      $region68: #{preact_resblock.2} parent=55 // pred_fallthru
        _
    $region56: #{preact_resblock.2} parent=5 // pred_fallthru
      _
  $region6: #{preact_resblock.2} parent=0 // loop_footer
    %s18 = sadd.s32 1, %s14
  $region7: #{preact_resblock.2} parent=0 // loop_footer_branch
    %13 = sbr.rel target = $region3
  $region8: #{preact_resblock.2} parent=0 // loop_exit
    _

// kernel: preact_resblock.3
$region0: #{preact_resblock.3}
  #allocation0 [shape = 'u32[]', space=smem, size = 0x4, offset = 0x4, fixed_abs, tag = 'smem constant byte address 0x4 - core index']
  #allocation1 [shape = 'u32[72,128]{1,0:T(1,128)}', space=vmem, size = 0x9000, scoped, tag = 'internal scratch']
  #allocation2 [shape = 'bf16[18,18,8]{2,1,0:T(8,128)(2,1)}', space=vmem, size = 0x1b000, scoped, tag = 'scratch operand']
  %s0 = inlined_call_operand.vmem [shape: bf16[2,16,16,8], index: 0, kind: input, shape index: {}]
  %s1 = inlined_call_operand.vmem [shape: bf16[2,16,16,8], index: 1, kind: input, shape index: {}]
  %s2 = inlined_call_operand.vmem [shape: f32[1,1,8], index: 2, kind: input, shape index: {}]
  %s3 = inlined_call_operand.vmem [shape: f32[1,1,8], index: 3, kind: input, shape index: {}]
  %s4 = inlined_call_operand.vmem [shape: bf16[72,8], index: 4, kind: input, shape index: {}]
  %s5 = inlined_call_operand.vmem [shape: f32[1,1,8], index: 5, kind: input, shape index: {}]
  %s6 = inlined_call_operand.vmem [shape: f32[1,1,8], index: 6, kind: input, shape index: {}]
  %s7 = inlined_call_operand.vmem [shape: f32[1,1,8], index: 7, kind: input, shape index: {}]
  %s8 = inlined_call_operand.vmem [shape: f32[2,16,16,8], index: 8, kind: output, shape index: {0}]
  %s9 = inlined_call_operand.vmem [shape: f32[2,8,8,8], index: 9, kind: output, shape index: {1}]
  %10 = xla_tuple %s8, %s9
  %s11 = sld [smem:[#allocation0]]
  $region73: #{preact_resblock.3} parent=0
    _
  %s13 = ssub.s32 1, %s11
  %s14 = scalar_select 0, %s13, %s11
  loop: start=0, step=1, limit=4
  $region2: #{preact_resblock.3} parent=0 // loop_pre_header
    _
  $region3: #{preact_resblock.3} parent=0 // loop_header
    %s16 = sphi 0, %s20
    %p17 = scmp.ge.s32.totalorder %s16, 4
    %s26 = sphi 0, %s28
    %s29 = sphi 0, %s26
    %s30 = sphi 0, %s29
    %s46 = sphi 0, %s30
    %s52 = sphi 0, %s54
    %s55 = sphi 0, %s52
    %s56 = sphi 0, %s55
    %s72 = sphi 0, %s56
    %s76 = sphi 0, %s76
    %s78 = sphi 0, %s76
    %s79 = sphi 0, %s78
    %s93 = sphi 0, %s79
    %s97 = sphi 0, %s97
    %s99 = sphi 0, %s97
    %s100 = sphi 0, %s99
    %s114 = sphi 0, %s100
    %s118 = sphi 0, %s118
    %s120 = sphi 0, %s118
    %s121 = sphi 0, %s120
    %s135 = sphi 0, %s121
    %s139 = sphi 0, %s139
    %s141 = sphi 0, %s139
    %s142 = sphi 0, %s141
    %s156 = sphi 0, %s142
    %s160 = sphi 0, %s160
    %s162 = sphi 0, %s160
    %s163 = sphi 0, %s162
    %s177 = sphi 0, %s163
    %s181 = sphi 0, %s181
    %s183 = sphi 0, %s181
    %s184 = sphi 0, %s183
    %s198 = sphi 0, %s184
    %s204 = sphi 0, %s206
    %s207 = sphi 0, %s204
    %s208 = sphi 0, %s207
    %s224 = sphi 0, %s208
    %s230 = sphi 0, %s232
    %s233 = sphi 0, %s230
    %s234 = sphi 0, %s233
    %s250 = sphi 0, %s234
  $region4: #{preact_resblock.3} parent=0 // loop_header_branch
    %19 = sbr.rel (%p17) target = $region8
  $region5: #{preact_resblock.3} parent=0 // loop_body
    %s21 = ssub.s32 %s16, 1
    %s22 = ssub.s32 %s16, 2
    %s23 = sadd.s32 %s16, 1
    %s24 = ssub.s32 %s16, %s23
    %p25 = scmp.eq.s32.totalorder %s24, 0
    %s27 = sadd.s32 %s26, 1
    %s28 = scalar_select %p25, %s26, %s27
    %p31 = pneg %p25
    %p32 = scmp.eq.s32.totalorder %s16, 1
    %p33 = por %p31, %p32
    %p34 = scmp.ne.s32.totalorder %s26, %s29
    %p35 = scmp.eq.s32.totalorder %s16, 0
    %p36 = por %p34, %p35
    %p37 = scmp.ne.s32.totalorder %s26, %s29
    %p38 = scmp.eq.s32.totalorder %s21, 1
    %p39 = por %p37, %p38
    %p40 = scmp.ne.s32.totalorder %s29, %s30
    %p41 = scmp.eq.s32.totalorder %s21, 0
    %p42 = por %p40, %p41
    %p43 = scmp.ne.s32.totalorder %s29, %s30
    %p44 = scmp.eq.s32.totalorder %s22, 1
    %p45 = por %p43, %p44
    %p47 = scmp.ne.s32.totalorder %s30, %s46
    %p48 = scmp.eq.s32.totalorder %s22, 0
    %p49 = por %p47, %p48
    %s50 = ssub.s32 %s16, %s23
    %p51 = scmp.eq.s32.totalorder %s50, 0
    %s53 = sadd.s32 %s52, 1
    %s54 = scalar_select %p51, %s52, %s53
    %p57 = pneg %p51
    %p58 = scmp.eq.s32.totalorder %s16, 1
    %p59 = por %p57, %p58
    %p60 = scmp.ne.s32.totalorder %s52, %s55
    %p61 = scmp.eq.s32.totalorder %s16, 0
    %p62 = por %p60, %p61
    %p63 = scmp.ne.s32.totalorder %s52, %s55
    %p64 = scmp.eq.s32.totalorder %s21, 1
    %p65 = por %p63, %p64
    %p66 = scmp.ne.s32.totalorder %s55, %s56
    %p67 = scmp.eq.s32.totalorder %s21, 0
    %p68 = por %p66, %p67
    %p69 = scmp.ne.s32.totalorder %s55, %s56
    %p70 = scmp.eq.s32.totalorder %s22, 1
    %p71 = por %p69, %p70
    %p73 = scmp.ne.s32.totalorder %s56, %s72
    %p74 = scmp.eq.s32.totalorder %s22, 0
    %p75 = por %p73, %p74
    %s77 = sadd.s32 %s76, 1
    %p80 = scmp.eq.s32.totalorder %s16, 1
    %p81 = scmp.ne.s32.totalorder %s76, %s78
    %p82 = scmp.eq.s32.totalorder %s16, 0
    %p83 = por %p81, %p82
    %p84 = scmp.ne.s32.totalorder %s76, %s78
    %p85 = scmp.eq.s32.totalorder %s21, 1
    %p86 = por %p84, %p85
    %p87 = scmp.ne.s32.totalorder %s78, %s79
    %p88 = scmp.eq.s32.totalorder %s21, 0
    %p89 = por %p87, %p88
    %p90 = scmp.ne.s32.totalorder %s78, %s79
    %p91 = scmp.eq.s32.totalorder %s22, 1
    %p92 = por %p90, %p91
    %p94 = scmp.ne.s32.totalorder %s79, %s93
    %p95 = scmp.eq.s32.totalorder %s22, 0
    %p96 = por %p94, %p95
    %s98 = sadd.s32 %s97, 1
    %p101 = scmp.eq.s32.totalorder %s16, 1
    %p102 = scmp.ne.s32.totalorder %s97, %s99
    %p103 = scmp.eq.s32.totalorder %s16, 0
    %p104 = por %p102, %p103
    %p105 = scmp.ne.s32.totalorder %s97, %s99
    %p106 = scmp.eq.s32.totalorder %s21, 1
    %p107 = por %p105, %p106
    %p108 = scmp.ne.s32.totalorder %s99, %s100
    %p109 = scmp.eq.s32.totalorder %s21, 0
    %p110 = por %p108, %p109
    %p111 = scmp.ne.s32.totalorder %s99, %s100
    %p112 = scmp.eq.s32.totalorder %s22, 1
    %p113 = por %p111, %p112
    %p115 = scmp.ne.s32.totalorder %s100, %s114
    %p116 = scmp.eq.s32.totalorder %s22, 0
    %p117 = por %p115, %p116
    %s119 = sadd.s32 %s118, 1
    %p122 = scmp.eq.s32.totalorder %s16, 1
    %p123 = scmp.ne.s32.totalorder %s118, %s120
    %p124 = scmp.eq.s32.totalorder %s16, 0
    %p125 = por %p123, %p124
    %p126 = scmp.ne.s32.totalorder %s118, %s120
    %p127 = scmp.eq.s32.totalorder %s21, 1
    %p128 = por %p126, %p127
    %p129 = scmp.ne.s32.totalorder %s120, %s121
    %p130 = scmp.eq.s32.totalorder %s21, 0
    %p131 = por %p129, %p130
    %p132 = scmp.ne.s32.totalorder %s120, %s121
    %p133 = scmp.eq.s32.totalorder %s22, 1
    %p134 = por %p132, %p133
    %p136 = scmp.ne.s32.totalorder %s121, %s135
    %p137 = scmp.eq.s32.totalorder %s22, 0
    %p138 = por %p136, %p137
    %s140 = sadd.s32 %s139, 1
    %p143 = scmp.eq.s32.totalorder %s16, 1
    %p144 = scmp.ne.s32.totalorder %s139, %s141
    %p145 = scmp.eq.s32.totalorder %s16, 0
    %p146 = por %p144, %p145
    %p147 = scmp.ne.s32.totalorder %s139, %s141
    %p148 = scmp.eq.s32.totalorder %s21, 1
    %p149 = por %p147, %p148
    %p150 = scmp.ne.s32.totalorder %s141, %s142
    %p151 = scmp.eq.s32.totalorder %s21, 0
    %p152 = por %p150, %p151
    %p153 = scmp.ne.s32.totalorder %s141, %s142
    %p154 = scmp.eq.s32.totalorder %s22, 1
    %p155 = por %p153, %p154
    %p157 = scmp.ne.s32.totalorder %s142, %s156
    %p158 = scmp.eq.s32.totalorder %s22, 0
    %p159 = por %p157, %p158
    %s161 = sadd.s32 %s160, 1
    %p164 = scmp.eq.s32.totalorder %s16, 1
    %p165 = scmp.ne.s32.totalorder %s160, %s162
    %p166 = scmp.eq.s32.totalorder %s16, 0
    %p167 = por %p165, %p166
    %p168 = scmp.ne.s32.totalorder %s160, %s162
    %p169 = scmp.eq.s32.totalorder %s21, 1
    %p170 = por %p168, %p169
    %p171 = scmp.ne.s32.totalorder %s162, %s163
    %p172 = scmp.eq.s32.totalorder %s21, 0
    %p173 = por %p171, %p172
    %p174 = scmp.ne.s32.totalorder %s162, %s163
    %p175 = scmp.eq.s32.totalorder %s22, 1
    %p176 = por %p174, %p175
    %p178 = scmp.ne.s32.totalorder %s163, %s177
    %p179 = scmp.eq.s32.totalorder %s22, 0
    %p180 = por %p178, %p179
    %s182 = sadd.s32 %s181, 1
    %p185 = scmp.eq.s32.totalorder %s16, 1
    %p186 = scmp.ne.s32.totalorder %s181, %s183
    %p187 = scmp.eq.s32.totalorder %s16, 0
    %p188 = por %p186, %p187
    %p189 = scmp.ne.s32.totalorder %s181, %s183
    %p190 = scmp.eq.s32.totalorder %s21, 1
    %p191 = por %p189, %p190
    %p192 = scmp.ne.s32.totalorder %s183, %s184
    %p193 = scmp.eq.s32.totalorder %s21, 0
    %p194 = por %p192, %p193
    %p195 = scmp.ne.s32.totalorder %s183, %s184
    %p196 = scmp.eq.s32.totalorder %s22, 1
    %p197 = por %p195, %p196
    %p199 = scmp.ne.s32.totalorder %s184, %s198
    %p200 = scmp.eq.s32.totalorder %s22, 0
    %p201 = por %p199, %p200
    %s202 = ssub.s32 %s16, %s23
    %p203 = scmp.eq.s32.totalorder %s202, 0
    %s205 = sadd.s32 %s204, 1
    %s206 = scalar_select %p203, %s204, %s205
    %p209 = pneg %p203
    %p210 = scmp.eq.s32.totalorder %s16, 1
    %p211 = por %p209, %p210
    %p212 = scmp.ne.s32.totalorder %s204, %s207
    %p213 = scmp.eq.s32.totalorder %s16, 0
    %p214 = por %p212, %p213
    %p215 = scmp.ne.s32.totalorder %s204, %s207
    %p216 = scmp.eq.s32.totalorder %s21, 1
    %p217 = por %p215, %p216
    %p218 = scmp.ne.s32.totalorder %s207, %s208
    %p219 = scmp.eq.s32.totalorder %s21, 0
    %p220 = por %p218, %p219
    %p221 = scmp.ne.s32.totalorder %s207, %s208
    %p222 = scmp.eq.s32.totalorder %s22, 1
    %p223 = por %p221, %p222
    %p225 = scmp.ne.s32.totalorder %s208, %s224
    %p226 = scmp.eq.s32.totalorder %s22, 0
    %p227 = por %p225, %p226
    %s228 = ssub.s32 %s16, %s23
    %p229 = scmp.eq.s32.totalorder %s228, 0
    %s231 = sadd.s32 %s230, 1
    %s232 = scalar_select %p229, %s230, %s231
    %p235 = pneg %p229
    %p236 = scmp.eq.s32.totalorder %s16, 1
    %p237 = por %p235, %p236
    %p238 = scmp.ne.s32.totalorder %s230, %s233
    %p239 = scmp.eq.s32.totalorder %s16, 0
    %p240 = por %p238, %p239
    %p241 = scmp.ne.s32.totalorder %s230, %s233
    %p242 = scmp.eq.s32.totalorder %s21, 1
    %p243 = por %p241, %p242
    %p244 = scmp.ne.s32.totalorder %s233, %s234
    %p245 = scmp.eq.s32.totalorder %s21, 0
    %p246 = por %p244, %p245
    %p247 = scmp.ne.s32.totalorder %s233, %s234
    %p248 = scmp.eq.s32.totalorder %s22, 1
    %p249 = por %p247, %p248
    %p251 = scmp.ne.s32.totalorder %s234, %s250
    %p252 = scmp.eq.s32.totalorder %s22, 0
    %p253 = por %p251, %p252
    %p254 = scmp.le.s32.totalorder 1, %s16
    %p255 = scmp.lt.s32.totalorder %s16, 3
    %p256 = pnand %p254, %p255
    %p257 = pneg %p256
    // Predicated region
    $region9: #{preact_resblock.3} parent=5 // pred_check
      _
    $region10: #{preact_resblock.3} parent=5 // pred_check_branch
      %259 = sbr.rel (%p256) target = $region12
    $region11: #{preact_resblock.3} parent=5 // pred_region
      %s260 = ssub.s32 %s16, 1
      // Predicated region
      $region13: #{preact_resblock.3} parent=11 // pred_check
        %p261 = pneg %p89
      $region14: #{preact_resblock.3} parent=11 // pred_check_branch
        %263 = sbr.rel (%p261) target = $region16
      $region15: #{preact_resblock.3} parent=11 // pred_region
        _
      $region16: #{preact_resblock.3} parent=11 // pred_fallthru
        _
      // Predicated region
      $region17: #{preact_resblock.3} parent=11 // pred_check
        %p264 = pneg %p110
      $region18: #{preact_resblock.3} parent=11 // pred_check_branch
        %266 = sbr.rel (%p264) target = $region20
      $region19: #{preact_resblock.3} parent=11 // pred_region
        _
      $region20: #{preact_resblock.3} parent=11 // pred_fallthru
        _
      // Predicated region
      $region21: #{preact_resblock.3} parent=11 // pred_check
        %p267 = pneg %p131
      $region22: #{preact_resblock.3} parent=11 // pred_check_branch
        %269 = sbr.rel (%p267) target = $region24
      $region23: #{preact_resblock.3} parent=11 // pred_region
        _
      $region24: #{preact_resblock.3} parent=11 // pred_fallthru
        _
      // Predicated region
      $region25: #{preact_resblock.3} parent=11 // pred_check
        %p270 = pneg %p152
      $region26: #{preact_resblock.3} parent=11 // pred_check_branch
        %272 = sbr.rel (%p270) target = $region28
      $region27: #{preact_resblock.3} parent=11 // pred_region
        _
      $region28: #{preact_resblock.3} parent=11 // pred_fallthru
        _
      // Predicated region
      $region29: #{preact_resblock.3} parent=11 // pred_check
        %p273 = pneg %p173
      $region30: #{preact_resblock.3} parent=11 // pred_check_branch
        %275 = sbr.rel (%p273) target = $region32
      $region31: #{preact_resblock.3} parent=11 // pred_region
        _
      $region32: #{preact_resblock.3} parent=11 // pred_fallthru
        _
      // Predicated region
      $region33: #{preact_resblock.3} parent=11 // pred_check
        %p276 = pneg %p194
      $region34: #{preact_resblock.3} parent=11 // pred_check_branch
        %278 = sbr.rel (%p276) target = $region36
      $region35: #{preact_resblock.3} parent=11 // pred_region
        _
      $region36: #{preact_resblock.3} parent=11 // pred_fallthru
        _
    $region12: #{preact_resblock.3} parent=5 // pred_fallthru
      _
    %p279 = scmp.lt.s32.totalorder %s16, 2
    // Predicated region
    $region37: #{preact_resblock.3} parent=5 // pred_check
      %p280 = pneg %p279
    $region38: #{preact_resblock.3} parent=5 // pred_check_branch
      %282 = sbr.rel (%p280) target = $region40
    $region39: #{preact_resblock.3} parent=5 // pred_region
      // Predicated region
      $region41: #{preact_resblock.3} parent=39 // pred_check
        %p283 = pneg %p36
      $region42: #{preact_resblock.3} parent=39 // pred_check_branch
        %285 = sbr.rel (%p283) target = $region44
      $region43: #{preact_resblock.3} parent=39 // pred_region
        %p286 = scmp.lt.s32.totalorder %s16, 1
        %s287 = scalar_select %p286, %s16, 1
        %s288 = smul.addr %s287, 32
        %s289 = smul.addr %s288, 4
        %s290 = scalar_lea.vmem %s0, %s289
      $region44: #{preact_resblock.3} parent=39 // pred_fallthru
        _
      // Predicated region
      $region45: #{preact_resblock.3} parent=39 // pred_check
        %p291 = pneg %p62
      $region46: #{preact_resblock.3} parent=39 // pred_check_branch
        %293 = sbr.rel (%p291) target = $region48
      $region47: #{preact_resblock.3} parent=39 // pred_region
        %p294 = scmp.lt.s32.totalorder %s16, 1
        %s295 = scalar_select %p294, %s16, 1
        %s296 = smul.addr %s295, 32
        %s297 = smul.addr %s296, 4
        %s298 = scalar_lea.vmem %s1, %s297
      $region48: #{preact_resblock.3} parent=39 // pred_fallthru
        _
    $region40: #{preact_resblock.3} parent=5 // pred_fallthru
      _
    %p299 = scmp.le.s32.totalorder 1, %s16
    %p300 = scmp.lt.s32.totalorder %s16, 3
    %p301 = pnand %p299, %p300
    %p302 = pneg %p301
    // Predicated region
    $region49: #{preact_resblock.3} parent=5 // pred_check
      _
    $region50: #{preact_resblock.3} parent=5 // pred_check_branch
      %304 = sbr.rel (%p301) target = $region52
    $region51: #{preact_resblock.3} parent=5 // pred_region
      %s305 = ssub.s32 %s16, 1
      %p306 = scmp.lt.s32.totalorder %s21, 1
      %s307 = scalar_select %p306, %s21, 1
      %s308 = smul.addr %s307, 32
      %s309 = smul.addr %s308, 4
      %s310 = scalar_lea.vmem %s0, %s309
      %p311 = pneg %p42
      %p312 = pneg %p39
      %p313 = scmp.lt.s32.totalorder %s21, 1
      %s314 = scalar_select %p313, %s21, 1
      %s315 = smul.addr %s314, 32
      %s316 = smul.addr %s315, 4
      %s317 = scalar_lea.vmem %s1, %s316
      %p318 = pneg %p68
      %p319 = pneg %p65
      %p320 = pneg %p89
      %p321 = pneg %p86
      %p322 = pneg %p110
      %p323 = pneg %p107
      %p324 = pneg %p131
      %p325 = pneg %p128
      %p326 = pneg %p152
      %p327 = pneg %p149
      %p328 = pneg %p173
      %p329 = pneg %p170
      %p330 = pneg %p194
      %p331 = pneg %p191
      %p332 = pneg %p220
      %p333 = pneg %p217
      %p334 = scmp.lt.s32.totalorder %s21, 1
      %s335 = scalar_select %p334, %s21, 1
      %s336 = smul.addr %s335, 32
      %s337 = smul.addr %s336, 8
      %s338 = scalar_lea.vmem %s8, %s337
      %p339 = pneg %p246
      %p340 = pneg %p243
      %p341 = scmp.lt.s32.totalorder %s21, 1
      %s342 = scalar_select %p341, %s21, 1
      %s343 = smul.addr %s342, 8
      %s344 = smul.addr %s343, 8
      %s345 = scalar_lea.vmem %s9, %s344
      %p346 = scmp.lt.s32.totalorder %s21, 1
      %s347 = scalar_select %p346, %s21, 1
      %s348 = smul.addr %s347, 32
      %s349 = smul.addr %s348, 4
      %s350 = scalar_lea.vmem %s0, %s349
      %p351 = scmp.lt.s32.totalorder %s21, 1
      %s352 = scalar_select %p351, %s21, 1
      %s353 = smul.addr %s352, 32
      %s354 = smul.addr %s353, 4
      %s355 = scalar_lea.vmem %s1, %s354
      %p356 = scmp.lt.s32.totalorder %s21, 1
      %s357 = scalar_select %p356, %s21, 1
      %s358 = smul.addr %s357, 32
      %s359 = smul.addr %s358, 8
      %s360 = scalar_lea.vmem %s8, %s359
      %p361 = scmp.lt.s32.totalorder %s21, 1
      %s362 = scalar_select %p361, %s21, 1
      %s363 = smul.addr %s362, 8
      %s364 = smul.addr %s363, 8
      %s365 = scalar_lea.vmem %s9, %s364
      %v367 = vld [vmem:[%s350] sm:$0xf]
      %v368 = vld [vmem:[%s350 + $0x4] sm:$0xf]
      %v369 = vld [vmem:[%s350 + $0x8] sm:$0xf]
      %v370 = vld [vmem:[%s350 + $0xc] sm:$0xf]
      %v371 = vld [vmem:[%s350 + $0x10] sm:$0xf]
      %v372 = vld [vmem:[%s350 + $0x14] sm:$0xf]
      %v373 = vld [vmem:[%s350 + $0x18] sm:$0xf]
      %v374 = vld [vmem:[%s350 + $0x1c] sm:$0xf]
      %v375 = vld [vmem:[%s350 + $0x20] sm:$0xf]
      %v376 = vld [vmem:[%s350 + $0x24] sm:$0xf]
      %v377 = vld [vmem:[%s350 + $0x28] sm:$0xf]
      %v378 = vld [vmem:[%s350 + $0x2c] sm:$0xf]
      %v379 = vld [vmem:[%s350 + $0x30] sm:$0xf]
      %v380 = vld [vmem:[%s350 + $0x34] sm:$0xf]
      %v381 = vld [vmem:[%s350 + $0x38] sm:$0xf]
      %v382 = vld [vmem:[%s350 + $0x3c] sm:$0xf]
      %v383 = vld [vmem:[%s350 + $0x40] sm:$0xf]
      %v384 = vld [vmem:[%s350 + $0x44] sm:$0xf]
      %v385 = vld [vmem:[%s350 + $0x48] sm:$0xf]
      %v386 = vld [vmem:[%s350 + $0x4c] sm:$0xf]
      %v387 = vld [vmem:[%s350 + $0x50] sm:$0xf]
      %v388 = vld [vmem:[%s350 + $0x54] sm:$0xf]
      %v389 = vld [vmem:[%s350 + $0x58] sm:$0xf]
      %v390 = vld [vmem:[%s350 + $0x5c] sm:$0xf]
      %v391 = vld [vmem:[%s350 + $0x60] sm:$0xf]
      %v392 = vld [vmem:[%s350 + $0x64] sm:$0xf]
      %v393 = vld [vmem:[%s350 + $0x68] sm:$0xf]
      %v394 = vld [vmem:[%s350 + $0x6c] sm:$0xf]
      %v395 = vld [vmem:[%s350 + $0x70] sm:$0xf]
      %v396 = vld [vmem:[%s350 + $0x74] sm:$0xf]
      %v397 = vld [vmem:[%s350 + $0x78] sm:$0xf]
      %v398 = vld [vmem:[%s350 + $0x7c] sm:$0xf]
      %v399 = vunpack.c.l.bf16 %v367
      %v400 = vunpack.c.l.bf16 %v368
      %v401 = vunpack.c.l.bf16 %v369
      %v402 = vunpack.c.l.bf16 %v370
      %v403 = vunpack.c.l.bf16 %v371
      %v404 = vunpack.c.l.bf16 %v372
      %v405 = vunpack.c.l.bf16 %v373
      %v406 = vunpack.c.l.bf16 %v374
      %v407 = vunpack.c.l.bf16 %v375
      %v408 = vunpack.c.l.bf16 %v376
      %v409 = vunpack.c.l.bf16 %v377
      %v410 = vunpack.c.l.bf16 %v378
      %v411 = vunpack.c.l.bf16 %v379
      %v412 = vunpack.c.l.bf16 %v380
      %v413 = vunpack.c.l.bf16 %v381
      %v414 = vunpack.c.l.bf16 %v382
      %v415 = vunpack.c.l.bf16 %v383
      %v416 = vunpack.c.l.bf16 %v384
      %v417 = vunpack.c.l.bf16 %v385
      %v418 = vunpack.c.l.bf16 %v386
      %v419 = vunpack.c.l.bf16 %v387
      %v420 = vunpack.c.l.bf16 %v388
      %v421 = vunpack.c.l.bf16 %v389
      %v422 = vunpack.c.l.bf16 %v390
      %v423 = vunpack.c.l.bf16 %v391
      %v424 = vunpack.c.l.bf16 %v392
      %v425 = vunpack.c.l.bf16 %v393
      %v426 = vunpack.c.l.bf16 %v394
      %v427 = vunpack.c.l.bf16 %v395
      %v428 = vunpack.c.l.bf16 %v396
      %v429 = vunpack.c.l.bf16 %v397
      %v430 = vunpack.c.l.bf16 %v398
      %v431 = vld [vmem:[%s2] sm:$0x1]
      %v433 = vperm.slane %v431, 0
      %v435 = vmul.f32 %v399, %v433
      %v436 = vmul.f32 %v400, %v433
      %v437 = vmul.f32 %v401, %v433
      %v438 = vmul.f32 %v402, %v433
      %v439 = vmul.f32 %v403, %v433
      %v440 = vmul.f32 %v404, %v433
      %v441 = vmul.f32 %v405, %v433
      %v442 = vmul.f32 %v406, %v433
      %v443 = vmul.f32 %v407, %v433
      %v444 = vmul.f32 %v408, %v433
      %v445 = vmul.f32 %v409, %v433
      %v446 = vmul.f32 %v410, %v433
      %v447 = vmul.f32 %v411, %v433
      %v448 = vmul.f32 %v412, %v433
      %v449 = vmul.f32 %v413, %v433
      %v450 = vmul.f32 %v414, %v433
      %v451 = vmul.f32 %v415, %v433
      %v452 = vmul.f32 %v416, %v433
      %v453 = vmul.f32 %v417, %v433
      %v454 = vmul.f32 %v418, %v433
      %v455 = vmul.f32 %v419, %v433
      %v456 = vmul.f32 %v420, %v433
      %v457 = vmul.f32 %v421, %v433
      %v458 = vmul.f32 %v422, %v433
      %v459 = vmul.f32 %v423, %v433
      %v460 = vmul.f32 %v424, %v433
      %v461 = vmul.f32 %v425, %v433
      %v462 = vmul.f32 %v426, %v433
      %v463 = vmul.f32 %v427, %v433
      %v464 = vmul.f32 %v428, %v433
      %v465 = vmul.f32 %v429, %v433
      %v466 = vmul.f32 %v430, %v433
      %v467 = vld [vmem:[%s3] sm:$0x1]
      %v469 = vperm.slane %v467, 0
      %v471 = vadd.f32 %v435, %v469
      %v472 = vadd.f32 %v436, %v469
      %v473 = vadd.f32 %v437, %v469
      %v474 = vadd.f32 %v438, %v469
      %v475 = vadd.f32 %v439, %v469
      %v476 = vadd.f32 %v440, %v469
      %v477 = vadd.f32 %v441, %v469
      %v478 = vadd.f32 %v442, %v469
      %v479 = vadd.f32 %v443, %v469
      %v480 = vadd.f32 %v444, %v469
      %v481 = vadd.f32 %v445, %v469
      %v482 = vadd.f32 %v446, %v469
      %v483 = vadd.f32 %v447, %v469
      %v484 = vadd.f32 %v448, %v469
      %v485 = vadd.f32 %v449, %v469
      %v486 = vadd.f32 %v450, %v469
      %v487 = vadd.f32 %v451, %v469
      %v488 = vadd.f32 %v452, %v469
      %v489 = vadd.f32 %v453, %v469
      %v490 = vadd.f32 %v454, %v469
      %v491 = vadd.f32 %v455, %v469
      %v492 = vadd.f32 %v456, %v469
      %v493 = vadd.f32 %v457, %v469
      %v494 = vadd.f32 %v458, %v469
      %v495 = vadd.f32 %v459, %v469
      %v496 = vadd.f32 %v460, %v469
      %v497 = vadd.f32 %v461, %v469
      %v498 = vadd.f32 %v462, %v469
      %v499 = vadd.f32 %v463, %v469
      %v500 = vadd.f32 %v464, %v469
      %v501 = vadd.f32 %v465, %v469
      %v502 = vadd.f32 %v466, %v469
      %v503 = vmax.f32 %v471, 0.0
      %v504 = vmax.f32 %v472, 0.0
      %v505 = vmax.f32 %v473, 0.0
      %v506 = vmax.f32 %v474, 0.0
      %v507 = vmax.f32 %v475, 0.0
      %v508 = vmax.f32 %v476, 0.0
      %v509 = vmax.f32 %v477, 0.0
      %v510 = vmax.f32 %v478, 0.0
      %v511 = vmax.f32 %v479, 0.0
      %v512 = vmax.f32 %v480, 0.0
      %v513 = vmax.f32 %v481, 0.0
      %v514 = vmax.f32 %v482, 0.0
      %v515 = vmax.f32 %v483, 0.0
      %v516 = vmax.f32 %v484, 0.0
      %v517 = vmax.f32 %v485, 0.0
      %v518 = vmax.f32 %v486, 0.0
      %v519 = vmax.f32 %v487, 0.0
      %v520 = vmax.f32 %v488, 0.0
      %v521 = vmax.f32 %v489, 0.0
      %v522 = vmax.f32 %v490, 0.0
      %v523 = vmax.f32 %v491, 0.0
      %v524 = vmax.f32 %v492, 0.0
      %v525 = vmax.f32 %v493, 0.0
      %v526 = vmax.f32 %v494, 0.0
      %v527 = vmax.f32 %v495, 0.0
      %v528 = vmax.f32 %v496, 0.0
      %v529 = vmax.f32 %v497, 0.0
      %v530 = vmax.f32 %v498, 0.0
      %v531 = vmax.f32 %v499, 0.0
      %v532 = vmax.f32 %v500, 0.0
      %v533 = vmax.f32 %v501, 0.0
      %v534 = vmax.f32 %v502, 0.0
      %vm535 = vcmask 60416
      %536 = vst.msk [vmem:[#allocation2] sm:$0xf] %vm535, 0
      %537 = vst.msk [vmem:[#allocation2 + $0x4] sm:$0xf] %vm535, 0
      %vm538 = vcmask 57344
      %539 = vst.msk [vmem:[#allocation2 + $0x8] sm:$0x1] %vm538, 0
      %s540 = scalar_lea.vmem [#allocation2], 204
      %541 = vst.msk [vmem:[%s540] sm:$0xf] %vm535, 0
      %542 = vst.msk [vmem:[%s540 + $0x4] sm:$0xf] %vm535, 0
      %543 = vst.msk [vmem:[%s540 + $0x8] sm:$0x1] %vm538, 0
      %vm544 = vcmask 57344
      %vm545 = vsmask.f32 256
      %vm546 = vmand %vm544, %vm545
      %v547 = vld [vmem:[#allocation2] sm:$0x1]
      %v548 = vsel %vm546, 0, %v547
      %549 = vst [vmem:[#allocation2] sm:$0x1] %v548
      %v550 = vld [vmem:[#allocation2 + $0xc] sm:$0x1]
      %v551 = vsel %vm546, 0, %v550
      %552 = vst [vmem:[#allocation2 + $0xc] sm:$0x1] %v551
      %v553 = vld [vmem:[#allocation2 + $0x18] sm:$0x1]
      %v554 = vsel %vm546, 0, %v553
      %555 = vst [vmem:[#allocation2 + $0x18] sm:$0x1] %v554
      %v556 = vld [vmem:[#allocation2 + $0x24] sm:$0x1]
      %v557 = vsel %vm546, 0, %v556
      %558 = vst [vmem:[#allocation2 + $0x24] sm:$0x1] %v557
      %v559 = vld [vmem:[#allocation2 + $0x30] sm:$0x1]
      %v560 = vsel %vm546, 0, %v559
      %561 = vst [vmem:[#allocation2 + $0x30] sm:$0x1] %v560
      %v562 = vld [vmem:[#allocation2 + $0x3c] sm:$0x1]
      %v563 = vsel %vm546, 0, %v562
      %564 = vst [vmem:[#allocation2 + $0x3c] sm:$0x1] %v563
      %v565 = vld [vmem:[#allocation2 + $0x48] sm:$0x1]
      %v566 = vsel %vm546, 0, %v565
      %567 = vst [vmem:[#allocation2 + $0x48] sm:$0x1] %v566
      %v568 = vld [vmem:[#allocation2 + $0x54] sm:$0x1]
      %v569 = vsel %vm546, 0, %v568
      %570 = vst [vmem:[#allocation2 + $0x54] sm:$0x1] %v569
      %v571 = vld [vmem:[#allocation2 + $0x60] sm:$0x1]
      %v572 = vsel %vm546, 0, %v571
      %573 = vst [vmem:[#allocation2 + $0x60] sm:$0x1] %v572
      %v574 = vld [vmem:[#allocation2 + $0x6c] sm:$0x1]
      %v575 = vsel %vm546, 0, %v574
      %576 = vst [vmem:[#allocation2 + $0x6c] sm:$0x1] %v575
      %v577 = vld [vmem:[#allocation2 + $0x78] sm:$0x1]
      %v578 = vsel %vm546, 0, %v577
      %579 = vst [vmem:[#allocation2 + $0x78] sm:$0x1] %v578
      %v580 = vld [vmem:[#allocation2 + $0x84] sm:$0x1]
      %v581 = vsel %vm546, 0, %v580
      %582 = vst [vmem:[#allocation2 + $0x84] sm:$0x1] %v581
      %v583 = vld [vmem:[#allocation2 + $0x90] sm:$0x1]
      %v584 = vsel %vm546, 0, %v583
      %585 = vst [vmem:[#allocation2 + $0x90] sm:$0x1] %v584
      %v586 = vld [vmem:[#allocation2 + $0x9c] sm:$0x1]
      %v587 = vsel %vm546, 0, %v586
      %588 = vst [vmem:[#allocation2 + $0x9c] sm:$0x1] %v587
      %v589 = vld [vmem:[#allocation2 + $0xa8] sm:$0x1]
      %v590 = vsel %vm546, 0, %v589
      %591 = vst [vmem:[#allocation2 + $0xa8] sm:$0x1] %v590
      %v592 = vld [vmem:[#allocation2 + $0xb4] sm:$0x1]
      %v593 = vsel %vm546, 0, %v592
      %594 = vst [vmem:[#allocation2 + $0xb4] sm:$0x1] %v593
      %v595 = vld [vmem:[#allocation2 + $0xc0] sm:$0x1]
      %v596 = vsel %vm546, 0, %v595
      %597 = vst [vmem:[#allocation2 + $0xc0] sm:$0x1] %v596
      %v598 = vld [vmem:[#allocation2 + $0xcc] sm:$0x1]
      %v599 = vsel %vm546, 0, %v598
      %600 = vst [vmem:[#allocation2 + $0xcc] sm:$0x1] %v599
      %vm601 = vsmask.f32 7938
      %vm602 = vmand %vm544, %vm601
      %v603 = vld [vmem:[#allocation2 + $0x8] sm:$0x1]
      %v604 = vsel %vm602, 0, %v603
      %605 = vst [vmem:[#allocation2 + $0x8] sm:$0x1] %v604
      %v606 = vld [vmem:[#allocation2 + $0x14] sm:$0x1]
      %v607 = vsel %vm602, 0, %v606
      %608 = vst [vmem:[#allocation2 + $0x14] sm:$0x1] %v607
      %v609 = vld [vmem:[#allocation2 + $0x20] sm:$0x1]
      %v610 = vsel %vm602, 0, %v609
      %611 = vst [vmem:[#allocation2 + $0x20] sm:$0x1] %v610
      %v612 = vld [vmem:[#allocation2 + $0x2c] sm:$0x1]
      %v613 = vsel %vm602, 0, %v612
      %614 = vst [vmem:[#allocation2 + $0x2c] sm:$0x1] %v613
      %v615 = vld [vmem:[#allocation2 + $0x38] sm:$0x1]
      %v616 = vsel %vm602, 0, %v615
      %617 = vst [vmem:[#allocation2 + $0x38] sm:$0x1] %v616
      %v618 = vld [vmem:[#allocation2 + $0x44] sm:$0x1]
      %v619 = vsel %vm602, 0, %v618
      %620 = vst [vmem:[#allocation2 + $0x44] sm:$0x1] %v619
      %v621 = vld [vmem:[#allocation2 + $0x50] sm:$0x1]
      %v622 = vsel %vm602, 0, %v621
      %623 = vst [vmem:[#allocation2 + $0x50] sm:$0x1] %v622
      %v624 = vld [vmem:[#allocation2 + $0x5c] sm:$0x1]
      %v625 = vsel %vm602, 0, %v624
      %626 = vst [vmem:[#allocation2 + $0x5c] sm:$0x1] %v625
      %v627 = vld [vmem:[#allocation2 + $0x68] sm:$0x1]
      %v628 = vsel %vm602, 0, %v627
      %629 = vst [vmem:[#allocation2 + $0x68] sm:$0x1] %v628
      %v630 = vld [vmem:[#allocation2 + $0x74] sm:$0x1]
      %v631 = vsel %vm602, 0, %v630
      %632 = vst [vmem:[#allocation2 + $0x74] sm:$0x1] %v631
      %v633 = vld [vmem:[#allocation2 + $0x80] sm:$0x1]
      %v634 = vsel %vm602, 0, %v633
      %635 = vst [vmem:[#allocation2 + $0x80] sm:$0x1] %v634
      %v636 = vld [vmem:[#allocation2 + $0x8c] sm:$0x1]
      %v637 = vsel %vm602, 0, %v636
      %638 = vst [vmem:[#allocation2 + $0x8c] sm:$0x1] %v637
      %v639 = vld [vmem:[#allocation2 + $0x98] sm:$0x1]
      %v640 = vsel %vm602, 0, %v639
      %641 = vst [vmem:[#allocation2 + $0x98] sm:$0x1] %v640
      %v642 = vld [vmem:[#allocation2 + $0xa4] sm:$0x1]
      %v643 = vsel %vm602, 0, %v642
      %644 = vst [vmem:[#allocation2 + $0xa4] sm:$0x1] %v643
      %v645 = vld [vmem:[#allocation2 + $0xb0] sm:$0x1]
      %v646 = vsel %vm602, 0, %v645
      %647 = vst [vmem:[#allocation2 + $0xb0] sm:$0x1] %v646
      %v648 = vld [vmem:[#allocation2 + $0xbc] sm:$0x1]
      %v649 = vsel %vm602, 0, %v648
      %650 = vst [vmem:[#allocation2 + $0xbc] sm:$0x1] %v649
      %v651 = vld [vmem:[#allocation2 + $0xc8] sm:$0x1]
      %v652 = vsel %vm602, 0, %v651
      %653 = vst [vmem:[#allocation2 + $0xc8] sm:$0x1] %v652
      %v654 = vld [vmem:[#allocation2 + $0xd4] sm:$0x1]
      %v655 = vsel %vm602, 0, %v654
      %656 = vst [vmem:[#allocation2 + $0xd4] sm:$0x1] %v655
      %v657 = vpack.c.bf16 %v503, %v503
      %v658 = vpack.c.bf16 %v504, %v504
      %v659 = vpack.c.bf16 %v505, %v505
      %v660 = vpack.c.bf16 %v506, %v506
      %v661 = vpack.c.bf16 %v507, %v507
      %v662 = vpack.c.bf16 %v508, %v508
      %v663 = vpack.c.bf16 %v509, %v509
      %v664 = vpack.c.bf16 %v510, %v510
      %v665 = vpack.c.bf16 %v511, %v511
      %v666 = vpack.c.bf16 %v512, %v512
      %v667 = vpack.c.bf16 %v513, %v513
      %v668 = vpack.c.bf16 %v514, %v514
      %v669 = vpack.c.bf16 %v515, %v515
      %v670 = vpack.c.bf16 %v516, %v516
      %v671 = vpack.c.bf16 %v517, %v517
      %v672 = vpack.c.bf16 %v518, %v518
      %v673 = vpack.c.bf16 %v519, %v519
      %v674 = vpack.c.bf16 %v520, %v520
      %v675 = vpack.c.bf16 %v521, %v521
      %v676 = vpack.c.bf16 %v522, %v522
      %v677 = vpack.c.bf16 %v523, %v523
      %v678 = vpack.c.bf16 %v524, %v524
      %v679 = vpack.c.bf16 %v525, %v525
      %v680 = vpack.c.bf16 %v526, %v526
      %v681 = vpack.c.bf16 %v527, %v527
      %v682 = vpack.c.bf16 %v528, %v528
      %v683 = vpack.c.bf16 %v529, %v529
      %v684 = vpack.c.bf16 %v530, %v530
      %v685 = vpack.c.bf16 %v531, %v531
      %v686 = vpack.c.bf16 %v532, %v532
      %v687 = vpack.c.bf16 %v533, %v533
      %v688 = vpack.c.bf16 %v534, %v534
      %vm689 = vsmask.f32 4368
      %vm690 = vmor %vm545, %vm689
      %v692 = vshrl.u32 %v657, 16
      %v694 = vrot.slane %v692, 7
      %v695 = vshll.u32 %v657, 16
      %v697 = vor.u32 %v694, %v695
      %v698 = vrot.slane %v694, 4
      %v700 = vshrl.u32 %v658, 16
      %v702 = vrot.slane %v700, 7
      %v703 = vshll.u32 %v658, 16
      %v705 = vor.u32 %v702, %v703
      %v706 = vsel %vm690, %v698, %v705
      %v707 = vrot.slane %v702, 4
      %v709 = vshrl.u32 %v659, 16
      %v711 = vrot.slane %v709, 7
      %v712 = vshll.u32 %v659, 16
      %v714 = vor.u32 %v711, %v712
      %v715 = vrot.slane %v711, 4
      %v717 = vshrl.u32 %v660, 16
      %v719 = vrot.slane %v717, 7
      %v720 = vshll.u32 %v660, 16
      %v722 = vor.u32 %v719, %v720
      %v723 = vsel %vm690, %v715, %v722
      %v724 = vrot.slane %v719, 4
      %v726 = vshrl.u32 %v661, 16
      %v728 = vrot.slane %v726, 7
      %v729 = vshll.u32 %v661, 16
      %v731 = vor.u32 %v728, %v729
      %v732 = vrot.slane %v728, 4
      %v734 = vshrl.u32 %v662, 16
      %v736 = vrot.slane %v734, 7
      %v737 = vshll.u32 %v662, 16
      %v739 = vor.u32 %v736, %v737
      %v740 = vsel %vm690, %v732, %v739
      %v741 = vrot.slane %v736, 4
      %v743 = vshrl.u32 %v663, 16
      %v745 = vrot.slane %v743, 7
      %v746 = vshll.u32 %v663, 16
      %v748 = vor.u32 %v745, %v746
      %v749 = vrot.slane %v745, 4
      %v751 = vshrl.u32 %v664, 16
      %v753 = vrot.slane %v751, 7
      %v754 = vshll.u32 %v664, 16
      %v756 = vor.u32 %v753, %v754
      %v757 = vsel %vm690, %v749, %v756
      %v758 = vrot.slane %v753, 4
      %v760 = vshrl.u32 %v665, 16
      %v762 = vrot.slane %v760, 7
      %v763 = vshll.u32 %v665, 16
      %v765 = vor.u32 %v762, %v763
      %v766 = vrot.slane %v762, 4
      %v768 = vshrl.u32 %v666, 16
      %v770 = vrot.slane %v768, 7
      %v771 = vshll.u32 %v666, 16
      %v773 = vor.u32 %v770, %v771
      %v774 = vsel %vm690, %v766, %v773
      %v775 = vrot.slane %v770, 4
      %v777 = vshrl.u32 %v667, 16
      %v779 = vrot.slane %v777, 7
      %v780 = vshll.u32 %v667, 16
      %v782 = vor.u32 %v779, %v780
      %v783 = vrot.slane %v779, 4
      %v785 = vshrl.u32 %v668, 16
      %v787 = vrot.slane %v785, 7
      %v788 = vshll.u32 %v668, 16
      %v790 = vor.u32 %v787, %v788
      %v791 = vsel %vm690, %v783, %v790
      %v792 = vrot.slane %v787, 4
      %v794 = vshrl.u32 %v669, 16
      %v796 = vrot.slane %v794, 7
      %v797 = vshll.u32 %v669, 16
      %v799 = vor.u32 %v796, %v797
      %v800 = vrot.slane %v796, 4
      %v802 = vshrl.u32 %v670, 16
      %v804 = vrot.slane %v802, 7
      %v805 = vshll.u32 %v670, 16
      %v807 = vor.u32 %v804, %v805
      %v808 = vsel %vm690, %v800, %v807
      %v809 = vrot.slane %v804, 4
      %v811 = vshrl.u32 %v671, 16
      %v813 = vrot.slane %v811, 7
      %v814 = vshll.u32 %v671, 16
      %v816 = vor.u32 %v813, %v814
      %v817 = vrot.slane %v813, 4
      %v819 = vshrl.u32 %v672, 16
      %v821 = vrot.slane %v819, 7
      %v822 = vshll.u32 %v672, 16
      %v824 = vor.u32 %v821, %v822
      %v825 = vsel %vm690, %v817, %v824
      %v826 = vrot.slane %v821, 4
      %v828 = vshrl.u32 %v673, 16
      %v830 = vrot.slane %v828, 7
      %v831 = vshll.u32 %v673, 16
      %v833 = vor.u32 %v830, %v831
      %v834 = vrot.slane %v830, 4
      %v836 = vshrl.u32 %v674, 16
      %v838 = vrot.slane %v836, 7
      %v839 = vshll.u32 %v674, 16
      %v841 = vor.u32 %v838, %v839
      %v842 = vsel %vm690, %v834, %v841
      %v843 = vrot.slane %v838, 4
      %v845 = vshrl.u32 %v675, 16
      %v847 = vrot.slane %v845, 7
      %v848 = vshll.u32 %v675, 16
      %v850 = vor.u32 %v847, %v848
      %v851 = vrot.slane %v847, 4
      %v853 = vshrl.u32 %v676, 16
      %v855 = vrot.slane %v853, 7
      %v856 = vshll.u32 %v676, 16
      %v858 = vor.u32 %v855, %v856
      %v859 = vsel %vm690, %v851, %v858
      %v860 = vrot.slane %v855, 4
      %v862 = vshrl.u32 %v677, 16
      %v864 = vrot.slane %v862, 7
      %v865 = vshll.u32 %v677, 16
      %v867 = vor.u32 %v864, %v865
      %v868 = vrot.slane %v864, 4
      %v870 = vshrl.u32 %v678, 16
      %v872 = vrot.slane %v870, 7
      %v873 = vshll.u32 %v678, 16
      %v875 = vor.u32 %v872, %v873
      %v876 = vsel %vm690, %v868, %v875
      %v877 = vrot.slane %v872, 4
      %v879 = vshrl.u32 %v679, 16
      %v881 = vrot.slane %v879, 7
      %v882 = vshll.u32 %v679, 16
      %v884 = vor.u32 %v881, %v882
      %v885 = vrot.slane %v881, 4
      %v887 = vshrl.u32 %v680, 16
      %v889 = vrot.slane %v887, 7
      %v890 = vshll.u32 %v680, 16
      %v892 = vor.u32 %v889, %v890
      %v893 = vsel %vm690, %v885, %v892
      %v894 = vrot.slane %v889, 4
      %v896 = vshrl.u32 %v681, 16
      %v898 = vrot.slane %v896, 7
      %v899 = vshll.u32 %v681, 16
      %v901 = vor.u32 %v898, %v899
      %v902 = vrot.slane %v898, 4
      %v904 = vshrl.u32 %v682, 16
      %v906 = vrot.slane %v904, 7
      %v907 = vshll.u32 %v682, 16
      %v909 = vor.u32 %v906, %v907
      %v910 = vsel %vm690, %v902, %v909
      %v911 = vrot.slane %v906, 4
      %v913 = vshrl.u32 %v683, 16
      %v915 = vrot.slane %v913, 7
      %v916 = vshll.u32 %v683, 16
      %v918 = vor.u32 %v915, %v916
      %v919 = vrot.slane %v915, 4
      %v921 = vshrl.u32 %v684, 16
      %v923 = vrot.slane %v921, 7
      %v924 = vshll.u32 %v684, 16
      %v926 = vor.u32 %v923, %v924
      %v927 = vsel %vm690, %v919, %v926
      %v928 = vrot.slane %v923, 4
      %v930 = vshrl.u32 %v685, 16
      %v932 = vrot.slane %v930, 7
      %v933 = vshll.u32 %v685, 16
      %v935 = vor.u32 %v932, %v933
      %v936 = vrot.slane %v932, 4
      %v938 = vshrl.u32 %v686, 16
      %v940 = vrot.slane %v938, 7
      %v941 = vshll.u32 %v686, 16
      %v943 = vor.u32 %v940, %v941
      %v944 = vsel %vm690, %v936, %v943
      %v945 = vrot.slane %v940, 4
      %v947 = vshrl.u32 %v687, 16
      %v949 = vrot.slane %v947, 7
      %v950 = vshll.u32 %v687, 16
      %v952 = vor.u32 %v949, %v950
      %v953 = vrot.slane %v949, 4
      %v955 = vshrl.u32 %v688, 16
      %v957 = vrot.slane %v955, 7
      %v958 = vshll.u32 %v688, 16
      %v960 = vor.u32 %v957, %v958
      %v961 = vsel %vm690, %v953, %v960
      %v962 = vrot.slane %v957, 4
      %s1011 = scalar_lea.vmem [#allocation2], 12
      %vm1012 = vcmask 60416
      %vm1013 = vmand %vm1012, %vm601
      %v1014 = vld [vmem:[%s1011] sm:$0xf]
      %v1015 = vsel %vm1013, %v697, %v1014
      %1016 = vst [vmem:[%s1011] sm:$0xf] %v1015
      %1017 = vst.msk [vmem:[%s1011 + $0x4] sm:$0xf] %vm535, %v706
      %v1018 = vld [vmem:[%s1011 + $0x8] sm:$0x1]
      %v1019 = vsel %vm546, %v707, %v1018
      %1020 = vst [vmem:[%s1011 + $0x8] sm:$0x1] %v1019
      %v1021 = vld [vmem:[%s1011 + $0xc] sm:$0xf]
      %v1022 = vsel %vm1013, %v714, %v1021
      %1023 = vst [vmem:[%s1011 + $0xc] sm:$0xf] %v1022
      %1024 = vst.msk [vmem:[%s1011 + $0x10] sm:$0xf] %vm535, %v723
      %v1025 = vld [vmem:[%s1011 + $0x14] sm:$0x1]
      %v1026 = vsel %vm546, %v724, %v1025
      %1027 = vst [vmem:[%s1011 + $0x14] sm:$0x1] %v1026
      %v1028 = vld [vmem:[%s1011 + $0x18] sm:$0xf]
      %v1029 = vsel %vm1013, %v731, %v1028
      %1030 = vst [vmem:[%s1011 + $0x18] sm:$0xf] %v1029
      %1031 = vst.msk [vmem:[%s1011 + $0x1c] sm:$0xf] %vm535, %v740
      %v1032 = vld [vmem:[%s1011 + $0x20] sm:$0x1]
      %v1033 = vsel %vm546, %v741, %v1032
      %1034 = vst [vmem:[%s1011 + $0x20] sm:$0x1] %v1033
      %v1035 = vld [vmem:[%s1011 + $0x24] sm:$0xf]
      %v1036 = vsel %vm1013, %v748, %v1035
      %1037 = vst [vmem:[%s1011 + $0x24] sm:$0xf] %v1036
      %1038 = vst.msk [vmem:[%s1011 + $0x28] sm:$0xf] %vm535, %v757
      %v1039 = vld [vmem:[%s1011 + $0x2c] sm:$0x1]
      %v1040 = vsel %vm546, %v758, %v1039
      %1041 = vst [vmem:[%s1011 + $0x2c] sm:$0x1] %v1040
      %v1042 = vld [vmem:[%s1011 + $0x30] sm:$0xf]
      %v1043 = vsel %vm1013, %v765, %v1042
      %1044 = vst [vmem:[%s1011 + $0x30] sm:$0xf] %v1043
      %1045 = vst.msk [vmem:[%s1011 + $0x34] sm:$0xf] %vm535, %v774
      %v1046 = vld [vmem:[%s1011 + $0x38] sm:$0x1]
      %v1047 = vsel %vm546, %v775, %v1046
      %1048 = vst [vmem:[%s1011 + $0x38] sm:$0x1] %v1047
      %v1049 = vld [vmem:[%s1011 + $0x3c] sm:$0xf]
      %v1050 = vsel %vm1013, %v782, %v1049
      %1051 = vst [vmem:[%s1011 + $0x3c] sm:$0xf] %v1050
      %1052 = vst.msk [vmem:[%s1011 + $0x40] sm:$0xf] %vm535, %v791
      %v1053 = vld [vmem:[%s1011 + $0x44] sm:$0x1]
      %v1054 = vsel %vm546, %v792, %v1053
      %1055 = vst [vmem:[%s1011 + $0x44] sm:$0x1] %v1054
      %v1056 = vld [vmem:[%s1011 + $0x48] sm:$0xf]
      %v1057 = vsel %vm1013, %v799, %v1056
      %1058 = vst [vmem:[%s1011 + $0x48] sm:$0xf] %v1057
      %1059 = vst.msk [vmem:[%s1011 + $0x4c] sm:$0xf] %vm535, %v808
      %v1060 = vld [vmem:[%s1011 + $0x50] sm:$0x1]
      %v1061 = vsel %vm546, %v809, %v1060
      %1062 = vst [vmem:[%s1011 + $0x50] sm:$0x1] %v1061
      %v1063 = vld [vmem:[%s1011 + $0x54] sm:$0xf]
      %v1064 = vsel %vm1013, %v816, %v1063
      %1065 = vst [vmem:[%s1011 + $0x54] sm:$0xf] %v1064
      %1066 = vst.msk [vmem:[%s1011 + $0x58] sm:$0xf] %vm535, %v825
      %v1067 = vld [vmem:[%s1011 + $0x5c] sm:$0x1]
      %v1068 = vsel %vm546, %v826, %v1067
      %1069 = vst [vmem:[%s1011 + $0x5c] sm:$0x1] %v1068
      %v1070 = vld [vmem:[%s1011 + $0x60] sm:$0xf]
      %v1071 = vsel %vm1013, %v833, %v1070
      %1072 = vst [vmem:[%s1011 + $0x60] sm:$0xf] %v1071
      %1073 = vst.msk [vmem:[%s1011 + $0x64] sm:$0xf] %vm535, %v842
      %v1074 = vld [vmem:[%s1011 + $0x68] sm:$0x1]
      %v1075 = vsel %vm546, %v843, %v1074
      %1076 = vst [vmem:[%s1011 + $0x68] sm:$0x1] %v1075
      %v1077 = vld [vmem:[%s1011 + $0x6c] sm:$0xf]
      %v1078 = vsel %vm1013, %v850, %v1077
      %1079 = vst [vmem:[%s1011 + $0x6c] sm:$0xf] %v1078
      %1080 = vst.msk [vmem:[%s1011 + $0x70] sm:$0xf] %vm535, %v859
      %v1081 = vld [vmem:[%s1011 + $0x74] sm:$0x1]
      %v1082 = vsel %vm546, %v860, %v1081
      %1083 = vst [vmem:[%s1011 + $0x74] sm:$0x1] %v1082
      %v1084 = vld [vmem:[%s1011 + $0x78] sm:$0xf]
      %v1085 = vsel %vm1013, %v867, %v1084
      %1086 = vst [vmem:[%s1011 + $0x78] sm:$0xf] %v1085
      %1087 = vst.msk [vmem:[%s1011 + $0x7c] sm:$0xf] %vm535, %v876
      %v1088 = vld [vmem:[%s1011 + $0x80] sm:$0x1]
      %v1089 = vsel %vm546, %v877, %v1088
      %1090 = vst [vmem:[%s1011 + $0x80] sm:$0x1] %v1089
      %v1091 = vld [vmem:[%s1011 + $0x84] sm:$0xf]
      %v1092 = vsel %vm1013, %v884, %v1091
      %1093 = vst [vmem:[%s1011 + $0x84] sm:$0xf] %v1092
      %1094 = vst.msk [vmem:[%s1011 + $0x88] sm:$0xf] %vm535, %v893
      %v1095 = vld [vmem:[%s1011 + $0x8c] sm:$0x1]
      %v1096 = vsel %vm546, %v894, %v1095
      %1097 = vst [vmem:[%s1011 + $0x8c] sm:$0x1] %v1096
      %v1098 = vld [vmem:[%s1011 + $0x90] sm:$0xf]
      %v1099 = vsel %vm1013, %v901, %v1098
      %1100 = vst [vmem:[%s1011 + $0x90] sm:$0xf] %v1099
      %1101 = vst.msk [vmem:[%s1011 + $0x94] sm:$0xf] %vm535, %v910
      %v1102 = vld [vmem:[%s1011 + $0x98] sm:$0x1]
      %v1103 = vsel %vm546, %v911, %v1102
      %1104 = vst [vmem:[%s1011 + $0x98] sm:$0x1] %v1103
      %v1105 = vld [vmem:[%s1011 + $0x9c] sm:$0xf]
      %v1106 = vsel %vm1013, %v918, %v1105
      %1107 = vst [vmem:[%s1011 + $0x9c] sm:$0xf] %v1106
      %1108 = vst.msk [vmem:[%s1011 + $0xa0] sm:$0xf] %vm535, %v927
      %v1109 = vld [vmem:[%s1011 + $0xa4] sm:$0x1]
      %v1110 = vsel %vm546, %v928, %v1109
      %1111 = vst [vmem:[%s1011 + $0xa4] sm:$0x1] %v1110
      %v1112 = vld [vmem:[%s1011 + $0xa8] sm:$0xf]
      %v1113 = vsel %vm1013, %v935, %v1112
      %1114 = vst [vmem:[%s1011 + $0xa8] sm:$0xf] %v1113
      %1115 = vst.msk [vmem:[%s1011 + $0xac] sm:$0xf] %vm535, %v944
      %v1116 = vld [vmem:[%s1011 + $0xb0] sm:$0x1]
      %v1117 = vsel %vm546, %v945, %v1116
      %1118 = vst [vmem:[%s1011 + $0xb0] sm:$0x1] %v1117
      %v1119 = vld [vmem:[%s1011 + $0xb4] sm:$0xf]
      %v1120 = vsel %vm1013, %v952, %v1119
      %1121 = vst [vmem:[%s1011 + $0xb4] sm:$0xf] %v1120
      %1122 = vst.msk [vmem:[%s1011 + $0xb8] sm:$0xf] %vm535, %v961
      %v1123 = vld [vmem:[%s1011 + $0xbc] sm:$0x1]
      %v1124 = vsel %vm546, %v962, %v1123
      %1125 = vst [vmem:[%s1011 + $0xbc] sm:$0x1] %v1124
      %v1126 = vld [vmem:[#allocation2] sm:$0xf]
      %v1127 = vld [vmem:[#allocation2 + $0x4] sm:$0xf]
      %v1128 = vld [vmem:[#allocation2 + $0xc] sm:$0xf]
      %v1129 = vld [vmem:[#allocation2 + $0x10] sm:$0xf]
      %v1130 = vld [vmem:[#allocation2 + $0x18] sm:$0xf]
      %v1131 = vld [vmem:[#allocation2 + $0x1c] sm:$0xf]
      %v1132 = vld [vmem:[#allocation2 + $0x24] sm:$0xf]
      %v1133 = vld [vmem:[#allocation2 + $0x28] sm:$0xf]
      %v1134 = vld [vmem:[#allocation2 + $0x30] sm:$0xf]
      %v1135 = vld [vmem:[#allocation2 + $0x34] sm:$0xf]
      %v1136 = vld [vmem:[#allocation2 + $0x3c] sm:$0xf]
      %v1137 = vld [vmem:[#allocation2 + $0x40] sm:$0xf]
      %v1138 = vld [vmem:[#allocation2 + $0x48] sm:$0xf]
      %v1139 = vld [vmem:[#allocation2 + $0x4c] sm:$0xf]
      %v1140 = vld [vmem:[#allocation2 + $0x54] sm:$0xf]
      %v1141 = vld [vmem:[#allocation2 + $0x58] sm:$0xf]
      %v1142 = vld [vmem:[#allocation2 + $0x60] sm:$0xf]
      %v1143 = vld [vmem:[#allocation2 + $0x64] sm:$0xf]
      %v1144 = vld [vmem:[#allocation2 + $0x6c] sm:$0xf]
      %v1145 = vld [vmem:[#allocation2 + $0x70] sm:$0xf]
      %v1146 = vld [vmem:[#allocation2 + $0x78] sm:$0xf]
      %v1147 = vld [vmem:[#allocation2 + $0x7c] sm:$0xf]
      %v1148 = vld [vmem:[#allocation2 + $0x84] sm:$0xf]
      %v1149 = vld [vmem:[#allocation2 + $0x88] sm:$0xf]
      %v1150 = vld [vmem:[#allocation2 + $0x90] sm:$0xf]
      %v1151 = vld [vmem:[#allocation2 + $0x94] sm:$0xf]
      %v1152 = vld [vmem:[#allocation2 + $0x9c] sm:$0xf]
      %v1153 = vld [vmem:[#allocation2 + $0xa0] sm:$0xf]
      %v1154 = vld [vmem:[#allocation2 + $0xa8] sm:$0xf]
      %v1155 = vld [vmem:[#allocation2 + $0xac] sm:$0xf]
      %v1156 = vld [vmem:[#allocation2 + $0xb4] sm:$0xf]
      %v1157 = vld [vmem:[#allocation2 + $0xb8] sm:$0xf]
      %v1158 = vld [vmem:[#allocation2 + $0x8] sm:$0x1]
      %v1159 = vld [vmem:[#allocation2 + $0x14] sm:$0x1]
      %v1160 = vld [vmem:[#allocation2 + $0x20] sm:$0x1]
      %v1161 = vld [vmem:[#allocation2 + $0x2c] sm:$0x1]
      %v1162 = vld [vmem:[#allocation2 + $0x38] sm:$0x1]
      %v1163 = vld [vmem:[#allocation2 + $0x44] sm:$0x1]
      %v1164 = vld [vmem:[#allocation2 + $0x50] sm:$0x1]
      %v1165 = vld [vmem:[#allocation2 + $0x5c] sm:$0x1]
      %v1166 = vld [vmem:[#allocation2 + $0x68] sm:$0x1]
      %v1167 = vld [vmem:[#allocation2 + $0x74] sm:$0x1]
      %v1168 = vld [vmem:[#allocation2 + $0x80] sm:$0x1]
      %v1169 = vld [vmem:[#allocation2 + $0x8c] sm:$0x1]
      %v1170 = vld [vmem:[#allocation2 + $0x98] sm:$0x1]
      %v1171 = vld [vmem:[#allocation2 + $0xa4] sm:$0x1]
      %v1172 = vld [vmem:[#allocation2 + $0xb0] sm:$0x1]
      %v1173 = vld [vmem:[#allocation2 + $0xbc] sm:$0x1]
      %v1174 = vld [vmem:[#allocation2] sm:$0xe]
      %v1175 = vld [vmem:[#allocation2 + $0xc] sm:$0xe]
      %v1176 = vld [vmem:[#allocation2 + $0x18] sm:$0xe]
      %v1177 = vld [vmem:[#allocation2 + $0x24] sm:$0xe]
      %v1178 = vld [vmem:[#allocation2 + $0x30] sm:$0xe]
      %v1179 = vld [vmem:[#allocation2 + $0x3c] sm:$0xe]
      %v1180 = vld [vmem:[#allocation2 + $0x48] sm:$0xe]
      %v1181 = vld [vmem:[#allocation2 + $0x54] sm:$0xe]
      %v1182 = vld [vmem:[#allocation2 + $0x60] sm:$0xe]
      %v1183 = vld [vmem:[#allocation2 + $0x6c] sm:$0xe]
      %v1184 = vld [vmem:[#allocation2 + $0x78] sm:$0xe]
      %v1185 = vld [vmem:[#allocation2 + $0x84] sm:$0xe]
      %v1186 = vld [vmem:[#allocation2 + $0x90] sm:$0xe]
      %v1187 = vld [vmem:[#allocation2 + $0x9c] sm:$0xe]
      %v1188 = vld [vmem:[#allocation2 + $0xa8] sm:$0xe]
      %v1189 = vld [vmem:[#allocation2 + $0xb4] sm:$0xe]
      %v1190 = vld [vmem:[%s1011] sm:$0xf]
      %v1191 = vld [vmem:[%s1011 + $0x4] sm:$0xf]
      %v1192 = vld [vmem:[%s1011 + $0xc] sm:$0xf]
      %v1193 = vld [vmem:[%s1011 + $0x10] sm:$0xf]
      %v1194 = vld [vmem:[%s1011 + $0x18] sm:$0xf]
      %v1195 = vld [vmem:[%s1011 + $0x1c] sm:$0xf]
      %v1196 = vld [vmem:[%s1011 + $0x24] sm:$0xf]
      %v1197 = vld [vmem:[%s1011 + $0x28] sm:$0xf]
      %v1198 = vld [vmem:[%s1011 + $0x30] sm:$0xf]
      %v1199 = vld [vmem:[%s1011 + $0x34] sm:$0xf]
      %v1200 = vld [vmem:[%s1011 + $0x3c] sm:$0xf]
      %v1201 = vld [vmem:[%s1011 + $0x40] sm:$0xf]
      %v1202 = vld [vmem:[%s1011 + $0x48] sm:$0xf]
      %v1203 = vld [vmem:[%s1011 + $0x4c] sm:$0xf]
      %v1204 = vld [vmem:[%s1011 + $0x54] sm:$0xf]
      %v1205 = vld [vmem:[%s1011 + $0x58] sm:$0xf]
      %v1206 = vld [vmem:[%s1011 + $0x60] sm:$0xf]
      %v1207 = vld [vmem:[%s1011 + $0x64] sm:$0xf]
      %v1208 = vld [vmem:[%s1011 + $0x6c] sm:$0xf]
      %v1209 = vld [vmem:[%s1011 + $0x70] sm:$0xf]
      %v1210 = vld [vmem:[%s1011 + $0x78] sm:$0xf]
      %v1211 = vld [vmem:[%s1011 + $0x7c] sm:$0xf]
      %v1212 = vld [vmem:[%s1011 + $0x84] sm:$0xf]
      %v1213 = vld [vmem:[%s1011 + $0x88] sm:$0xf]
      %v1214 = vld [vmem:[%s1011 + $0x90] sm:$0xf]
      %v1215 = vld [vmem:[%s1011 + $0x94] sm:$0xf]
      %v1216 = vld [vmem:[%s1011 + $0x9c] sm:$0xf]
      %v1217 = vld [vmem:[%s1011 + $0xa0] sm:$0xf]
      %v1218 = vld [vmem:[%s1011 + $0xa8] sm:$0xf]
      %v1219 = vld [vmem:[%s1011 + $0xac] sm:$0xf]
      %v1220 = vld [vmem:[%s1011 + $0xb4] sm:$0xf]
      %v1221 = vld [vmem:[%s1011 + $0xb8] sm:$0xf]
      %v1222 = vld [vmem:[%s1011 + $0x8] sm:$0x1]
      %v1223 = vld [vmem:[%s1011 + $0x14] sm:$0x1]
      %v1224 = vld [vmem:[%s1011 + $0x20] sm:$0x1]
      %v1225 = vld [vmem:[%s1011 + $0x2c] sm:$0x1]
      %v1226 = vld [vmem:[%s1011 + $0x38] sm:$0x1]
      %v1227 = vld [vmem:[%s1011 + $0x44] sm:$0x1]
      %v1228 = vld [vmem:[%s1011 + $0x50] sm:$0x1]
      %v1229 = vld [vmem:[%s1011 + $0x5c] sm:$0x1]
      %v1230 = vld [vmem:[%s1011 + $0x68] sm:$0x1]
      %v1231 = vld [vmem:[%s1011 + $0x74] sm:$0x1]
      %v1232 = vld [vmem:[%s1011 + $0x80] sm:$0x1]
      %v1233 = vld [vmem:[%s1011 + $0x8c] sm:$0x1]
      %v1234 = vld [vmem:[%s1011 + $0x98] sm:$0x1]
      %v1235 = vld [vmem:[%s1011 + $0xa4] sm:$0x1]
      %v1236 = vld [vmem:[%s1011 + $0xb0] sm:$0x1]
      %v1237 = vld [vmem:[%s1011 + $0xbc] sm:$0x1]
      %v1238 = vld [vmem:[%s1011] sm:$0xe]
      %v1239 = vld [vmem:[%s1011 + $0xc] sm:$0xe]
      %v1240 = vld [vmem:[%s1011 + $0x18] sm:$0xe]
      %v1241 = vld [vmem:[%s1011 + $0x24] sm:$0xe]
      %v1242 = vld [vmem:[%s1011 + $0x30] sm:$0xe]
      %v1243 = vld [vmem:[%s1011 + $0x3c] sm:$0xe]
      %v1244 = vld [vmem:[%s1011 + $0x48] sm:$0xe]
      %v1245 = vld [vmem:[%s1011 + $0x54] sm:$0xe]
      %v1246 = vld [vmem:[%s1011 + $0x60] sm:$0xe]
      %v1247 = vld [vmem:[%s1011 + $0x6c] sm:$0xe]
      %v1248 = vld [vmem:[%s1011 + $0x78] sm:$0xe]
      %v1249 = vld [vmem:[%s1011 + $0x84] sm:$0xe]
      %v1250 = vld [vmem:[%s1011 + $0x90] sm:$0xe]
      %v1251 = vld [vmem:[%s1011 + $0x9c] sm:$0xe]
      %v1252 = vld [vmem:[%s1011 + $0xa8] sm:$0xe]
      %v1253 = vld [vmem:[%s1011 + $0xb4] sm:$0xe]
      %s1254 = scalar_lea.vmem [#allocation2], 24
      %v1255 = vld [vmem:[%s1254] sm:$0xf]
      %v1256 = vld [vmem:[%s1254 + $0x4] sm:$0xf]
      %v1257 = vld [vmem:[%s1254 + $0xc] sm:$0xf]
      %v1258 = vld [vmem:[%s1254 + $0x10] sm:$0xf]
      %v1259 = vld [vmem:[%s1254 + $0x18] sm:$0xf]
      %v1260 = vld [vmem:[%s1254 + $0x1c] sm:$0xf]
      %v1261 = vld [vmem:[%s1254 + $0x24] sm:$0xf]
      %v1262 = vld [vmem:[%s1254 + $0x28] sm:$0xf]
      %v1263 = vld [vmem:[%s1254 + $0x30] sm:$0xf]
      %v1264 = vld [vmem:[%s1254 + $0x34] sm:$0xf]
      %v1265 = vld [vmem:[%s1254 + $0x3c] sm:$0xf]
      %v1266 = vld [vmem:[%s1254 + $0x40] sm:$0xf]
      %v1267 = vld [vmem:[%s1254 + $0x48] sm:$0xf]
      %v1268 = vld [vmem:[%s1254 + $0x4c] sm:$0xf]
      %v1269 = vld [vmem:[%s1254 + $0x54] sm:$0xf]
      %v1270 = vld [vmem:[%s1254 + $0x58] sm:$0xf]
      %v1271 = vld [vmem:[%s1254 + $0x60] sm:$0xf]
      %v1272 = vld [vmem:[%s1254 + $0x64] sm:$0xf]
      %v1273 = vld [vmem:[%s1254 + $0x6c] sm:$0xf]
      %v1274 = vld [vmem:[%s1254 + $0x70] sm:$0xf]
      %v1275 = vld [vmem:[%s1254 + $0x78] sm:$0xf]
      %v1276 = vld [vmem:[%s1254 + $0x7c] sm:$0xf]
      %v1277 = vld [vmem:[%s1254 + $0x84] sm:$0xf]
      %v1278 = vld [vmem:[%s1254 + $0x88] sm:$0xf]
      %v1279 = vld [vmem:[%s1254 + $0x90] sm:$0xf]
      %v1280 = vld [vmem:[%s1254 + $0x94] sm:$0xf]
      %v1281 = vld [vmem:[%s1254 + $0x9c] sm:$0xf]
      %v1282 = vld [vmem:[%s1254 + $0xa0] sm:$0xf]
      %v1283 = vld [vmem:[%s1254 + $0xa8] sm:$0xf]
      %v1284 = vld [vmem:[%s1254 + $0xac] sm:$0xf]
      %v1285 = vld [vmem:[%s1254 + $0xb4] sm:$0xf]
      %v1286 = vld [vmem:[%s1254 + $0xb8] sm:$0xf]
      %v1287 = vld [vmem:[%s1254 + $0x8] sm:$0x1]
      %v1288 = vld [vmem:[%s1254 + $0x14] sm:$0x1]
      %v1289 = vld [vmem:[%s1254 + $0x20] sm:$0x1]
      %v1290 = vld [vmem:[%s1254 + $0x2c] sm:$0x1]
      %v1291 = vld [vmem:[%s1254 + $0x38] sm:$0x1]
      %v1292 = vld [vmem:[%s1254 + $0x44] sm:$0x1]
      %v1293 = vld [vmem:[%s1254 + $0x50] sm:$0x1]
      %v1294 = vld [vmem:[%s1254 + $0x5c] sm:$0x1]
      %v1295 = vld [vmem:[%s1254 + $0x68] sm:$0x1]
      %v1296 = vld [vmem:[%s1254 + $0x74] sm:$0x1]
      %v1297 = vld [vmem:[%s1254 + $0x80] sm:$0x1]
      %v1298 = vld [vmem:[%s1254 + $0x8c] sm:$0x1]
      %v1299 = vld [vmem:[%s1254 + $0x98] sm:$0x1]
      %v1300 = vld [vmem:[%s1254 + $0xa4] sm:$0x1]
      %v1301 = vld [vmem:[%s1254 + $0xb0] sm:$0x1]
      %v1302 = vld [vmem:[%s1254 + $0xbc] sm:$0x1]
      %v1303 = vld [vmem:[%s1254] sm:$0xe]
      %v1304 = vld [vmem:[%s1254 + $0xc] sm:$0xe]
      %v1305 = vld [vmem:[%s1254 + $0x18] sm:$0xe]
      %v1306 = vld [vmem:[%s1254 + $0x24] sm:$0xe]
      %v1307 = vld [vmem:[%s1254 + $0x30] sm:$0xe]
      %v1308 = vld [vmem:[%s1254 + $0x3c] sm:$0xe]
      %v1309 = vld [vmem:[%s1254 + $0x48] sm:$0xe]
      %v1310 = vld [vmem:[%s1254 + $0x54] sm:$0xe]
      %v1311 = vld [vmem:[%s1254 + $0x60] sm:$0xe]
      %v1312 = vld [vmem:[%s1254 + $0x6c] sm:$0xe]
      %v1313 = vld [vmem:[%s1254 + $0x78] sm:$0xe]
      %v1314 = vld [vmem:[%s1254 + $0x84] sm:$0xe]
      %v1315 = vld [vmem:[%s1254 + $0x90] sm:$0xe]
      %v1316 = vld [vmem:[%s1254 + $0x9c] sm:$0xe]
      %v1317 = vld [vmem:[%s1254 + $0xa8] sm:$0xe]
      %v1318 = vld [vmem:[%s1254 + $0xb4] sm:$0xe]
      %v1351 = vunpack.c.l.b16 %v1126
      %v1352 = vunpack.c.l.b16 %v1127
      %v1353 = vunpack.c.l.b16 %v1128
      %v1354 = vunpack.c.l.b16 %v1129
      %v1355 = vunpack.c.l.b16 %v1130
      %v1356 = vunpack.c.l.b16 %v1131
      %v1357 = vunpack.c.l.b16 %v1132
      %v1358 = vunpack.c.l.b16 %v1133
      %v1359 = vunpack.c.l.b16 %v1134
      %v1360 = vunpack.c.l.b16 %v1135
      %v1361 = vunpack.c.l.b16 %v1136
      %v1362 = vunpack.c.l.b16 %v1137
      %v1363 = vunpack.c.l.b16 %v1138
      %v1364 = vunpack.c.l.b16 %v1139
      %v1365 = vunpack.c.l.b16 %v1140
      %v1366 = vunpack.c.l.b16 %v1141
      %v1367 = vunpack.c.l.b16 %v1142
      %v1368 = vunpack.c.l.b16 %v1143
      %v1369 = vunpack.c.l.b16 %v1144
      %v1370 = vunpack.c.l.b16 %v1145
      %v1371 = vunpack.c.l.b16 %v1146
      %v1372 = vunpack.c.l.b16 %v1147
      %v1373 = vunpack.c.l.b16 %v1148
      %v1374 = vunpack.c.l.b16 %v1149
      %v1375 = vunpack.c.l.b16 %v1150
      %v1376 = vunpack.c.l.b16 %v1151
      %v1377 = vunpack.c.l.b16 %v1152
      %v1378 = vunpack.c.l.b16 %v1153
      %v1379 = vunpack.c.l.b16 %v1154
      %v1380 = vunpack.c.l.b16 %v1155
      %v1381 = vunpack.c.l.b16 %v1156
      %v1382 = vunpack.c.l.b16 %v1157
      %v1383 = vpack.c.b16 %v1352, %v1351
      %v1384 = vpack.c.b16 %v1354, %v1353
      %v1385 = vpack.c.b16 %v1356, %v1355
      %v1386 = vpack.c.b16 %v1358, %v1357
      %v1387 = vpack.c.b16 %v1360, %v1359
      %v1388 = vpack.c.b16 %v1362, %v1361
      %v1389 = vpack.c.b16 %v1364, %v1363
      %v1390 = vpack.c.b16 %v1366, %v1365
      %v1391 = vpack.c.b16 %v1368, %v1367
      %v1392 = vpack.c.b16 %v1370, %v1369
      %v1393 = vpack.c.b16 %v1372, %v1371
      %v1394 = vpack.c.b16 %v1374, %v1373
      %v1395 = vpack.c.b16 %v1376, %v1375
      %v1396 = vpack.c.b16 %v1378, %v1377
      %v1397 = vpack.c.b16 %v1380, %v1379
      %v1398 = vpack.c.b16 %v1382, %v1381
      %v1415 = vunpack.c.l.b16 %v1158
      %v1416 = vunpack.c.l.b16 %v1159
      %v1417 = vunpack.c.l.b16 %v1160
      %v1418 = vunpack.c.l.b16 %v1161
      %v1419 = vunpack.c.l.b16 %v1162
      %v1420 = vunpack.c.l.b16 %v1163
      %v1421 = vunpack.c.l.b16 %v1164
      %v1422 = vunpack.c.l.b16 %v1165
      %v1423 = vunpack.c.l.b16 %v1166
      %v1424 = vunpack.c.l.b16 %v1167
      %v1425 = vunpack.c.l.b16 %v1168
      %v1426 = vunpack.c.l.b16 %v1169
      %v1427 = vunpack.c.l.b16 %v1170
      %v1428 = vunpack.c.l.b16 %v1171
      %v1429 = vunpack.c.l.b16 %v1172
      %v1430 = vunpack.c.l.b16 %v1173
      %v1431 = vpack.c.b16 %v1415, %v1415
      %v1432 = vpack.c.b16 %v1416, %v1416
      %v1433 = vpack.c.b16 %v1417, %v1417
      %v1434 = vpack.c.b16 %v1418, %v1418
      %v1435 = vpack.c.b16 %v1419, %v1419
      %v1436 = vpack.c.b16 %v1420, %v1420
      %v1437 = vpack.c.b16 %v1421, %v1421
      %v1438 = vpack.c.b16 %v1422, %v1422
      %v1439 = vpack.c.b16 %v1423, %v1423
      %v1440 = vpack.c.b16 %v1424, %v1424
      %v1441 = vpack.c.b16 %v1425, %v1425
      %v1442 = vpack.c.b16 %v1426, %v1426
      %v1443 = vpack.c.b16 %v1427, %v1427
      %v1444 = vpack.c.b16 %v1428, %v1428
      %v1445 = vpack.c.b16 %v1429, %v1429
      %v1446 = vpack.c.b16 %v1430, %v1430
      %vm1447 = vsmask.f32 7424
      %v1449 = vshrl.u32 %v1383, 16
      %v1451 = vshll.u32 %v1383, 16
      %v1453 = vrot.slane %v1451, 1
      %v1454 = vor.u32 %v1449, %v1453
      %v1456 = vshll.u32 %v1431, 16
      %v1458 = vrot.slane %v1456, 1
      %v1459 = vsel %vm1447, %v1454, %v1458
      %v1461 = vshrl.u32 %v1384, 16
      %v1463 = vshll.u32 %v1384, 16
      %v1465 = vrot.slane %v1463, 1
      %v1466 = vor.u32 %v1461, %v1465
      %v1468 = vshll.u32 %v1432, 16
      %v1470 = vrot.slane %v1468, 1
      %v1471 = vsel %vm1447, %v1466, %v1470
      %v1473 = vshrl.u32 %v1385, 16
      %v1475 = vshll.u32 %v1385, 16
      %v1477 = vrot.slane %v1475, 1
      %v1478 = vor.u32 %v1473, %v1477
      %v1480 = vshll.u32 %v1433, 16
      %v1482 = vrot.slane %v1480, 1
      %v1483 = vsel %vm1447, %v1478, %v1482
      %v1485 = vshrl.u32 %v1386, 16
      %v1487 = vshll.u32 %v1386, 16
      %v1489 = vrot.slane %v1487, 1
      %v1490 = vor.u32 %v1485, %v1489
      %v1492 = vshll.u32 %v1434, 16
      %v1494 = vrot.slane %v1492, 1
      %v1495 = vsel %vm1447, %v1490, %v1494
      %v1497 = vshrl.u32 %v1387, 16
      %v1499 = vshll.u32 %v1387, 16
      %v1501 = vrot.slane %v1499, 1
      %v1502 = vor.u32 %v1497, %v1501
      %v1504 = vshll.u32 %v1435, 16
      %v1506 = vrot.slane %v1504, 1
      %v1507 = vsel %vm1447, %v1502, %v1506
      %v1509 = vshrl.u32 %v1388, 16
      %v1511 = vshll.u32 %v1388, 16
      %v1513 = vrot.slane %v1511, 1
      %v1514 = vor.u32 %v1509, %v1513
      %v1516 = vshll.u32 %v1436, 16
      %v1518 = vrot.slane %v1516, 1
      %v1519 = vsel %vm1447, %v1514, %v1518
      %v1521 = vshrl.u32 %v1389, 16
      %v1523 = vshll.u32 %v1389, 16
      %v1525 = vrot.slane %v1523, 1
      %v1526 = vor.u32 %v1521, %v1525
      %v1528 = vshll.u32 %v1437, 16
      %v1530 = vrot.slane %v1528, 1
      %v1531 = vsel %vm1447, %v1526, %v1530
      %v1533 = vshrl.u32 %v1390, 16
      %v1535 = vshll.u32 %v1390, 16
      %v1537 = vrot.slane %v1535, 1
      %v1538 = vor.u32 %v1533, %v1537
      %v1540 = vshll.u32 %v1438, 16
      %v1542 = vrot.slane %v1540, 1
      %v1543 = vsel %vm1447, %v1538, %v1542
      %v1545 = vshrl.u32 %v1391, 16
      %v1547 = vshll.u32 %v1391, 16
      %v1549 = vrot.slane %v1547, 1
      %v1550 = vor.u32 %v1545, %v1549
      %v1552 = vshll.u32 %v1439, 16
      %v1554 = vrot.slane %v1552, 1
      %v1555 = vsel %vm1447, %v1550, %v1554
      %v1557 = vshrl.u32 %v1392, 16
      %v1559 = vshll.u32 %v1392, 16
      %v1561 = vrot.slane %v1559, 1
      %v1562 = vor.u32 %v1557, %v1561
      %v1564 = vshll.u32 %v1440, 16
      %v1566 = vrot.slane %v1564, 1
      %v1567 = vsel %vm1447, %v1562, %v1566
      %v1569 = vshrl.u32 %v1393, 16
      %v1571 = vshll.u32 %v1393, 16
      %v1573 = vrot.slane %v1571, 1
      %v1574 = vor.u32 %v1569, %v1573
      %v1576 = vshll.u32 %v1441, 16
      %v1578 = vrot.slane %v1576, 1
      %v1579 = vsel %vm1447, %v1574, %v1578
      %v1581 = vshrl.u32 %v1394, 16
      %v1583 = vshll.u32 %v1394, 16
      %v1585 = vrot.slane %v1583, 1
      %v1586 = vor.u32 %v1581, %v1585
      %v1588 = vshll.u32 %v1442, 16
      %v1590 = vrot.slane %v1588, 1
      %v1591 = vsel %vm1447, %v1586, %v1590
      %v1593 = vshrl.u32 %v1395, 16
      %v1595 = vshll.u32 %v1395, 16
      %v1597 = vrot.slane %v1595, 1
      %v1598 = vor.u32 %v1593, %v1597
      %v1600 = vshll.u32 %v1443, 16
      %v1602 = vrot.slane %v1600, 1
      %v1603 = vsel %vm1447, %v1598, %v1602
      %v1605 = vshrl.u32 %v1396, 16
      %v1607 = vshll.u32 %v1396, 16
      %v1609 = vrot.slane %v1607, 1
      %v1610 = vor.u32 %v1605, %v1609
      %v1612 = vshll.u32 %v1444, 16
      %v1614 = vrot.slane %v1612, 1
      %v1615 = vsel %vm1447, %v1610, %v1614
      %v1617 = vshrl.u32 %v1397, 16
      %v1619 = vshll.u32 %v1397, 16
      %v1621 = vrot.slane %v1619, 1
      %v1622 = vor.u32 %v1617, %v1621
      %v1624 = vshll.u32 %v1445, 16
      %v1626 = vrot.slane %v1624, 1
      %v1627 = vsel %vm1447, %v1622, %v1626
      %v1629 = vshrl.u32 %v1398, 16
      %v1631 = vshll.u32 %v1398, 16
      %v1633 = vrot.slane %v1631, 1
      %v1634 = vor.u32 %v1629, %v1633
      %v1636 = vshll.u32 %v1446, 16
      %v1638 = vrot.slane %v1636, 1
      %v1639 = vsel %vm1447, %v1634, %v1638
      %1640 = vrot.lane.b32.xlu0 %v1459, 8
      %v1641 = vpop.permute.xlu0 %1640
      %1642 = vrot.lane.b32.xlu0 %v1471, 8
      %v1643 = vpop.permute.xlu0 %1642
      %1644 = vrot.lane.b32.xlu0 %v1483, 8
      %v1645 = vpop.permute.xlu0 %1644
      %1646 = vrot.lane.b32.xlu0 %v1495, 8
      %v1647 = vpop.permute.xlu0 %1646
      %1648 = vrot.lane.b32.xlu0 %v1507, 8
      %v1649 = vpop.permute.xlu0 %1648
      %1650 = vrot.lane.b32.xlu0 %v1519, 8
      %v1651 = vpop.permute.xlu0 %1650
      %1652 = vrot.lane.b32.xlu0 %v1531, 8
      %v1653 = vpop.permute.xlu0 %1652
      %1654 = vrot.lane.b32.xlu0 %v1543, 8
      %v1655 = vpop.permute.xlu0 %1654
      %1656 = vrot.lane.b32.xlu0 %v1555, 8
      %v1657 = vpop.permute.xlu0 %1656
      %1658 = vrot.lane.b32.xlu0 %v1567, 8
      %v1659 = vpop.permute.xlu0 %1658
      %1660 = vrot.lane.b32.xlu0 %v1579, 8
      %v1661 = vpop.permute.xlu0 %1660
      %1662 = vrot.lane.b32.xlu0 %v1591, 8
      %v1663 = vpop.permute.xlu0 %1662
      %1664 = vrot.lane.b32.xlu0 %v1603, 8
      %v1665 = vpop.permute.xlu0 %1664
      %1666 = vrot.lane.b32.xlu0 %v1615, 8
      %v1667 = vpop.permute.xlu0 %1666
      %1668 = vrot.lane.b32.xlu0 %v1627, 8
      %v1669 = vpop.permute.xlu0 %1668
      %1670 = vrot.lane.b32.xlu0 %v1639, 8
      %v1671 = vpop.permute.xlu0 %1670
      %v1688 = vunpack.c.l.b16 %v1174
      %v1689 = vunpack.c.l.b16 %v1175
      %v1690 = vunpack.c.l.b16 %v1176
      %v1691 = vunpack.c.l.b16 %v1177
      %v1692 = vunpack.c.l.b16 %v1178
      %v1693 = vunpack.c.l.b16 %v1179
      %v1694 = vunpack.c.l.b16 %v1180
      %v1695 = vunpack.c.l.b16 %v1181
      %v1696 = vunpack.c.l.b16 %v1182
      %v1697 = vunpack.c.l.b16 %v1183
      %v1698 = vunpack.c.l.b16 %v1184
      %v1699 = vunpack.c.l.b16 %v1185
      %v1700 = vunpack.c.l.b16 %v1186
      %v1701 = vunpack.c.l.b16 %v1187
      %v1702 = vunpack.c.l.b16 %v1188
      %v1703 = vunpack.c.l.b16 %v1189
      %v1704 = vpack.c.b16 %v1352, %v1688
      %v1705 = vpack.c.b16 %v1354, %v1689
      %v1706 = vpack.c.b16 %v1356, %v1690
      %v1707 = vpack.c.b16 %v1358, %v1691
      %v1708 = vpack.c.b16 %v1360, %v1692
      %v1709 = vpack.c.b16 %v1362, %v1693
      %v1710 = vpack.c.b16 %v1364, %v1694
      %v1711 = vpack.c.b16 %v1366, %v1695
      %v1712 = vpack.c.b16 %v1368, %v1696
      %v1713 = vpack.c.b16 %v1370, %v1697
      %v1714 = vpack.c.b16 %v1372, %v1698
      %v1715 = vpack.c.b16 %v1374, %v1699
      %v1716 = vpack.c.b16 %v1376, %v1700
      %v1717 = vpack.c.b16 %v1378, %v1701
      %v1718 = vpack.c.b16 %v1380, %v1702
      %v1719 = vpack.c.b16 %v1382, %v1703
      %vm1720 = vcmask 1046528
      %v1721 = vrot.slane %v1704, 1
      %v1722 = vrot.slane %v1431, 1
      %v1723 = vsel %vm1720, %v1721, %v1722
      %v1724 = vrot.slane %v1705, 1
      %v1725 = vrot.slane %v1432, 1
      %v1726 = vsel %vm1720, %v1724, %v1725
      %v1727 = vrot.slane %v1706, 1
      %v1728 = vrot.slane %v1433, 1
      %v1729 = vsel %vm1720, %v1727, %v1728
      %v1730 = vrot.slane %v1707, 1
      %v1731 = vrot.slane %v1434, 1
      %v1732 = vsel %vm1720, %v1730, %v1731
      %v1733 = vrot.slane %v1708, 1
      %v1734 = vrot.slane %v1435, 1
      %v1735 = vsel %vm1720, %v1733, %v1734
      %v1736 = vrot.slane %v1709, 1
      %v1737 = vrot.slane %v1436, 1
      %v1738 = vsel %vm1720, %v1736, %v1737
      %v1739 = vrot.slane %v1710, 1
      %v1740 = vrot.slane %v1437, 1
      %v1741 = vsel %vm1720, %v1739, %v1740
      %v1742 = vrot.slane %v1711, 1
      %v1743 = vrot.slane %v1438, 1
      %v1744 = vsel %vm1720, %v1742, %v1743
      %v1745 = vrot.slane %v1712, 1
      %v1746 = vrot.slane %v1439, 1
      %v1747 = vsel %vm1720, %v1745, %v1746
      %v1748 = vrot.slane %v1713, 1
      %v1749 = vrot.slane %v1440, 1
      %v1750 = vsel %vm1720, %v1748, %v1749
      %v1751 = vrot.slane %v1714, 1
      %v1752 = vrot.slane %v1441, 1
      %v1753 = vsel %vm1720, %v1751, %v1752
      %v1754 = vrot.slane %v1715, 1
      %v1755 = vrot.slane %v1442, 1
      %v1756 = vsel %vm1720, %v1754, %v1755
      %v1757 = vrot.slane %v1716, 1
      %v1758 = vrot.slane %v1443, 1
      %v1759 = vsel %vm1720, %v1757, %v1758
      %v1760 = vrot.slane %v1717, 1
      %v1761 = vrot.slane %v1444, 1
      %v1762 = vsel %vm1720, %v1760, %v1761
      %v1763 = vrot.slane %v1718, 1
      %v1764 = vrot.slane %v1445, 1
      %v1765 = vsel %vm1720, %v1763, %v1764
      %v1766 = vrot.slane %v1719, 1
      %v1767 = vrot.slane %v1446, 1
      %v1768 = vsel %vm1720, %v1766, %v1767
      %1769 = vrot.lane.b32.xlu0 %v1723, 16
      %v1770 = vpop.permute.xlu0 %1769
      %1771 = vrot.lane.b32.xlu0 %v1726, 16
      %v1772 = vpop.permute.xlu0 %1771
      %1773 = vrot.lane.b32.xlu0 %v1729, 16
      %v1774 = vpop.permute.xlu0 %1773
      %1775 = vrot.lane.b32.xlu0 %v1732, 16
      %v1776 = vpop.permute.xlu0 %1775
      %1777 = vrot.lane.b32.xlu0 %v1735, 16
      %v1778 = vpop.permute.xlu0 %1777
      %1779 = vrot.lane.b32.xlu0 %v1738, 16
      %v1780 = vpop.permute.xlu0 %1779
      %1781 = vrot.lane.b32.xlu0 %v1741, 16
      %v1782 = vpop.permute.xlu0 %1781
      %1783 = vrot.lane.b32.xlu0 %v1744, 16
      %v1784 = vpop.permute.xlu0 %1783
      %1785 = vrot.lane.b32.xlu0 %v1747, 16
      %v1786 = vpop.permute.xlu0 %1785
      %1787 = vrot.lane.b32.xlu0 %v1750, 16
      %v1788 = vpop.permute.xlu0 %1787
      %1789 = vrot.lane.b32.xlu0 %v1753, 16
      %v1790 = vpop.permute.xlu0 %1789
      %1791 = vrot.lane.b32.xlu0 %v1756, 16
      %v1792 = vpop.permute.xlu0 %1791
      %1793 = vrot.lane.b32.xlu0 %v1759, 16
      %v1794 = vpop.permute.xlu0 %1793
      %1795 = vrot.lane.b32.xlu0 %v1762, 16
      %v1796 = vpop.permute.xlu0 %1795
      %1797 = vrot.lane.b32.xlu0 %v1765, 16
      %v1798 = vpop.permute.xlu0 %1797
      %1799 = vrot.lane.b32.xlu0 %v1768, 16
      %v1800 = vpop.permute.xlu0 %1799
      %v1833 = vunpack.c.l.b16 %v1190
      %v1834 = vunpack.c.l.b16 %v1191
      %v1835 = vunpack.c.l.b16 %v1192
      %v1836 = vunpack.c.l.b16 %v1193
      %v1837 = vunpack.c.l.b16 %v1194
      %v1838 = vunpack.c.l.b16 %v1195
      %v1839 = vunpack.c.l.b16 %v1196
      %v1840 = vunpack.c.l.b16 %v1197
      %v1841 = vunpack.c.l.b16 %v1198
      %v1842 = vunpack.c.l.b16 %v1199
      %v1843 = vunpack.c.l.b16 %v1200
      %v1844 = vunpack.c.l.b16 %v1201
      %v1845 = vunpack.c.l.b16 %v1202
      %v1846 = vunpack.c.l.b16 %v1203
      %v1847 = vunpack.c.l.b16 %v1204
      %v1848 = vunpack.c.l.b16 %v1205
      %v1849 = vunpack.c.l.b16 %v1206
      %v1850 = vunpack.c.l.b16 %v1207
      %v1851 = vunpack.c.l.b16 %v1208
      %v1852 = vunpack.c.l.b16 %v1209
      %v1853 = vunpack.c.l.b16 %v1210
      %v1854 = vunpack.c.l.b16 %v1211
      %v1855 = vunpack.c.l.b16 %v1212
      %v1856 = vunpack.c.l.b16 %v1213
      %v1857 = vunpack.c.l.b16 %v1214
      %v1858 = vunpack.c.l.b16 %v1215
      %v1859 = vunpack.c.l.b16 %v1216
      %v1860 = vunpack.c.l.b16 %v1217
      %v1861 = vunpack.c.l.b16 %v1218
      %v1862 = vunpack.c.l.b16 %v1219
      %v1863 = vunpack.c.l.b16 %v1220
      %v1864 = vunpack.c.l.b16 %v1221
      %v1865 = vpack.c.b16 %v1834, %v1833
      %v1866 = vpack.c.b16 %v1836, %v1835
      %v1867 = vpack.c.b16 %v1838, %v1837
      %v1868 = vpack.c.b16 %v1840, %v1839
      %v1869 = vpack.c.b16 %v1842, %v1841
      %v1870 = vpack.c.b16 %v1844, %v1843
      %v1871 = vpack.c.b16 %v1846, %v1845
      %v1872 = vpack.c.b16 %v1848, %v1847
      %v1873 = vpack.c.b16 %v1850, %v1849
      %v1874 = vpack.c.b16 %v1852, %v1851
      %v1875 = vpack.c.b16 %v1854, %v1853
      %v1876 = vpack.c.b16 %v1856, %v1855
      %v1877 = vpack.c.b16 %v1858, %v1857
      %v1878 = vpack.c.b16 %v1860, %v1859
      %v1879 = vpack.c.b16 %v1862, %v1861
      %v1880 = vpack.c.b16 %v1864, %v1863
      %1881 = vrot.lane.b32.xlu0 %v1865, 24
      %v1882 = vpop.permute.xlu0 %1881
      %1883 = vrot.lane.b32.xlu0 %v1866, 24
      %v1884 = vpop.permute.xlu0 %1883
      %1885 = vrot.lane.b32.xlu0 %v1867, 24
      %v1886 = vpop.permute.xlu0 %1885
      %1887 = vrot.lane.b32.xlu0 %v1868, 24
      %v1888 = vpop.permute.xlu0 %1887
      %1889 = vrot.lane.b32.xlu0 %v1869, 24
      %v1890 = vpop.permute.xlu0 %1889
      %1891 = vrot.lane.b32.xlu0 %v1870, 24
      %v1892 = vpop.permute.xlu0 %1891
      %1893 = vrot.lane.b32.xlu0 %v1871, 24
      %v1894 = vpop.permute.xlu0 %1893
      %1895 = vrot.lane.b32.xlu0 %v1872, 24
      %v1896 = vpop.permute.xlu0 %1895
      %1897 = vrot.lane.b32.xlu0 %v1873, 24
      %v1898 = vpop.permute.xlu0 %1897
      %1899 = vrot.lane.b32.xlu0 %v1874, 24
      %v1900 = vpop.permute.xlu0 %1899
      %1901 = vrot.lane.b32.xlu0 %v1875, 24
      %v1902 = vpop.permute.xlu0 %1901
      %1903 = vrot.lane.b32.xlu0 %v1876, 24
      %v1904 = vpop.permute.xlu0 %1903
      %1905 = vrot.lane.b32.xlu0 %v1877, 24
      %v1906 = vpop.permute.xlu0 %1905
      %1907 = vrot.lane.b32.xlu0 %v1878, 24
      %v1908 = vpop.permute.xlu0 %1907
      %1909 = vrot.lane.b32.xlu0 %v1879, 24
      %v1910 = vpop.permute.xlu0 %1909
      %1911 = vrot.lane.b32.xlu0 %v1880, 24
      %v1912 = vpop.permute.xlu0 %1911
      %v1929 = vunpack.c.l.b16 %v1222
      %v1930 = vunpack.c.l.b16 %v1223
      %v1931 = vunpack.c.l.b16 %v1224
      %v1932 = vunpack.c.l.b16 %v1225
      %v1933 = vunpack.c.l.b16 %v1226
      %v1934 = vunpack.c.l.b16 %v1227
      %v1935 = vunpack.c.l.b16 %v1228
      %v1936 = vunpack.c.l.b16 %v1229
      %v1937 = vunpack.c.l.b16 %v1230
      %v1938 = vunpack.c.l.b16 %v1231
      %v1939 = vunpack.c.l.b16 %v1232
      %v1940 = vunpack.c.l.b16 %v1233
      %v1941 = vunpack.c.l.b16 %v1234
      %v1942 = vunpack.c.l.b16 %v1235
      %v1943 = vunpack.c.l.b16 %v1236
      %v1944 = vunpack.c.l.b16 %v1237
      %v1945 = vpack.c.b16 %v1929, %v1929
      %v1946 = vpack.c.b16 %v1930, %v1930
      %v1947 = vpack.c.b16 %v1931, %v1931
      %v1948 = vpack.c.b16 %v1932, %v1932
      %v1949 = vpack.c.b16 %v1933, %v1933
      %v1950 = vpack.c.b16 %v1934, %v1934
      %v1951 = vpack.c.b16 %v1935, %v1935
      %v1952 = vpack.c.b16 %v1936, %v1936
      %v1953 = vpack.c.b16 %v1937, %v1937
      %v1954 = vpack.c.b16 %v1938, %v1938
      %v1955 = vpack.c.b16 %v1939, %v1939
      %v1956 = vpack.c.b16 %v1940, %v1940
      %v1957 = vpack.c.b16 %v1941, %v1941
      %v1958 = vpack.c.b16 %v1942, %v1942
      %v1959 = vpack.c.b16 %v1943, %v1943
      %v1960 = vpack.c.b16 %v1944, %v1944
      %v1962 = vshrl.u32 %v1865, 16
      %v1964 = vshll.u32 %v1865, 16
      %v1966 = vrot.slane %v1964, 1
      %v1967 = vor.u32 %v1962, %v1966
      %v1969 = vshll.u32 %v1945, 16
      %v1971 = vrot.slane %v1969, 1
      %v1972 = vsel %vm1447, %v1967, %v1971
      %v1974 = vshrl.u32 %v1866, 16
      %v1976 = vshll.u32 %v1866, 16
      %v1978 = vrot.slane %v1976, 1
      %v1979 = vor.u32 %v1974, %v1978
      %v1981 = vshll.u32 %v1946, 16
      %v1983 = vrot.slane %v1981, 1
      %v1984 = vsel %vm1447, %v1979, %v1983
      %v1986 = vshrl.u32 %v1867, 16
      %v1988 = vshll.u32 %v1867, 16
      %v1990 = vrot.slane %v1988, 1
      %v1991 = vor.u32 %v1986, %v1990
      %v1993 = vshll.u32 %v1947, 16
      %v1995 = vrot.slane %v1993, 1
      %v1996 = vsel %vm1447, %v1991, %v1995
      %v1998 = vshrl.u32 %v1868, 16
      %v2000 = vshll.u32 %v1868, 16
      %v2002 = vrot.slane %v2000, 1
      %v2003 = vor.u32 %v1998, %v2002
      %v2005 = vshll.u32 %v1948, 16
      %v2007 = vrot.slane %v2005, 1
      %v2008 = vsel %vm1447, %v2003, %v2007
      %v2010 = vshrl.u32 %v1869, 16
      %v2012 = vshll.u32 %v1869, 16
      %v2014 = vrot.slane %v2012, 1
      %v2015 = vor.u32 %v2010, %v2014
      %v2017 = vshll.u32 %v1949, 16
      %v2019 = vrot.slane %v2017, 1
      %v2020 = vsel %vm1447, %v2015, %v2019
      %v2022 = vshrl.u32 %v1870, 16
      %v2024 = vshll.u32 %v1870, 16
      %v2026 = vrot.slane %v2024, 1
      %v2027 = vor.u32 %v2022, %v2026
      %v2029 = vshll.u32 %v1950, 16
      %v2031 = vrot.slane %v2029, 1
      %v2032 = vsel %vm1447, %v2027, %v2031
      %v2034 = vshrl.u32 %v1871, 16
      %v2036 = vshll.u32 %v1871, 16
      %v2038 = vrot.slane %v2036, 1
      %v2039 = vor.u32 %v2034, %v2038
      %v2041 = vshll.u32 %v1951, 16
      %v2043 = vrot.slane %v2041, 1
      %v2044 = vsel %vm1447, %v2039, %v2043
      %v2046 = vshrl.u32 %v1872, 16
      %v2048 = vshll.u32 %v1872, 16
      %v2050 = vrot.slane %v2048, 1
      %v2051 = vor.u32 %v2046, %v2050
      %v2053 = vshll.u32 %v1952, 16
      %v2055 = vrot.slane %v2053, 1
      %v2056 = vsel %vm1447, %v2051, %v2055
      %v2058 = vshrl.u32 %v1873, 16
      %v2060 = vshll.u32 %v1873, 16
      %v2062 = vrot.slane %v2060, 1
      %v2063 = vor.u32 %v2058, %v2062
      %v2065 = vshll.u32 %v1953, 16
      %v2067 = vrot.slane %v2065, 1
      %v2068 = vsel %vm1447, %v2063, %v2067
      %v2070 = vshrl.u32 %v1874, 16
      %v2072 = vshll.u32 %v1874, 16
      %v2074 = vrot.slane %v2072, 1
      %v2075 = vor.u32 %v2070, %v2074
      %v2077 = vshll.u32 %v1954, 16
      %v2079 = vrot.slane %v2077, 1
      %v2080 = vsel %vm1447, %v2075, %v2079
      %v2082 = vshrl.u32 %v1875, 16
      %v2084 = vshll.u32 %v1875, 16
      %v2086 = vrot.slane %v2084, 1
      %v2087 = vor.u32 %v2082, %v2086
      %v2089 = vshll.u32 %v1955, 16
      %v2091 = vrot.slane %v2089, 1
      %v2092 = vsel %vm1447, %v2087, %v2091
      %v2094 = vshrl.u32 %v1876, 16
      %v2096 = vshll.u32 %v1876, 16
      %v2098 = vrot.slane %v2096, 1
      %v2099 = vor.u32 %v2094, %v2098
      %v2101 = vshll.u32 %v1956, 16
      %v2103 = vrot.slane %v2101, 1
      %v2104 = vsel %vm1447, %v2099, %v2103
      %v2106 = vshrl.u32 %v1877, 16
      %v2108 = vshll.u32 %v1877, 16
      %v2110 = vrot.slane %v2108, 1
      %v2111 = vor.u32 %v2106, %v2110
      %v2113 = vshll.u32 %v1957, 16
      %v2115 = vrot.slane %v2113, 1
      %v2116 = vsel %vm1447, %v2111, %v2115
      %v2118 = vshrl.u32 %v1878, 16
      %v2120 = vshll.u32 %v1878, 16
      %v2122 = vrot.slane %v2120, 1
      %v2123 = vor.u32 %v2118, %v2122
      %v2125 = vshll.u32 %v1958, 16
      %v2127 = vrot.slane %v2125, 1
      %v2128 = vsel %vm1447, %v2123, %v2127
      %v2130 = vshrl.u32 %v1879, 16
      %v2132 = vshll.u32 %v1879, 16
      %v2134 = vrot.slane %v2132, 1
      %v2135 = vor.u32 %v2130, %v2134
      %v2137 = vshll.u32 %v1959, 16
      %v2139 = vrot.slane %v2137, 1
      %v2140 = vsel %vm1447, %v2135, %v2139
      %v2142 = vshrl.u32 %v1880, 16
      %v2144 = vshll.u32 %v1880, 16
      %v2146 = vrot.slane %v2144, 1
      %v2147 = vor.u32 %v2142, %v2146
      %v2149 = vshll.u32 %v1960, 16
      %v2151 = vrot.slane %v2149, 1
      %v2152 = vsel %vm1447, %v2147, %v2151
      %2153 = vrot.lane.b32.xlu0 %v1972, 32
      %v2154 = vpop.permute.xlu0 %2153
      %2155 = vrot.lane.b32.xlu0 %v1984, 32
      %v2156 = vpop.permute.xlu0 %2155
      %2157 = vrot.lane.b32.xlu0 %v1996, 32
      %v2158 = vpop.permute.xlu0 %2157
      %2159 = vrot.lane.b32.xlu0 %v2008, 32
      %v2160 = vpop.permute.xlu0 %2159
      %2161 = vrot.lane.b32.xlu0 %v2020, 32
      %v2162 = vpop.permute.xlu0 %2161
      %2163 = vrot.lane.b32.xlu0 %v2032, 32
      %v2164 = vpop.permute.xlu0 %2163
      %2165 = vrot.lane.b32.xlu0 %v2044, 32
      %v2166 = vpop.permute.xlu0 %2165
      %2167 = vrot.lane.b32.xlu0 %v2056, 32
      %v2168 = vpop.permute.xlu0 %2167
      %2169 = vrot.lane.b32.xlu0 %v2068, 32
      %v2170 = vpop.permute.xlu0 %2169
      %2171 = vrot.lane.b32.xlu0 %v2080, 32
      %v2172 = vpop.permute.xlu0 %2171
      %2173 = vrot.lane.b32.xlu0 %v2092, 32
      %v2174 = vpop.permute.xlu0 %2173
      %2175 = vrot.lane.b32.xlu0 %v2104, 32
      %v2176 = vpop.permute.xlu0 %2175
      %2177 = vrot.lane.b32.xlu0 %v2116, 32
      %v2178 = vpop.permute.xlu0 %2177
      %2179 = vrot.lane.b32.xlu0 %v2128, 32
      %v2180 = vpop.permute.xlu0 %2179
      %2181 = vrot.lane.b32.xlu0 %v2140, 32
      %v2182 = vpop.permute.xlu0 %2181
      %2183 = vrot.lane.b32.xlu0 %v2152, 32
      %v2184 = vpop.permute.xlu0 %2183
      %v2201 = vunpack.c.l.b16 %v1238
      %v2202 = vunpack.c.l.b16 %v1239
      %v2203 = vunpack.c.l.b16 %v1240
      %v2204 = vunpack.c.l.b16 %v1241
      %v2205 = vunpack.c.l.b16 %v1242
      %v2206 = vunpack.c.l.b16 %v1243
      %v2207 = vunpack.c.l.b16 %v1244
      %v2208 = vunpack.c.l.b16 %v1245
      %v2209 = vunpack.c.l.b16 %v1246
      %v2210 = vunpack.c.l.b16 %v1247
      %v2211 = vunpack.c.l.b16 %v1248
      %v2212 = vunpack.c.l.b16 %v1249
      %v2213 = vunpack.c.l.b16 %v1250
      %v2214 = vunpack.c.l.b16 %v1251
      %v2215 = vunpack.c.l.b16 %v1252
      %v2216 = vunpack.c.l.b16 %v1253
      %v2217 = vpack.c.b16 %v1834, %v2201
      %v2218 = vpack.c.b16 %v1836, %v2202
      %v2219 = vpack.c.b16 %v1838, %v2203
      %v2220 = vpack.c.b16 %v1840, %v2204
      %v2221 = vpack.c.b16 %v1842, %v2205
      %v2222 = vpack.c.b16 %v1844, %v2206
      %v2223 = vpack.c.b16 %v1846, %v2207
      %v2224 = vpack.c.b16 %v1848, %v2208
      %v2225 = vpack.c.b16 %v1850, %v2209
      %v2226 = vpack.c.b16 %v1852, %v2210
      %v2227 = vpack.c.b16 %v1854, %v2211
      %v2228 = vpack.c.b16 %v1856, %v2212
      %v2229 = vpack.c.b16 %v1858, %v2213
      %v2230 = vpack.c.b16 %v1860, %v2214
      %v2231 = vpack.c.b16 %v1862, %v2215
      %v2232 = vpack.c.b16 %v1864, %v2216
      %v2233 = vrot.slane %v2217, 1
      %v2234 = vrot.slane %v1945, 1
      %v2235 = vsel %vm1720, %v2233, %v2234
      %v2236 = vrot.slane %v2218, 1
      %v2237 = vrot.slane %v1946, 1
      %v2238 = vsel %vm1720, %v2236, %v2237
      %v2239 = vrot.slane %v2219, 1
      %v2240 = vrot.slane %v1947, 1
      %v2241 = vsel %vm1720, %v2239, %v2240
      %v2242 = vrot.slane %v2220, 1
      %v2243 = vrot.slane %v1948, 1
      %v2244 = vsel %vm1720, %v2242, %v2243
      %v2245 = vrot.slane %v2221, 1
      %v2246 = vrot.slane %v1949, 1
      %v2247 = vsel %vm1720, %v2245, %v2246
      %v2248 = vrot.slane %v2222, 1
      %v2249 = vrot.slane %v1950, 1
      %v2250 = vsel %vm1720, %v2248, %v2249
      %v2251 = vrot.slane %v2223, 1
      %v2252 = vrot.slane %v1951, 1
      %v2253 = vsel %vm1720, %v2251, %v2252
      %v2254 = vrot.slane %v2224, 1
      %v2255 = vrot.slane %v1952, 1
      %v2256 = vsel %vm1720, %v2254, %v2255
      %v2257 = vrot.slane %v2225, 1
      %v2258 = vrot.slane %v1953, 1
      %v2259 = vsel %vm1720, %v2257, %v2258
      %v2260 = vrot.slane %v2226, 1
      %v2261 = vrot.slane %v1954, 1
      %v2262 = vsel %vm1720, %v2260, %v2261
      %v2263 = vrot.slane %v2227, 1
      %v2264 = vrot.slane %v1955, 1
      %v2265 = vsel %vm1720, %v2263, %v2264
      %v2266 = vrot.slane %v2228, 1
      %v2267 = vrot.slane %v1956, 1
      %v2268 = vsel %vm1720, %v2266, %v2267
      %v2269 = vrot.slane %v2229, 1
      %v2270 = vrot.slane %v1957, 1
      %v2271 = vsel %vm1720, %v2269, %v2270
      %v2272 = vrot.slane %v2230, 1
      %v2273 = vrot.slane %v1958, 1
      %v2274 = vsel %vm1720, %v2272, %v2273
      %v2275 = vrot.slane %v2231, 1
      %v2276 = vrot.slane %v1959, 1
      %v2277 = vsel %vm1720, %v2275, %v2276
      %v2278 = vrot.slane %v2232, 1
      %v2279 = vrot.slane %v1960, 1
      %v2280 = vsel %vm1720, %v2278, %v2279
      %2281 = vrot.lane.b32.xlu0 %v2235, 40
      %v2282 = vpop.permute.xlu0 %2281
      %2283 = vrot.lane.b32.xlu0 %v2238, 40
      %v2284 = vpop.permute.xlu0 %2283
      %2285 = vrot.lane.b32.xlu0 %v2241, 40
      %v2286 = vpop.permute.xlu0 %2285
      %2287 = vrot.lane.b32.xlu0 %v2244, 40
      %v2288 = vpop.permute.xlu0 %2287
      %2289 = vrot.lane.b32.xlu0 %v2247, 40
      %v2290 = vpop.permute.xlu0 %2289
      %2291 = vrot.lane.b32.xlu0 %v2250, 40
      %v2292 = vpop.permute.xlu0 %2291
      %2293 = vrot.lane.b32.xlu0 %v2253, 40
      %v2294 = vpop.permute.xlu0 %2293
      %2295 = vrot.lane.b32.xlu0 %v2256, 40
      %v2296 = vpop.permute.xlu0 %2295
      %2297 = vrot.lane.b32.xlu0 %v2259, 40
      %v2298 = vpop.permute.xlu0 %2297
      %2299 = vrot.lane.b32.xlu0 %v2262, 40
      %v2300 = vpop.permute.xlu0 %2299
      %2301 = vrot.lane.b32.xlu0 %v2265, 40
      %v2302 = vpop.permute.xlu0 %2301
      %2303 = vrot.lane.b32.xlu0 %v2268, 40
      %v2304 = vpop.permute.xlu0 %2303
      %2305 = vrot.lane.b32.xlu0 %v2271, 40
      %v2306 = vpop.permute.xlu0 %2305
      %2307 = vrot.lane.b32.xlu0 %v2274, 40
      %v2308 = vpop.permute.xlu0 %2307
      %2309 = vrot.lane.b32.xlu0 %v2277, 40
      %v2310 = vpop.permute.xlu0 %2309
      %2311 = vrot.lane.b32.xlu0 %v2280, 40
      %v2312 = vpop.permute.xlu0 %2311
      %v2345 = vunpack.c.l.b16 %v1255
      %v2346 = vunpack.c.l.b16 %v1256
      %v2347 = vunpack.c.l.b16 %v1257
      %v2348 = vunpack.c.l.b16 %v1258
      %v2349 = vunpack.c.l.b16 %v1259
      %v2350 = vunpack.c.l.b16 %v1260
      %v2351 = vunpack.c.l.b16 %v1261
      %v2352 = vunpack.c.l.b16 %v1262
      %v2353 = vunpack.c.l.b16 %v1263
      %v2354 = vunpack.c.l.b16 %v1264
      %v2355 = vunpack.c.l.b16 %v1265
      %v2356 = vunpack.c.l.b16 %v1266
      %v2357 = vunpack.c.l.b16 %v1267
      %v2358 = vunpack.c.l.b16 %v1268
      %v2359 = vunpack.c.l.b16 %v1269
      %v2360 = vunpack.c.l.b16 %v1270
      %v2361 = vunpack.c.l.b16 %v1271
      %v2362 = vunpack.c.l.b16 %v1272
      %v2363 = vunpack.c.l.b16 %v1273
      %v2364 = vunpack.c.l.b16 %v1274
      %v2365 = vunpack.c.l.b16 %v1275
      %v2366 = vunpack.c.l.b16 %v1276
      %v2367 = vunpack.c.l.b16 %v1277
      %v2368 = vunpack.c.l.b16 %v1278
      %v2369 = vunpack.c.l.b16 %v1279
      %v2370 = vunpack.c.l.b16 %v1280
      %v2371 = vunpack.c.l.b16 %v1281
      %v2372 = vunpack.c.l.b16 %v1282
      %v2373 = vunpack.c.l.b16 %v1283
      %v2374 = vunpack.c.l.b16 %v1284
      %v2375 = vunpack.c.l.b16 %v1285
      %v2376 = vunpack.c.l.b16 %v1286
      %v2377 = vpack.c.b16 %v2346, %v2345
      %v2378 = vpack.c.b16 %v2348, %v2347
      %v2379 = vpack.c.b16 %v2350, %v2349
      %v2380 = vpack.c.b16 %v2352, %v2351
      %v2381 = vpack.c.b16 %v2354, %v2353
      %v2382 = vpack.c.b16 %v2356, %v2355
      %v2383 = vpack.c.b16 %v2358, %v2357
      %v2384 = vpack.c.b16 %v2360, %v2359
      %v2385 = vpack.c.b16 %v2362, %v2361
      %v2386 = vpack.c.b16 %v2364, %v2363
      %v2387 = vpack.c.b16 %v2366, %v2365
      %v2388 = vpack.c.b16 %v2368, %v2367
      %v2389 = vpack.c.b16 %v2370, %v2369
      %v2390 = vpack.c.b16 %v2372, %v2371
      %v2391 = vpack.c.b16 %v2374, %v2373
      %v2392 = vpack.c.b16 %v2376, %v2375
      %2393 = vrot.lane.b32.xlu0 %v2377, 48
      %v2394 = vpop.permute.xlu0 %2393
      %2395 = vrot.lane.b32.xlu0 %v2378, 48
      %v2396 = vpop.permute.xlu0 %2395
      %2397 = vrot.lane.b32.xlu0 %v2379, 48
      %v2398 = vpop.permute.xlu0 %2397
      %2399 = vrot.lane.b32.xlu0 %v2380, 48
      %v2400 = vpop.permute.xlu0 %2399
      %2401 = vrot.lane.b32.xlu0 %v2381, 48
      %v2402 = vpop.permute.xlu0 %2401
      %2403 = vrot.lane.b32.xlu0 %v2382, 48
      %v2404 = vpop.permute.xlu0 %2403
      %2405 = vrot.lane.b32.xlu0 %v2383, 48
      %v2406 = vpop.permute.xlu0 %2405
      %2407 = vrot.lane.b32.xlu0 %v2384, 48
      %v2408 = vpop.permute.xlu0 %2407
      %2409 = vrot.lane.b32.xlu0 %v2385, 48
      %v2410 = vpop.permute.xlu0 %2409
      %2411 = vrot.lane.b32.xlu0 %v2386, 48
      %v2412 = vpop.permute.xlu0 %2411
      %2413 = vrot.lane.b32.xlu0 %v2387, 48
      %v2414 = vpop.permute.xlu0 %2413
      %2415 = vrot.lane.b32.xlu0 %v2388, 48
      %v2416 = vpop.permute.xlu0 %2415
      %2417 = vrot.lane.b32.xlu0 %v2389, 48
      %v2418 = vpop.permute.xlu0 %2417
      %2419 = vrot.lane.b32.xlu0 %v2390, 48
      %v2420 = vpop.permute.xlu0 %2419
      %2421 = vrot.lane.b32.xlu0 %v2391, 48
      %v2422 = vpop.permute.xlu0 %2421
      %2423 = vrot.lane.b32.xlu0 %v2392, 48
      %v2424 = vpop.permute.xlu0 %2423
      %v2441 = vunpack.c.l.b16 %v1287
      %v2442 = vunpack.c.l.b16 %v1288
      %v2443 = vunpack.c.l.b16 %v1289
      %v2444 = vunpack.c.l.b16 %v1290
      %v2445 = vunpack.c.l.b16 %v1291
      %v2446 = vunpack.c.l.b16 %v1292
      %v2447 = vunpack.c.l.b16 %v1293
      %v2448 = vunpack.c.l.b16 %v1294
      %v2449 = vunpack.c.l.b16 %v1295
      %v2450 = vunpack.c.l.b16 %v1296
      %v2451 = vunpack.c.l.b16 %v1297
      %v2452 = vunpack.c.l.b16 %v1298
      %v2453 = vunpack.c.l.b16 %v1299
      %v2454 = vunpack.c.l.b16 %v1300
      %v2455 = vunpack.c.l.b16 %v1301
      %v2456 = vunpack.c.l.b16 %v1302
      %v2457 = vpack.c.b16 %v2441, %v2441
      %v2458 = vpack.c.b16 %v2442, %v2442
      %v2459 = vpack.c.b16 %v2443, %v2443
      %v2460 = vpack.c.b16 %v2444, %v2444
      %v2461 = vpack.c.b16 %v2445, %v2445
      %v2462 = vpack.c.b16 %v2446, %v2446
      %v2463 = vpack.c.b16 %v2447, %v2447
      %v2464 = vpack.c.b16 %v2448, %v2448
      %v2465 = vpack.c.b16 %v2449, %v2449
      %v2466 = vpack.c.b16 %v2450, %v2450
      %v2467 = vpack.c.b16 %v2451, %v2451
      %v2468 = vpack.c.b16 %v2452, %v2452
      %v2469 = vpack.c.b16 %v2453, %v2453
      %v2470 = vpack.c.b16 %v2454, %v2454
      %v2471 = vpack.c.b16 %v2455, %v2455
      %v2472 = vpack.c.b16 %v2456, %v2456
      %v2474 = vshrl.u32 %v2377, 16
      %v2476 = vshll.u32 %v2377, 16
      %v2478 = vrot.slane %v2476, 1
      %v2479 = vor.u32 %v2474, %v2478
      %v2481 = vshll.u32 %v2457, 16
      %v2483 = vrot.slane %v2481, 1
      %v2484 = vsel %vm1447, %v2479, %v2483
      %v2486 = vshrl.u32 %v2378, 16
      %v2488 = vshll.u32 %v2378, 16
      %v2490 = vrot.slane %v2488, 1
      %v2491 = vor.u32 %v2486, %v2490
      %v2493 = vshll.u32 %v2458, 16
      %v2495 = vrot.slane %v2493, 1
      %v2496 = vsel %vm1447, %v2491, %v2495
      %v2498 = vshrl.u32 %v2379, 16
      %v2500 = vshll.u32 %v2379, 16
      %v2502 = vrot.slane %v2500, 1
      %v2503 = vor.u32 %v2498, %v2502
      %v2505 = vshll.u32 %v2459, 16
      %v2507 = vrot.slane %v2505, 1
      %v2508 = vsel %vm1447, %v2503, %v2507
      %v2510 = vshrl.u32 %v2380, 16
      %v2512 = vshll.u32 %v2380, 16
      %v2514 = vrot.slane %v2512, 1
      %v2515 = vor.u32 %v2510, %v2514
      %v2517 = vshll.u32 %v2460, 16
      %v2519 = vrot.slane %v2517, 1
      %v2520 = vsel %vm1447, %v2515, %v2519
      %v2522 = vshrl.u32 %v2381, 16
      %v2524 = vshll.u32 %v2381, 16
      %v2526 = vrot.slane %v2524, 1
      %v2527 = vor.u32 %v2522, %v2526
      %v2529 = vshll.u32 %v2461, 16
      %v2531 = vrot.slane %v2529, 1
      %v2532 = vsel %vm1447, %v2527, %v2531
      %v2534 = vshrl.u32 %v2382, 16
      %v2536 = vshll.u32 %v2382, 16
      %v2538 = vrot.slane %v2536, 1
      %v2539 = vor.u32 %v2534, %v2538
      %v2541 = vshll.u32 %v2462, 16
      %v2543 = vrot.slane %v2541, 1
      %v2544 = vsel %vm1447, %v2539, %v2543
      %v2546 = vshrl.u32 %v2383, 16
      %v2548 = vshll.u32 %v2383, 16
      %v2550 = vrot.slane %v2548, 1
      %v2551 = vor.u32 %v2546, %v2550
      %v2553 = vshll.u32 %v2463, 16
      %v2555 = vrot.slane %v2553, 1
      %v2556 = vsel %vm1447, %v2551, %v2555
      %v2558 = vshrl.u32 %v2384, 16
      %v2560 = vshll.u32 %v2384, 16
      %v2562 = vrot.slane %v2560, 1
      %v2563 = vor.u32 %v2558, %v2562
      %v2565 = vshll.u32 %v2464, 16
      %v2567 = vrot.slane %v2565, 1
      %v2568 = vsel %vm1447, %v2563, %v2567
      %v2570 = vshrl.u32 %v2385, 16
      %v2572 = vshll.u32 %v2385, 16
      %v2574 = vrot.slane %v2572, 1
      %v2575 = vor.u32 %v2570, %v2574
      %v2577 = vshll.u32 %v2465, 16
      %v2579 = vrot.slane %v2577, 1
      %v2580 = vsel %vm1447, %v2575, %v2579
      %v2582 = vshrl.u32 %v2386, 16
      %v2584 = vshll.u32 %v2386, 16
      %v2586 = vrot.slane %v2584, 1
      %v2587 = vor.u32 %v2582, %v2586
      %v2589 = vshll.u32 %v2466, 16
      %v2591 = vrot.slane %v2589, 1
      %v2592 = vsel %vm1447, %v2587, %v2591
      %v2594 = vshrl.u32 %v2387, 16
      %v2596 = vshll.u32 %v2387, 16
      %v2598 = vrot.slane %v2596, 1
      %v2599 = vor.u32 %v2594, %v2598
      %v2601 = vshll.u32 %v2467, 16
      %v2603 = vrot.slane %v2601, 1
      %v2604 = vsel %vm1447, %v2599, %v2603
      %v2606 = vshrl.u32 %v2388, 16
      %v2608 = vshll.u32 %v2388, 16
      %v2610 = vrot.slane %v2608, 1
      %v2611 = vor.u32 %v2606, %v2610
      %v2613 = vshll.u32 %v2468, 16
      %v2615 = vrot.slane %v2613, 1
      %v2616 = vsel %vm1447, %v2611, %v2615
      %v2618 = vshrl.u32 %v2389, 16
      %v2620 = vshll.u32 %v2389, 16
      %v2622 = vrot.slane %v2620, 1
      %v2623 = vor.u32 %v2618, %v2622
      %v2625 = vshll.u32 %v2469, 16
      %v2627 = vrot.slane %v2625, 1
      %v2628 = vsel %vm1447, %v2623, %v2627
      %v2630 = vshrl.u32 %v2390, 16
      %v2632 = vshll.u32 %v2390, 16
      %v2634 = vrot.slane %v2632, 1
      %v2635 = vor.u32 %v2630, %v2634
      %v2637 = vshll.u32 %v2470, 16
      %v2639 = vrot.slane %v2637, 1
      %v2640 = vsel %vm1447, %v2635, %v2639
      %v2642 = vshrl.u32 %v2391, 16
      %v2644 = vshll.u32 %v2391, 16
      %v2646 = vrot.slane %v2644, 1
      %v2647 = vor.u32 %v2642, %v2646
      %v2649 = vshll.u32 %v2471, 16
      %v2651 = vrot.slane %v2649, 1
      %v2652 = vsel %vm1447, %v2647, %v2651
      %v2654 = vshrl.u32 %v2392, 16
      %v2656 = vshll.u32 %v2392, 16
      %v2658 = vrot.slane %v2656, 1
      %v2659 = vor.u32 %v2654, %v2658
      %v2661 = vshll.u32 %v2472, 16
      %v2663 = vrot.slane %v2661, 1
      %v2664 = vsel %vm1447, %v2659, %v2663
      %2665 = vrot.lane.b32.xlu0 %v2484, 56
      %v2666 = vpop.permute.xlu0 %2665
      %2667 = vrot.lane.b32.xlu0 %v2496, 56
      %v2668 = vpop.permute.xlu0 %2667
      %2669 = vrot.lane.b32.xlu0 %v2508, 56
      %v2670 = vpop.permute.xlu0 %2669
      %2671 = vrot.lane.b32.xlu0 %v2520, 56
      %v2672 = vpop.permute.xlu0 %2671
      %2673 = vrot.lane.b32.xlu0 %v2532, 56
      %v2674 = vpop.permute.xlu0 %2673
      %2675 = vrot.lane.b32.xlu0 %v2544, 56
      %v2676 = vpop.permute.xlu0 %2675
      %2677 = vrot.lane.b32.xlu0 %v2556, 56
      %v2678 = vpop.permute.xlu0 %2677
      %2679 = vrot.lane.b32.xlu0 %v2568, 56
      %v2680 = vpop.permute.xlu0 %2679
      %2681 = vrot.lane.b32.xlu0 %v2580, 56
      %v2682 = vpop.permute.xlu0 %2681
      %2683 = vrot.lane.b32.xlu0 %v2592, 56
      %v2684 = vpop.permute.xlu0 %2683
      %2685 = vrot.lane.b32.xlu0 %v2604, 56
      %v2686 = vpop.permute.xlu0 %2685
      %2687 = vrot.lane.b32.xlu0 %v2616, 56
      %v2688 = vpop.permute.xlu0 %2687
      %2689 = vrot.lane.b32.xlu0 %v2628, 56
      %v2690 = vpop.permute.xlu0 %2689
      %2691 = vrot.lane.b32.xlu0 %v2640, 56
      %v2692 = vpop.permute.xlu0 %2691
      %2693 = vrot.lane.b32.xlu0 %v2652, 56
      %v2694 = vpop.permute.xlu0 %2693
      %2695 = vrot.lane.b32.xlu0 %v2664, 56
      %v2696 = vpop.permute.xlu0 %2695
      %v2713 = vunpack.c.l.b16 %v1303
      %v2714 = vunpack.c.l.b16 %v1304
      %v2715 = vunpack.c.l.b16 %v1305
      %v2716 = vunpack.c.l.b16 %v1306
      %v2717 = vunpack.c.l.b16 %v1307
      %v2718 = vunpack.c.l.b16 %v1308
      %v2719 = vunpack.c.l.b16 %v1309
      %v2720 = vunpack.c.l.b16 %v1310
      %v2721 = vunpack.c.l.b16 %v1311
      %v2722 = vunpack.c.l.b16 %v1312
      %v2723 = vunpack.c.l.b16 %v1313
      %v2724 = vunpack.c.l.b16 %v1314
      %v2725 = vunpack.c.l.b16 %v1315
      %v2726 = vunpack.c.l.b16 %v1316
      %v2727 = vunpack.c.l.b16 %v1317
      %v2728 = vunpack.c.l.b16 %v1318
      %v2729 = vpack.c.b16 %v2346, %v2713
      %v2730 = vpack.c.b16 %v2348, %v2714
      %v2731 = vpack.c.b16 %v2350, %v2715
      %v2732 = vpack.c.b16 %v2352, %v2716
      %v2733 = vpack.c.b16 %v2354, %v2717
      %v2734 = vpack.c.b16 %v2356, %v2718
      %v2735 = vpack.c.b16 %v2358, %v2719
      %v2736 = vpack.c.b16 %v2360, %v2720
      %v2737 = vpack.c.b16 %v2362, %v2721
      %v2738 = vpack.c.b16 %v2364, %v2722
      %v2739 = vpack.c.b16 %v2366, %v2723
      %v2740 = vpack.c.b16 %v2368, %v2724
      %v2741 = vpack.c.b16 %v2370, %v2725
      %v2742 = vpack.c.b16 %v2372, %v2726
      %v2743 = vpack.c.b16 %v2374, %v2727
      %v2744 = vpack.c.b16 %v2376, %v2728
      %v2745 = vrot.slane %v2729, 1
      %v2746 = vrot.slane %v2457, 1
      %v2747 = vsel %vm1720, %v2745, %v2746
      %v2748 = vrot.slane %v2730, 1
      %v2749 = vrot.slane %v2458, 1
      %v2750 = vsel %vm1720, %v2748, %v2749
      %v2751 = vrot.slane %v2731, 1
      %v2752 = vrot.slane %v2459, 1
      %v2753 = vsel %vm1720, %v2751, %v2752
      %v2754 = vrot.slane %v2732, 1
      %v2755 = vrot.slane %v2460, 1
      %v2756 = vsel %vm1720, %v2754, %v2755
      %v2757 = vrot.slane %v2733, 1
      %v2758 = vrot.slane %v2461, 1
      %v2759 = vsel %vm1720, %v2757, %v2758
      %v2760 = vrot.slane %v2734, 1
      %v2761 = vrot.slane %v2462, 1
      %v2762 = vsel %vm1720, %v2760, %v2761
      %v2763 = vrot.slane %v2735, 1
      %v2764 = vrot.slane %v2463, 1
      %v2765 = vsel %vm1720, %v2763, %v2764
      %v2766 = vrot.slane %v2736, 1
      %v2767 = vrot.slane %v2464, 1
      %v2768 = vsel %vm1720, %v2766, %v2767
      %v2769 = vrot.slane %v2737, 1
      %v2770 = vrot.slane %v2465, 1
      %v2771 = vsel %vm1720, %v2769, %v2770
      %v2772 = vrot.slane %v2738, 1
      %v2773 = vrot.slane %v2466, 1
      %v2774 = vsel %vm1720, %v2772, %v2773
      %v2775 = vrot.slane %v2739, 1
      %v2776 = vrot.slane %v2467, 1
      %v2777 = vsel %vm1720, %v2775, %v2776
      %v2778 = vrot.slane %v2740, 1
      %v2779 = vrot.slane %v2468, 1
      %v2780 = vsel %vm1720, %v2778, %v2779
      %v2781 = vrot.slane %v2741, 1
      %v2782 = vrot.slane %v2469, 1
      %v2783 = vsel %vm1720, %v2781, %v2782
      %v2784 = vrot.slane %v2742, 1
      %v2785 = vrot.slane %v2470, 1
      %v2786 = vsel %vm1720, %v2784, %v2785
      %v2787 = vrot.slane %v2743, 1
      %v2788 = vrot.slane %v2471, 1
      %v2789 = vsel %vm1720, %v2787, %v2788
      %v2790 = vrot.slane %v2744, 1
      %v2791 = vrot.slane %v2472, 1
      %v2792 = vsel %vm1720, %v2790, %v2791
      %2793 = vrot.lane.b32.xlu0 %v2747, 64
      %v2794 = vpop.permute.xlu0 %2793
      %2795 = vrot.lane.b32.xlu0 %v2750, 64
      %v2796 = vpop.permute.xlu0 %2795
      %2797 = vrot.lane.b32.xlu0 %v2753, 64
      %v2798 = vpop.permute.xlu0 %2797
      %2799 = vrot.lane.b32.xlu0 %v2756, 64
      %v2800 = vpop.permute.xlu0 %2799
      %2801 = vrot.lane.b32.xlu0 %v2759, 64
      %v2802 = vpop.permute.xlu0 %2801
      %2803 = vrot.lane.b32.xlu0 %v2762, 64
      %v2804 = vpop.permute.xlu0 %2803
      %2805 = vrot.lane.b32.xlu0 %v2765, 64
      %v2806 = vpop.permute.xlu0 %2805
      %2807 = vrot.lane.b32.xlu0 %v2768, 64
      %v2808 = vpop.permute.xlu0 %2807
      %2809 = vrot.lane.b32.xlu0 %v2771, 64
      %v2810 = vpop.permute.xlu0 %2809
      %2811 = vrot.lane.b32.xlu0 %v2774, 64
      %v2812 = vpop.permute.xlu0 %2811
      %2813 = vrot.lane.b32.xlu0 %v2777, 64
      %v2814 = vpop.permute.xlu0 %2813
      %2815 = vrot.lane.b32.xlu0 %v2780, 64
      %v2816 = vpop.permute.xlu0 %2815
      %2817 = vrot.lane.b32.xlu0 %v2783, 64
      %v2818 = vpop.permute.xlu0 %2817
      %2819 = vrot.lane.b32.xlu0 %v2786, 64
      %v2820 = vpop.permute.xlu0 %2819
      %2821 = vrot.lane.b32.xlu0 %v2789, 64
      %v2822 = vpop.permute.xlu0 %2821
      %2823 = vrot.lane.b32.xlu0 %v2792, 64
      %v2824 = vpop.permute.xlu0 %2823
      %vm2825 = vcmask 64512
      %v2827 = vsel %vm2825, %v1383, %v1641
      %v2829 = vsel %vm2825, %v1384, %v1643
      %v2831 = vsel %vm2825, %v1385, %v1645
      %v2833 = vsel %vm2825, %v1386, %v1647
      %v2835 = vsel %vm2825, %v1387, %v1649
      %v2837 = vsel %vm2825, %v1388, %v1651
      %v2839 = vsel %vm2825, %v1389, %v1653
      %v2841 = vsel %vm2825, %v1390, %v1655
      %v2843 = vsel %vm2825, %v1391, %v1657
      %v2845 = vsel %vm2825, %v1392, %v1659
      %v2847 = vsel %vm2825, %v1393, %v1661
      %v2849 = vsel %vm2825, %v1394, %v1663
      %v2851 = vsel %vm2825, %v1395, %v1665
      %v2853 = vsel %vm2825, %v1396, %v1667
      %v2855 = vsel %vm2825, %v1397, %v1669
      %v2857 = vsel %vm2825, %v1398, %v1671
      %vm2858 = vcmask 130048
      %v2860 = vsel %vm2858, %v2827, %v1770
      %v2862 = vsel %vm2858, %v2829, %v1772
      %v2864 = vsel %vm2858, %v2831, %v1774
      %v2866 = vsel %vm2858, %v2833, %v1776
      %v2868 = vsel %vm2858, %v2835, %v1778
      %v2870 = vsel %vm2858, %v2837, %v1780
      %v2872 = vsel %vm2858, %v2839, %v1782
      %v2874 = vsel %vm2858, %v2841, %v1784
      %v2876 = vsel %vm2858, %v2843, %v1786
      %v2878 = vsel %vm2858, %v2845, %v1788
      %v2880 = vsel %vm2858, %v2847, %v1790
      %v2882 = vsel %vm2858, %v2849, %v1792
      %v2884 = vsel %vm2858, %v2851, %v1794
      %v2886 = vsel %vm2858, %v2853, %v1796
      %v2888 = vsel %vm2858, %v2855, %v1798
      %v2890 = vsel %vm2858, %v2857, %v1800
      %vm2891 = vcmask 195584
      %v2893 = vsel %vm2891, %v2860, %v1882
      %v2895 = vsel %vm2891, %v2862, %v1884
      %v2897 = vsel %vm2891, %v2864, %v1886
      %v2899 = vsel %vm2891, %v2866, %v1888
      %v2901 = vsel %vm2891, %v2868, %v1890
      %v2903 = vsel %vm2891, %v2870, %v1892
      %v2905 = vsel %vm2891, %v2872, %v1894
      %v2907 = vsel %vm2891, %v2874, %v1896
      %v2909 = vsel %vm2891, %v2876, %v1898
      %v2911 = vsel %vm2891, %v2878, %v1900
      %v2913 = vsel %vm2891, %v2880, %v1902
      %v2915 = vsel %vm2891, %v2882, %v1904
      %v2917 = vsel %vm2891, %v2884, %v1906
      %v2919 = vsel %vm2891, %v2886, %v1908
      %v2921 = vsel %vm2891, %v2888, %v1910
      %v2923 = vsel %vm2891, %v2890, %v1912
      %vm2924 = vcmask 261120
      %v2926 = vsel %vm2924, %v2893, %v2154
      %v2928 = vsel %vm2924, %v2895, %v2156
      %v2930 = vsel %vm2924, %v2897, %v2158
      %v2932 = vsel %vm2924, %v2899, %v2160
      %v2934 = vsel %vm2924, %v2901, %v2162
      %v2936 = vsel %vm2924, %v2903, %v2164
      %v2938 = vsel %vm2924, %v2905, %v2166
      %v2940 = vsel %vm2924, %v2907, %v2168
      %v2942 = vsel %vm2924, %v2909, %v2170
      %v2944 = vsel %vm2924, %v2911, %v2172
      %v2946 = vsel %vm2924, %v2913, %v2174
      %v2948 = vsel %vm2924, %v2915, %v2176
      %v2950 = vsel %vm2924, %v2917, %v2178
      %v2952 = vsel %vm2924, %v2919, %v2180
      %v2954 = vsel %vm2924, %v2921, %v2182
      %v2956 = vsel %vm2924, %v2923, %v2184
      %vm2957 = vcmask 326656
      %v2959 = vsel %vm2957, %v2926, %v2282
      %v2961 = vsel %vm2957, %v2928, %v2284
      %v2963 = vsel %vm2957, %v2930, %v2286
      %v2965 = vsel %vm2957, %v2932, %v2288
      %v2967 = vsel %vm2957, %v2934, %v2290
      %v2969 = vsel %vm2957, %v2936, %v2292
      %v2971 = vsel %vm2957, %v2938, %v2294
      %v2973 = vsel %vm2957, %v2940, %v2296
      %v2975 = vsel %vm2957, %v2942, %v2298
      %v2977 = vsel %vm2957, %v2944, %v2300
      %v2979 = vsel %vm2957, %v2946, %v2302
      %v2981 = vsel %vm2957, %v2948, %v2304
      %v2983 = vsel %vm2957, %v2950, %v2306
      %v2985 = vsel %vm2957, %v2952, %v2308
      %v2987 = vsel %vm2957, %v2954, %v2310
      %v2989 = vsel %vm2957, %v2956, %v2312
      %vm2990 = vcmask 392192
      %v2992 = vsel %vm2990, %v2959, %v2394
      %v2994 = vsel %vm2990, %v2961, %v2396
      %v2996 = vsel %vm2990, %v2963, %v2398
      %v2998 = vsel %vm2990, %v2965, %v2400
      %v3000 = vsel %vm2990, %v2967, %v2402
      %v3002 = vsel %vm2990, %v2969, %v2404
      %v3004 = vsel %vm2990, %v2971, %v2406
      %v3006 = vsel %vm2990, %v2973, %v2408
      %v3008 = vsel %vm2990, %v2975, %v2410
      %v3010 = vsel %vm2990, %v2977, %v2412
      %v3012 = vsel %vm2990, %v2979, %v2414
      %v3014 = vsel %vm2990, %v2981, %v2416
      %v3016 = vsel %vm2990, %v2983, %v2418
      %v3018 = vsel %vm2990, %v2985, %v2420
      %v3020 = vsel %vm2990, %v2987, %v2422
      %v3022 = vsel %vm2990, %v2989, %v2424
      %vm3023 = vcmask 457728
      %v3025 = vsel %vm3023, %v2992, %v2666
      %v3027 = vsel %vm3023, %v2994, %v2668
      %v3029 = vsel %vm3023, %v2996, %v2670
      %v3031 = vsel %vm3023, %v2998, %v2672
      %v3033 = vsel %vm3023, %v3000, %v2674
      %v3035 = vsel %vm3023, %v3002, %v2676
      %v3037 = vsel %vm3023, %v3004, %v2678
      %v3039 = vsel %vm3023, %v3006, %v2680
      %v3041 = vsel %vm3023, %v3008, %v2682
      %v3043 = vsel %vm3023, %v3010, %v2684
      %v3045 = vsel %vm3023, %v3012, %v2686
      %v3047 = vsel %vm3023, %v3014, %v2688
      %v3049 = vsel %vm3023, %v3016, %v2690
      %v3051 = vsel %vm3023, %v3018, %v2692
      %v3053 = vsel %vm3023, %v3020, %v2694
      %v3055 = vsel %vm3023, %v3022, %v2696
      %vm3056 = vcmask 523264
      %v3058 = vsel %vm3056, %v3025, %v2794
      %v3060 = vsel %vm3056, %v3027, %v2796
      %v3062 = vsel %vm3056, %v3029, %v2798
      %v3064 = vsel %vm3056, %v3031, %v2800
      %v3066 = vsel %vm3056, %v3033, %v2802
      %v3068 = vsel %vm3056, %v3035, %v2804
      %v3070 = vsel %vm3056, %v3037, %v2806
      %v3072 = vsel %vm3056, %v3039, %v2808
      %v3074 = vsel %vm3056, %v3041, %v2810
      %v3076 = vsel %vm3056, %v3043, %v2812
      %v3078 = vsel %vm3056, %v3045, %v2814
      %v3080 = vsel %vm3056, %v3047, %v2816
      %v3082 = vsel %vm3056, %v3049, %v2818
      %v3084 = vsel %vm3056, %v3051, %v2820
      %v3086 = vsel %vm3056, %v3053, %v2822
      %v3088 = vsel %vm3056, %v3055, %v2824
      %v3089 = vld [vmem:[%s4] sm:$0xf]
      %v3090 = vld [vmem:[%s4 + $0x4] sm:$0xf]
      %v3091 = vld [vmem:[%s4 + $0x8] sm:$0xf]
      %v3092 = vld [vmem:[%s4 + $0xc] sm:$0xf]
      %v3093 = vld [vmem:[%s4 + $0x10] sm:$0xf]
      %v3094 = vld [vmem:[%s4 + $0x14] sm:$0xf]
      %v3095 = vld [vmem:[%s4 + $0x18] sm:$0xf]
      %v3096 = vld [vmem:[%s4 + $0x1c] sm:$0xf]
      %v3097 = vld [vmem:[%s4 + $0x20] sm:$0xf]
      %v3107 = vunpack.c.l.b16 %v3089
      %v3108 = vunpack.c.l.b16 %v3090
      %v3109 = vunpack.c.l.b16 %v3091
      %v3110 = vunpack.c.l.b16 %v3092
      %v3111 = vunpack.c.l.b16 %v3093
      %v3112 = vunpack.c.l.b16 %v3094
      %v3113 = vunpack.c.l.b16 %v3095
      %v3114 = vunpack.c.l.b16 %v3096
      %v3115 = vunpack.c.l.b16 %v3097
      %v3116 = vpack.c.b16 %v3108, %v3107
      %v3117 = vpack.c.b16 %v3110, %v3109
      %v3118 = vpack.c.b16 %v3112, %v3111
      %v3119 = vpack.c.b16 %v3114, %v3113
      %v3120 = vpack.c.b16 %v3115, %v3115
      %vm3125 = vcmask 588800
      %v3126 = vsel %vm3125, %v3058, 0
      %v3128 = vsel %vm3125, %v3060, 0
      %v3130 = vsel %vm3125, %v3062, 0
      %v3132 = vsel %vm3125, %v3064, 0
      %v3134 = vsel %vm3125, %v3066, 0
      %v3136 = vsel %vm3125, %v3068, 0
      %v3138 = vsel %vm3125, %v3070, 0
      %v3140 = vsel %vm3125, %v3072, 0
      %v3142 = vsel %vm3125, %v3074, 0
      %v3144 = vsel %vm3125, %v3076, 0
      %v3146 = vsel %vm3125, %v3078, 0
      %v3148 = vsel %vm3125, %v3080, 0
      %v3150 = vsel %vm3125, %v3082, 0
      %v3152 = vsel %vm3125, %v3084, 0
      %v3154 = vsel %vm3125, %v3086, 0
      %v3156 = vsel %vm3125, %v3088, 0
      %vm3158 = vcmask 1043456
      %v3160 = vsel %vm3158, %v3120, 0
      %3162 = vmatpush.bf16.msra.mxu0 0
      %3163 = vmatpush.bf16.msra.mxu0 0
      %3164 = vmatpush.bf16.msra.mxu0 0
      %3165 = vmatpush.bf16.msra.mxu0 %v3160
      %3166 = vmatpush.bf16.msra.mxu0 %v3119
      %3167 = vmatpush.bf16.msra.mxu0 %v3118
      %3168 = vmatpush.bf16.msra.mxu0 %v3117
      %3169 = vmatpush.bf16.msra.mxu0 %v3116
      %3170 = vmatmul.bf16.gmra.mxu0 %v3126
      %v3171 = vpop.f32.mrf.mxu0
      %v3172 = vadd.f32 0.0, %v3171
      %v3173 = vpop.f32.mrf.mxu0
      %v3174 = vadd.f32 0.0, %v3173
      %3175 = vmatmul.bf16.gmra.mxu0 %v3128
      %v3176 = vpop.f32.mrf.mxu0
      %v3177 = vadd.f32 0.0, %v3176
      %v3178 = vpop.f32.mrf.mxu0
      %v3179 = vadd.f32 0.0, %v3178
      %3180 = vmatmul.bf16.gmra.mxu0 %v3130
      %v3181 = vpop.f32.mrf.mxu0
      %v3182 = vadd.f32 0.0, %v3181
      %v3183 = vpop.f32.mrf.mxu0
      %v3184 = vadd.f32 0.0, %v3183
      %3185 = vmatmul.bf16.gmra.mxu0 %v3132
      %v3186 = vpop.f32.mrf.mxu0
      %v3187 = vadd.f32 0.0, %v3186
      %v3188 = vpop.f32.mrf.mxu0
      %v3189 = vadd.f32 0.0, %v3188
      %3190 = vmatmul.bf16.gmra.mxu0 %v3134
      %v3191 = vpop.f32.mrf.mxu0
      %v3192 = vadd.f32 0.0, %v3191
      %v3193 = vpop.f32.mrf.mxu0
      %v3194 = vadd.f32 0.0, %v3193
      %3195 = vmatmul.bf16.gmra.mxu0 %v3136
      %v3196 = vpop.f32.mrf.mxu0
      %v3197 = vadd.f32 0.0, %v3196
      %v3198 = vpop.f32.mrf.mxu0
      %v3199 = vadd.f32 0.0, %v3198
      %3200 = vmatmul.bf16.gmra.mxu0 %v3138
      %v3201 = vpop.f32.mrf.mxu0
      %v3202 = vadd.f32 0.0, %v3201
      %v3203 = vpop.f32.mrf.mxu0
      %v3204 = vadd.f32 0.0, %v3203
      %3205 = vmatmul.bf16.gmra.mxu0 %v3140
      %v3206 = vpop.f32.mrf.mxu0
      %v3207 = vadd.f32 0.0, %v3206
      %v3208 = vpop.f32.mrf.mxu0
      %v3209 = vadd.f32 0.0, %v3208
      %3210 = vmatmul.bf16.gmra.mxu0 %v3142
      %v3211 = vpop.f32.mrf.mxu0
      %v3212 = vadd.f32 0.0, %v3211
      %v3213 = vpop.f32.mrf.mxu0
      %v3214 = vadd.f32 0.0, %v3213
      %3215 = vmatmul.bf16.gmra.mxu0 %v3144
      %v3216 = vpop.f32.mrf.mxu0
      %v3217 = vadd.f32 0.0, %v3216
      %v3218 = vpop.f32.mrf.mxu0
      %v3219 = vadd.f32 0.0, %v3218
      %3220 = vmatmul.bf16.gmra.mxu0 %v3146
      %v3221 = vpop.f32.mrf.mxu0
      %v3222 = vadd.f32 0.0, %v3221
      %v3223 = vpop.f32.mrf.mxu0
      %v3224 = vadd.f32 0.0, %v3223
      %3225 = vmatmul.bf16.gmra.mxu0 %v3148
      %v3226 = vpop.f32.mrf.mxu0
      %v3227 = vadd.f32 0.0, %v3226
      %v3228 = vpop.f32.mrf.mxu0
      %v3229 = vadd.f32 0.0, %v3228
      %3230 = vmatmul.bf16.gmra.mxu0 %v3150
      %v3231 = vpop.f32.mrf.mxu0
      %v3232 = vadd.f32 0.0, %v3231
      %v3233 = vpop.f32.mrf.mxu0
      %v3234 = vadd.f32 0.0, %v3233
      %3235 = vmatmul.bf16.gmra.mxu0 %v3152
      %v3236 = vpop.f32.mrf.mxu0
      %v3237 = vadd.f32 0.0, %v3236
      %v3238 = vpop.f32.mrf.mxu0
      %v3239 = vadd.f32 0.0, %v3238
      %3240 = vmatmul.bf16.gmra.mxu0 %v3154
      %v3241 = vpop.f32.mrf.mxu0
      %v3242 = vadd.f32 0.0, %v3241
      %v3243 = vpop.f32.mrf.mxu0
      %v3244 = vadd.f32 0.0, %v3243
      %3245 = vmatmul.bf16.gmra.mxu0 %v3156
      %v3246 = vpop.f32.mrf.mxu0
      %v3247 = vadd.f32 0.0, %v3246
      %v3248 = vpop.f32.mrf.mxu0
      %v3249 = vadd.f32 0.0, %v3248
      %3250 = vdwg.mxu0
      %v3251 = vld [vmem:[%s5] sm:$0x1]
      %v3253 = vperm.slane %v3251, 0
      %v3255 = vadd.f32 %v3172, %v3253
      %v3256 = vadd.f32 %v3174, %v3253
      %v3257 = vadd.f32 %v3177, %v3253
      %v3258 = vadd.f32 %v3179, %v3253
      %v3259 = vadd.f32 %v3182, %v3253
      %v3260 = vadd.f32 %v3184, %v3253
      %v3261 = vadd.f32 %v3187, %v3253
      %v3262 = vadd.f32 %v3189, %v3253
      %v3263 = vadd.f32 %v3192, %v3253
      %v3264 = vadd.f32 %v3194, %v3253
      %v3265 = vadd.f32 %v3197, %v3253
      %v3266 = vadd.f32 %v3199, %v3253
      %v3267 = vadd.f32 %v3202, %v3253
      %v3268 = vadd.f32 %v3204, %v3253
      %v3269 = vadd.f32 %v3207, %v3253
      %v3270 = vadd.f32 %v3209, %v3253
      %v3271 = vadd.f32 %v3212, %v3253
      %v3272 = vadd.f32 %v3214, %v3253
      %v3273 = vadd.f32 %v3217, %v3253
      %v3274 = vadd.f32 %v3219, %v3253
      %v3275 = vadd.f32 %v3222, %v3253
      %v3276 = vadd.f32 %v3224, %v3253
      %v3277 = vadd.f32 %v3227, %v3253
      %v3278 = vadd.f32 %v3229, %v3253
      %v3279 = vadd.f32 %v3232, %v3253
      %v3280 = vadd.f32 %v3234, %v3253
      %v3281 = vadd.f32 %v3237, %v3253
      %v3282 = vadd.f32 %v3239, %v3253
      %v3283 = vadd.f32 %v3242, %v3253
      %v3284 = vadd.f32 %v3244, %v3253
      %v3285 = vadd.f32 %v3247, %v3253
      %v3286 = vadd.f32 %v3249, %v3253
      %v3287 = vld [vmem:[%s355] sm:$0xf]
      %v3288 = vld [vmem:[%s355 + $0x4] sm:$0xf]
      %v3289 = vld [vmem:[%s355 + $0x8] sm:$0xf]
      %v3290 = vld [vmem:[%s355 + $0xc] sm:$0xf]
      %v3291 = vld [vmem:[%s355 + $0x10] sm:$0xf]
      %v3292 = vld [vmem:[%s355 + $0x14] sm:$0xf]
      %v3293 = vld [vmem:[%s355 + $0x18] sm:$0xf]
      %v3294 = vld [vmem:[%s355 + $0x1c] sm:$0xf]
      %v3295 = vld [vmem:[%s355 + $0x20] sm:$0xf]
      %v3296 = vld [vmem:[%s355 + $0x24] sm:$0xf]
      %v3297 = vld [vmem:[%s355 + $0x28] sm:$0xf]
      %v3298 = vld [vmem:[%s355 + $0x2c] sm:$0xf]
      %v3299 = vld [vmem:[%s355 + $0x30] sm:$0xf]
      %v3300 = vld [vmem:[%s355 + $0x34] sm:$0xf]
      %v3301 = vld [vmem:[%s355 + $0x38] sm:$0xf]
      %v3302 = vld [vmem:[%s355 + $0x3c] sm:$0xf]
      %v3303 = vld [vmem:[%s355 + $0x40] sm:$0xf]
      %v3304 = vld [vmem:[%s355 + $0x44] sm:$0xf]
      %v3305 = vld [vmem:[%s355 + $0x48] sm:$0xf]
      %v3306 = vld [vmem:[%s355 + $0x4c] sm:$0xf]
      %v3307 = vld [vmem:[%s355 + $0x50] sm:$0xf]
      %v3308 = vld [vmem:[%s355 + $0x54] sm:$0xf]
      %v3309 = vld [vmem:[%s355 + $0x58] sm:$0xf]
      %v3310 = vld [vmem:[%s355 + $0x5c] sm:$0xf]
      %v3311 = vld [vmem:[%s355 + $0x60] sm:$0xf]
      %v3312 = vld [vmem:[%s355 + $0x64] sm:$0xf]
      %v3313 = vld [vmem:[%s355 + $0x68] sm:$0xf]
      %v3314 = vld [vmem:[%s355 + $0x6c] sm:$0xf]
      %v3315 = vld [vmem:[%s355 + $0x70] sm:$0xf]
      %v3316 = vld [vmem:[%s355 + $0x74] sm:$0xf]
      %v3317 = vld [vmem:[%s355 + $0x78] sm:$0xf]
      %v3318 = vld [vmem:[%s355 + $0x7c] sm:$0xf]
      %v3319 = vunpack.c.l.bf16 %v3287
      %v3320 = vunpack.c.l.bf16 %v3288
      %v3321 = vunpack.c.l.bf16 %v3289
      %v3322 = vunpack.c.l.bf16 %v3290
      %v3323 = vunpack.c.l.bf16 %v3291
      %v3324 = vunpack.c.l.bf16 %v3292
      %v3325 = vunpack.c.l.bf16 %v3293
      %v3326 = vunpack.c.l.bf16 %v3294
      %v3327 = vunpack.c.l.bf16 %v3295
      %v3328 = vunpack.c.l.bf16 %v3296
      %v3329 = vunpack.c.l.bf16 %v3297
      %v3330 = vunpack.c.l.bf16 %v3298
      %v3331 = vunpack.c.l.bf16 %v3299
      %v3332 = vunpack.c.l.bf16 %v3300
      %v3333 = vunpack.c.l.bf16 %v3301
      %v3334 = vunpack.c.l.bf16 %v3302
      %v3335 = vunpack.c.l.bf16 %v3303
      %v3336 = vunpack.c.l.bf16 %v3304
      %v3337 = vunpack.c.l.bf16 %v3305
      %v3338 = vunpack.c.l.bf16 %v3306
      %v3339 = vunpack.c.l.bf16 %v3307
      %v3340 = vunpack.c.l.bf16 %v3308
      %v3341 = vunpack.c.l.bf16 %v3309
      %v3342 = vunpack.c.l.bf16 %v3310
      %v3343 = vunpack.c.l.bf16 %v3311
      %v3344 = vunpack.c.l.bf16 %v3312
      %v3345 = vunpack.c.l.bf16 %v3313
      %v3346 = vunpack.c.l.bf16 %v3314
      %v3347 = vunpack.c.l.bf16 %v3315
      %v3348 = vunpack.c.l.bf16 %v3316
      %v3349 = vunpack.c.l.bf16 %v3317
      %v3350 = vunpack.c.l.bf16 %v3318
      %v3351 = vld [vmem:[%s6] sm:$0x1]
      %v3353 = vperm.slane %v3351, 0
      %v3355 = vmul.f32 %v3319, %v3353
      %v3356 = vmul.f32 %v3320, %v3353
      %v3357 = vmul.f32 %v3321, %v3353
      %v3358 = vmul.f32 %v3322, %v3353
      %v3359 = vmul.f32 %v3323, %v3353
      %v3360 = vmul.f32 %v3324, %v3353
      %v3361 = vmul.f32 %v3325, %v3353
      %v3362 = vmul.f32 %v3326, %v3353
      %v3363 = vmul.f32 %v3327, %v3353
      %v3364 = vmul.f32 %v3328, %v3353
      %v3365 = vmul.f32 %v3329, %v3353
      %v3366 = vmul.f32 %v3330, %v3353
      %v3367 = vmul.f32 %v3331, %v3353
      %v3368 = vmul.f32 %v3332, %v3353
      %v3369 = vmul.f32 %v3333, %v3353
      %v3370 = vmul.f32 %v3334, %v3353
      %v3371 = vmul.f32 %v3335, %v3353
      %v3372 = vmul.f32 %v3336, %v3353
      %v3373 = vmul.f32 %v3337, %v3353
      %v3374 = vmul.f32 %v3338, %v3353
      %v3375 = vmul.f32 %v3339, %v3353
      %v3376 = vmul.f32 %v3340, %v3353
      %v3377 = vmul.f32 %v3341, %v3353
      %v3378 = vmul.f32 %v3342, %v3353
      %v3379 = vmul.f32 %v3343, %v3353
      %v3380 = vmul.f32 %v3344, %v3353
      %v3381 = vmul.f32 %v3345, %v3353
      %v3382 = vmul.f32 %v3346, %v3353
      %v3383 = vmul.f32 %v3347, %v3353
      %v3384 = vmul.f32 %v3348, %v3353
      %v3385 = vmul.f32 %v3349, %v3353
      %v3386 = vmul.f32 %v3350, %v3353
      %v3387 = vld [vmem:[%s7] sm:$0x1]
      %v3389 = vperm.slane %v3387, 0
      %v3391 = vadd.f32 %v3355, %v3389
      %v3392 = vadd.f32 %v3356, %v3389
      %v3393 = vadd.f32 %v3357, %v3389
      %v3394 = vadd.f32 %v3358, %v3389
      %v3395 = vadd.f32 %v3359, %v3389
      %v3396 = vadd.f32 %v3360, %v3389
      %v3397 = vadd.f32 %v3361, %v3389
      %v3398 = vadd.f32 %v3362, %v3389
      %v3399 = vadd.f32 %v3363, %v3389
      %v3400 = vadd.f32 %v3364, %v3389
      %v3401 = vadd.f32 %v3365, %v3389
      %v3402 = vadd.f32 %v3366, %v3389
      %v3403 = vadd.f32 %v3367, %v3389
      %v3404 = vadd.f32 %v3368, %v3389
      %v3405 = vadd.f32 %v3369, %v3389
      %v3406 = vadd.f32 %v3370, %v3389
      %v3407 = vadd.f32 %v3371, %v3389
      %v3408 = vadd.f32 %v3372, %v3389
      %v3409 = vadd.f32 %v3373, %v3389
      %v3410 = vadd.f32 %v3374, %v3389
      %v3411 = vadd.f32 %v3375, %v3389
      %v3412 = vadd.f32 %v3376, %v3389
      %v3413 = vadd.f32 %v3377, %v3389
      %v3414 = vadd.f32 %v3378, %v3389
      %v3415 = vadd.f32 %v3379, %v3389
      %v3416 = vadd.f32 %v3380, %v3389
      %v3417 = vadd.f32 %v3381, %v3389
      %v3418 = vadd.f32 %v3382, %v3389
      %v3419 = vadd.f32 %v3383, %v3389
      %v3420 = vadd.f32 %v3384, %v3389
      %v3421 = vadd.f32 %v3385, %v3389
      %v3422 = vadd.f32 %v3386, %v3389
      %v3423 = vadd.f32 %v3255, %v3391
      %v3424 = vadd.f32 %v3256, %v3392
      %v3425 = vadd.f32 %v3257, %v3393
      %v3426 = vadd.f32 %v3258, %v3394
      %v3427 = vadd.f32 %v3259, %v3395
      %v3428 = vadd.f32 %v3260, %v3396
      %v3429 = vadd.f32 %v3261, %v3397
      %v3430 = vadd.f32 %v3262, %v3398
      %v3431 = vadd.f32 %v3263, %v3399
      %v3432 = vadd.f32 %v3264, %v3400
      %v3433 = vadd.f32 %v3265, %v3401
      %v3434 = vadd.f32 %v3266, %v3402
      %v3435 = vadd.f32 %v3267, %v3403
      %v3436 = vadd.f32 %v3268, %v3404
      %v3437 = vadd.f32 %v3269, %v3405
      %v3438 = vadd.f32 %v3270, %v3406
      %v3439 = vadd.f32 %v3271, %v3407
      %v3440 = vadd.f32 %v3272, %v3408
      %v3441 = vadd.f32 %v3273, %v3409
      %v3442 = vadd.f32 %v3274, %v3410
      %v3443 = vadd.f32 %v3275, %v3411
      %v3444 = vadd.f32 %v3276, %v3412
      %v3445 = vadd.f32 %v3277, %v3413
      %v3446 = vadd.f32 %v3278, %v3414
      %v3447 = vadd.f32 %v3279, %v3415
      %v3448 = vadd.f32 %v3280, %v3416
      %v3449 = vadd.f32 %v3281, %v3417
      %v3450 = vadd.f32 %v3282, %v3418
      %v3451 = vadd.f32 %v3283, %v3419
      %v3452 = vadd.f32 %v3284, %v3420
      %v3453 = vadd.f32 %v3285, %v3421
      %v3454 = vadd.f32 %v3286, %v3422
      %3455 = vst.msk [vmem:[%s360] sm:$0xff] %vm2825, %v3423
      %3456 = vst.msk [vmem:[%s360 + $0x8] sm:$0xff] %vm2825, %v3424
      %3457 = vst.msk [vmem:[%s360 + $0x10] sm:$0xff] %vm2825, %v3425
      %3458 = vst.msk [vmem:[%s360 + $0x18] sm:$0xff] %vm2825, %v3426
      %3459 = vst.msk [vmem:[%s360 + $0x20] sm:$0xff] %vm2825, %v3427
      %3460 = vst.msk [vmem:[%s360 + $0x28] sm:$0xff] %vm2825, %v3428
      %3461 = vst.msk [vmem:[%s360 + $0x30] sm:$0xff] %vm2825, %v3429
      %3462 = vst.msk [vmem:[%s360 + $0x38] sm:$0xff] %vm2825, %v3430
      %3463 = vst.msk [vmem:[%s360 + $0x40] sm:$0xff] %vm2825, %v3431
      %3464 = vst.msk [vmem:[%s360 + $0x48] sm:$0xff] %vm2825, %v3432
      %3465 = vst.msk [vmem:[%s360 + $0x50] sm:$0xff] %vm2825, %v3433
      %3466 = vst.msk [vmem:[%s360 + $0x58] sm:$0xff] %vm2825, %v3434
      %3467 = vst.msk [vmem:[%s360 + $0x60] sm:$0xff] %vm2825, %v3435
      %3468 = vst.msk [vmem:[%s360 + $0x68] sm:$0xff] %vm2825, %v3436
      %3469 = vst.msk [vmem:[%s360 + $0x70] sm:$0xff] %vm2825, %v3437
      %3470 = vst.msk [vmem:[%s360 + $0x78] sm:$0xff] %vm2825, %v3438
      %3471 = vst.msk [vmem:[%s360 + $0x80] sm:$0xff] %vm2825, %v3439
      %3472 = vst.msk [vmem:[%s360 + $0x88] sm:$0xff] %vm2825, %v3440
      %3473 = vst.msk [vmem:[%s360 + $0x90] sm:$0xff] %vm2825, %v3441
      %3474 = vst.msk [vmem:[%s360 + $0x98] sm:$0xff] %vm2825, %v3442
      %3475 = vst.msk [vmem:[%s360 + $0xa0] sm:$0xff] %vm2825, %v3443
      %3476 = vst.msk [vmem:[%s360 + $0xa8] sm:$0xff] %vm2825, %v3444
      %3477 = vst.msk [vmem:[%s360 + $0xb0] sm:$0xff] %vm2825, %v3445
      %3478 = vst.msk [vmem:[%s360 + $0xb8] sm:$0xff] %vm2825, %v3446
      %3479 = vst.msk [vmem:[%s360 + $0xc0] sm:$0xff] %vm2825, %v3447
      %3480 = vst.msk [vmem:[%s360 + $0xc8] sm:$0xff] %vm2825, %v3448
      %3481 = vst.msk [vmem:[%s360 + $0xd0] sm:$0xff] %vm2825, %v3449
      %3482 = vst.msk [vmem:[%s360 + $0xd8] sm:$0xff] %vm2825, %v3450
      %3483 = vst.msk [vmem:[%s360 + $0xe0] sm:$0xff] %vm2825, %v3451
      %3484 = vst.msk [vmem:[%s360 + $0xe8] sm:$0xff] %vm2825, %v3452
      %3485 = vst.msk [vmem:[%s360 + $0xf0] sm:$0xff] %vm2825, %v3453
      %3486 = vst.msk [vmem:[%s360 + $0xf8] sm:$0xff] %vm2825, %v3454
      %v3519 = vrot.slane %v3423, 2
      %v3520 = vrot.slane %v3423, 4
      %v3521 = vrot.slane %v3423, 6
      %v3522 = vrot.slane %v3424, 2
      %v3523 = vrot.slane %v3424, 4
      %v3524 = vrot.slane %v3424, 6
      %v3525 = vrot.slane %v3425, 2
      %v3526 = vrot.slane %v3425, 4
      %v3527 = vrot.slane %v3425, 6
      %v3528 = vrot.slane %v3426, 2
      %v3529 = vrot.slane %v3426, 4
      %v3530 = vrot.slane %v3426, 6
      %v3531 = vrot.slane %v3427, 2
      %v3532 = vrot.slane %v3427, 4
      %v3533 = vrot.slane %v3427, 6
      %v3534 = vrot.slane %v3428, 2
      %v3535 = vrot.slane %v3428, 4
      %v3536 = vrot.slane %v3428, 6
      %v3537 = vrot.slane %v3429, 2
      %v3538 = vrot.slane %v3429, 4
      %v3539 = vrot.slane %v3429, 6
      %v3540 = vrot.slane %v3430, 2
      %v3541 = vrot.slane %v3430, 4
      %v3542 = vrot.slane %v3430, 6
      %v3543 = vrot.slane %v3431, 2
      %v3544 = vrot.slane %v3431, 4
      %v3545 = vrot.slane %v3431, 6
      %v3546 = vrot.slane %v3432, 2
      %v3547 = vrot.slane %v3432, 4
      %v3548 = vrot.slane %v3432, 6
      %v3549 = vrot.slane %v3433, 2
      %v3550 = vrot.slane %v3433, 4
      %v3551 = vrot.slane %v3433, 6
      %v3552 = vrot.slane %v3434, 2
      %v3553 = vrot.slane %v3434, 4
      %v3554 = vrot.slane %v3434, 6
      %v3555 = vrot.slane %v3435, 2
      %v3556 = vrot.slane %v3435, 4
      %v3557 = vrot.slane %v3435, 6
      %v3558 = vrot.slane %v3436, 2
      %v3559 = vrot.slane %v3436, 4
      %v3560 = vrot.slane %v3436, 6
      %v3561 = vrot.slane %v3437, 2
      %v3562 = vrot.slane %v3437, 4
      %v3563 = vrot.slane %v3437, 6
      %v3564 = vrot.slane %v3438, 2
      %v3565 = vrot.slane %v3438, 4
      %v3566 = vrot.slane %v3438, 6
      %v3567 = vrot.slane %v3439, 2
      %v3568 = vrot.slane %v3439, 4
      %v3569 = vrot.slane %v3439, 6
      %v3570 = vrot.slane %v3440, 2
      %v3571 = vrot.slane %v3440, 4
      %v3572 = vrot.slane %v3440, 6
      %v3573 = vrot.slane %v3441, 2
      %v3574 = vrot.slane %v3441, 4
      %v3575 = vrot.slane %v3441, 6
      %v3576 = vrot.slane %v3442, 2
      %v3577 = vrot.slane %v3442, 4
      %v3578 = vrot.slane %v3442, 6
      %v3579 = vrot.slane %v3443, 2
      %v3580 = vrot.slane %v3443, 4
      %v3581 = vrot.slane %v3443, 6
      %v3582 = vrot.slane %v3444, 2
      %v3583 = vrot.slane %v3444, 4
      %v3584 = vrot.slane %v3444, 6
      %v3585 = vrot.slane %v3445, 2
      %v3586 = vrot.slane %v3445, 4
      %v3587 = vrot.slane %v3445, 6
      %v3588 = vrot.slane %v3446, 2
      %v3589 = vrot.slane %v3446, 4
      %v3590 = vrot.slane %v3446, 6
      %v3591 = vrot.slane %v3447, 2
      %v3592 = vrot.slane %v3447, 4
      %v3593 = vrot.slane %v3447, 6
      %v3594 = vrot.slane %v3448, 2
      %v3595 = vrot.slane %v3448, 4
      %v3596 = vrot.slane %v3448, 6
      %v3597 = vrot.slane %v3449, 2
      %v3598 = vrot.slane %v3449, 4
      %v3599 = vrot.slane %v3449, 6
      %v3600 = vrot.slane %v3450, 2
      %v3601 = vrot.slane %v3450, 4
      %v3602 = vrot.slane %v3450, 6
      %v3603 = vrot.slane %v3451, 2
      %v3604 = vrot.slane %v3451, 4
      %v3605 = vrot.slane %v3451, 6
      %v3606 = vrot.slane %v3452, 2
      %v3607 = vrot.slane %v3452, 4
      %v3608 = vrot.slane %v3452, 6
      %v3609 = vrot.slane %v3453, 2
      %v3610 = vrot.slane %v3453, 4
      %v3611 = vrot.slane %v3453, 6
      %v3612 = vrot.slane %v3454, 2
      %v3613 = vrot.slane %v3454, 4
      %v3614 = vrot.slane %v3454, 6
      %vm3711 = vcmask 58368
      %v3712 = vsel %vm3711, %v3423, -inf
      %v3713 = vrot.slane %v3712, 4
      %v3714 = vmax.f32 %v3712, %v3713
      %v3715 = vrot.slane %v3714, 2
      %v3716 = vmax.f32 %v3714, %v3715
      %v3717 = vrot.slane %v3716, 1
      %v3718 = vmax.f32 %v3716, %v3717
      %v3719 = vsel %vm3711, %v3519, -inf
      %v3720 = vrot.slane %v3719, 4
      %v3721 = vmax.f32 %v3719, %v3720
      %v3722 = vrot.slane %v3721, 2
      %v3723 = vmax.f32 %v3721, %v3722
      %v3724 = vrot.slane %v3723, 1
      %v3725 = vmax.f32 %v3723, %v3724
      %v3726 = vsel %vm3711, %v3520, -inf
      %v3727 = vrot.slane %v3726, 4
      %v3728 = vmax.f32 %v3726, %v3727
      %v3729 = vrot.slane %v3728, 2
      %v3730 = vmax.f32 %v3728, %v3729
      %v3731 = vrot.slane %v3730, 1
      %v3732 = vmax.f32 %v3730, %v3731
      %v3733 = vsel %vm3711, %v3521, -inf
      %v3734 = vrot.slane %v3733, 4
      %v3735 = vmax.f32 %v3733, %v3734
      %v3736 = vrot.slane %v3735, 2
      %v3737 = vmax.f32 %v3735, %v3736
      %v3738 = vrot.slane %v3737, 1
      %v3739 = vmax.f32 %v3737, %v3738
      %v3740 = vsel %vm3711, %v3424, -inf
      %v3741 = vrot.slane %v3740, 4
      %v3742 = vmax.f32 %v3740, %v3741
      %v3743 = vrot.slane %v3742, 2
      %v3744 = vmax.f32 %v3742, %v3743
      %v3745 = vrot.slane %v3744, 1
      %v3746 = vmax.f32 %v3744, %v3745
      %v3747 = vsel %vm3711, %v3522, -inf
      %v3748 = vrot.slane %v3747, 4
      %v3749 = vmax.f32 %v3747, %v3748
      %v3750 = vrot.slane %v3749, 2
      %v3751 = vmax.f32 %v3749, %v3750
      %v3752 = vrot.slane %v3751, 1
      %v3753 = vmax.f32 %v3751, %v3752
      %v3754 = vsel %vm3711, %v3523, -inf
      %v3755 = vrot.slane %v3754, 4
      %v3756 = vmax.f32 %v3754, %v3755
      %v3757 = vrot.slane %v3756, 2
      %v3758 = vmax.f32 %v3756, %v3757
      %v3759 = vrot.slane %v3758, 1
      %v3760 = vmax.f32 %v3758, %v3759
      %v3761 = vsel %vm3711, %v3524, -inf
      %v3762 = vrot.slane %v3761, 4
      %v3763 = vmax.f32 %v3761, %v3762
      %v3764 = vrot.slane %v3763, 2
      %v3765 = vmax.f32 %v3763, %v3764
      %v3766 = vrot.slane %v3765, 1
      %v3767 = vmax.f32 %v3765, %v3766
      %v3768 = vsel %vm3711, %v3425, -inf
      %v3769 = vrot.slane %v3768, 4
      %v3770 = vmax.f32 %v3768, %v3769
      %v3771 = vrot.slane %v3770, 2
      %v3772 = vmax.f32 %v3770, %v3771
      %v3773 = vrot.slane %v3772, 1
      %v3774 = vmax.f32 %v3772, %v3773
      %v3775 = vsel %vm3711, %v3525, -inf
      %v3776 = vrot.slane %v3775, 4
      %v3777 = vmax.f32 %v3775, %v3776
      %v3778 = vrot.slane %v3777, 2
      %v3779 = vmax.f32 %v3777, %v3778
      %v3780 = vrot.slane %v3779, 1
      %v3781 = vmax.f32 %v3779, %v3780
      %v3782 = vsel %vm3711, %v3526, -inf
      %v3783 = vrot.slane %v3782, 4
      %v3784 = vmax.f32 %v3782, %v3783
      %v3785 = vrot.slane %v3784, 2
      %v3786 = vmax.f32 %v3784, %v3785
      %v3787 = vrot.slane %v3786, 1
      %v3788 = vmax.f32 %v3786, %v3787
      %v3789 = vsel %vm3711, %v3527, -inf
      %v3790 = vrot.slane %v3789, 4
      %v3791 = vmax.f32 %v3789, %v3790
      %v3792 = vrot.slane %v3791, 2
      %v3793 = vmax.f32 %v3791, %v3792
      %v3794 = vrot.slane %v3793, 1
      %v3795 = vmax.f32 %v3793, %v3794
      %v3796 = vsel %vm3711, %v3426, -inf
      %v3797 = vrot.slane %v3796, 4
      %v3798 = vmax.f32 %v3796, %v3797
      %v3799 = vrot.slane %v3798, 2
      %v3800 = vmax.f32 %v3798, %v3799
      %v3801 = vrot.slane %v3800, 1
      %v3802 = vmax.f32 %v3800, %v3801
      %v3803 = vsel %vm3711, %v3528, -inf
      %v3804 = vrot.slane %v3803, 4
      %v3805 = vmax.f32 %v3803, %v3804
      %v3806 = vrot.slane %v3805, 2
      %v3807 = vmax.f32 %v3805, %v3806
      %v3808 = vrot.slane %v3807, 1
      %v3809 = vmax.f32 %v3807, %v3808
      %v3810 = vsel %vm3711, %v3529, -inf
      %v3811 = vrot.slane %v3810, 4
      %v3812 = vmax.f32 %v3810, %v3811
      %v3813 = vrot.slane %v3812, 2
      %v3814 = vmax.f32 %v3812, %v3813
      %v3815 = vrot.slane %v3814, 1
      %v3816 = vmax.f32 %v3814, %v3815
      %v3817 = vsel %vm3711, %v3530, -inf
      %v3818 = vrot.slane %v3817, 4
      %v3819 = vmax.f32 %v3817, %v3818
      %v3820 = vrot.slane %v3819, 2
      %v3821 = vmax.f32 %v3819, %v3820
      %v3822 = vrot.slane %v3821, 1
      %v3823 = vmax.f32 %v3821, %v3822
      %v3824 = vsel %vm3711, %v3427, -inf
      %v3825 = vrot.slane %v3824, 4
      %v3826 = vmax.f32 %v3824, %v3825
      %v3827 = vrot.slane %v3826, 2
      %v3828 = vmax.f32 %v3826, %v3827
      %v3829 = vrot.slane %v3828, 1
      %v3830 = vmax.f32 %v3828, %v3829
      %v3831 = vsel %vm3711, %v3531, -inf
      %v3832 = vrot.slane %v3831, 4
      %v3833 = vmax.f32 %v3831, %v3832
      %v3834 = vrot.slane %v3833, 2
      %v3835 = vmax.f32 %v3833, %v3834
      %v3836 = vrot.slane %v3835, 1
      %v3837 = vmax.f32 %v3835, %v3836
      %v3838 = vsel %vm3711, %v3532, -inf
      %v3839 = vrot.slane %v3838, 4
      %v3840 = vmax.f32 %v3838, %v3839
      %v3841 = vrot.slane %v3840, 2
      %v3842 = vmax.f32 %v3840, %v3841
      %v3843 = vrot.slane %v3842, 1
      %v3844 = vmax.f32 %v3842, %v3843
      %v3845 = vsel %vm3711, %v3533, -inf
      %v3846 = vrot.slane %v3845, 4
      %v3847 = vmax.f32 %v3845, %v3846
      %v3848 = vrot.slane %v3847, 2
      %v3849 = vmax.f32 %v3847, %v3848
      %v3850 = vrot.slane %v3849, 1
      %v3851 = vmax.f32 %v3849, %v3850
      %v3852 = vsel %vm3711, %v3428, -inf
      %v3853 = vrot.slane %v3852, 4
      %v3854 = vmax.f32 %v3852, %v3853
      %v3855 = vrot.slane %v3854, 2
      %v3856 = vmax.f32 %v3854, %v3855
      %v3857 = vrot.slane %v3856, 1
      %v3858 = vmax.f32 %v3856, %v3857
      %v3859 = vsel %vm3711, %v3534, -inf
      %v3860 = vrot.slane %v3859, 4
      %v3861 = vmax.f32 %v3859, %v3860
      %v3862 = vrot.slane %v3861, 2
      %v3863 = vmax.f32 %v3861, %v3862
      %v3864 = vrot.slane %v3863, 1
      %v3865 = vmax.f32 %v3863, %v3864
      %v3866 = vsel %vm3711, %v3535, -inf
      %v3867 = vrot.slane %v3866, 4
      %v3868 = vmax.f32 %v3866, %v3867
      %v3869 = vrot.slane %v3868, 2
      %v3870 = vmax.f32 %v3868, %v3869
      %v3871 = vrot.slane %v3870, 1
      %v3872 = vmax.f32 %v3870, %v3871
      %v3873 = vsel %vm3711, %v3536, -inf
      %v3874 = vrot.slane %v3873, 4
      %v3875 = vmax.f32 %v3873, %v3874
      %v3876 = vrot.slane %v3875, 2
      %v3877 = vmax.f32 %v3875, %v3876
      %v3878 = vrot.slane %v3877, 1
      %v3879 = vmax.f32 %v3877, %v3878
      %v3880 = vsel %vm3711, %v3429, -inf
      %v3881 = vrot.slane %v3880, 4
      %v3882 = vmax.f32 %v3880, %v3881
      %v3883 = vrot.slane %v3882, 2
      %v3884 = vmax.f32 %v3882, %v3883
      %v3885 = vrot.slane %v3884, 1
      %v3886 = vmax.f32 %v3884, %v3885
      %v3887 = vsel %vm3711, %v3537, -inf
      %v3888 = vrot.slane %v3887, 4
      %v3889 = vmax.f32 %v3887, %v3888
      %v3890 = vrot.slane %v3889, 2
      %v3891 = vmax.f32 %v3889, %v3890
      %v3892 = vrot.slane %v3891, 1
      %v3893 = vmax.f32 %v3891, %v3892
      %v3894 = vsel %vm3711, %v3538, -inf
      %v3895 = vrot.slane %v3894, 4
      %v3896 = vmax.f32 %v3894, %v3895
      %v3897 = vrot.slane %v3896, 2
      %v3898 = vmax.f32 %v3896, %v3897
      %v3899 = vrot.slane %v3898, 1
      %v3900 = vmax.f32 %v3898, %v3899
      %v3901 = vsel %vm3711, %v3539, -inf
      %v3902 = vrot.slane %v3901, 4
      %v3903 = vmax.f32 %v3901, %v3902
      %v3904 = vrot.slane %v3903, 2
      %v3905 = vmax.f32 %v3903, %v3904
      %v3906 = vrot.slane %v3905, 1
      %v3907 = vmax.f32 %v3905, %v3906
      %v3908 = vsel %vm3711, %v3430, -inf
      %v3909 = vrot.slane %v3908, 4
      %v3910 = vmax.f32 %v3908, %v3909
      %v3911 = vrot.slane %v3910, 2
      %v3912 = vmax.f32 %v3910, %v3911
      %v3913 = vrot.slane %v3912, 1
      %v3914 = vmax.f32 %v3912, %v3913
      %v3915 = vsel %vm3711, %v3540, -inf
      %v3916 = vrot.slane %v3915, 4
      %v3917 = vmax.f32 %v3915, %v3916
      %v3918 = vrot.slane %v3917, 2
      %v3919 = vmax.f32 %v3917, %v3918
      %v3920 = vrot.slane %v3919, 1
      %v3921 = vmax.f32 %v3919, %v3920
      %v3922 = vsel %vm3711, %v3541, -inf
      %v3923 = vrot.slane %v3922, 4
      %v3924 = vmax.f32 %v3922, %v3923
      %v3925 = vrot.slane %v3924, 2
      %v3926 = vmax.f32 %v3924, %v3925
      %v3927 = vrot.slane %v3926, 1
      %v3928 = vmax.f32 %v3926, %v3927
      %v3929 = vsel %vm3711, %v3542, -inf
      %v3930 = vrot.slane %v3929, 4
      %v3931 = vmax.f32 %v3929, %v3930
      %v3932 = vrot.slane %v3931, 2
      %v3933 = vmax.f32 %v3931, %v3932
      %v3934 = vrot.slane %v3933, 1
      %v3935 = vmax.f32 %v3933, %v3934
      %v3936 = vsel %vm3711, %v3431, -inf
      %v3937 = vrot.slane %v3936, 4
      %v3938 = vmax.f32 %v3936, %v3937
      %v3939 = vrot.slane %v3938, 2
      %v3940 = vmax.f32 %v3938, %v3939
      %v3941 = vrot.slane %v3940, 1
      %v3942 = vmax.f32 %v3940, %v3941
      %v3943 = vsel %vm3711, %v3543, -inf
      %v3944 = vrot.slane %v3943, 4
      %v3945 = vmax.f32 %v3943, %v3944
      %v3946 = vrot.slane %v3945, 2
      %v3947 = vmax.f32 %v3945, %v3946
      %v3948 = vrot.slane %v3947, 1
      %v3949 = vmax.f32 %v3947, %v3948
      %v3950 = vsel %vm3711, %v3544, -inf
      %v3951 = vrot.slane %v3950, 4
      %v3952 = vmax.f32 %v3950, %v3951
      %v3953 = vrot.slane %v3952, 2
      %v3954 = vmax.f32 %v3952, %v3953
      %v3955 = vrot.slane %v3954, 1
      %v3956 = vmax.f32 %v3954, %v3955
      %v3957 = vsel %vm3711, %v3545, -inf
      %v3958 = vrot.slane %v3957, 4
      %v3959 = vmax.f32 %v3957, %v3958
      %v3960 = vrot.slane %v3959, 2
      %v3961 = vmax.f32 %v3959, %v3960
      %v3962 = vrot.slane %v3961, 1
      %v3963 = vmax.f32 %v3961, %v3962
      %v3964 = vsel %vm3711, %v3432, -inf
      %v3965 = vrot.slane %v3964, 4
      %v3966 = vmax.f32 %v3964, %v3965
      %v3967 = vrot.slane %v3966, 2
      %v3968 = vmax.f32 %v3966, %v3967
      %v3969 = vrot.slane %v3968, 1
      %v3970 = vmax.f32 %v3968, %v3969
      %v3971 = vsel %vm3711, %v3546, -inf
      %v3972 = vrot.slane %v3971, 4
      %v3973 = vmax.f32 %v3971, %v3972
      %v3974 = vrot.slane %v3973, 2
      %v3975 = vmax.f32 %v3973, %v3974
      %v3976 = vrot.slane %v3975, 1
      %v3977 = vmax.f32 %v3975, %v3976
      %v3978 = vsel %vm3711, %v3547, -inf
      %v3979 = vrot.slane %v3978, 4
      %v3980 = vmax.f32 %v3978, %v3979
      %v3981 = vrot.slane %v3980, 2
      %v3982 = vmax.f32 %v3980, %v3981
      %v3983 = vrot.slane %v3982, 1
      %v3984 = vmax.f32 %v3982, %v3983
      %v3985 = vsel %vm3711, %v3548, -inf
      %v3986 = vrot.slane %v3985, 4
      %v3987 = vmax.f32 %v3985, %v3986
      %v3988 = vrot.slane %v3987, 2
      %v3989 = vmax.f32 %v3987, %v3988
      %v3990 = vrot.slane %v3989, 1
      %v3991 = vmax.f32 %v3989, %v3990
      %v3992 = vsel %vm3711, %v3433, -inf
      %v3993 = vrot.slane %v3992, 4
      %v3994 = vmax.f32 %v3992, %v3993
      %v3995 = vrot.slane %v3994, 2
      %v3996 = vmax.f32 %v3994, %v3995
      %v3997 = vrot.slane %v3996, 1
      %v3998 = vmax.f32 %v3996, %v3997
      %v3999 = vsel %vm3711, %v3549, -inf
      %v4000 = vrot.slane %v3999, 4
      %v4001 = vmax.f32 %v3999, %v4000
      %v4002 = vrot.slane %v4001, 2
      %v4003 = vmax.f32 %v4001, %v4002
      %v4004 = vrot.slane %v4003, 1
      %v4005 = vmax.f32 %v4003, %v4004
      %v4006 = vsel %vm3711, %v3550, -inf
      %v4007 = vrot.slane %v4006, 4
      %v4008 = vmax.f32 %v4006, %v4007
      %v4009 = vrot.slane %v4008, 2
      %v4010 = vmax.f32 %v4008, %v4009
      %v4011 = vrot.slane %v4010, 1
      %v4012 = vmax.f32 %v4010, %v4011
      %v4013 = vsel %vm3711, %v3551, -inf
      %v4014 = vrot.slane %v4013, 4
      %v4015 = vmax.f32 %v4013, %v4014
      %v4016 = vrot.slane %v4015, 2
      %v4017 = vmax.f32 %v4015, %v4016
      %v4018 = vrot.slane %v4017, 1
      %v4019 = vmax.f32 %v4017, %v4018
      %v4020 = vsel %vm3711, %v3434, -inf
      %v4021 = vrot.slane %v4020, 4
      %v4022 = vmax.f32 %v4020, %v4021
      %v4023 = vrot.slane %v4022, 2
      %v4024 = vmax.f32 %v4022, %v4023
      %v4025 = vrot.slane %v4024, 1
      %v4026 = vmax.f32 %v4024, %v4025
      %v4027 = vsel %vm3711, %v3552, -inf
      %v4028 = vrot.slane %v4027, 4
      %v4029 = vmax.f32 %v4027, %v4028
      %v4030 = vrot.slane %v4029, 2
      %v4031 = vmax.f32 %v4029, %v4030
      %v4032 = vrot.slane %v4031, 1
      %v4033 = vmax.f32 %v4031, %v4032
      %v4034 = vsel %vm3711, %v3553, -inf
      %v4035 = vrot.slane %v4034, 4
      %v4036 = vmax.f32 %v4034, %v4035
      %v4037 = vrot.slane %v4036, 2
      %v4038 = vmax.f32 %v4036, %v4037
      %v4039 = vrot.slane %v4038, 1
      %v4040 = vmax.f32 %v4038, %v4039
      %v4041 = vsel %vm3711, %v3554, -inf
      %v4042 = vrot.slane %v4041, 4
      %v4043 = vmax.f32 %v4041, %v4042
      %v4044 = vrot.slane %v4043, 2
      %v4045 = vmax.f32 %v4043, %v4044
      %v4046 = vrot.slane %v4045, 1
      %v4047 = vmax.f32 %v4045, %v4046
      %v4048 = vsel %vm3711, %v3435, -inf
      %v4049 = vrot.slane %v4048, 4
      %v4050 = vmax.f32 %v4048, %v4049
      %v4051 = vrot.slane %v4050, 2
      %v4052 = vmax.f32 %v4050, %v4051
      %v4053 = vrot.slane %v4052, 1
      %v4054 = vmax.f32 %v4052, %v4053
      %v4055 = vsel %vm3711, %v3555, -inf
      %v4056 = vrot.slane %v4055, 4
      %v4057 = vmax.f32 %v4055, %v4056
      %v4058 = vrot.slane %v4057, 2
      %v4059 = vmax.f32 %v4057, %v4058
      %v4060 = vrot.slane %v4059, 1
      %v4061 = vmax.f32 %v4059, %v4060
      %v4062 = vsel %vm3711, %v3556, -inf
      %v4063 = vrot.slane %v4062, 4
      %v4064 = vmax.f32 %v4062, %v4063
      %v4065 = vrot.slane %v4064, 2
      %v4066 = vmax.f32 %v4064, %v4065
      %v4067 = vrot.slane %v4066, 1
      %v4068 = vmax.f32 %v4066, %v4067
      %v4069 = vsel %vm3711, %v3557, -inf
      %v4070 = vrot.slane %v4069, 4
      %v4071 = vmax.f32 %v4069, %v4070
      %v4072 = vrot.slane %v4071, 2
      %v4073 = vmax.f32 %v4071, %v4072
      %v4074 = vrot.slane %v4073, 1
      %v4075 = vmax.f32 %v4073, %v4074
      %v4076 = vsel %vm3711, %v3436, -inf
      %v4077 = vrot.slane %v4076, 4
      %v4078 = vmax.f32 %v4076, %v4077
      %v4079 = vrot.slane %v4078, 2
      %v4080 = vmax.f32 %v4078, %v4079
      %v4081 = vrot.slane %v4080, 1
      %v4082 = vmax.f32 %v4080, %v4081
      %v4083 = vsel %vm3711, %v3558, -inf
      %v4084 = vrot.slane %v4083, 4
      %v4085 = vmax.f32 %v4083, %v4084
      %v4086 = vrot.slane %v4085, 2
      %v4087 = vmax.f32 %v4085, %v4086
      %v4088 = vrot.slane %v4087, 1
      %v4089 = vmax.f32 %v4087, %v4088
      %v4090 = vsel %vm3711, %v3559, -inf
      %v4091 = vrot.slane %v4090, 4
      %v4092 = vmax.f32 %v4090, %v4091
      %v4093 = vrot.slane %v4092, 2
      %v4094 = vmax.f32 %v4092, %v4093
      %v4095 = vrot.slane %v4094, 1
      %v4096 = vmax.f32 %v4094, %v4095
      %v4097 = vsel %vm3711, %v3560, -inf
      %v4098 = vrot.slane %v4097, 4
      %v4099 = vmax.f32 %v4097, %v4098
      %v4100 = vrot.slane %v4099, 2
      %v4101 = vmax.f32 %v4099, %v4100
      %v4102 = vrot.slane %v4101, 1
      %v4103 = vmax.f32 %v4101, %v4102
      %v4104 = vsel %vm3711, %v3437, -inf
      %v4105 = vrot.slane %v4104, 4
      %v4106 = vmax.f32 %v4104, %v4105
      %v4107 = vrot.slane %v4106, 2
      %v4108 = vmax.f32 %v4106, %v4107
      %v4109 = vrot.slane %v4108, 1
      %v4110 = vmax.f32 %v4108, %v4109
      %v4111 = vsel %vm3711, %v3561, -inf
      %v4112 = vrot.slane %v4111, 4
      %v4113 = vmax.f32 %v4111, %v4112
      %v4114 = vrot.slane %v4113, 2
      %v4115 = vmax.f32 %v4113, %v4114
      %v4116 = vrot.slane %v4115, 1
      %v4117 = vmax.f32 %v4115, %v4116
      %v4118 = vsel %vm3711, %v3562, -inf
      %v4119 = vrot.slane %v4118, 4
      %v4120 = vmax.f32 %v4118, %v4119
      %v4121 = vrot.slane %v4120, 2
      %v4122 = vmax.f32 %v4120, %v4121
      %v4123 = vrot.slane %v4122, 1
      %v4124 = vmax.f32 %v4122, %v4123
      %v4125 = vsel %vm3711, %v3563, -inf
      %v4126 = vrot.slane %v4125, 4
      %v4127 = vmax.f32 %v4125, %v4126
      %v4128 = vrot.slane %v4127, 2
      %v4129 = vmax.f32 %v4127, %v4128
      %v4130 = vrot.slane %v4129, 1
      %v4131 = vmax.f32 %v4129, %v4130
      %v4132 = vsel %vm3711, %v3438, -inf
      %v4133 = vrot.slane %v4132, 4
      %v4134 = vmax.f32 %v4132, %v4133
      %v4135 = vrot.slane %v4134, 2
      %v4136 = vmax.f32 %v4134, %v4135
      %v4137 = vrot.slane %v4136, 1
      %v4138 = vmax.f32 %v4136, %v4137
      %v4139 = vsel %vm3711, %v3564, -inf
      %v4140 = vrot.slane %v4139, 4
      %v4141 = vmax.f32 %v4139, %v4140
      %v4142 = vrot.slane %v4141, 2
      %v4143 = vmax.f32 %v4141, %v4142
      %v4144 = vrot.slane %v4143, 1
      %v4145 = vmax.f32 %v4143, %v4144
      %v4146 = vsel %vm3711, %v3565, -inf
      %v4147 = vrot.slane %v4146, 4
      %v4148 = vmax.f32 %v4146, %v4147
      %v4149 = vrot.slane %v4148, 2
      %v4150 = vmax.f32 %v4148, %v4149
      %v4151 = vrot.slane %v4150, 1
      %v4152 = vmax.f32 %v4150, %v4151
      %v4153 = vsel %vm3711, %v3566, -inf
      %v4154 = vrot.slane %v4153, 4
      %v4155 = vmax.f32 %v4153, %v4154
      %v4156 = vrot.slane %v4155, 2
      %v4157 = vmax.f32 %v4155, %v4156
      %v4158 = vrot.slane %v4157, 1
      %v4159 = vmax.f32 %v4157, %v4158
      %v4160 = vsel %vm3711, %v3439, -inf
      %v4161 = vrot.slane %v4160, 4
      %v4162 = vmax.f32 %v4160, %v4161
      %v4163 = vrot.slane %v4162, 2
      %v4164 = vmax.f32 %v4162, %v4163
      %v4165 = vrot.slane %v4164, 1
      %v4166 = vmax.f32 %v4164, %v4165
      %v4167 = vsel %vm3711, %v3567, -inf
      %v4168 = vrot.slane %v4167, 4
      %v4169 = vmax.f32 %v4167, %v4168
      %v4170 = vrot.slane %v4169, 2
      %v4171 = vmax.f32 %v4169, %v4170
      %v4172 = vrot.slane %v4171, 1
      %v4173 = vmax.f32 %v4171, %v4172
      %v4174 = vsel %vm3711, %v3568, -inf
      %v4175 = vrot.slane %v4174, 4
      %v4176 = vmax.f32 %v4174, %v4175
      %v4177 = vrot.slane %v4176, 2
      %v4178 = vmax.f32 %v4176, %v4177
      %v4179 = vrot.slane %v4178, 1
      %v4180 = vmax.f32 %v4178, %v4179
      %v4181 = vsel %vm3711, %v3569, -inf
      %v4182 = vrot.slane %v4181, 4
      %v4183 = vmax.f32 %v4181, %v4182
      %v4184 = vrot.slane %v4183, 2
      %v4185 = vmax.f32 %v4183, %v4184
      %v4186 = vrot.slane %v4185, 1
      %v4187 = vmax.f32 %v4185, %v4186
      %v4188 = vsel %vm3711, %v3440, -inf
      %v4189 = vrot.slane %v4188, 4
      %v4190 = vmax.f32 %v4188, %v4189
      %v4191 = vrot.slane %v4190, 2
      %v4192 = vmax.f32 %v4190, %v4191
      %v4193 = vrot.slane %v4192, 1
      %v4194 = vmax.f32 %v4192, %v4193
      %v4195 = vsel %vm3711, %v3570, -inf
      %v4196 = vrot.slane %v4195, 4
      %v4197 = vmax.f32 %v4195, %v4196
      %v4198 = vrot.slane %v4197, 2
      %v4199 = vmax.f32 %v4197, %v4198
      %v4200 = vrot.slane %v4199, 1
      %v4201 = vmax.f32 %v4199, %v4200
      %v4202 = vsel %vm3711, %v3571, -inf
      %v4203 = vrot.slane %v4202, 4
      %v4204 = vmax.f32 %v4202, %v4203
      %v4205 = vrot.slane %v4204, 2
      %v4206 = vmax.f32 %v4204, %v4205
      %v4207 = vrot.slane %v4206, 1
      %v4208 = vmax.f32 %v4206, %v4207
      %v4209 = vsel %vm3711, %v3572, -inf
      %v4210 = vrot.slane %v4209, 4
      %v4211 = vmax.f32 %v4209, %v4210
      %v4212 = vrot.slane %v4211, 2
      %v4213 = vmax.f32 %v4211, %v4212
      %v4214 = vrot.slane %v4213, 1
      %v4215 = vmax.f32 %v4213, %v4214
      %v4216 = vsel %vm3711, %v3441, -inf
      %v4217 = vrot.slane %v4216, 4
      %v4218 = vmax.f32 %v4216, %v4217
      %v4219 = vrot.slane %v4218, 2
      %v4220 = vmax.f32 %v4218, %v4219
      %v4221 = vrot.slane %v4220, 1
      %v4222 = vmax.f32 %v4220, %v4221
      %v4223 = vsel %vm3711, %v3573, -inf
      %v4224 = vrot.slane %v4223, 4
      %v4225 = vmax.f32 %v4223, %v4224
      %v4226 = vrot.slane %v4225, 2
      %v4227 = vmax.f32 %v4225, %v4226
      %v4228 = vrot.slane %v4227, 1
      %v4229 = vmax.f32 %v4227, %v4228
      %v4230 = vsel %vm3711, %v3574, -inf
      %v4231 = vrot.slane %v4230, 4
      %v4232 = vmax.f32 %v4230, %v4231
      %v4233 = vrot.slane %v4232, 2
      %v4234 = vmax.f32 %v4232, %v4233
      %v4235 = vrot.slane %v4234, 1
      %v4236 = vmax.f32 %v4234, %v4235
      %v4237 = vsel %vm3711, %v3575, -inf
      %v4238 = vrot.slane %v4237, 4
      %v4239 = vmax.f32 %v4237, %v4238
      %v4240 = vrot.slane %v4239, 2
      %v4241 = vmax.f32 %v4239, %v4240
      %v4242 = vrot.slane %v4241, 1
      %v4243 = vmax.f32 %v4241, %v4242
      %v4244 = vsel %vm3711, %v3442, -inf
      %v4245 = vrot.slane %v4244, 4
      %v4246 = vmax.f32 %v4244, %v4245
      %v4247 = vrot.slane %v4246, 2
      %v4248 = vmax.f32 %v4246, %v4247
      %v4249 = vrot.slane %v4248, 1
      %v4250 = vmax.f32 %v4248, %v4249
      %v4251 = vsel %vm3711, %v3576, -inf
      %v4252 = vrot.slane %v4251, 4
      %v4253 = vmax.f32 %v4251, %v4252
      %v4254 = vrot.slane %v4253, 2
      %v4255 = vmax.f32 %v4253, %v4254
      %v4256 = vrot.slane %v4255, 1
      %v4257 = vmax.f32 %v4255, %v4256
      %v4258 = vsel %vm3711, %v3577, -inf
      %v4259 = vrot.slane %v4258, 4
      %v4260 = vmax.f32 %v4258, %v4259
      %v4261 = vrot.slane %v4260, 2
      %v4262 = vmax.f32 %v4260, %v4261
      %v4263 = vrot.slane %v4262, 1
      %v4264 = vmax.f32 %v4262, %v4263
      %v4265 = vsel %vm3711, %v3578, -inf
      %v4266 = vrot.slane %v4265, 4
      %v4267 = vmax.f32 %v4265, %v4266
      %v4268 = vrot.slane %v4267, 2
      %v4269 = vmax.f32 %v4267, %v4268
      %v4270 = vrot.slane %v4269, 1
      %v4271 = vmax.f32 %v4269, %v4270
      %v4272 = vsel %vm3711, %v3443, -inf
      %v4273 = vrot.slane %v4272, 4
      %v4274 = vmax.f32 %v4272, %v4273
      %v4275 = vrot.slane %v4274, 2
      %v4276 = vmax.f32 %v4274, %v4275
      %v4277 = vrot.slane %v4276, 1
      %v4278 = vmax.f32 %v4276, %v4277
      %v4279 = vsel %vm3711, %v3579, -inf
      %v4280 = vrot.slane %v4279, 4
      %v4281 = vmax.f32 %v4279, %v4280
      %v4282 = vrot.slane %v4281, 2
      %v4283 = vmax.f32 %v4281, %v4282
      %v4284 = vrot.slane %v4283, 1
      %v4285 = vmax.f32 %v4283, %v4284
      %v4286 = vsel %vm3711, %v3580, -inf
      %v4287 = vrot.slane %v4286, 4
      %v4288 = vmax.f32 %v4286, %v4287
      %v4289 = vrot.slane %v4288, 2
      %v4290 = vmax.f32 %v4288, %v4289
      %v4291 = vrot.slane %v4290, 1
      %v4292 = vmax.f32 %v4290, %v4291
      %v4293 = vsel %vm3711, %v3581, -inf
      %v4294 = vrot.slane %v4293, 4
      %v4295 = vmax.f32 %v4293, %v4294
      %v4296 = vrot.slane %v4295, 2
      %v4297 = vmax.f32 %v4295, %v4296
      %v4298 = vrot.slane %v4297, 1
      %v4299 = vmax.f32 %v4297, %v4298
      %v4300 = vsel %vm3711, %v3444, -inf
      %v4301 = vrot.slane %v4300, 4
      %v4302 = vmax.f32 %v4300, %v4301
      %v4303 = vrot.slane %v4302, 2
      %v4304 = vmax.f32 %v4302, %v4303
      %v4305 = vrot.slane %v4304, 1
      %v4306 = vmax.f32 %v4304, %v4305
      %v4307 = vsel %vm3711, %v3582, -inf
      %v4308 = vrot.slane %v4307, 4
      %v4309 = vmax.f32 %v4307, %v4308
      %v4310 = vrot.slane %v4309, 2
      %v4311 = vmax.f32 %v4309, %v4310
      %v4312 = vrot.slane %v4311, 1
      %v4313 = vmax.f32 %v4311, %v4312
      %v4314 = vsel %vm3711, %v3583, -inf
      %v4315 = vrot.slane %v4314, 4
      %v4316 = vmax.f32 %v4314, %v4315
      %v4317 = vrot.slane %v4316, 2
      %v4318 = vmax.f32 %v4316, %v4317
      %v4319 = vrot.slane %v4318, 1
      %v4320 = vmax.f32 %v4318, %v4319
      %v4321 = vsel %vm3711, %v3584, -inf
      %v4322 = vrot.slane %v4321, 4
      %v4323 = vmax.f32 %v4321, %v4322
      %v4324 = vrot.slane %v4323, 2
      %v4325 = vmax.f32 %v4323, %v4324
      %v4326 = vrot.slane %v4325, 1
      %v4327 = vmax.f32 %v4325, %v4326
      %v4328 = vsel %vm3711, %v3445, -inf
      %v4329 = vrot.slane %v4328, 4
      %v4330 = vmax.f32 %v4328, %v4329
      %v4331 = vrot.slane %v4330, 2
      %v4332 = vmax.f32 %v4330, %v4331
      %v4333 = vrot.slane %v4332, 1
      %v4334 = vmax.f32 %v4332, %v4333
      %v4335 = vsel %vm3711, %v3585, -inf
      %v4336 = vrot.slane %v4335, 4
      %v4337 = vmax.f32 %v4335, %v4336
      %v4338 = vrot.slane %v4337, 2
      %v4339 = vmax.f32 %v4337, %v4338
      %v4340 = vrot.slane %v4339, 1
      %v4341 = vmax.f32 %v4339, %v4340
      %v4342 = vsel %vm3711, %v3586, -inf
      %v4343 = vrot.slane %v4342, 4
      %v4344 = vmax.f32 %v4342, %v4343
      %v4345 = vrot.slane %v4344, 2
      %v4346 = vmax.f32 %v4344, %v4345
      %v4347 = vrot.slane %v4346, 1
      %v4348 = vmax.f32 %v4346, %v4347
      %v4349 = vsel %vm3711, %v3587, -inf
      %v4350 = vrot.slane %v4349, 4
      %v4351 = vmax.f32 %v4349, %v4350
      %v4352 = vrot.slane %v4351, 2
      %v4353 = vmax.f32 %v4351, %v4352
      %v4354 = vrot.slane %v4353, 1
      %v4355 = vmax.f32 %v4353, %v4354
      %v4356 = vsel %vm3711, %v3446, -inf
      %v4357 = vrot.slane %v4356, 4
      %v4358 = vmax.f32 %v4356, %v4357
      %v4359 = vrot.slane %v4358, 2
      %v4360 = vmax.f32 %v4358, %v4359
      %v4361 = vrot.slane %v4360, 1
      %v4362 = vmax.f32 %v4360, %v4361
      %v4363 = vsel %vm3711, %v3588, -inf
      %v4364 = vrot.slane %v4363, 4
      %v4365 = vmax.f32 %v4363, %v4364
      %v4366 = vrot.slane %v4365, 2
      %v4367 = vmax.f32 %v4365, %v4366
      %v4368 = vrot.slane %v4367, 1
      %v4369 = vmax.f32 %v4367, %v4368
      %v4370 = vsel %vm3711, %v3589, -inf
      %v4371 = vrot.slane %v4370, 4
      %v4372 = vmax.f32 %v4370, %v4371
      %v4373 = vrot.slane %v4372, 2
      %v4374 = vmax.f32 %v4372, %v4373
      %v4375 = vrot.slane %v4374, 1
      %v4376 = vmax.f32 %v4374, %v4375
      %v4377 = vsel %vm3711, %v3590, -inf
      %v4378 = vrot.slane %v4377, 4
      %v4379 = vmax.f32 %v4377, %v4378
      %v4380 = vrot.slane %v4379, 2
      %v4381 = vmax.f32 %v4379, %v4380
      %v4382 = vrot.slane %v4381, 1
      %v4383 = vmax.f32 %v4381, %v4382
      %v4384 = vsel %vm3711, %v3447, -inf
      %v4385 = vrot.slane %v4384, 4
      %v4386 = vmax.f32 %v4384, %v4385
      %v4387 = vrot.slane %v4386, 2
      %v4388 = vmax.f32 %v4386, %v4387
      %v4389 = vrot.slane %v4388, 1
      %v4390 = vmax.f32 %v4388, %v4389
      %v4391 = vsel %vm3711, %v3591, -inf
      %v4392 = vrot.slane %v4391, 4
      %v4393 = vmax.f32 %v4391, %v4392
      %v4394 = vrot.slane %v4393, 2
      %v4395 = vmax.f32 %v4393, %v4394
      %v4396 = vrot.slane %v4395, 1
      %v4397 = vmax.f32 %v4395, %v4396
      %v4398 = vsel %vm3711, %v3592, -inf
      %v4399 = vrot.slane %v4398, 4
      %v4400 = vmax.f32 %v4398, %v4399
      %v4401 = vrot.slane %v4400, 2
      %v4402 = vmax.f32 %v4400, %v4401
      %v4403 = vrot.slane %v4402, 1
      %v4404 = vmax.f32 %v4402, %v4403
      %v4405 = vsel %vm3711, %v3593, -inf
      %v4406 = vrot.slane %v4405, 4
      %v4407 = vmax.f32 %v4405, %v4406
      %v4408 = vrot.slane %v4407, 2
      %v4409 = vmax.f32 %v4407, %v4408
      %v4410 = vrot.slane %v4409, 1
      %v4411 = vmax.f32 %v4409, %v4410
      %v4412 = vsel %vm3711, %v3448, -inf
      %v4413 = vrot.slane %v4412, 4
      %v4414 = vmax.f32 %v4412, %v4413
      %v4415 = vrot.slane %v4414, 2
      %v4416 = vmax.f32 %v4414, %v4415
      %v4417 = vrot.slane %v4416, 1
      %v4418 = vmax.f32 %v4416, %v4417
      %v4419 = vsel %vm3711, %v3594, -inf
      %v4420 = vrot.slane %v4419, 4
      %v4421 = vmax.f32 %v4419, %v4420
      %v4422 = vrot.slane %v4421, 2
      %v4423 = vmax.f32 %v4421, %v4422
      %v4424 = vrot.slane %v4423, 1
      %v4425 = vmax.f32 %v4423, %v4424
      %v4426 = vsel %vm3711, %v3595, -inf
      %v4427 = vrot.slane %v4426, 4
      %v4428 = vmax.f32 %v4426, %v4427
      %v4429 = vrot.slane %v4428, 2
      %v4430 = vmax.f32 %v4428, %v4429
      %v4431 = vrot.slane %v4430, 1
      %v4432 = vmax.f32 %v4430, %v4431
      %v4433 = vsel %vm3711, %v3596, -inf
      %v4434 = vrot.slane %v4433, 4
      %v4435 = vmax.f32 %v4433, %v4434
      %v4436 = vrot.slane %v4435, 2
      %v4437 = vmax.f32 %v4435, %v4436
      %v4438 = vrot.slane %v4437, 1
      %v4439 = vmax.f32 %v4437, %v4438
      %v4440 = vsel %vm3711, %v3449, -inf
      %v4441 = vrot.slane %v4440, 4
      %v4442 = vmax.f32 %v4440, %v4441
      %v4443 = vrot.slane %v4442, 2
      %v4444 = vmax.f32 %v4442, %v4443
      %v4445 = vrot.slane %v4444, 1
      %v4446 = vmax.f32 %v4444, %v4445
      %v4447 = vsel %vm3711, %v3597, -inf
      %v4448 = vrot.slane %v4447, 4
      %v4449 = vmax.f32 %v4447, %v4448
      %v4450 = vrot.slane %v4449, 2
      %v4451 = vmax.f32 %v4449, %v4450
      %v4452 = vrot.slane %v4451, 1
      %v4453 = vmax.f32 %v4451, %v4452
      %v4454 = vsel %vm3711, %v3598, -inf
      %v4455 = vrot.slane %v4454, 4
      %v4456 = vmax.f32 %v4454, %v4455
      %v4457 = vrot.slane %v4456, 2
      %v4458 = vmax.f32 %v4456, %v4457
      %v4459 = vrot.slane %v4458, 1
      %v4460 = vmax.f32 %v4458, %v4459
      %v4461 = vsel %vm3711, %v3599, -inf
      %v4462 = vrot.slane %v4461, 4
      %v4463 = vmax.f32 %v4461, %v4462
      %v4464 = vrot.slane %v4463, 2
      %v4465 = vmax.f32 %v4463, %v4464
      %v4466 = vrot.slane %v4465, 1
      %v4467 = vmax.f32 %v4465, %v4466
      %v4468 = vsel %vm3711, %v3450, -inf
      %v4469 = vrot.slane %v4468, 4
      %v4470 = vmax.f32 %v4468, %v4469
      %v4471 = vrot.slane %v4470, 2
      %v4472 = vmax.f32 %v4470, %v4471
      %v4473 = vrot.slane %v4472, 1
      %v4474 = vmax.f32 %v4472, %v4473
      %v4475 = vsel %vm3711, %v3600, -inf
      %v4476 = vrot.slane %v4475, 4
      %v4477 = vmax.f32 %v4475, %v4476
      %v4478 = vrot.slane %v4477, 2
      %v4479 = vmax.f32 %v4477, %v4478
      %v4480 = vrot.slane %v4479, 1
      %v4481 = vmax.f32 %v4479, %v4480
      %v4482 = vsel %vm3711, %v3601, -inf
      %v4483 = vrot.slane %v4482, 4
      %v4484 = vmax.f32 %v4482, %v4483
      %v4485 = vrot.slane %v4484, 2
      %v4486 = vmax.f32 %v4484, %v4485
      %v4487 = vrot.slane %v4486, 1
      %v4488 = vmax.f32 %v4486, %v4487
      %v4489 = vsel %vm3711, %v3602, -inf
      %v4490 = vrot.slane %v4489, 4
      %v4491 = vmax.f32 %v4489, %v4490
      %v4492 = vrot.slane %v4491, 2
      %v4493 = vmax.f32 %v4491, %v4492
      %v4494 = vrot.slane %v4493, 1
      %v4495 = vmax.f32 %v4493, %v4494
      %v4496 = vsel %vm3711, %v3451, -inf
      %v4497 = vrot.slane %v4496, 4
      %v4498 = vmax.f32 %v4496, %v4497
      %v4499 = vrot.slane %v4498, 2
      %v4500 = vmax.f32 %v4498, %v4499
      %v4501 = vrot.slane %v4500, 1
      %v4502 = vmax.f32 %v4500, %v4501
      %v4503 = vsel %vm3711, %v3603, -inf
      %v4504 = vrot.slane %v4503, 4
      %v4505 = vmax.f32 %v4503, %v4504
      %v4506 = vrot.slane %v4505, 2
      %v4507 = vmax.f32 %v4505, %v4506
      %v4508 = vrot.slane %v4507, 1
      %v4509 = vmax.f32 %v4507, %v4508
      %v4510 = vsel %vm3711, %v3604, -inf
      %v4511 = vrot.slane %v4510, 4
      %v4512 = vmax.f32 %v4510, %v4511
      %v4513 = vrot.slane %v4512, 2
      %v4514 = vmax.f32 %v4512, %v4513
      %v4515 = vrot.slane %v4514, 1
      %v4516 = vmax.f32 %v4514, %v4515
      %v4517 = vsel %vm3711, %v3605, -inf
      %v4518 = vrot.slane %v4517, 4
      %v4519 = vmax.f32 %v4517, %v4518
      %v4520 = vrot.slane %v4519, 2
      %v4521 = vmax.f32 %v4519, %v4520
      %v4522 = vrot.slane %v4521, 1
      %v4523 = vmax.f32 %v4521, %v4522
      %v4524 = vsel %vm3711, %v3452, -inf
      %v4525 = vrot.slane %v4524, 4
      %v4526 = vmax.f32 %v4524, %v4525
      %v4527 = vrot.slane %v4526, 2
      %v4528 = vmax.f32 %v4526, %v4527
      %v4529 = vrot.slane %v4528, 1
      %v4530 = vmax.f32 %v4528, %v4529
      %v4531 = vsel %vm3711, %v3606, -inf
      %v4532 = vrot.slane %v4531, 4
      %v4533 = vmax.f32 %v4531, %v4532
      %v4534 = vrot.slane %v4533, 2
      %v4535 = vmax.f32 %v4533, %v4534
      %v4536 = vrot.slane %v4535, 1
      %v4537 = vmax.f32 %v4535, %v4536
      %v4538 = vsel %vm3711, %v3607, -inf
      %v4539 = vrot.slane %v4538, 4
      %v4540 = vmax.f32 %v4538, %v4539
      %v4541 = vrot.slane %v4540, 2
      %v4542 = vmax.f32 %v4540, %v4541
      %v4543 = vrot.slane %v4542, 1
      %v4544 = vmax.f32 %v4542, %v4543
      %v4545 = vsel %vm3711, %v3608, -inf
      %v4546 = vrot.slane %v4545, 4
      %v4547 = vmax.f32 %v4545, %v4546
      %v4548 = vrot.slane %v4547, 2
      %v4549 = vmax.f32 %v4547, %v4548
      %v4550 = vrot.slane %v4549, 1
      %v4551 = vmax.f32 %v4549, %v4550
      %v4552 = vsel %vm3711, %v3453, -inf
      %v4553 = vrot.slane %v4552, 4
      %v4554 = vmax.f32 %v4552, %v4553
      %v4555 = vrot.slane %v4554, 2
      %v4556 = vmax.f32 %v4554, %v4555
      %v4557 = vrot.slane %v4556, 1
      %v4558 = vmax.f32 %v4556, %v4557
      %v4559 = vsel %vm3711, %v3609, -inf
      %v4560 = vrot.slane %v4559, 4
      %v4561 = vmax.f32 %v4559, %v4560
      %v4562 = vrot.slane %v4561, 2
      %v4563 = vmax.f32 %v4561, %v4562
      %v4564 = vrot.slane %v4563, 1
      %v4565 = vmax.f32 %v4563, %v4564
      %v4566 = vsel %vm3711, %v3610, -inf
      %v4567 = vrot.slane %v4566, 4
      %v4568 = vmax.f32 %v4566, %v4567
      %v4569 = vrot.slane %v4568, 2
      %v4570 = vmax.f32 %v4568, %v4569
      %v4571 = vrot.slane %v4570, 1
      %v4572 = vmax.f32 %v4570, %v4571
      %v4573 = vsel %vm3711, %v3611, -inf
      %v4574 = vrot.slane %v4573, 4
      %v4575 = vmax.f32 %v4573, %v4574
      %v4576 = vrot.slane %v4575, 2
      %v4577 = vmax.f32 %v4575, %v4576
      %v4578 = vrot.slane %v4577, 1
      %v4579 = vmax.f32 %v4577, %v4578
      %v4580 = vsel %vm3711, %v3454, -inf
      %v4581 = vrot.slane %v4580, 4
      %v4582 = vmax.f32 %v4580, %v4581
      %v4583 = vrot.slane %v4582, 2
      %v4584 = vmax.f32 %v4582, %v4583
      %v4585 = vrot.slane %v4584, 1
      %v4586 = vmax.f32 %v4584, %v4585
      %v4587 = vsel %vm3711, %v3612, -inf
      %v4588 = vrot.slane %v4587, 4
      %v4589 = vmax.f32 %v4587, %v4588
      %v4590 = vrot.slane %v4589, 2
      %v4591 = vmax.f32 %v4589, %v4590
      %v4592 = vrot.slane %v4591, 1
      %v4593 = vmax.f32 %v4591, %v4592
      %v4594 = vsel %vm3711, %v3613, -inf
      %v4595 = vrot.slane %v4594, 4
      %v4596 = vmax.f32 %v4594, %v4595
      %v4597 = vrot.slane %v4596, 2
      %v4598 = vmax.f32 %v4596, %v4597
      %v4599 = vrot.slane %v4598, 1
      %v4600 = vmax.f32 %v4598, %v4599
      %v4601 = vsel %vm3711, %v3614, -inf
      %v4602 = vrot.slane %v4601, 4
      %v4603 = vmax.f32 %v4601, %v4602
      %v4604 = vrot.slane %v4603, 2
      %v4605 = vmax.f32 %v4603, %v4604
      %v4606 = vrot.slane %v4605, 1
      %v4607 = vmax.f32 %v4605, %v4606
      %v4608 = vsel %vm2825, %v3718, -inf
      %v4609 = vsel %vm2825, %v3774, -inf
      %v4610 = vmax.f32 %v4608, %v4609
      %v4611 = vsel %vm2825, %v3725, -inf
      %v4612 = vsel %vm2825, %v3781, -inf
      %v4613 = vmax.f32 %v4611, %v4612
      %v4614 = vsel %vm2825, %v3732, -inf
      %v4615 = vsel %vm2825, %v3788, -inf
      %v4616 = vmax.f32 %v4614, %v4615
      %v4617 = vsel %vm2825, %v3739, -inf
      %v4618 = vsel %vm2825, %v3795, -inf
      %v4619 = vmax.f32 %v4617, %v4618
      %v4620 = vsel %vm2825, %v3746, -inf
      %v4621 = vsel %vm2825, %v3802, -inf
      %v4622 = vmax.f32 %v4620, %v4621
      %v4623 = vsel %vm2825, %v3753, -inf
      %v4624 = vsel %vm2825, %v3809, -inf
      %v4625 = vmax.f32 %v4623, %v4624
      %v4626 = vsel %vm2825, %v3760, -inf
      %v4627 = vsel %vm2825, %v3816, -inf
      %v4628 = vmax.f32 %v4626, %v4627
      %v4629 = vsel %vm2825, %v3767, -inf
      %v4630 = vsel %vm2825, %v3823, -inf
      %v4631 = vmax.f32 %v4629, %v4630
      %v4632 = vsel %vm2825, %v3830, -inf
      %v4633 = vsel %vm2825, %v3886, -inf
      %v4634 = vmax.f32 %v4632, %v4633
      %v4635 = vsel %vm2825, %v3837, -inf
      %v4636 = vsel %vm2825, %v3893, -inf
      %v4637 = vmax.f32 %v4635, %v4636
      %v4638 = vsel %vm2825, %v3844, -inf
      %v4639 = vsel %vm2825, %v3900, -inf
      %v4640 = vmax.f32 %v4638, %v4639
      %v4641 = vsel %vm2825, %v3851, -inf
      %v4642 = vsel %vm2825, %v3907, -inf
      %v4643 = vmax.f32 %v4641, %v4642
      %v4644 = vsel %vm2825, %v3858, -inf
      %v4645 = vsel %vm2825, %v3914, -inf
      %v4646 = vmax.f32 %v4644, %v4645
      %v4647 = vsel %vm2825, %v3865, -inf
      %v4648 = vsel %vm2825, %v3921, -inf
      %v4649 = vmax.f32 %v4647, %v4648
      %v4650 = vsel %vm2825, %v3872, -inf
      %v4651 = vsel %vm2825, %v3928, -inf
      %v4652 = vmax.f32 %v4650, %v4651
      %v4653 = vsel %vm2825, %v3879, -inf
      %v4654 = vsel %vm2825, %v3935, -inf
      %v4655 = vmax.f32 %v4653, %v4654
      %v4656 = vsel %vm2825, %v3942, -inf
      %v4657 = vsel %vm2825, %v3998, -inf
      %v4658 = vmax.f32 %v4656, %v4657
      %v4659 = vsel %vm2825, %v3949, -inf
      %v4660 = vsel %vm2825, %v4005, -inf
      %v4661 = vmax.f32 %v4659, %v4660
      %v4662 = vsel %vm2825, %v3956, -inf
      %v4663 = vsel %vm2825, %v4012, -inf
      %v4664 = vmax.f32 %v4662, %v4663
      %v4665 = vsel %vm2825, %v3963, -inf
      %v4666 = vsel %vm2825, %v4019, -inf
      %v4667 = vmax.f32 %v4665, %v4666
      %v4668 = vsel %vm2825, %v3970, -inf
      %v4669 = vsel %vm2825, %v4026, -inf
      %v4670 = vmax.f32 %v4668, %v4669
      %v4671 = vsel %vm2825, %v3977, -inf
      %v4672 = vsel %vm2825, %v4033, -inf
      %v4673 = vmax.f32 %v4671, %v4672
      %v4674 = vsel %vm2825, %v3984, -inf
      %v4675 = vsel %vm2825, %v4040, -inf
      %v4676 = vmax.f32 %v4674, %v4675
      %v4677 = vsel %vm2825, %v3991, -inf
      %v4678 = vsel %vm2825, %v4047, -inf
      %v4679 = vmax.f32 %v4677, %v4678
      %v4680 = vsel %vm2825, %v4054, -inf
      %v4681 = vsel %vm2825, %v4110, -inf
      %v4682 = vmax.f32 %v4680, %v4681
      %v4683 = vsel %vm2825, %v4061, -inf
      %v4684 = vsel %vm2825, %v4117, -inf
      %v4685 = vmax.f32 %v4683, %v4684
      %v4686 = vsel %vm2825, %v4068, -inf
      %v4687 = vsel %vm2825, %v4124, -inf
      %v4688 = vmax.f32 %v4686, %v4687
      %v4689 = vsel %vm2825, %v4075, -inf
      %v4690 = vsel %vm2825, %v4131, -inf
      %v4691 = vmax.f32 %v4689, %v4690
      %v4692 = vsel %vm2825, %v4082, -inf
      %v4693 = vsel %vm2825, %v4138, -inf
      %v4694 = vmax.f32 %v4692, %v4693
      %v4695 = vsel %vm2825, %v4089, -inf
      %v4696 = vsel %vm2825, %v4145, -inf
      %v4697 = vmax.f32 %v4695, %v4696
      %v4698 = vsel %vm2825, %v4096, -inf
      %v4699 = vsel %vm2825, %v4152, -inf
      %v4700 = vmax.f32 %v4698, %v4699
      %v4701 = vsel %vm2825, %v4103, -inf
      %v4702 = vsel %vm2825, %v4159, -inf
      %v4703 = vmax.f32 %v4701, %v4702
      %v4704 = vsel %vm2825, %v4166, -inf
      %v4705 = vsel %vm2825, %v4222, -inf
      %v4706 = vmax.f32 %v4704, %v4705
      %v4707 = vsel %vm2825, %v4173, -inf
      %v4708 = vsel %vm2825, %v4229, -inf
      %v4709 = vmax.f32 %v4707, %v4708
      %v4710 = vsel %vm2825, %v4180, -inf
      %v4711 = vsel %vm2825, %v4236, -inf
      %v4712 = vmax.f32 %v4710, %v4711
      %v4713 = vsel %vm2825, %v4187, -inf
      %v4714 = vsel %vm2825, %v4243, -inf
      %v4715 = vmax.f32 %v4713, %v4714
      %v4716 = vsel %vm2825, %v4194, -inf
      %v4717 = vsel %vm2825, %v4250, -inf
      %v4718 = vmax.f32 %v4716, %v4717
      %v4719 = vsel %vm2825, %v4201, -inf
      %v4720 = vsel %vm2825, %v4257, -inf
      %v4721 = vmax.f32 %v4719, %v4720
      %v4722 = vsel %vm2825, %v4208, -inf
      %v4723 = vsel %vm2825, %v4264, -inf
      %v4724 = vmax.f32 %v4722, %v4723
      %v4725 = vsel %vm2825, %v4215, -inf
      %v4726 = vsel %vm2825, %v4271, -inf
      %v4727 = vmax.f32 %v4725, %v4726
      %v4728 = vsel %vm2825, %v4278, -inf
      %v4729 = vsel %vm2825, %v4334, -inf
      %v4730 = vmax.f32 %v4728, %v4729
      %v4731 = vsel %vm2825, %v4285, -inf
      %v4732 = vsel %vm2825, %v4341, -inf
      %v4733 = vmax.f32 %v4731, %v4732
      %v4734 = vsel %vm2825, %v4292, -inf
      %v4735 = vsel %vm2825, %v4348, -inf
      %v4736 = vmax.f32 %v4734, %v4735
      %v4737 = vsel %vm2825, %v4299, -inf
      %v4738 = vsel %vm2825, %v4355, -inf
      %v4739 = vmax.f32 %v4737, %v4738
      %v4740 = vsel %vm2825, %v4306, -inf
      %v4741 = vsel %vm2825, %v4362, -inf
      %v4742 = vmax.f32 %v4740, %v4741
      %v4743 = vsel %vm2825, %v4313, -inf
      %v4744 = vsel %vm2825, %v4369, -inf
      %v4745 = vmax.f32 %v4743, %v4744
      %v4746 = vsel %vm2825, %v4320, -inf
      %v4747 = vsel %vm2825, %v4376, -inf
      %v4748 = vmax.f32 %v4746, %v4747
      %v4749 = vsel %vm2825, %v4327, -inf
      %v4750 = vsel %vm2825, %v4383, -inf
      %v4751 = vmax.f32 %v4749, %v4750
      %v4752 = vsel %vm2825, %v4390, -inf
      %v4753 = vsel %vm2825, %v4446, -inf
      %v4754 = vmax.f32 %v4752, %v4753
      %v4755 = vsel %vm2825, %v4397, -inf
      %v4756 = vsel %vm2825, %v4453, -inf
      %v4757 = vmax.f32 %v4755, %v4756
      %v4758 = vsel %vm2825, %v4404, -inf
      %v4759 = vsel %vm2825, %v4460, -inf
      %v4760 = vmax.f32 %v4758, %v4759
      %v4761 = vsel %vm2825, %v4411, -inf
      %v4762 = vsel %vm2825, %v4467, -inf
      %v4763 = vmax.f32 %v4761, %v4762
      %v4764 = vsel %vm2825, %v4418, -inf
      %v4765 = vsel %vm2825, %v4474, -inf
      %v4766 = vmax.f32 %v4764, %v4765
      %v4767 = vsel %vm2825, %v4425, -inf
      %v4768 = vsel %vm2825, %v4481, -inf
      %v4769 = vmax.f32 %v4767, %v4768
      %v4770 = vsel %vm2825, %v4432, -inf
      %v4771 = vsel %vm2825, %v4488, -inf
      %v4772 = vmax.f32 %v4770, %v4771
      %v4773 = vsel %vm2825, %v4439, -inf
      %v4774 = vsel %vm2825, %v4495, -inf
      %v4775 = vmax.f32 %v4773, %v4774
      %v4776 = vsel %vm2825, %v4502, -inf
      %v4777 = vsel %vm2825, %v4558, -inf
      %v4778 = vmax.f32 %v4776, %v4777
      %v4779 = vsel %vm2825, %v4509, -inf
      %v4780 = vsel %vm2825, %v4565, -inf
      %v4781 = vmax.f32 %v4779, %v4780
      %v4782 = vsel %vm2825, %v4516, -inf
      %v4783 = vsel %vm2825, %v4572, -inf
      %v4784 = vmax.f32 %v4782, %v4783
      %v4785 = vsel %vm2825, %v4523, -inf
      %v4786 = vsel %vm2825, %v4579, -inf
      %v4787 = vmax.f32 %v4785, %v4786
      %v4788 = vsel %vm2825, %v4530, -inf
      %v4789 = vsel %vm2825, %v4586, -inf
      %v4790 = vmax.f32 %v4788, %v4789
      %v4791 = vsel %vm2825, %v4537, -inf
      %v4792 = vsel %vm2825, %v4593, -inf
      %v4793 = vmax.f32 %v4791, %v4792
      %v4794 = vsel %vm2825, %v4544, -inf
      %v4795 = vsel %vm2825, %v4600, -inf
      %v4796 = vmax.f32 %v4794, %v4795
      %v4797 = vsel %vm2825, %v4551, -inf
      %v4798 = vsel %vm2825, %v4607, -inf
      %v4799 = vmax.f32 %v4797, %v4798
      %vm4864 = vcmask 1041409
      %v4865 = vsel %vm4864, %v4613, %v4610
      %vm4866 = vcmask 1042434
      %v4867 = vsel %vm4866, %v4616, %v4865
      %vm4868 = vcmask 1043459
      %v4869 = vsel %vm4868, %v4619, %v4867
      %vm4870 = vcmask 1044484
      %v4871 = vsel %vm4870, %v4622, %v4869
      %vm4872 = vcmask 1045509
      %v4873 = vsel %vm4872, %v4625, %v4871
      %vm4874 = vcmask 1046534
      %v4875 = vsel %vm4874, %v4628, %v4873
      %vm4876 = vcmask 1047559
      %v4877 = vsel %vm4876, %v4631, %v4875
      %v4878 = vsel %vm4864, %v4637, %v4634
      %v4879 = vsel %vm4866, %v4640, %v4878
      %v4880 = vsel %vm4868, %v4643, %v4879
      %v4881 = vsel %vm4870, %v4646, %v4880
      %v4882 = vsel %vm4872, %v4649, %v4881
      %v4883 = vsel %vm4874, %v4652, %v4882
      %v4884 = vsel %vm4876, %v4655, %v4883
      %v4885 = vsel %vm4864, %v4661, %v4658
      %v4886 = vsel %vm4866, %v4664, %v4885
      %v4887 = vsel %vm4868, %v4667, %v4886
      %v4888 = vsel %vm4870, %v4670, %v4887
      %v4889 = vsel %vm4872, %v4673, %v4888
      %v4890 = vsel %vm4874, %v4676, %v4889
      %v4891 = vsel %vm4876, %v4679, %v4890
      %v4892 = vsel %vm4864, %v4685, %v4682
      %v4893 = vsel %vm4866, %v4688, %v4892
      %v4894 = vsel %vm4868, %v4691, %v4893
      %v4895 = vsel %vm4870, %v4694, %v4894
      %v4896 = vsel %vm4872, %v4697, %v4895
      %v4897 = vsel %vm4874, %v4700, %v4896
      %v4898 = vsel %vm4876, %v4703, %v4897
      %v4899 = vsel %vm4864, %v4709, %v4706
      %v4900 = vsel %vm4866, %v4712, %v4899
      %v4901 = vsel %vm4868, %v4715, %v4900
      %v4902 = vsel %vm4870, %v4718, %v4901
      %v4903 = vsel %vm4872, %v4721, %v4902
      %v4904 = vsel %vm4874, %v4724, %v4903
      %v4905 = vsel %vm4876, %v4727, %v4904
      %v4906 = vsel %vm4864, %v4733, %v4730
      %v4907 = vsel %vm4866, %v4736, %v4906
      %v4908 = vsel %vm4868, %v4739, %v4907
      %v4909 = vsel %vm4870, %v4742, %v4908
      %v4910 = vsel %vm4872, %v4745, %v4909
      %v4911 = vsel %vm4874, %v4748, %v4910
      %v4912 = vsel %vm4876, %v4751, %v4911
      %v4913 = vsel %vm4864, %v4757, %v4754
      %v4914 = vsel %vm4866, %v4760, %v4913
      %v4915 = vsel %vm4868, %v4763, %v4914
      %v4916 = vsel %vm4870, %v4766, %v4915
      %v4917 = vsel %vm4872, %v4769, %v4916
      %v4918 = vsel %vm4874, %v4772, %v4917
      %v4919 = vsel %vm4876, %v4775, %v4918
      %v4920 = vsel %vm4864, %v4781, %v4778
      %v4921 = vsel %vm4866, %v4784, %v4920
      %v4922 = vsel %vm4868, %v4787, %v4921
      %v4923 = vsel %vm4870, %v4790, %v4922
      %v4924 = vsel %vm4872, %v4793, %v4923
      %v4925 = vsel %vm4874, %v4796, %v4924
      %v4926 = vsel %vm4876, %v4799, %v4925
      %4935 = vst.msk [vmem:[%s365] sm:$0xff] %vm2825, %v4877
      %4936 = vst.msk [vmem:[%s365 + $0x8] sm:$0xff] %vm2825, %v4884
      %4937 = vst.msk [vmem:[%s365 + $0x10] sm:$0xff] %vm2825, %v4891
      %4938 = vst.msk [vmem:[%s365 + $0x18] sm:$0xff] %vm2825, %v4898
      %4939 = vst.msk [vmem:[%s365 + $0x20] sm:$0xff] %vm2825, %v4905
      %4940 = vst.msk [vmem:[%s365 + $0x28] sm:$0xff] %vm2825, %v4912
      %4941 = vst.msk [vmem:[%s365 + $0x30] sm:$0xff] %vm2825, %v4919
      %4942 = vst.msk [vmem:[%s365 + $0x38] sm:$0xff] %vm2825, %v4926
      %p4943 = scmp.lt.s32.totalorder %s21, 1
      %s4944 = scalar_select %p4943, %s21, 1
      %s4945 = smul.addr %s4944, 32
      %s4946 = smul.addr %s4945, 8
      %s4947 = scalar_lea.vmem %s8, %s4946
      %p4948 = scmp.lt.s32.totalorder %s21, 1
      %s4949 = scalar_select %p4948, %s21, 1
      %s4950 = smul.addr %s4949, 8
      %s4951 = smul.addr %s4950, 8
      %s4952 = scalar_lea.vmem %s9, %s4951
      // Predicated region
      $region53: #{preact_resblock.3} parent=51 // pred_check
        %p4953 = pneg %p217
      $region54: #{preact_resblock.3} parent=51 // pred_check_branch
        %4955 = sbr.rel (%p4953) target = $region56
      $region55: #{preact_resblock.3} parent=51 // pred_region
        _
      $region56: #{preact_resblock.3} parent=51 // pred_fallthru
        _
      // Predicated region
      $region57: #{preact_resblock.3} parent=51 // pred_check
        %p4956 = pneg %p243
      $region58: #{preact_resblock.3} parent=51 // pred_check_branch
        %4958 = sbr.rel (%p4956) target = $region60
      $region59: #{preact_resblock.3} parent=51 // pred_region
        _
      $region60: #{preact_resblock.3} parent=51 // pred_fallthru
        _
    $region52: #{preact_resblock.3} parent=5 // pred_fallthru
      _
    %p4959 = scmp.le.s32.totalorder 2, %s16
    // Predicated region
    $region61: #{preact_resblock.3} parent=5 // pred_check
      %p4960 = pneg %p4959
    $region62: #{preact_resblock.3} parent=5 // pred_check_branch
      %4962 = sbr.rel (%p4960) target = $region64
    $region63: #{preact_resblock.3} parent=5 // pred_region
      %s4963 = ssub.s32 %s16, 2
      // Predicated region
      $region65: #{preact_resblock.3} parent=63 // pred_check
        %p4964 = pneg %p223
      $region66: #{preact_resblock.3} parent=63 // pred_check_branch
        %4966 = sbr.rel (%p4964) target = $region68
      $region67: #{preact_resblock.3} parent=63 // pred_region
        %p4967 = scmp.lt.s32.totalorder %s22, 1
        %s4968 = scalar_select %p4967, %s22, 1
        %s4969 = smul.addr %s4968, 32
        %s4970 = smul.addr %s4969, 8
        %s4971 = scalar_lea.vmem %s8, %s4970
      $region68: #{preact_resblock.3} parent=63 // pred_fallthru
        _
      // Predicated region
      $region69: #{preact_resblock.3} parent=63 // pred_check
        %p4972 = pneg %p249
      $region70: #{preact_resblock.3} parent=63 // pred_check_branch
        %4974 = sbr.rel (%p4972) target = $region72
      $region71: #{preact_resblock.3} parent=63 // pred_region
        %p4975 = scmp.lt.s32.totalorder %s22, 1
        %s4976 = scalar_select %p4975, %s22, 1
        %s4977 = smul.addr %s4976, 8
        %s4978 = smul.addr %s4977, 8
        %s4979 = scalar_lea.vmem %s9, %s4978
      $region72: #{preact_resblock.3} parent=63 // pred_fallthru
        _
    $region64: #{preact_resblock.3} parent=5 // pred_fallthru
      _
  $region6: #{preact_resblock.3} parent=0 // loop_footer
    %s20 = sadd.s32 1, %s16
  $region7: #{preact_resblock.3} parent=0 // loop_footer_branch
    %15 = sbr.rel target = $region3
  $region8: #{preact_resblock.3} parent=0 // loop_exit
    _

</llo_original>
